<compile_context>
chip_gen: v7x
topology: tpu7x:2x2x1
jax: 0.10.0
libtpu: 0.0.40
codegen_flags: <defaults>
</compile_context>

<pallas_src>
import math

import jax
import jax.numpy as jnp
from jax.experimental import pallas as pl
from jax.experimental.pallas import tpu as pltpu


# ---------------------------------------------------------------------------
# Kernel helpers (traced inside the Pallas kernel body).
# ---------------------------------------------------------------------------
def _half_cell(gates, c_prev, hp):
    """One direction's LSTM cell; gate lane order is (i, f, o, g), each hp wide.

    gates : (B, 4*hp) pre-activations.
    c_prev: (B, hp)   previous cell state.
    """
    ifo = jax.nn.sigmoid(gates[:, 0:3 * hp])      # one contiguous sigmoid push
    g = jnp.tanh(gates[:, 3 * hp:4 * hp])         # one tanh push
    c = ifo[:, hp:2 * hp] * c_prev + ifo[:, 0:hp] * g
    h = ifo[:, 2 * hp:3 * hp] * jnp.tanh(c)
    return h, c


def _run_bidir_layer(gx_ref, whh_bd, out_scr):
    """Forward + backward recurrences of one layer (time loop fully unrolled).

    gx_ref : (B, T, 8*hp) fused input projections (+bias); fwd gates occupy
             lanes [0,4hp), bwd gates [4hp,8hp); gate order (i,f,o,g).
    whh_bd : (2*hp, 8*hp) block-diagonal hidden->hidden weights (already a
             VALUE: loaded once per layer, NOT re-loaded per step).
    out_scr: (B, T, 2*hp) padded layer output (fwd lanes [0,hp), bwd [hp,2hp)).
    """
    B, T, _ = gx_ref.shape
    hp = whh_bd.shape[0] // 2
    f32 = jnp.float32

    h_cat = jnp.zeros((B, 2 * hp), f32)           # [h_fwd | h_bwd]
    c_f = jnp.zeros((B, hp), f32)
    c_b = jnp.zeros((B, hp), f32)

    # TODO(synk): switch to lax.fori_loop(..., unroll=4) with pl.ds-indexed
    #             loads/stores once T grows beyond ~16 (bounds vreg live ranges).
    for s in range(T):                            # static unroll; T is small
        tb = T - 1 - s                            # backward walks reversed time
        gx_t = jnp.concatenate(
            [gx_ref[:, s, 0:4 * hp], gx_ref[:, tb, 4 * hp:8 * hp]], axis=-1)
        # Single MXU issue per step for BOTH directions (block-diagonal RHS).
        gates = gx_t + jnp.dot(h_cat, whh_bd, preferred_element_type=f32)
        h_f, c_f = _half_cell(gates[:, 0:4 * hp], c_f, hp)
        h_b, c_b = _half_cell(gates[:, 4 * hp:8 * hp], c_b, hp)
        h_cat = jnp.concatenate([h_f, h_b], axis=-1)
        # TODO(synk): on v5e, collect h_f/h_b and emit batched lane-dense stores
        #             after the loop (single vector-store slot there).
        out_scr[:, s, 0:hp] = h_f
        out_scr[:, tb, hp:2 * hp] = h_b


def _bilstm2_fused_kernel(
    x_ref,                                   # (Bb, T, D)   embedded input chunk
    w0_ih, w0_hh, b0,                        # layer 0 fused weights
    w1_ih, w1_hh, b1,                        # layer 1 fused weights
    out_ref,                                 # (Bb, T, 2H)  batch_first output
    gx_scr,                                  # (Bb, T, 8hp) fused projections
    l_scr,                                   # (Bb, T, 2hp) padded layer output
):
    B, T, D = x_ref.shape
    hp = w0_hh.shape[0] // 2                 # padded per-direction hidden size
    H = out_ref.shape[-1] // 2               # true per-direction hidden size
    f32 = jnp.float32

    # ---- layer 0: ONE fused (fwd+bwd) sequence-wide input projection,
    #      hoisted off the serial recurrence.
    x2 = x_ref[...].astype(f32).reshape(B * T, D)
    gx_scr[...] = (jnp.dot(x2, w0_ih[...], preferred_element_type=f32)
                   + b0[...]).reshape(B, T, 8 * hp)
    _run_bidir_layer(gx_scr, w0_hh[...], l_scr)

    # ---- layer 1: input is the padded bidirectional layer-0 output (never
    #      leaves VMEM). gx_scr / l_scr are reused: layer-0 contents are fully
    #      consumed before they are overwritten.
    l0 = l_scr[...].reshape(B * T, 2 * hp)
    gx_scr[...] = (jnp.dot(l0, w1_ih[...], preferred_element_type=f32)
                   + b1[...]).reshape(B, T, 8 * hp)
    _run_bidir_layer(gx_scr, w1_hh[...], l_scr)

    # ---- drop lane padding and emit the dense (Bb, T, 2H) output at once.
    l1 = l_scr[...]
    if hp == H:
        out_ref[...] = l1.astype(out_ref.dtype)
    else:
        out_ref[...] = jnp.concatenate(
            [l1[:, :, 0:H], l1[:, :, hp:hp + H]], axis=-1).astype(out_ref.dtype)


# ---------------------------------------------------------------------------
# Parameter construction / packing.
# ---------------------------------------------------------------------------
def init_bilstm_params(key, embedding_dim, hidden_dim, num_layers=2):
    """PyTorch-layout nn.LSTM params: U(-1/sqrt(H), 1/sqrt(H)) init."""
    k = 1.0 / math.sqrt(hidden_dim)
    params = []
    for layer in range(num_layers):
        in_dim = embedding_dim if layer == 0 else 2 * hidden_dim
        layer_params = []
        for _direction in range(2):  # forward, reverse
            key, k1, k2, k3, k4 = jax.random.split(key, 5)
            w_ih = jax.random.uniform(k1, (4 * hidden_dim, in_dim),
                                      jnp.float32, -k, k)
            w_hh = jax.random.uniform(k2, (4 * hidden_dim, hidden_dim),
                                      jnp.float32, -k, k)
            b_ih = jax.random.uniform(k3, (4 * hidden_dim,), jnp.float32, -k, k)
            b_hh = jax.random.uniform(k4, (4 * hidden_dim,), jnp.float32, -k, k)
            layer_params.append((w_ih, w_hh, b_ih, b_hh))
        params.append(tuple(layer_params))
    return params


# PyTorch nn.LSTM gate order is (i, f, g, o); the kernel uses (i, f, o, g) so
# the three sigmoid gates are lane-contiguous (1 sigmoid + 1 tanh per step).
_GATE_SRC = (0, 1, 3, 2)   # kernel gate slot -> pytorch gate slot


def _reorder_pad_gates(wt, H, hp):
    """(rows, 4H) PyTorch-ordered -> (rows, 4*hp): gate k occupies lanes
    [k*hp, k*hp + H) in kernel order (i, f, o, g); padded lanes are zero."""
    rows = wt.shape[0]
    out = jnp.zeros((rows, 4 * hp), wt.dtype)
    for dst, src in enumerate(_GATE_SRC):
        out = out.at[:, dst * hp:dst * hp + H].set(wt[:, src * H:(src + 1) * H])
    return out


def pack_bilstm_params(params, hidden_dim):
    """Convert PyTorch-layout 2-layer bidirectional LSTM params into the fused,
    padded, pre-transposed operands consumed by the Pallas kernel."""
    assert len(params) == 2, "fused kernel is specialised to num_layers=2"
    H = hidden_dim
    hp = ((H + 127) // 128) * 128            # per-direction size padded to lanes
    packed = []
    for layer, layer_params in enumerate(params):
        wih_dirs, whh_dirs, b_dirs = [], [], []
        for (w_ih, w_hh, b_ih, b_hh) in layer_params:
            wih_t = _reorder_pad_gates(jnp.asarray(w_ih).T, H, hp)   # (in, 4hp)
            if layer > 0:
                # Layer-1 input is the padded concat(fwd, bwd) of layer 0:
                # remap input rows 0:H -> 0:H (fwd) and H:2H -> hp:hp+H (bwd).
                remapped = jnp.zeros((2 * hp, 4 * hp), wih_t.dtype)
                remapped = remapped.at[0:H].set(wih_t[0:H])
                remapped = remapped.at[hp:hp + H].set(wih_t[H:2 * H])
                wih_t = remapped
            wih_dirs.append(wih_t)
            whh_t = _reorder_pad_gates(jnp.asarray(w_hh).T, H, hp)   # (H, 4hp)
            whh_dirs.append(
                jnp.zeros((hp, 4 * hp), whh_t.dtype).at[0:H].set(whh_t))
            b_dirs.append(
                _reorder_pad_gates((b_ih + b_hh).reshape(1, 4 * H), H, hp))
        # Fused input projection: ONE (in, 8hp) weight per layer.
        w_ih_fused = jnp.concatenate(wih_dirs, axis=1)               # (in, 8hp)
        b_fused = jnp.concatenate(b_dirs, axis=1)                    # (1, 8hp)
        # Block-diagonal hidden->hidden: ONE (2hp, 8hp) RHS per layer.
        w_hh_bd = jnp.zeros((2 * hp, 8 * hp), jnp.float32)
        w_hh_bd = w_hh_bd.at[0:hp, 0:4 * hp].set(whh_dirs[0])
        w_hh_bd = w_hh_bd.at[hp:2 * hp, 4 * hp:8 * hp].set(whh_dirs[1])
        packed.extend([w_ih_fused, w_hh_bd, b_fused])
    return {"H": H, "HP": hp, "weights": tuple(packed)}


# ---------------------------------------------------------------------------
# Public forward (equivalent of BILSTM.forward).
# ---------------------------------------------------------------------------
def bilstm_forward(embedded, packed_params, encoding=False, batch_block=8):
    B, T, D = embedded.shape
    H, hp = packed_params["H"], packed_params["HP"]
    weights = packed_params["weights"]

    # Batch-chunk grid: bounds scratch at large B and enables megacore sharding.
    if batch_block is None or B % batch_block != 0:
        bb = B
    else:
        bb = batch_block

    def _wspec(w):
        return pl.BlockSpec(w.shape, lambda i: (0, 0))   # whole-array resident

    h_lstm = pl.pallas_call(
        _bilstm2_fused_kernel,
        out_shape=jax.ShapeDtypeStruct((B, T, 2 * H), embedded.dtype),
        grid=(B // bb,),
        in_specs=[pl.BlockSpec((bb, T, D), lambda i: (i, 0, 0))]
                 + [_wspec(w) for w in weights],
        out_specs=pl.BlockSpec((bb, T, 2 * H), lambda i: (i, 0, 0)),
        scratch_shapes=[
            pltpu.VMEM((bb, T, 8 * hp), jnp.float32),   # fused gate projections
            pltpu.VMEM((bb, T, 2 * hp), jnp.float32),   # padded layer output
        ],
        compiler_params=pltpu.CompilerParams(
            dimension_semantics=("parallel",)),
    )(embedded, *weights)

    if encoding:
        # TODO(synk): fuse mean/max pooling into the kernel epilogue to avoid
        #             the extra HBM round-trip of the (B,T,2H) activation.
        avg_pool = jnp.mean(h_lstm, axis=1)
        max_pool = jnp.max(h_lstm, axis=1)
        return jnp.concatenate((avg_pool, max_pool), axis=1)
    return h_lstm


# ---------------------------------------------------------------------------
# Pure-JAX reference (unpadded, PyTorch layout) for a correctness check.
# ---------------------------------------------------------------------------
def _lstm_ref_direction(x_seq, w_ih, w_hh, b_ih, b_hh, H):
    T, B, _ = x_seq.shape
    h = jnp.zeros((B, H), jnp.float32)
    c = jnp.zeros((B, H), jnp.float32)
    prec = jax.lax.Precision.HIGHEST
    outs = []
    for t in range(T):
        gates = (jnp.dot(x_seq[t], w_ih.T, precision=prec)
                 + jnp.dot(h, w_hh.T, precision=prec) + b_ih + b_hh)
        i = jax.nn.sigmoid(gates[:, 0 * H:1 * H])
        f = jax.nn.sigmoid(gates[:, 1 * H:2 * H])
        g = jnp.tanh(gates[:, 2 * H:3 * H])
        o = jax.nn.sigmoid(gates[:, 3 * H:4 * H])
        c = f * c + i * g
        h = o * jnp.tanh(c)
        outs.append(h)
    return jnp.stack(outs)                       # (T, B, H)


def bilstm_reference(embedded, params, hidden_dim):
    x = jnp.transpose(embedded, (1, 0, 2))       # time-major
    for layer_params in params:
        fwd = _lstm_ref_direction(x, *layer_params[0], hidden_dim)
        bwd = _lstm_ref_direction(x[::-1], *layer_params[1], hidden_dim)[::-1]
        x = jnp.concatenate([fwd, bwd], axis=-1)
    return jnp.transpose(x, (1, 0, 2))           # back to batch_first


if __name__ == "__main__":
    # Small shapes consistent with the module's forward:
    # embedded: (batch, seq, embedding_dim); hidden size per direction = 64.
    B, T, EMBED_DIM, HIDDEN = 2, 8, 128, 64

    key = jax.random.PRNGKey(0)
    key_x, key_p = jax.random.split(key)

    embedded = jax.random.normal(key_x, (B, T, EMBED_DIM), dtype=jnp.float32)
    params = init_bilstm_params(key_p, EMBED_DIM, HIDDEN, num_layers=2)
    packed = pack_bilstm_params(params, HIDDEN)

    h_lstm = bilstm_forward(embedded, packed, encoding=False)
    h_lstm = jax.block_until_ready(h_lstm)

    assert h_lstm.shape == (B, T, 2 * HIDDEN), h_lstm.shape
    assert h_lstm.dtype == jnp.float32
    assert bool(jnp.all(jnp.isfinite(h_lstm)))

    # Numerical check against an unpadded pure-JAX nn.LSTM-equivalent reference.
    ref = bilstm_reference(embedded, params, HIDDEN)
    max_err = float(jnp.max(jnp.abs(h_lstm - ref)))
    assert max_err < 5e-2, f"max abs error vs reference: {max_err}"

    # Exercise the encoding=True path (mean/max pooling + concat) as well.
    enc = jax.block_until_ready(bilstm_forward(embedded, packed, encoding=True))
    assert enc.shape == (B, 4 * HIDDEN), enc.shape

    print("KERNEL_OK")
</pallas_src>

<mosaic_0001>
module attributes {stable_mosaic.version = 11 : i64} {
  func.func @_bilstm2_fused_kernel(%arg0: i32, %arg1: memref<2x8x128xf32, #tpu.memory_space<vmem>>, %arg2: memref<128x1024xf32, #tpu.memory_space<vmem>>, %arg3: memref<256x1024xf32, #tpu.memory_space<vmem>>, %arg4: memref<1x1024xf32, #tpu.memory_space<vmem>>, %arg5: memref<256x1024xf32, #tpu.memory_space<vmem>>, %arg6: memref<256x1024xf32, #tpu.memory_space<vmem>>, %arg7: memref<1x1024xf32, #tpu.memory_space<vmem>>, %arg8: memref<2x8x128xf32, #tpu.memory_space<vmem>>, %arg9: memref<2x8x1024xf32, #tpu.memory_space<vmem>>, %arg10: memref<2x8x256xf32, #tpu.memory_space<vmem>>) attributes {dimension_semantics = [#tpu.dimension_semantics<parallel>], iteration_bounds = array<i64: 1>, scalar_prefetch = 0 : i64, scratch_operands = 2 : i64, tpu.core_type = #tpu.core_type<tc>, window_params = [{transform_indices = @transform_0, window_bounds = array<i64: 2, 8, 128>}, {pipeline_mode = #tpu.pipeline_mode<synchronous>, transform_indices = @transform_1, window_bounds = array<i64: 128, 1024>}, {pipeline_mode = #tpu.pipeline_mode<synchronous>, transform_indices = @transform_2, window_bounds = array<i64: 256, 1024>}, {pipeline_mode = #tpu.pipeline_mode<synchronous>, transform_indices = @transform_3, window_bounds = array<i64: 1, 1024>}, {pipeline_mode = #tpu.pipeline_mode<synchronous>, transform_indices = @transform_4, window_bounds = array<i64: 256, 1024>}, {pipeline_mode = #tpu.pipeline_mode<synchronous>, transform_indices = @transform_5, window_bounds = array<i64: 256, 1024>}, {pipeline_mode = #tpu.pipeline_mode<synchronous>, transform_indices = @transform_6, window_bounds = array<i64: 1, 1024>}, {transform_indices = @transform_7, window_bounds = array<i64: 2, 8, 128>}]} {
    %c0 = arith.constant 0 : index
    %c0_0 = arith.constant 0 : index
    %c0_1 = arith.constant 0 : index
    %0 = vector.load %arg1[%c0, %c0_0, %c0_1] : memref<2x8x128xf32, #tpu.memory_space<vmem>>, vector<2x8x128xf32>
    %1 = vector.shape_cast %0 : vector<2x8x128xf32> to vector<16x128xf32>
    %c0_2 = arith.constant 0 : index
    %c0_3 = arith.constant 0 : index
    %2 = vector.load %arg2[%c0_2, %c0_3] : memref<128x1024xf32, #tpu.memory_space<vmem>>, vector<128x1024xf32>
    %cst = arith.constant dense<0.000000e+00> : vector<16x1024xf32>
    %3 = tpu.matmul %1, %2, %cst {dimension_numbers = #tpu.dot_dimension_numbers<[1], [0], [0], [1], [0, 0, 1, 1], [], []>} : vector<16x128xf32>, vector<128x1024xf32>, vector<16x1024xf32> -> vector<16x1024xf32>
    %c0_4 = arith.constant 0 : index
    %c0_5 = arith.constant 0 : index
    %4 = vector.load %arg4[%c0_4, %c0_5] : memref<1x1024xf32, #tpu.memory_space<vmem>>, vector<1x1024xf32>
    %5 = vector.broadcast %4 : vector<1x1024xf32> to vector<16x1024xf32>
    %6 = arith.addf %3, %5 : vector<16x1024xf32>
    %7 = vector.shape_cast %6 : vector<16x1024xf32> to vector<2x8x1024xf32>
    %c0_6 = arith.constant 0 : index
    %c0_7 = arith.constant 0 : index
    %c0_8 = arith.constant 0 : index
    %8 = vector.load %arg9[%c0_6, %c0_7, %c0_8] : memref<2x8x1024xf32, #tpu.memory_space<vmem>>, vector<2x8x1024xf32>
    tpu.vector_store %arg9[%c0_6, %c0_7, %c0_8], %7 {strides = array<i32>} : memref<2x8x1024xf32, #tpu.memory_space<vmem>>, vector<2x8x1024xf32>,
    %c0_9 = arith.constant 0 : index
    %c0_10 = arith.constant 0 : index
    %9 = vector.load %arg3[%c0_9, %c0_10] : memref<256x1024xf32, #tpu.memory_space<vmem>>, vector<256x1024xf32>
    %cst_11 = arith.constant 0.000000e+00 : f32
    %10 = vector.broadcast %cst_11 : f32 to vector<2x256xf32>
    %cst_12 = arith.constant 0.000000e+00 : f32
    %11 = vector.broadcast %cst_12 : f32 to vector<2x128xf32>
    %cst_13 = arith.constant 0.000000e+00 : f32
    %12 = vector.broadcast %cst_13 : f32 to vector<2x128xf32>
    %c0_14 = arith.constant 0 : index
    %c0_15 = arith.constant 0 : index
    %c0_16 = arith.constant 0 : index
    %13 = vector.load %arg9[%c0_14, %c0_15, %c0_16] : memref<2x8x1024xf32, #tpu.memory_space<vmem>>, vector<2x1x512xf32>
    %14 = vector.shape_cast %13 : vector<2x1x512xf32> to vector<2x512xf32>
    %c0_17 = arith.constant 0 : index
    %c7 = arith.constant 7 : index
    %c512 = arith.constant 512 : index
    %15 = vector.load %arg9[%c0_17, %c7, %c512] : memref<2x8x1024xf32, #tpu.memory_space<vmem>>, vector<2x1x512xf32>
    %16 = vector.shape_cast %15 : vector<2x1x512xf32> to vector<2x512xf32>
    %17 = tpu.concatenate %14, %16 in 1 : vector<2x512xf32>, vector<2x512xf32> -> vector<2x1024xf32>
    %cst_18 = arith.constant dense<0.000000e+00> : vector<2x1024xf32>
    %18 = tpu.matmul %10, %9, %cst_18 {dimension_numbers = #tpu.dot_dimension_numbers<[1], [0], [0], [1], [0, 0, 1, 1], [], []>} : vector<2x256xf32>, vector<256x1024xf32>, vector<2x1024xf32> -> vector<2x1024xf32>
    %19 = arith.addf %17, %18 : vector<2x1024xf32>
    %20 = vector.extract_strided_slice %19 {offsets = [0, 0], sizes = [2, 512], strides = [1, 1]} : vector<2x1024xf32> to vector<2x512xf32>
    %21 = vector.extract_strided_slice %20 {offsets = [0, 0], sizes = [2, 384], strides = [1, 1]} : vector<2x512xf32> to vector<2x384xf32>
    %22 = arith.negf %21 : vector<2x384xf32>
    %23 = math.exp %22 : vector<2x384xf32>
    %cst_19 = arith.constant 1.000000e+00 : f32
    %24 = vector.broadcast %cst_19 : f32 to vector<2x384xf32>
    %25 = arith.addf %24, %23 : vector<2x384xf32>
    %26 = arith.divf %24, %25 : vector<2x384xf32>
    %27 = vector.extract_strided_slice %20 {offsets = [0, 384], sizes = [2, 128], strides = [1, 1]} : vector<2x512xf32> to vector<2x128xf32>
    %28 = math.tanh %27 : vector<2x128xf32>
    %29 = vector.extract_strided_slice %26 {offsets = [0, 128], sizes = [2, 128], strides = [1, 1]} : vector<2x384xf32> to vector<2x128xf32>
    %30 = arith.mulf %29, %11 : vector<2x128xf32>
    %31 = vector.extract_strided_slice %26 {offsets = [0, 0], sizes = [2, 128], strides = [1, 1]} : vector<2x384xf32> to vector<2x128xf32>
    %32 = arith.mulf %31, %28 : vector<2x128xf32>
    %33 = arith.addf %30, %32 : vector<2x128xf32>
    %34 = vector.extract_strided_slice %26 {offsets = [0, 256], sizes = [2, 128], strides = [1, 1]} : vector<2x384xf32> to vector<2x128xf32>
    %35 = math.tanh %33 : vector<2x128xf32>
    %36 = arith.mulf %34, %35 : vector<2x128xf32>
    %37 = vector.extract_strided_slice %19 {offsets = [0, 512], sizes = [2, 512], strides = [1, 1]} : vector<2x1024xf32> to vector<2x512xf32>
    %38 = vector.extract_strided_slice %37 {offsets = [0, 0], sizes = [2, 384], strides = [1, 1]} : vector<2x512xf32> to vector<2x384xf32>
    %39 = arith.negf %38 : vector<2x384xf32>
    %40 = math.exp %39 : vector<2x384xf32>
    %cst_20 = arith.constant 1.000000e+00 : f32
    %41 = vector.broadcast %cst_20 : f32 to vector<2x384xf32>
    %42 = arith.addf %41, %40 : vector<2x384xf32>
    %43 = arith.divf %41, %42 : vector<2x384xf32>
    %44 = vector.extract_strided_slice %37 {offsets = [0, 384], sizes = [2, 128], strides = [1, 1]} : vector<2x512xf32> to vector<2x128xf32>
    %45 = math.tanh %44 : vector<2x128xf32>
    %46 = vector.extract_strided_slice %43 {offsets = [0, 128], sizes = [2, 128], strides = [1, 1]} : vector<2x384xf32> to vector<2x128xf32>
    %47 = arith.mulf %46, %12 : vector<2x128xf32>
    %48 = vector.extract_strided_slice %43 {offsets = [0, 0], sizes = [2, 128], strides = [1, 1]} : vector<2x384xf32> to vector<2x128xf32>
    %49 = arith.mulf %48, %45 : vector<2x128xf32>
    %50 = arith.addf %47, %49 : vector<2x128xf32>
    %51 = vector.extract_strided_slice %43 {offsets = [0, 256], sizes = [2, 128], strides = [1, 1]} : vector<2x384xf32> to vector<2x128xf32>
    %52 = math.tanh %50 : vector<2x128xf32>
    %53 = arith.mulf %51, %52 : vector<2x128xf32>
    %54 = tpu.concatenate %36, %53 in 1 : vector<2x128xf32>, vector<2x128xf32> -> vector<2x256xf32>
    %c0_21 = arith.constant 0 : index
    %c0_22 = arith.constant 0 : index
    %c0_23 = arith.constant 0 : index
    %55 = vector.load %arg10[%c0_21, %c0_22, %c0_23] : memref<2x8x256xf32, #tpu.memory_space<vmem>>, vector<2x1x128xf32>
    %56 = vector.shape_cast %55 : vector<2x1x128xf32> to vector<2x128xf32>
    %57 = vector.shape_cast %36 : vector<2x128xf32> to vector<2x1x128xf32>
    tpu.vector_store %arg10[%c0_21, %c0_22, %c0_23], %57 {strides = array<i32>} : memref<2x8x256xf32, #tpu.memory_space<vmem>>, vector<2x1x128xf32>,
    %c0_24 = arith.constant 0 : index
    %c7_25 = arith.constant 7 : index
    %c128 = arith.constant 128 : index
    %58 = vector.load %arg10[%c0_24, %c7_25, %c128] : memref<2x8x256xf32, #tpu.memory_space<vmem>>, vector<2x1x128xf32>
    %59 = vector.shape_cast %58 : vector<2x1x128xf32> to vector<2x128xf32>
    %60 = vector.shape_cast %53 : vector<2x128xf32> to vector<2x1x128xf32>
    tpu.vector_store %arg10[%c0_24, %c7_25, %c128], %60 {strides = array<i32>} : memref<2x8x256xf32, #tpu.memory_space<vmem>>, vector<2x1x128xf32>,
    %c0_26 = arith.constant 0 : index
    %c1 = arith.constant 1 : index
    %c0_27 = arith.constant 0 : index
    %61 = vector.load %arg9[%c0_26, %c1, %c0_27] : memref<2x8x1024xf32, #tpu.memory_space<vmem>>, vector<2x1x512xf32>
    %62 = vector.shape_cast %61 : vector<2x1x512xf32> to vector<2x512xf32>
    %c0_28 = arith.constant 0 : index
    %c6 = arith.constant 6 : index
    %c512_29 = arith.constant 512 : index
    %63 = vector.load %arg9[%c0_28, %c6, %c512_29] : memref<2x8x1024xf32, #tpu.memory_space<vmem>>, vector<2x1x512xf32>
    %64 = vector.shape_cast %63 : vector<2x1x512xf32> to vector<2x512xf32>
    %65 = tpu.concatenate %62, %64 in 1 : vector<2x512xf32>, vector<2x512xf32> -> vector<2x1024xf32>
    %cst_30 = arith.constant dense<0.000000e+00> : vector<2x1024xf32>
    %66 = tpu.matmul %54, %9, %cst_30 {dimension_numbers = #tpu.dot_dimension_numbers<[1], [0], [0], [1], [0, 0, 1, 1], [], []>} : vector<2x256xf32>, vector<256x1024xf32>, vector<2x1024xf32> -> vector<2x1024xf32>
    %67 = arith.addf %65, %66 : vector<2x1024xf32>
    %68 = vector.extract_strided_slice %67 {offsets = [0, 0], sizes = [2, 512], strides = [1, 1]} : vector<2x1024xf32> to vector<2x512xf32>
    %69 = vector.extract_strided_slice %68 {offsets = [0, 0], sizes = [2, 384], strides = [1, 1]} : vector<2x512xf32> to vector<2x384xf32>
    %70 = arith.negf %69 : vector<2x384xf32>
    %71 = math.exp %70 : vector<2x384xf32>
    %cst_31 = arith.constant 1.000000e+00 : f32
    %72 = vector.broadcast %cst_31 : f32 to vector<2x384xf32>
    %73 = arith.addf %72, %71 : vector<2x384xf32>
    %74 = arith.divf %72, %73 : vector<2x384xf32>
    %75 = vector.extract_strided_slice %68 {offsets = [0, 384], sizes = [2, 128], strides = [1, 1]} : vector<2x512xf32> to vector<2x128xf32>
    %76 = math.tanh %75 : vector<2x128xf32>
    %77 = vector.extract_strided_slice %74 {offsets = [0, 128], sizes = [2, 128], strides = [1, 1]} : vector<2x384xf32> to vector<2x128xf32>
    %78 = arith.mulf %77, %33 : vector<2x128xf32>
    %79 = vector.extract_strided_slice %74 {offsets = [0, 0], sizes = [2, 128], strides = [1, 1]} : vector<2x384xf32> to vector<2x128xf32>
    %80 = arith.mulf %79, %76 : vector<2x128xf32>
    %81 = arith.addf %78, %80 : vector<2x128xf32>
    %82 = vector.extract_strided_slice %74 {offsets = [0, 256], sizes = [2, 128], strides = [1, 1]} : vector<2x384xf32> to vector<2x128xf32>
    %83 = math.tanh %81 : vector<2x128xf32>
    %84 = arith.mulf %82, %83 : vector<2x128xf32>
    %85 = vector.extract_strided_slice %67 {offsets = [0, 512], sizes = [2, 512], strides = [1, 1]} : vector<2x1024xf32> to vector<2x512xf32>
    %86 = vector.extract_strided_slice %85 {offsets = [0, 0], sizes = [2, 384], strides = [1, 1]} : vector<2x512xf32> to vector<2x384xf32>
    %87 = arith.negf %86 : vector<2x384xf32>
    %88 = math.exp %87 : vector<2x384xf32>
    %cst_32 = arith.constant 1.000000e+00 : f32
    %89 = vector.broadcast %cst_32 : f32 to vector<2x384xf32>
    %90 = arith.addf %89, %88 : vector<2x384xf32>
    %91 = arith.divf %89, %90 : vector<2x384xf32>
    %92 = vector.extract_strided_slice %85 {offsets = [0, 384], sizes = [2, 128], strides = [1, 1]} : vector<2x512xf32> to vector<2x128xf32>
    %93 = math.tanh %92 : vector<2x128xf32>
    %94 = vector.extract_strided_slice %91 {offsets = [0, 128], sizes = [2, 128], strides = [1, 1]} : vector<2x384xf32> to vector<2x128xf32>
    %95 = arith.mulf %94, %50 : vector<2x128xf32>
    %96 = vector.extract_strided_slice %91 {offsets = [0, 0], sizes = [2, 128], strides = [1, 1]} : vector<2x384xf32> to vector<2x128xf32>
    %97 = arith.mulf %96, %93 : vector<2x128xf32>
    %98 = arith.addf %95, %97 : vector<2x128xf32>
    %99 = vector.extract_strided_slice %91 {offsets = [0, 256], sizes = [2, 128], strides = [1, 1]} : vector<2x384xf32> to vector<2x128xf32>
    %100 = math.tanh %98 : vector<2x128xf32>
    %101 = arith.mulf %99, %100 : vector<2x128xf32>
    %102 = tpu.concatenate %84, %101 in 1 : vector<2x128xf32>, vector<2x128xf32> -> vector<2x256xf32>
    %c0_33 = arith.constant 0 : index
    %c1_34 = arith.constant 1 : index
    %c0_35 = arith.constant 0 : index
    %103 = vector.load %arg10[%c0_33, %c1_34, %c0_35] : memref<2x8x256xf32, #tpu.memory_space<vmem>>, vector<2x1x128xf32>
    %104 = vector.shape_cast %103 : vector<2x1x128xf32> to vector<2x128xf32>
    %105 = vector.shape_cast %84 : vector<2x128xf32> to vector<2x1x128xf32>
    tpu.vector_store %arg10[%c0_33, %c1_34, %c0_35], %105 {strides = array<i32>} : memref<2x8x256xf32, #tpu.memory_space<vmem>>, vector<2x1x128xf32>,
    %c0_36 = arith.constant 0 : index
    %c6_37 = arith.constant 6 : index
    %c128_38 = arith.constant 128 : index
    %106 = vector.load %arg10[%c0_36, %c6_37, %c128_38] : memref<2x8x256xf32, #tpu.memory_space<vmem>>, vector<2x1x128xf32>
    %107 = vector.shape_cast %106 : vector<2x1x128xf32> to vector<2x128xf32>
    %108 = vector.shape_cast %101 : vector<2x128xf32> to vector<2x1x128xf32>
    tpu.vector_store %arg10[%c0_36, %c6_37, %c128_38], %108 {strides = array<i32>} : memref<2x8x256xf32, #tpu.memory_space<vmem>>, vector<2x1x128xf32>,
    %c0_39 = arith.constant 0 : index
    %c2 = arith.constant 2 : index
    %c0_40 = arith.constant 0 : index
    %109 = vector.load %arg9[%c0_39, %c2, %c0_40] : memref<2x8x1024xf32, #tpu.memory_space<vmem>>, vector<2x1x512xf32>
    %110 = vector.shape_cast %109 : vector<2x1x512xf32> to vector<2x512xf32>
    %c0_41 = arith.constant 0 : index
    %c5 = arith.constant 5 : index
    %c512_42 = arith.constant 512 : index
    %111 = vector.load %arg9[%c0_41, %c5, %c512_42] : memref<2x8x1024xf32, #tpu.memory_space<vmem>>, vector<2x1x512xf32>
    %112 = vector.shape_cast %111 : vector<2x1x512xf32> to vector<2x512xf32>
    %113 = tpu.concatenate %110, %112 in 1 : vector<2x512xf32>, vector<2x512xf32> -> vector<2x1024xf32>
    %cst_43 = arith.constant dense<0.000000e+00> : vector<2x1024xf32>
    %114 = tpu.matmul %102, %9, %cst_43 {dimension_numbers = #tpu.dot_dimension_numbers<[1], [0], [0], [1], [0, 0, 1, 1], [], []>} : vector<2x256xf32>, vector<256x1024xf32>, vector<2x1024xf32> -> vector<2x1024xf32>
    %115 = arith.addf %113, %114 : vector<2x1024xf32>
    %116 = vector.extract_strided_slice %115 {offsets = [0, 0], sizes = [2, 512], strides = [1, 1]} : vector<2x1024xf32> to vector<2x512xf32>
    %117 = vector.extract_strided_slice %116 {offsets = [0, 0], sizes = [2, 384], strides = [1, 1]} : vector<2x512xf32> to vector<2x384xf32>
    %118 = arith.negf %117 : vector<2x384xf32>
    %119 = math.exp %118 : vector<2x384xf32>
    %cst_44 = arith.constant 1.000000e+00 : f32
    %120 = vector.broadcast %cst_44 : f32 to vector<2x384xf32>
    %121 = arith.addf %120, %119 : vector<2x384xf32>
    %122 = arith.divf %120, %121 : vector<2x384xf32>
    %123 = vector.extract_strided_slice %116 {offsets = [0, 384], sizes = [2, 128], strides = [1, 1]} : vector<2x512xf32> to vector<2x128xf32>
    %124 = math.tanh %123 : vector<2x128xf32>
    %125 = vector.extract_strided_slice %122 {offsets = [0, 128], sizes = [2, 128], strides = [1, 1]} : vector<2x384xf32> to vector<2x128xf32>
    %126 = arith.mulf %125, %81 : vector<2x128xf32>
    %127 = vector.extract_strided_slice %122 {offsets = [0, 0], sizes = [2, 128], strides = [1, 1]} : vector<2x384xf32> to vector<2x128xf32>
    %128 = arith.mulf %127, %124 : vector<2x128xf32>
    %129 = arith.addf %126, %128 : vector<2x128xf32>
    %130 = vector.extract_strided_slice %122 {offsets = [0, 256], sizes = [2, 128], strides = [1, 1]} : vector<2x384xf32> to vector<2x128xf32>
    %131 = math.tanh %129 : vector<2x128xf32>
    %132 = arith.mulf %130, %131 : vector<2x128xf32>
    %133 = vector.extract_strided_slice %115 {offsets = [0, 512], sizes = [2, 512], strides = [1, 1]} : vector<2x1024xf32> to vector<2x512xf32>
    %134 = vector.extract_strided_slice %133 {offsets = [0, 0], sizes = [2, 384], strides = [1, 1]} : vector<2x512xf32> to vector<2x384xf32>
    %135 = arith.negf %134 : vector<2x384xf32>
    %136 = math.exp %135 : vector<2x384xf32>
    %cst_45 = arith.constant 1.000000e+00 : f32
    %137 = vector.broadcast %cst_45 : f32 to vector<2x384xf32>
    %138 = arith.addf %137, %136 : vector<2x384xf32>
    %139 = arith.divf %137, %138 : vector<2x384xf32>
    %140 = vector.extract_strided_slice %133 {offsets = [0, 384], sizes = [2, 128], strides = [1, 1]} : vector<2x512xf32> to vector<2x128xf32>
    %141 = math.tanh %140 : vector<2x128xf32>
    %142 = vector.extract_strided_slice %139 {offsets = [0, 128], sizes = [2, 128], strides = [1, 1]} : vector<2x384xf32> to vector<2x128xf32>
    %143 = arith.mulf %142, %98 : vector<2x128xf32>
    %144 = vector.extract_strided_slice %139 {offsets = [0, 0], sizes = [2, 128], strides = [1, 1]} : vector<2x384xf32> to vector<2x128xf32>
    %145 = arith.mulf %144, %141 : vector<2x128xf32>
    %146 = arith.addf %143, %145 : vector<2x128xf32>
    %147 = vector.extract_strided_slice %139 {offsets = [0, 256], sizes = [2, 128], strides = [1, 1]} : vector<2x384xf32> to vector<2x128xf32>
    %148 = math.tanh %146 : vector<2x128xf32>
    %149 = arith.mulf %147, %148 : vector<2x128xf32>
    %150 = tpu.concatenate %132, %149 in 1 : vector<2x128xf32>, vector<2x128xf32> -> vector<2x256xf32>
    %c0_46 = arith.constant 0 : index
    %c2_47 = arith.constant 2 : index
    %c0_48 = arith.constant 0 : index
    %151 = vector.load %arg10[%c0_46, %c2_47, %c0_48] : memref<2x8x256xf32, #tpu.memory_space<vmem>>, vector<2x1x128xf32>
    %152 = vector.shape_cast %151 : vector<2x1x128xf32> to vector<2x128xf32>
    %153 = vector.shape_cast %132 : vector<2x128xf32> to vector<2x1x128xf32>
    tpu.vector_store %arg10[%c0_46, %c2_47, %c0_48], %153 {strides = array<i32>} : memref<2x8x256xf32, #tpu.memory_space<vmem>>, vector<2x1x128xf32>,
    %c0_49 = arith.constant 0 : index
    %c5_50 = arith.constant 5 : index
    %c128_51 = arith.constant 128 : index
    %154 = vector.load %arg10[%c0_49, %c5_50, %c128_51] : memref<2x8x256xf32, #tpu.memory_space<vmem>>, vector<2x1x128xf32>
    %155 = vector.shape_cast %154 : vector<2x1x128xf32> to vector<2x128xf32>
    %156 = vector.shape_cast %149 : vector<2x128xf32> to vector<2x1x128xf32>
    tpu.vector_store %arg10[%c0_49, %c5_50, %c128_51], %156 {strides = array<i32>} : memref<2x8x256xf32, #tpu.memory_space<vmem>>, vector<2x1x128xf32>,
    %c0_52 = arith.constant 0 : index
    %c3 = arith.constant 3 : index
    %c0_53 = arith.constant 0 : index
    %157 = vector.load %arg9[%c0_52, %c3, %c0_53] : memref<2x8x1024xf32, #tpu.memory_space<vmem>>, vector<2x1x512xf32>
    %158 = vector.shape_cast %157 : vector<2x1x512xf32> to vector<2x512xf32>
    %c0_54 = arith.constant 0 : index
    %c4 = arith.constant 4 : index
    %c512_55 = arith.constant 512 : index
    %159 = vector.load %arg9[%c0_54, %c4, %c512_55] : memref<2x8x1024xf32, #tpu.memory_space<vmem>>, vector<2x1x512xf32>
    %160 = vector.shape_cast %159 : vector<2x1x512xf32> to vector<2x512xf32>
    %161 = tpu.concatenate %158, %160 in 1 : vector<2x512xf32>, vector<2x512xf32> -> vector<2x1024xf32>
    %cst_56 = arith.constant dense<0.000000e+00> : vector<2x1024xf32>
    %162 = tpu.matmul %150, %9, %cst_56 {dimension_numbers = #tpu.dot_dimension_numbers<[1], [0], [0], [1], [0, 0, 1, 1], [], []>} : vector<2x256xf32>, vector<256x1024xf32>, vector<2x1024xf32> -> vector<2x1024xf32>
    %163 = arith.addf %161, %162 : vector<2x1024xf32>
    %164 = vector.extract_strided_slice %163 {offsets = [0, 0], sizes = [2, 512], strides = [1, 1]} : vector<2x1024xf32> to vector<2x512xf32>
    %165 = vector.extract_strided_slice %164 {offsets = [0, 0], sizes = [2, 384], strides = [1, 1]} : vector<2x512xf32> to vector<2x384xf32>
    %166 = arith.negf %165 : vector<2x384xf32>
    %167 = math.exp %166 : vector<2x384xf32>
    %cst_57 = arith.constant 1.000000e+00 : f32
    %168 = vector.broadcast %cst_57 : f32 to vector<2x384xf32>
    %169 = arith.addf %168, %167 : vector<2x384xf32>
    %170 = arith.divf %168, %169 : vector<2x384xf32>
    %171 = vector.extract_strided_slice %164 {offsets = [0, 384], sizes = [2, 128], strides = [1, 1]} : vector<2x512xf32> to vector<2x128xf32>
    %172 = math.tanh %171 : vector<2x128xf32>
    %173 = vector.extract_strided_slice %170 {offsets = [0, 128], sizes = [2, 128], strides = [1, 1]} : vector<2x384xf32> to vector<2x128xf32>
    %174 = arith.mulf %173, %129 : vector<2x128xf32>
    %175 = vector.extract_strided_slice %170 {offsets = [0, 0], sizes = [2, 128], strides = [1, 1]} : vector<2x384xf32> to vector<2x128xf32>
    %176 = arith.mulf %175, %172 : vector<2x128xf32>
    %177 = arith.addf %174, %176 : vector<2x128xf32>
    %178 = vector.extract_strided_slice %170 {offsets = [0, 256], sizes = [2, 128], strides = [1, 1]} : vector<2x384xf32> to vector<2x128xf32>
    %179 = math.tanh %177 : vector<2x128xf32>
    %180 = arith.mulf %178, %179 : vector<2x128xf32>
    %181 = vector.extract_strided_slice %163 {offsets = [0, 512], sizes = [2, 512], strides = [1, 1]} : vector<2x1024xf32> to vector<2x512xf32>
    %182 = vector.extract_strided_slice %181 {offsets = [0, 0], sizes = [2, 384], strides = [1, 1]} : vector<2x512xf32> to vector<2x384xf32>
    %183 = arith.negf %182 : vector<2x384xf32>
    %184 = math.exp %183 : vector<2x384xf32>
    %cst_58 = arith.constant 1.000000e+00 : f32
    %185 = vector.broadcast %cst_58 : f32 to vector<2x384xf32>
    %186 = arith.addf %185, %184 : vector<2x384xf32>
    %187 = arith.divf %185, %186 : vector<2x384xf32>
    %188 = vector.extract_strided_slice %181 {offsets = [0, 384], sizes = [2, 128], strides = [1, 1]} : vector<2x512xf32> to vector<2x128xf32>
    %189 = math.tanh %188 : vector<2x128xf32>
    %190 = vector.extract_strided_slice %187 {offsets = [0, 128], sizes = [2, 128], strides = [1, 1]} : vector<2x384xf32> to vector<2x128xf32>
    %191 = arith.mulf %190, %146 : vector<2x128xf32>
    %192 = vector.extract_strided_slice %187 {offsets = [0, 0], sizes = [2, 128], strides = [1, 1]} : vector<2x384xf32> to vector<2x128xf32>
    %193 = arith.mulf %192, %189 : vector<2x128xf32>
    %194 = arith.addf %191, %193 : vector<2x128xf32>
    %195 = vector.extract_strided_slice %187 {offsets = [0, 256], sizes = [2, 128], strides = [1, 1]} : vector<2x384xf32> to vector<2x128xf32>
    %196 = math.tanh %194 : vector<2x128xf32>
    %197 = arith.mulf %195, %196 : vector<2x128xf32>
    %198 = tpu.concatenate %180, %197 in 1 : vector<2x128xf32>, vector<2x128xf32> -> vector<2x256xf32>
    %c0_59 = arith.constant 0 : index
    %c3_60 = arith.constant 3 : index
    %c0_61 = arith.constant 0 : index
    %199 = vector.load %arg10[%c0_59, %c3_60, %c0_61] : memref<2x8x256xf32, #tpu.memory_space<vmem>>, vector<2x1x128xf32>
    %200 = vector.shape_cast %199 : vector<2x1x128xf32> to vector<2x128xf32>
    %201 = vector.shape_cast %180 : vector<2x128xf32> to vector<2x1x128xf32>
    tpu.vector_store %arg10[%c0_59, %c3_60, %c0_61], %201 {strides = array<i32>} : memref<2x8x256xf32, #tpu.memory_space<vmem>>, vector<2x1x128xf32>,
    %c0_62 = arith.constant 0 : index
    %c4_63 = arith.constant 4 : index
    %c128_64 = arith.constant 128 : index
    %202 = vector.load %arg10[%c0_62, %c4_63, %c128_64] : memref<2x8x256xf32, #tpu.memory_space<vmem>>, vector<2x1x128xf32>
    %203 = vector.shape_cast %202 : vector<2x1x128xf32> to vector<2x128xf32>
    %204 = vector.shape_cast %197 : vector<2x128xf32> to vector<2x1x128xf32>
    tpu.vector_store %arg10[%c0_62, %c4_63, %c128_64], %204 {strides = array<i32>} : memref<2x8x256xf32, #tpu.memory_space<vmem>>, vector<2x1x128xf32>,
    %c0_65 = arith.constant 0 : index
    %c4_66 = arith.constant 4 : index
    %c0_67 = arith.constant 0 : index
    %205 = vector.load %arg9[%c0_65, %c4_66, %c0_67] : memref<2x8x1024xf32, #tpu.memory_space<vmem>>, vector<2x1x512xf32>
    %206 = vector.shape_cast %205 : vector<2x1x512xf32> to vector<2x512xf32>
    %c0_68 = arith.constant 0 : index
    %c3_69 = arith.constant 3 : index
    %c512_70 = arith.constant 512 : index
    %207 = vector.load %arg9[%c0_68, %c3_69, %c512_70] : memref<2x8x1024xf32, #tpu.memory_space<vmem>>, vector<2x1x512xf32>
    %208 = vector.shape_cast %207 : vector<2x1x512xf32> to vector<2x512xf32>
    %209 = tpu.concatenate %206, %208 in 1 : vector<2x512xf32>, vector<2x512xf32> -> vector<2x1024xf32>
    %cst_71 = arith.constant dense<0.000000e+00> : vector<2x1024xf32>
    %210 = tpu.matmul %198, %9, %cst_71 {dimension_numbers = #tpu.dot_dimension_numbers<[1], [0], [0], [1], [0, 0, 1, 1], [], []>} : vector<2x256xf32>, vector<256x1024xf32>, vector<2x1024xf32> -> vector<2x1024xf32>
    %211 = arith.addf %209, %210 : vector<2x1024xf32>
    %212 = vector.extract_strided_slice %211 {offsets = [0, 0], sizes = [2, 512], strides = [1, 1]} : vector<2x1024xf32> to vector<2x512xf32>
    %213 = vector.extract_strided_slice %212 {offsets = [0, 0], sizes = [2, 384], strides = [1, 1]} : vector<2x512xf32> to vector<2x384xf32>
    %214 = arith.negf %213 : vector<2x384xf32>
    %215 = math.exp %214 : vector<2x384xf32>
    %cst_72 = arith.constant 1.000000e+00 : f32
    %216 = vector.broadcast %cst_72 : f32 to vector<2x384xf32>
    %217 = arith.addf %216, %215 : vector<2x384xf32>
    %218 = arith.divf %216, %217 : vector<2x384xf32>
    %219 = vector.extract_strided_slice %212 {offsets = [0, 384], sizes = [2, 128], strides = [1, 1]} : vector<2x512xf32> to vector<2x128xf32>
    %220 = math.tanh %219 : vector<2x128xf32>
    %221 = vector.extract_strided_slice %218 {offsets = [0, 128], sizes = [2, 128], strides = [1, 1]} : vector<2x384xf32> to vector<2x128xf32>
    %222 = arith.mulf %221, %177 : vector<2x128xf32>
    %223 = vector.extract_strided_slice %218 {offsets = [0, 0], sizes = [2, 128], strides = [1, 1]} : vector<2x384xf32> to vector<2x128xf32>
    %224 = arith.mulf %223, %220 : vector<2x128xf32>
    %225 = arith.addf %222, %224 : vector<2x128xf32>
    %226 = vector.extract_strided_slice %218 {offsets = [0, 256], sizes = [2, 128], strides = [1, 1]} : vector<2x384xf32> to vector<2x128xf32>
    %227 = math.tanh %225 : vector<2x128xf32>
    %228 = arith.mulf %226, %227 : vector<2x128xf32>
    %229 = vector.extract_strided_slice %211 {offsets = [0, 512], sizes = [2, 512], strides = [1, 1]} : vector<2x1024xf32> to vector<2x512xf32>
    %230 = vector.extract_strided_slice %229 {offsets = [0, 0], sizes = [2, 384], strides = [1, 1]} : vector<2x512xf32> to vector<2x384xf32>
    %231 = arith.negf %230 : vector<2x384xf32>
    %232 = math.exp %231 : vector<2x384xf32>
    %cst_73 = arith.constant 1.000000e+00 : f32
    %233 = vector.broadcast %cst_73 : f32 to vector<2x384xf32>
    %234 = arith.addf %233, %232 : vector<2x384xf32>
    %235 = arith.divf %233, %234 : vector<2x384xf32>
    %236 = vector.extract_strided_slice %229 {offsets = [0, 384], sizes = [2, 128], strides = [1, 1]} : vector<2x512xf32> to vector<2x128xf32>
    %237 = math.tanh %236 : vector<2x128xf32>
    %238 = vector.extract_strided_slice %235 {offsets = [0, 128], sizes = [2, 128], strides = [1, 1]} : vector<2x384xf32> to vector<2x128xf32>
    %239 = arith.mulf %238, %194 : vector<2x128xf32>
    %240 = vector.extract_strided_slice %235 {offsets = [0, 0], sizes = [2, 128], strides = [1, 1]} : vector<2x384xf32> to vector<2x128xf32>
    %241 = arith.mulf %240, %237 : vector<2x128xf32>
    %242 = arith.addf %239, %241 : vector<2x128xf32>
    %243 = vector.extract_strided_slice %235 {offsets = [0, 256], sizes = [2, 128], strides = [1, 1]} : vector<2x384xf32> to vector<2x128xf32>
    %244 = math.tanh %242 : vector<2x128xf32>
    %245 = arith.mulf %243, %244 : vector<2x128xf32>
    %246 = tpu.concatenate %228, %245 in 1 : vector<2x128xf32>, vector<2x128xf32> -> vector<2x256xf32>
    %c0_74 = arith.constant 0 : index
    %c4_75 = arith.constant 4 : index
    %c0_76 = arith.constant 0 : index
    %247 = vector.load %arg10[%c0_74, %c4_75, %c0_76] : memref<2x8x256xf32, #tpu.memory_space<vmem>>, vector<2x1x128xf32>
    %248 = vector.shape_cast %247 : vector<2x1x128xf32> to vector<2x128xf32>
    %249 = vector.shape_cast %228 : vector<2x128xf32> to vector<2x1x128xf32>
    tpu.vector_store %arg10[%c0_74, %c4_75, %c0_76], %249 {strides = array<i32>} : memref<2x8x256xf32, #tpu.memory_space<vmem>>, vector<2x1x128xf32>,
    %c0_77 = arith.constant 0 : index
    %c3_78 = arith.constant 3 : index
    %c128_79 = arith.constant 128 : index
    %250 = vector.load %arg10[%c0_77, %c3_78, %c128_79] : memref<2x8x256xf32, #tpu.memory_space<vmem>>, vector<2x1x128xf32>
    %251 = vector.shape_cast %250 : vector<2x1x128xf32> to vector<2x128xf32>
    %252 = vector.shape_cast %245 : vector<2x128xf32> to vector<2x1x128xf32>
    tpu.vector_store %arg10[%c0_77, %c3_78, %c128_79], %252 {strides = array<i32>} : memref<2x8x256xf32, #tpu.memory_space<vmem>>, vector<2x1x128xf32>,
    %c0_80 = arith.constant 0 : index
    %c5_81 = arith.constant 5 : index
    %c0_82 = arith.constant 0 : index
    %253 = vector.load %arg9[%c0_80, %c5_81, %c0_82] : memref<2x8x1024xf32, #tpu.memory_space<vmem>>, vector<2x1x512xf32>
    %254 = vector.shape_cast %253 : vector<2x1x512xf32> to vector<2x512xf32>
    %c0_83 = arith.constant 0 : index
    %c2_84 = arith.constant 2 : index
    %c512_85 = arith.constant 512 : index
    %255 = vector.load %arg9[%c0_83, %c2_84, %c512_85] : memref<2x8x1024xf32, #tpu.memory_space<vmem>>, vector<2x1x512xf32>
    %256 = vector.shape_cast %255 : vector<2x1x512xf32> to vector<2x512xf32>
    %257 = tpu.concatenate %254, %256 in 1 : vector<2x512xf32>, vector<2x512xf32> -> vector<2x1024xf32>
    %cst_86 = arith.constant dense<0.000000e+00> : vector<2x1024xf32>
    %258 = tpu.matmul %246, %9, %cst_86 {dimension_numbers = #tpu.dot_dimension_numbers<[1], [0], [0], [1], [0, 0, 1, 1], [], []>} : vector<2x256xf32>, vector<256x1024xf32>, vector<2x1024xf32> -> vector<2x1024xf32>
    %259 = arith.addf %257, %258 : vector<2x1024xf32>
    %260 = vector.extract_strided_slice %259 {offsets = [0, 0], sizes = [2, 512], strides = [1, 1]} : vector<2x1024xf32> to vector<2x512xf32>
    %261 = vector.extract_strided_slice %260 {offsets = [0, 0], sizes = [2, 384], strides = [1, 1]} : vector<2x512xf32> to vector<2x384xf32>
    %262 = arith.negf %261 : vector<2x384xf32>
    %263 = math.exp %262 : vector<2x384xf32>
    %cst_87 = arith.constant 1.000000e+00 : f32
    %264 = vector.broadcast %cst_87 : f32 to vector<2x384xf32>
    %265 = arith.addf %264, %263 : vector<2x384xf32>
    %266 = arith.divf %264, %265 : vector<2x384xf32>
    %267 = vector.extract_strided_slice %260 {offsets = [0, 384], sizes = [2, 128], strides = [1, 1]} : vector<2x512xf32> to vector<2x128xf32>
    %268 = math.tanh %267 : vector<2x128xf32>
    %269 = vector.extract_strided_slice %266 {offsets = [0, 128], sizes = [2, 128], strides = [1, 1]} : vector<2x384xf32> to vector<2x128xf32>
    %270 = arith.mulf %269, %225 : vector<2x128xf32>
    %271 = vector.extract_strided_slice %266 {offsets = [0, 0], sizes = [2, 128], strides = [1, 1]} : vector<2x384xf32> to vector<2x128xf32>
    %272 = arith.mulf %271, %268 : vector<2x128xf32>
    %273 = arith.addf %270, %272 : vector<2x128xf32>
    %274 = vector.extract_strided_slice %266 {offsets = [0, 256], sizes = [2, 128], strides = [1, 1]} : vector<2x384xf32> to vector<2x128xf32>
    %275 = math.tanh %273 : vector<2x128xf32>
    %276 = arith.mulf %274, %275 : vector<2x128xf32>
    %277 = vector.extract_strided_slice %259 {offsets = [0, 512], sizes = [2, 512], strides = [1, 1]} : vector<2x1024xf32> to vector<2x512xf32>
    %278 = vector.extract_strided_slice %277 {offsets = [0, 0], sizes = [2, 384], strides = [1, 1]} : vector<2x512xf32> to vector<2x384xf32>
    %279 = arith.negf %278 : vector<2x384xf32>
    %280 = math.exp %279 : vector<2x384xf32>
    %cst_88 = arith.constant 1.000000e+00 : f32
    %281 = vector.broadcast %cst_88 : f32 to vector<2x384xf32>
    %282 = arith.addf %281, %280 : vector<2x384xf32>
    %283 = arith.divf %281, %282 : vector<2x384xf32>
    %284 = vector.extract_strided_slice %277 {offsets = [0, 384], sizes = [2, 128], strides = [1, 1]} : vector<2x512xf32> to vector<2x128xf32>
    %285 = math.tanh %284 : vector<2x128xf32>
    %286 = vector.extract_strided_slice %283 {offsets = [0, 128], sizes = [2, 128], strides = [1, 1]} : vector<2x384xf32> to vector<2x128xf32>
    %287 = arith.mulf %286, %242 : vector<2x128xf32>
    %288 = vector.extract_strided_slice %283 {offsets = [0, 0], sizes = [2, 128], strides = [1, 1]} : vector<2x384xf32> to vector<2x128xf32>
    %289 = arith.mulf %288, %285 : vector<2x128xf32>
    %290 = arith.addf %287, %289 : vector<2x128xf32>
    %291 = vector.extract_strided_slice %283 {offsets = [0, 256], sizes = [2, 128], strides = [1, 1]} : vector<2x384xf32> to vector<2x128xf32>
    %292 = math.tanh %290 : vector<2x128xf32>
    %293 = arith.mulf %291, %292 : vector<2x128xf32>
    %294 = tpu.concatenate %276, %293 in 1 : vector<2x128xf32>, vector<2x128xf32> -> vector<2x256xf32>
    %c0_89 = arith.constant 0 : index
    %c5_90 = arith.constant 5 : index
    %c0_91 = arith.constant 0 : index
    %295 = vector.load %arg10[%c0_89, %c5_90, %c0_91] : memref<2x8x256xf32, #tpu.memory_space<vmem>>, vector<2x1x128xf32>
    %296 = vector.shape_cast %295 : vector<2x1x128xf32> to vector<2x128xf32>
    %297 = vector.shape_cast %276 : vector<2x128xf32> to vector<2x1x128xf32>
    tpu.vector_store %arg10[%c0_89, %c5_90, %c0_91], %297 {strides = array<i32>} : memref<2x8x256xf32, #tpu.memory_space<vmem>>, vector<2x1x128xf32>,
    %c0_92 = arith.constant 0 : index
    %c2_93 = arith.constant 2 : index
    %c128_94 = arith.constant 128 : index
    %298 = vector.load %arg10[%c0_92, %c2_93, %c128_94] : memref<2x8x256xf32, #tpu.memory_space<vmem>>, vector<2x1x128xf32>
    %299 = vector.shape_cast %298 : vector<2x1x128xf32> to vector<2x128xf32>
    %300 = vector.shape_cast %293 : vector<2x128xf32> to vector<2x1x128xf32>
    tpu.vector_store %arg10[%c0_92, %c2_93, %c128_94], %300 {strides = array<i32>} : memref<2x8x256xf32, #tpu.memory_space<vmem>>, vector<2x1x128xf32>,
    %c0_95 = arith.constant 0 : index
    %c6_96 = arith.constant 6 : index
    %c0_97 = arith.constant 0 : index
    %301 = vector.load %arg9[%c0_95, %c6_96, %c0_97] : memref<2x8x1024xf32, #tpu.memory_space<vmem>>, vector<2x1x512xf32>
    %302 = vector.shape_cast %301 : vector<2x1x512xf32> to vector<2x512xf32>
    %c0_98 = arith.constant 0 : index
    %c1_99 = arith.constant 1 : index
    %c512_100 = arith.constant 512 : index
    %303 = vector.load %arg9[%c0_98, %c1_99, %c512_100] : memref<2x8x1024xf32, #tpu.memory_space<vmem>>, vector<2x1x512xf32>
    %304 = vector.shape_cast %303 : vector<2x1x512xf32> to vector<2x512xf32>
    %305 = tpu.concatenate %302, %304 in 1 : vector<2x512xf32>, vector<2x512xf32> -> vector<2x1024xf32>
    %cst_101 = arith.constant dense<0.000000e+00> : vector<2x1024xf32>
    %306 = tpu.matmul %294, %9, %cst_101 {dimension_numbers = #tpu.dot_dimension_numbers<[1], [0], [0], [1], [0, 0, 1, 1], [], []>} : vector<2x256xf32>, vector<256x1024xf32>, vector<2x1024xf32> -> vector<2x1024xf32>
    %307 = arith.addf %305, %306 : vector<2x1024xf32>
    %308 = vector.extract_strided_slice %307 {offsets = [0, 0], sizes = [2, 512], strides = [1, 1]} : vector<2x1024xf32> to vector<2x512xf32>
    %309 = vector.extract_strided_slice %308 {offsets = [0, 0], sizes = [2, 384], strides = [1, 1]} : vector<2x512xf32> to vector<2x384xf32>
    %310 = arith.negf %309 : vector<2x384xf32>
    %311 = math.exp %310 : vector<2x384xf32>
    %cst_102 = arith.constant 1.000000e+00 : f32
    %312 = vector.broadcast %cst_102 : f32 to vector<2x384xf32>
    %313 = arith.addf %312, %311 : vector<2x384xf32>
    %314 = arith.divf %312, %313 : vector<2x384xf32>
    %315 = vector.extract_strided_slice %308 {offsets = [0, 384], sizes = [2, 128], strides = [1, 1]} : vector<2x512xf32> to vector<2x128xf32>
    %316 = math.tanh %315 : vector<2x128xf32>
    %317 = vector.extract_strided_slice %314 {offsets = [0, 128], sizes = [2, 128], strides = [1, 1]} : vector<2x384xf32> to vector<2x128xf32>
    %318 = arith.mulf %317, %273 : vector<2x128xf32>
    %319 = vector.extract_strided_slice %314 {offsets = [0, 0], sizes = [2, 128], strides = [1, 1]} : vector<2x384xf32> to vector<2x128xf32>
    %320 = arith.mulf %319, %316 : vector<2x128xf32>
    %321 = arith.addf %318, %320 : vector<2x128xf32>
    %322 = vector.extract_strided_slice %314 {offsets = [0, 256], sizes = [2, 128], strides = [1, 1]} : vector<2x384xf32> to vector<2x128xf32>
    %323 = math.tanh %321 : vector<2x128xf32>
    %324 = arith.mulf %322, %323 : vector<2x128xf32>
    %325 = vector.extract_strided_slice %307 {offsets = [0, 512], sizes = [2, 512], strides = [1, 1]} : vector<2x1024xf32> to vector<2x512xf32>
    %326 = vector.extract_strided_slice %325 {offsets = [0, 0], sizes = [2, 384], strides = [1, 1]} : vector<2x512xf32> to vector<2x384xf32>
    %327 = arith.negf %326 : vector<2x384xf32>
    %328 = math.exp %327 : vector<2x384xf32>
    %cst_103 = arith.constant 1.000000e+00 : f32
    %329 = vector.broadcast %cst_103 : f32 to vector<2x384xf32>
    %330 = arith.addf %329, %328 : vector<2x384xf32>
    %331 = arith.divf %329, %330 : vector<2x384xf32>
    %332 = vector.extract_strided_slice %325 {offsets = [0, 384], sizes = [2, 128], strides = [1, 1]} : vector<2x512xf32> to vector<2x128xf32>
    %333 = math.tanh %332 : vector<2x128xf32>
    %334 = vector.extract_strided_slice %331 {offsets = [0, 128], sizes = [2, 128], strides = [1, 1]} : vector<2x384xf32> to vector<2x128xf32>
    %335 = arith.mulf %334, %290 : vector<2x128xf32>
    %336 = vector.extract_strided_slice %331 {offsets = [0, 0], sizes = [2, 128], strides = [1, 1]} : vector<2x384xf32> to vector<2x128xf32>
    %337 = arith.mulf %336, %333 : vector<2x128xf32>
    %338 = arith.addf %335, %337 : vector<2x128xf32>
    %339 = vector.extract_strided_slice %331 {offsets = [0, 256], sizes = [2, 128], strides = [1, 1]} : vector<2x384xf32> to vector<2x128xf32>
    %340 = math.tanh %338 : vector<2x128xf32>
    %341 = arith.mulf %339, %340 : vector<2x128xf32>
    %342 = tpu.concatenate %324, %341 in 1 : vector<2x128xf32>, vector<2x128xf32> -> vector<2x256xf32>
    %c0_104 = arith.constant 0 : index
    %c6_105 = arith.constant 6 : index
    %c0_106 = arith.constant 0 : index
    %343 = vector.load %arg10[%c0_104, %c6_105, %c0_106] : memref<2x8x256xf32, #tpu.memory_space<vmem>>, vector<2x1x128xf32>
    %344 = vector.shape_cast %343 : vector<2x1x128xf32> to vector<2x128xf32>
    %345 = vector.shape_cast %324 : vector<2x128xf32> to vector<2x1x128xf32>
    tpu.vector_store %arg10[%c0_104, %c6_105, %c0_106], %345 {strides = array<i32>} : memref<2x8x256xf32, #tpu.memory_space<vmem>>, vector<2x1x128xf32>,
    %c0_107 = arith.constant 0 : index
    %c1_108 = arith.constant 1 : index
    %c128_109 = arith.constant 128 : index
    %346 = vector.load %arg10[%c0_107, %c1_108, %c128_109] : memref<2x8x256xf32, #tpu.memory_space<vmem>>, vector<2x1x128xf32>
    %347 = vector.shape_cast %346 : vector<2x1x128xf32> to vector<2x128xf32>
    %348 = vector.shape_cast %341 : vector<2x128xf32> to vector<2x1x128xf32>
    tpu.vector_store %arg10[%c0_107, %c1_108, %c128_109], %348 {strides = array<i32>} : memref<2x8x256xf32, #tpu.memory_space<vmem>>, vector<2x1x128xf32>,
    %c0_110 = arith.constant 0 : index
    %c7_111 = arith.constant 7 : index
    %c0_112 = arith.constant 0 : index
    %349 = vector.load %arg9[%c0_110, %c7_111, %c0_112] : memref<2x8x1024xf32, #tpu.memory_space<vmem>>, vector<2x1x512xf32>
    %350 = vector.shape_cast %349 : vector<2x1x512xf32> to vector<2x512xf32>
    %c0_113 = arith.constant 0 : index
    %c0_114 = arith.constant 0 : index
    %c512_115 = arith.constant 512 : index
    %351 = vector.load %arg9[%c0_113, %c0_114, %c512_115] : memref<2x8x1024xf32, #tpu.memory_space<vmem>>, vector<2x1x512xf32>
    %352 = vector.shape_cast %351 : vector<2x1x512xf32> to vector<2x512xf32>
    %353 = tpu.concatenate %350, %352 in 1 : vector<2x512xf32>, vector<2x512xf32> -> vector<2x1024xf32>
    %cst_116 = arith.constant dense<0.000000e+00> : vector<2x1024xf32>
    %354 = tpu.matmul %342, %9, %cst_116 {dimension_numbers = #tpu.dot_dimension_numbers<[1], [0], [0], [1], [0, 0, 1, 1], [], []>} : vector<2x256xf32>, vector<256x1024xf32>, vector<2x1024xf32> -> vector<2x1024xf32>
    %355 = arith.addf %353, %354 : vector<2x1024xf32>
    %356 = vector.extract_strided_slice %355 {offsets = [0, 0], sizes = [2, 512], strides = [1, 1]} : vector<2x1024xf32> to vector<2x512xf32>
    %357 = vector.extract_strided_slice %356 {offsets = [0, 0], sizes = [2, 384], strides = [1, 1]} : vector<2x512xf32> to vector<2x384xf32>
    %358 = arith.negf %357 : vector<2x384xf32>
    %359 = math.exp %358 : vector<2x384xf32>
    %cst_117 = arith.constant 1.000000e+00 : f32
    %360 = vector.broadcast %cst_117 : f32 to vector<2x384xf32>
    %361 = arith.addf %360, %359 : vector<2x384xf32>
    %362 = arith.divf %360, %361 : vector<2x384xf32>
    %363 = vector.extract_strided_slice %356 {offsets = [0, 384], sizes = [2, 128], strides = [1, 1]} : vector<2x512xf32> to vector<2x128xf32>
    %364 = math.tanh %363 : vector<2x128xf32>
    %365 = vector.extract_strided_slice %362 {offsets = [0, 128], sizes = [2, 128], strides = [1, 1]} : vector<2x384xf32> to vector<2x128xf32>
    %366 = arith.mulf %365, %321 : vector<2x128xf32>
    %367 = vector.extract_strided_slice %362 {offsets = [0, 0], sizes = [2, 128], strides = [1, 1]} : vector<2x384xf32> to vector<2x128xf32>
    %368 = arith.mulf %367, %364 : vector<2x128xf32>
    %369 = arith.addf %366, %368 : vector<2x128xf32>
    %370 = vector.extract_strided_slice %362 {offsets = [0, 256], sizes = [2, 128], strides = [1, 1]} : vector<2x384xf32> to vector<2x128xf32>
    %371 = math.tanh %369 : vector<2x128xf32>
    %372 = arith.mulf %370, %371 : vector<2x128xf32>
    %373 = vector.extract_strided_slice %355 {offsets = [0, 512], sizes = [2, 512], strides = [1, 1]} : vector<2x1024xf32> to vector<2x512xf32>
    %374 = vector.extract_strided_slice %373 {offsets = [0, 0], sizes = [2, 384], strides = [1, 1]} : vector<2x512xf32> to vector<2x384xf32>
    %375 = arith.negf %374 : vector<2x384xf32>
    %376 = math.exp %375 : vector<2x384xf32>
    %cst_118 = arith.constant 1.000000e+00 : f32
    %377 = vector.broadcast %cst_118 : f32 to vector<2x384xf32>
    %378 = arith.addf %377, %376 : vector<2x384xf32>
    %379 = arith.divf %377, %378 : vector<2x384xf32>
    %380 = vector.extract_strided_slice %373 {offsets = [0, 384], sizes = [2, 128], strides = [1, 1]} : vector<2x512xf32> to vector<2x128xf32>
    %381 = math.tanh %380 : vector<2x128xf32>
    %382 = vector.extract_strided_slice %379 {offsets = [0, 128], sizes = [2, 128], strides = [1, 1]} : vector<2x384xf32> to vector<2x128xf32>
    %383 = arith.mulf %382, %338 : vector<2x128xf32>
    %384 = vector.extract_strided_slice %379 {offsets = [0, 0], sizes = [2, 128], strides = [1, 1]} : vector<2x384xf32> to vector<2x128xf32>
    %385 = arith.mulf %384, %381 : vector<2x128xf32>
    %386 = arith.addf %383, %385 : vector<2x128xf32>
    %387 = vector.extract_strided_slice %379 {offsets = [0, 256], sizes = [2, 128], strides = [1, 1]} : vector<2x384xf32> to vector<2x128xf32>
    %388 = math.tanh %386 : vector<2x128xf32>
    %389 = arith.mulf %387, %388 : vector<2x128xf32>
    %c0_119 = arith.constant 0 : index
    %c7_120 = arith.constant 7 : index
    %c0_121 = arith.constant 0 : index
    %390 = vector.load %arg10[%c0_119, %c7_120, %c0_121] : memref<2x8x256xf32, #tpu.memory_space<vmem>>, vector<2x1x128xf32>
    %391 = vector.shape_cast %390 : vector<2x1x128xf32> to vector<2x128xf32>
    %392 = vector.shape_cast %372 : vector<2x128xf32> to vector<2x1x128xf32>
    tpu.vector_store %arg10[%c0_119, %c7_120, %c0_121], %392 {strides = array<i32>} : memref<2x8x256xf32, #tpu.memory_space<vmem>>, vector<2x1x128xf32>,
    %c0_122 = arith.constant 0 : index
    %c0_123 = arith.constant 0 : index
    %c128_124 = arith.constant 128 : index
    %393 = vector.load %arg10[%c0_122, %c0_123, %c128_124] : memref<2x8x256xf32, #tpu.memory_space<vmem>>, vector<2x1x128xf32>
    %394 = vector.shape_cast %393 : vector<2x1x128xf32> to vector<2x128xf32>
    %395 = vector.shape_cast %389 : vector<2x128xf32> to vector<2x1x128xf32>
    tpu.vector_store %arg10[%c0_122, %c0_123, %c128_124], %395 {strides = array<i32>} : memref<2x8x256xf32, #tpu.memory_space<vmem>>, vector<2x1x128xf32>,
    %c0_125 = arith.constant 0 : index
    %c0_126 = arith.constant 0 : index
    %c0_127 = arith.constant 0 : index
    %396 = vector.load %arg10[%c0_125, %c0_126, %c0_127] : memref<2x8x256xf32, #tpu.memory_space<vmem>>, vector<2x8x256xf32>
    %397 = vector.shape_cast %396 : vector<2x8x256xf32> to vector<16x256xf32>
    %c0_128 = arith.constant 0 : index
    %c0_129 = arith.constant 0 : index
    %398 = vector.load %arg5[%c0_128, %c0_129] : memref<256x1024xf32, #tpu.memory_space<vmem>>, vector<256x1024xf32>
    %cst_130 = arith.constant dense<0.000000e+00> : vector<16x1024xf32>
    %399 = tpu.matmul %397, %398, %cst_130 {dimension_numbers = #tpu.dot_dimension_numbers<[1], [0], [0], [1], [0, 0, 1, 1], [], []>} : vector<16x256xf32>, vector<256x1024xf32>, vector<16x1024xf32> -> vector<16x1024xf32>
    %c0_131 = arith.constant 0 : index
    %c0_132 = arith.constant 0 : index
    %400 = vector.load %arg7[%c0_131, %c0_132] : memref<1x1024xf32, #tpu.memory_space<vmem>>, vector<1x1024xf32>
    %401 = vector.broadcast %400 : vector<1x1024xf32> to vector<16x1024xf32>
    %402 = arith.addf %399, %401 : vector<16x1024xf32>
    %403 = vector.shape_cast %402 : vector<16x1024xf32> to vector<2x8x1024xf32>
    %c0_133 = arith.constant 0 : index
    %c0_134 = arith.constant 0 : index
    %c0_135 = arith.constant 0 : index
    %404 = vector.load %arg9[%c0_133, %c0_134, %c0_135] : memref<2x8x1024xf32, #tpu.memory_space<vmem>>, vector<2x8x1024xf32>
    tpu.vector_store %arg9[%c0_133, %c0_134, %c0_135], %403 {strides = array<i32>} : memref<2x8x1024xf32, #tpu.memory_space<vmem>>, vector<2x8x1024xf32>,
    %c0_136 = arith.constant 0 : index
    %c0_137 = arith.constant 0 : index
    %405 = vector.load %arg6[%c0_136, %c0_137] : memref<256x1024xf32, #tpu.memory_space<vmem>>, vector<256x1024xf32>
    %cst_138 = arith.constant 0.000000e+00 : f32
    %406 = vector.broadcast %cst_138 : f32 to vector<2x256xf32>
    %cst_139 = arith.constant 0.000000e+00 : f32
    %407 = vector.broadcast %cst_139 : f32 to vector<2x128xf32>
    %cst_140 = arith.constant 0.000000e+00 : f32
    %408 = vector.broadcast %cst_140 : f32 to vector<2x128xf32>
    %c0_141 = arith.constant 0 : index
    %c0_142 = arith.constant 0 : index
    %c0_143 = arith.constant 0 : index
    %409 = vector.load %arg9[%c0_141, %c0_142, %c0_143] : memref<2x8x1024xf32, #tpu.memory_space<vmem>>, vector<2x1x512xf32>
    %410 = vector.shape_cast %409 : vector<2x1x512xf32> to vector<2x512xf32>
    %c0_144 = arith.constant 0 : index
    %c7_145 = arith.constant 7 : index
    %c512_146 = arith.constant 512 : index
    %411 = vector.load %arg9[%c0_144, %c7_145, %c512_146] : memref<2x8x1024xf32, #tpu.memory_space<vmem>>, vector<2x1x512xf32>
    %412 = vector.shape_cast %411 : vector<2x1x512xf32> to vector<2x512xf32>
    %413 = tpu.concatenate %410, %412 in 1 : vector<2x512xf32>, vector<2x512xf32> -> vector<2x1024xf32>
    %cst_147 = arith.constant dense<0.000000e+00> : vector<2x1024xf32>
    %414 = tpu.matmul %406, %405, %cst_147 {dimension_numbers = #tpu.dot_dimension_numbers<[1], [0], [0], [1], [0, 0, 1, 1], [], []>} : vector<2x256xf32>, vector<256x1024xf32>, vector<2x1024xf32> -> vector<2x1024xf32>
    %415 = arith.addf %413, %414 : vector<2x1024xf32>
    %416 = vector.extract_strided_slice %415 {offsets = [0, 0], sizes = [2, 512], strides = [1, 1]} : vector<2x1024xf32> to vector<2x512xf32>
    %417 = vector.extract_strided_slice %416 {offsets = [0, 0], sizes = [2, 384], strides = [1, 1]} : vector<2x512xf32> to vector<2x384xf32>
    %418 = arith.negf %417 : vector<2x384xf32>
    %419 = math.exp %418 : vector<2x384xf32>
    %cst_148 = arith.constant 1.000000e+00 : f32
    %420 = vector.broadcast %cst_148 : f32 to vector<2x384xf32>
    %421 = arith.addf %420, %419 : vector<2x384xf32>
    %422 = arith.divf %420, %421 : vector<2x384xf32>
    %423 = vector.extract_strided_slice %416 {offsets = [0, 384], sizes = [2, 128], strides = [1, 1]} : vector<2x512xf32> to vector<2x128xf32>
    %424 = math.tanh %423 : vector<2x128xf32>
    %425 = vector.extract_strided_slice %422 {offsets = [0, 128], sizes = [2, 128], strides = [1, 1]} : vector<2x384xf32> to vector<2x128xf32>
    %426 = arith.mulf %425, %407 : vector<2x128xf32>
    %427 = vector.extract_strided_slice %422 {offsets = [0, 0], sizes = [2, 128], strides = [1, 1]} : vector<2x384xf32> to vector<2x128xf32>
    %428 = arith.mulf %427, %424 : vector<2x128xf32>
    %429 = arith.addf %426, %428 : vector<2x128xf32>
    %430 = vector.extract_strided_slice %422 {offsets = [0, 256], sizes = [2, 128], strides = [1, 1]} : vector<2x384xf32> to vector<2x128xf32>
    %431 = math.tanh %429 : vector<2x128xf32>
    %432 = arith.mulf %430, %431 : vector<2x128xf32>
    %433 = vector.extract_strided_slice %415 {offsets = [0, 512], sizes = [2, 512], strides = [1, 1]} : vector<2x1024xf32> to vector<2x512xf32>
    %434 = vector.extract_strided_slice %433 {offsets = [0, 0], sizes = [2, 384], strides = [1, 1]} : vector<2x512xf32> to vector<2x384xf32>
    %435 = arith.negf %434 : vector<2x384xf32>
    %436 = math.exp %435 : vector<2x384xf32>
    %cst_149 = arith.constant 1.000000e+00 : f32
    %437 = vector.broadcast %cst_149 : f32 to vector<2x384xf32>
    %438 = arith.addf %437, %436 : vector<2x384xf32>
    %439 = arith.divf %437, %438 : vector<2x384xf32>
    %440 = vector.extract_strided_slice %433 {offsets = [0, 384], sizes = [2, 128], strides = [1, 1]} : vector<2x512xf32> to vector<2x128xf32>
    %441 = math.tanh %440 : vector<2x128xf32>
    %442 = vector.extract_strided_slice %439 {offsets = [0, 128], sizes = [2, 128], strides = [1, 1]} : vector<2x384xf32> to vector<2x128xf32>
    %443 = arith.mulf %442, %408 : vector<2x128xf32>
    %444 = vector.extract_strided_slice %439 {offsets = [0, 0], sizes = [2, 128], strides = [1, 1]} : vector<2x384xf32> to vector<2x128xf32>
    %445 = arith.mulf %444, %441 : vector<2x128xf32>
    %446 = arith.addf %443, %445 : vector<2x128xf32>
    %447 = vector.extract_strided_slice %439 {offsets = [0, 256], sizes = [2, 128], strides = [1, 1]} : vector<2x384xf32> to vector<2x128xf32>
    %448 = math.tanh %446 : vector<2x128xf32>
    %449 = arith.mulf %447, %448 : vector<2x128xf32>
    %450 = tpu.concatenate %432, %449 in 1 : vector<2x128xf32>, vector<2x128xf32> -> vector<2x256xf32>
    %c0_150 = arith.constant 0 : index
    %c0_151 = arith.constant 0 : index
    %c0_152 = arith.constant 0 : index
    %451 = vector.load %arg10[%c0_150, %c0_151, %c0_152] : memref<2x8x256xf32, #tpu.memory_space<vmem>>, vector<2x1x128xf32>
    %452 = vector.shape_cast %451 : vector<2x1x128xf32> to vector<2x128xf32>
    %453 = vector.shape_cast %432 : vector<2x128xf32> to vector<2x1x128xf32>
    tpu.vector_store %arg10[%c0_150, %c0_151, %c0_152], %453 {strides = array<i32>} : memref<2x8x256xf32, #tpu.memory_space<vmem>>, vector<2x1x128xf32>,
    %c0_153 = arith.constant 0 : index
    %c7_154 = arith.constant 7 : index
    %c128_155 = arith.constant 128 : index
    %454 = vector.load %arg10[%c0_153, %c7_154, %c128_155] : memref<2x8x256xf32, #tpu.memory_space<vmem>>, vector<2x1x128xf32>
    %455 = vector.shape_cast %454 : vector<2x1x128xf32> to vector<2x128xf32>
    %456 = vector.shape_cast %449 : vector<2x128xf32> to vector<2x1x128xf32>
    tpu.vector_store %arg10[%c0_153, %c7_154, %c128_155], %456 {strides = array<i32>} : memref<2x8x256xf32, #tpu.memory_space<vmem>>, vector<2x1x128xf32>,
    %c0_156 = arith.constant 0 : index
    %c1_157 = arith.constant 1 : index
    %c0_158 = arith.constant 0 : index
    %457 = vector.load %arg9[%c0_156, %c1_157, %c0_158] : memref<2x8x1024xf32, #tpu.memory_space<vmem>>, vector<2x1x512xf32>
    %458 = vector.shape_cast %457 : vector<2x1x512xf32> to vector<2x512xf32>
    %c0_159 = arith.constant 0 : index
    %c6_160 = arith.constant 6 : index
    %c512_161 = arith.constant 512 : index
    %459 = vector.load %arg9[%c0_159, %c6_160, %c512_161] : memref<2x8x1024xf32, #tpu.memory_space<vmem>>, vector<2x1x512xf32>
    %460 = vector.shape_cast %459 : vector<2x1x512xf32> to vector<2x512xf32>
    %461 = tpu.concatenate %458, %460 in 1 : vector<2x512xf32>, vector<2x512xf32> -> vector<2x1024xf32>
    %cst_162 = arith.constant dense<0.000000e+00> : vector<2x1024xf32>
    %462 = tpu.matmul %450, %405, %cst_162 {dimension_numbers = #tpu.dot_dimension_numbers<[1], [0], [0], [1], [0, 0, 1, 1], [], []>} : vector<2x256xf32>, vector<256x1024xf32>, vector<2x1024xf32> -> vector<2x1024xf32>
    %463 = arith.addf %461, %462 : vector<2x1024xf32>
    %464 = vector.extract_strided_slice %463 {offsets = [0, 0], sizes = [2, 512], strides = [1, 1]} : vector<2x1024xf32> to vector<2x512xf32>
    %465 = vector.extract_strided_slice %464 {offsets = [0, 0], sizes = [2, 384], strides = [1, 1]} : vector<2x512xf32> to vector<2x384xf32>
    %466 = arith.negf %465 : vector<2x384xf32>
    %467 = math.exp %466 : vector<2x384xf32>
    %cst_163 = arith.constant 1.000000e+00 : f32
    %468 = vector.broadcast %cst_163 : f32 to vector<2x384xf32>
    %469 = arith.addf %468, %467 : vector<2x384xf32>
    %470 = arith.divf %468, %469 : vector<2x384xf32>
    %471 = vector.extract_strided_slice %464 {offsets = [0, 384], sizes = [2, 128], strides = [1, 1]} : vector<2x512xf32> to vector<2x128xf32>
    %472 = math.tanh %471 : vector<2x128xf32>
    %473 = vector.extract_strided_slice %470 {offsets = [0, 128], sizes = [2, 128], strides = [1, 1]} : vector<2x384xf32> to vector<2x128xf32>
    %474 = arith.mulf %473, %429 : vector<2x128xf32>
    %475 = vector.extract_strided_slice %470 {offsets = [0, 0], sizes = [2, 128], strides = [1, 1]} : vector<2x384xf32> to vector<2x128xf32>
    %476 = arith.mulf %475, %472 : vector<2x128xf32>
    %477 = arith.addf %474, %476 : vector<2x128xf32>
    %478 = vector.extract_strided_slice %470 {offsets = [0, 256], sizes = [2, 128], strides = [1, 1]} : vector<2x384xf32> to vector<2x128xf32>
    %479 = math.tanh %477 : vector<2x128xf32>
    %480 = arith.mulf %478, %479 : vector<2x128xf32>
    %481 = vector.extract_strided_slice %463 {offsets = [0, 512], sizes = [2, 512], strides = [1, 1]} : vector<2x1024xf32> to vector<2x512xf32>
    %482 = vector.extract_strided_slice %481 {offsets = [0, 0], sizes = [2, 384], strides = [1, 1]} : vector<2x512xf32> to vector<2x384xf32>
    %483 = arith.negf %482 : vector<2x384xf32>
    %484 = math.exp %483 : vector<2x384xf32>
    %cst_164 = arith.constant 1.000000e+00 : f32
    %485 = vector.broadcast %cst_164 : f32 to vector<2x384xf32>
    %486 = arith.addf %485, %484 : vector<2x384xf32>
    %487 = arith.divf %485, %486 : vector<2x384xf32>
    %488 = vector.extract_strided_slice %481 {offsets = [0, 384], sizes = [2, 128], strides = [1, 1]} : vector<2x512xf32> to vector<2x128xf32>
    %489 = math.tanh %488 : vector<2x128xf32>
    %490 = vector.extract_strided_slice %487 {offsets = [0, 128], sizes = [2, 128], strides = [1, 1]} : vector<2x384xf32> to vector<2x128xf32>
    %491 = arith.mulf %490, %446 : vector<2x128xf32>
    %492 = vector.extract_strided_slice %487 {offsets = [0, 0], sizes = [2, 128], strides = [1, 1]} : vector<2x384xf32> to vector<2x128xf32>
    %493 = arith.mulf %492, %489 : vector<2x128xf32>
    %494 = arith.addf %491, %493 : vector<2x128xf32>
    %495 = vector.extract_strided_slice %487 {offsets = [0, 256], sizes = [2, 128], strides = [1, 1]} : vector<2x384xf32> to vector<2x128xf32>
    %496 = math.tanh %494 : vector<2x128xf32>
    %497 = arith.mulf %495, %496 : vector<2x128xf32>
    %498 = tpu.concatenate %480, %497 in 1 : vector<2x128xf32>, vector<2x128xf32> -> vector<2x256xf32>
    %c0_165 = arith.constant 0 : index
    %c1_166 = arith.constant 1 : index
    %c0_167 = arith.constant 0 : index
    %499 = vector.load %arg10[%c0_165, %c1_166, %c0_167] : memref<2x8x256xf32, #tpu.memory_space<vmem>>, vector<2x1x128xf32>
    %500 = vector.shape_cast %499 : vector<2x1x128xf32> to vector<2x128xf32>
    %501 = vector.shape_cast %480 : vector<2x128xf32> to vector<2x1x128xf32>
    tpu.vector_store %arg10[%c0_165, %c1_166, %c0_167], %501 {strides = array<i32>} : memref<2x8x256xf32, #tpu.memory_space<vmem>>, vector<2x1x128xf32>,
    %c0_168 = arith.constant 0 : index
    %c6_169 = arith.constant 6 : index
    %c128_170 = arith.constant 128 : index
    %502 = vector.load %arg10[%c0_168, %c6_169, %c128_170] : memref<2x8x256xf32, #tpu.memory_space<vmem>>, vector<2x1x128xf32>
    %503 = vector.shape_cast %502 : vector<2x1x128xf32> to vector<2x128xf32>
    %504 = vector.shape_cast %497 : vector<2x128xf32> to vector<2x1x128xf32>
    tpu.vector_store %arg10[%c0_168, %c6_169, %c128_170], %504 {strides = array<i32>} : memref<2x8x256xf32, #tpu.memory_space<vmem>>, vector<2x1x128xf32>,
    %c0_171 = arith.constant 0 : index
    %c2_172 = arith.constant 2 : index
    %c0_173 = arith.constant 0 : index
    %505 = vector.load %arg9[%c0_171, %c2_172, %c0_173] : memref<2x8x1024xf32, #tpu.memory_space<vmem>>, vector<2x1x512xf32>
    %506 = vector.shape_cast %505 : vector<2x1x512xf32> to vector<2x512xf32>
    %c0_174 = arith.constant 0 : index
    %c5_175 = arith.constant 5 : index
    %c512_176 = arith.constant 512 : index
    %507 = vector.load %arg9[%c0_174, %c5_175, %c512_176] : memref<2x8x1024xf32, #tpu.memory_space<vmem>>, vector<2x1x512xf32>
    %508 = vector.shape_cast %507 : vector<2x1x512xf32> to vector<2x512xf32>
    %509 = tpu.concatenate %506, %508 in 1 : vector<2x512xf32>, vector<2x512xf32> -> vector<2x1024xf32>
    %cst_177 = arith.constant dense<0.000000e+00> : vector<2x1024xf32>
    %510 = tpu.matmul %498, %405, %cst_177 {dimension_numbers = #tpu.dot_dimension_numbers<[1], [0], [0], [1], [0, 0, 1, 1], [], []>} : vector<2x256xf32>, vector<256x1024xf32>, vector<2x1024xf32> -> vector<2x1024xf32>
    %511 = arith.addf %509, %510 : vector<2x1024xf32>
    %512 = vector.extract_strided_slice %511 {offsets = [0, 0], sizes = [2, 512], strides = [1, 1]} : vector<2x1024xf32> to vector<2x512xf32>
    %513 = vector.extract_strided_slice %512 {offsets = [0, 0], sizes = [2, 384], strides = [1, 1]} : vector<2x512xf32> to vector<2x384xf32>
    %514 = arith.negf %513 : vector<2x384xf32>
    %515 = math.exp %514 : vector<2x384xf32>
    %cst_178 = arith.constant 1.000000e+00 : f32
    %516 = vector.broadcast %cst_178 : f32 to vector<2x384xf32>
    %517 = arith.addf %516, %515 : vector<2x384xf32>
    %518 = arith.divf %516, %517 : vector<2x384xf32>
    %519 = vector.extract_strided_slice %512 {offsets = [0, 384], sizes = [2, 128], strides = [1, 1]} : vector<2x512xf32> to vector<2x128xf32>
    %520 = math.tanh %519 : vector<2x128xf32>
    %521 = vector.extract_strided_slice %518 {offsets = [0, 128], sizes = [2, 128], strides = [1, 1]} : vector<2x384xf32> to vector<2x128xf32>
    %522 = arith.mulf %521, %477 : vector<2x128xf32>
    %523 = vector.extract_strided_slice %518 {offsets = [0, 0], sizes = [2, 128], strides = [1, 1]} : vector<2x384xf32> to vector<2x128xf32>
    %524 = arith.mulf %523, %520 : vector<2x128xf32>
    %525 = arith.addf %522, %524 : vector<2x128xf32>
    %526 = vector.extract_strided_slice %518 {offsets = [0, 256], sizes = [2, 128], strides = [1, 1]} : vector<2x384xf32> to vector<2x128xf32>
    %527 = math.tanh %525 : vector<2x128xf32>
    %528 = arith.mulf %526, %527 : vector<2x128xf32>
    %529 = vector.extract_strided_slice %511 {offsets = [0, 512], sizes = [2, 512], strides = [1, 1]} : vector<2x1024xf32> to vector<2x512xf32>
    %530 = vector.extract_strided_slice %529 {offsets = [0, 0], sizes = [2, 384], strides = [1, 1]} : vector<2x512xf32> to vector<2x384xf32>
    %531 = arith.negf %530 : vector<2x384xf32>
    %532 = math.exp %531 : vector<2x384xf32>
    %cst_179 = arith.constant 1.000000e+00 : f32
    %533 = vector.broadcast %cst_179 : f32 to vector<2x384xf32>
    %534 = arith.addf %533, %532 : vector<2x384xf32>
    %535 = arith.divf %533, %534 : vector<2x384xf32>
    %536 = vector.extract_strided_slice %529 {offsets = [0, 384], sizes = [2, 128], strides = [1, 1]} : vector<2x512xf32> to vector<2x128xf32>
    %537 = math.tanh %536 : vector<2x128xf32>
    %538 = vector.extract_strided_slice %535 {offsets = [0, 128], sizes = [2, 128], strides = [1, 1]} : vector<2x384xf32> to vector<2x128xf32>
    %539 = arith.mulf %538, %494 : vector<2x128xf32>
    %540 = vector.extract_strided_slice %535 {offsets = [0, 0], sizes = [2, 128], strides = [1, 1]} : vector<2x384xf32> to vector<2x128xf32>
    %541 = arith.mulf %540, %537 : vector<2x128xf32>
    %542 = arith.addf %539, %541 : vector<2x128xf32>
    %543 = vector.extract_strided_slice %535 {offsets = [0, 256], sizes = [2, 128], strides = [1, 1]} : vector<2x384xf32> to vector<2x128xf32>
    %544 = math.tanh %542 : vector<2x128xf32>
    %545 = arith.mulf %543, %544 : vector<2x128xf32>
    %546 = tpu.concatenate %528, %545 in 1 : vector<2x128xf32>, vector<2x128xf32> -> vector<2x256xf32>
    %c0_180 = arith.constant 0 : index
    %c2_181 = arith.constant 2 : index
    %c0_182 = arith.constant 0 : index
    %547 = vector.load %arg10[%c0_180, %c2_181, %c0_182] : memref<2x8x256xf32, #tpu.memory_space<vmem>>, vector<2x1x128xf32>
    %548 = vector.shape_cast %547 : vector<2x1x128xf32> to vector<2x128xf32>
    %549 = vector.shape_cast %528 : vector<2x128xf32> to vector<2x1x128xf32>
    tpu.vector_store %arg10[%c0_180, %c2_181, %c0_182], %549 {strides = array<i32>} : memref<2x8x256xf32, #tpu.memory_space<vmem>>, vector<2x1x128xf32>,
    %c0_183 = arith.constant 0 : index
    %c5_184 = arith.constant 5 : index
    %c128_185 = arith.constant 128 : index
    %550 = vector.load %arg10[%c0_183, %c5_184, %c128_185] : memref<2x8x256xf32, #tpu.memory_space<vmem>>, vector<2x1x128xf32>
    %551 = vector.shape_cast %550 : vector<2x1x128xf32> to vector<2x128xf32>
    %552 = vector.shape_cast %545 : vector<2x128xf32> to vector<2x1x128xf32>
    tpu.vector_store %arg10[%c0_183, %c5_184, %c128_185], %552 {strides = array<i32>} : memref<2x8x256xf32, #tpu.memory_space<vmem>>, vector<2x1x128xf32>,
    %c0_186 = arith.constant 0 : index
    %c3_187 = arith.constant 3 : index
    %c0_188 = arith.constant 0 : index
    %553 = vector.load %arg9[%c0_186, %c3_187, %c0_188] : memref<2x8x1024xf32, #tpu.memory_space<vmem>>, vector<2x1x512xf32>
    %554 = vector.shape_cast %553 : vector<2x1x512xf32> to vector<2x512xf32>
    %c0_189 = arith.constant 0 : index
    %c4_190 = arith.constant 4 : index
    %c512_191 = arith.constant 512 : index
    %555 = vector.load %arg9[%c0_189, %c4_190, %c512_191] : memref<2x8x1024xf32, #tpu.memory_space<vmem>>, vector<2x1x512xf32>
    %556 = vector.shape_cast %555 : vector<2x1x512xf32> to vector<2x512xf32>
    %557 = tpu.concatenate %554, %556 in 1 : vector<2x512xf32>, vector<2x512xf32> -> vector<2x1024xf32>
    %cst_192 = arith.constant dense<0.000000e+00> : vector<2x1024xf32>
    %558 = tpu.matmul %546, %405, %cst_192 {dimension_numbers = #tpu.dot_dimension_numbers<[1], [0], [0], [1], [0, 0, 1, 1], [], []>} : vector<2x256xf32>, vector<256x1024xf32>, vector<2x1024xf32> -> vector<2x1024xf32>
    %559 = arith.addf %557, %558 : vector<2x1024xf32>
    %560 = vector.extract_strided_slice %559 {offsets = [0, 0], sizes = [2, 512], strides = [1, 1]} : vector<2x1024xf32> to vector<2x512xf32>
    %561 = vector.extract_strided_slice %560 {offsets = [0, 0], sizes = [2, 384], strides = [1, 1]} : vector<2x512xf32> to vector<2x384xf32>
    %562 = arith.negf %561 : vector<2x384xf32>
    %563 = math.exp %562 : vector<2x384xf32>
    %cst_193 = arith.constant 1.000000e+00 : f32
    %564 = vector.broadcast %cst_193 : f32 to vector<2x384xf32>
    %565 = arith.addf %564, %563 : vector<2x384xf32>
    %566 = arith.divf %564, %565 : vector<2x384xf32>
    %567 = vector.extract_strided_slice %560 {offsets = [0, 384], sizes = [2, 128], strides = [1, 1]} : vector<2x512xf32> to vector<2x128xf32>
    %568 = math.tanh %567 : vector<2x128xf32>
    %569 = vector.extract_strided_slice %566 {offsets = [0, 128], sizes = [2, 128], strides = [1, 1]} : vector<2x384xf32> to vector<2x128xf32>
    %570 = arith.mulf %569, %525 : vector<2x128xf32>
    %571 = vector.extract_strided_slice %566 {offsets = [0, 0], sizes = [2, 128], strides = [1, 1]} : vector<2x384xf32> to vector<2x128xf32>
    %572 = arith.mulf %571, %568 : vector<2x128xf32>
    %573 = arith.addf %570, %572 : vector<2x128xf32>
    %574 = vector.extract_strided_slice %566 {offsets = [0, 256], sizes = [2, 128], strides = [1, 1]} : vector<2x384xf32> to vector<2x128xf32>
    %575 = math.tanh %573 : vector<2x128xf32>
    %576 = arith.mulf %574, %575 : vector<2x128xf32>
    %577 = vector.extract_strided_slice %559 {offsets = [0, 512], sizes = [2, 512], strides = [1, 1]} : vector<2x1024xf32> to vector<2x512xf32>
    %578 = vector.extract_strided_slice %577 {offsets = [0, 0], sizes = [2, 384], strides = [1, 1]} : vector<2x512xf32> to vector<2x384xf32>
    %579 = arith.negf %578 : vector<2x384xf32>
    %580 = math.exp %579 : vector<2x384xf32>
    %cst_194 = arith.constant 1.000000e+00 : f32
    %581 = vector.broadcast %cst_194 : f32 to vector<2x384xf32>
    %582 = arith.addf %581, %580 : vector<2x384xf32>
    %583 = arith.divf %581, %582 : vector<2x384xf32>
    %584 = vector.extract_strided_slice %577 {offsets = [0, 384], sizes = [2, 128], strides = [1, 1]} : vector<2x512xf32> to vector<2x128xf32>
    %585 = math.tanh %584 : vector<2x128xf32>
    %586 = vector.extract_strided_slice %583 {offsets = [0, 128], sizes = [2, 128], strides = [1, 1]} : vector<2x384xf32> to vector<2x128xf32>
    %587 = arith.mulf %586, %542 : vector<2x128xf32>
    %588 = vector.extract_strided_slice %583 {offsets = [0, 0], sizes = [2, 128], strides = [1, 1]} : vector<2x384xf32> to vector<2x128xf32>
    %589 = arith.mulf %588, %585 : vector<2x128xf32>
    %590 = arith.addf %587, %589 : vector<2x128xf32>
    %591 = vector.extract_strided_slice %583 {offsets = [0, 256], sizes = [2, 128], strides = [1, 1]} : vector<2x384xf32> to vector<2x128xf32>
    %592 = math.tanh %590 : vector<2x128xf32>
    %593 = arith.mulf %591, %592 : vector<2x128xf32>
    %594 = tpu.concatenate %576, %593 in 1 : vector<2x128xf32>, vector<2x128xf32> -> vector<2x256xf32>
    %c0_195 = arith.constant 0 : index
    %c3_196 = arith.constant 3 : index
    %c0_197 = arith.constant 0 : index
    %595 = vector.load %arg10[%c0_195, %c3_196, %c0_197] : memref<2x8x256xf32, #tpu.memory_space<vmem>>, vector<2x1x128xf32>
    %596 = vector.shape_cast %595 : vector<2x1x128xf32> to vector<2x128xf32>
    %597 = vector.shape_cast %576 : vector<2x128xf32> to vector<2x1x128xf32>
    tpu.vector_store %arg10[%c0_195, %c3_196, %c0_197], %597 {strides = array<i32>} : memref<2x8x256xf32, #tpu.memory_space<vmem>>, vector<2x1x128xf32>,
    %c0_198 = arith.constant 0 : index
    %c4_199 = arith.constant 4 : index
    %c128_200 = arith.constant 128 : index
    %598 = vector.load %arg10[%c0_198, %c4_199, %c128_200] : memref<2x8x256xf32, #tpu.memory_space<vmem>>, vector<2x1x128xf32>
    %599 = vector.shape_cast %598 : vector<2x1x128xf32> to vector<2x128xf32>
    %600 = vector.shape_cast %593 : vector<2x128xf32> to vector<2x1x128xf32>
    tpu.vector_store %arg10[%c0_198, %c4_199, %c128_200], %600 {strides = array<i32>} : memref<2x8x256xf32, #tpu.memory_space<vmem>>, vector<2x1x128xf32>,
    %c0_201 = arith.constant 0 : index
    %c4_202 = arith.constant 4 : index
    %c0_203 = arith.constant 0 : index
    %601 = vector.load %arg9[%c0_201, %c4_202, %c0_203] : memref<2x8x1024xf32, #tpu.memory_space<vmem>>, vector<2x1x512xf32>
    %602 = vector.shape_cast %601 : vector<2x1x512xf32> to vector<2x512xf32>
    %c0_204 = arith.constant 0 : index
    %c3_205 = arith.constant 3 : index
    %c512_206 = arith.constant 512 : index
    %603 = vector.load %arg9[%c0_204, %c3_205, %c512_206] : memref<2x8x1024xf32, #tpu.memory_space<vmem>>, vector<2x1x512xf32>
    %604 = vector.shape_cast %603 : vector<2x1x512xf32> to vector<2x512xf32>
    %605 = tpu.concatenate %602, %604 in 1 : vector<2x512xf32>, vector<2x512xf32> -> vector<2x1024xf32>
    %cst_207 = arith.constant dense<0.000000e+00> : vector<2x1024xf32>
    %606 = tpu.matmul %594, %405, %cst_207 {dimension_numbers = #tpu.dot_dimension_numbers<[1], [0], [0], [1], [0, 0, 1, 1], [], []>} : vector<2x256xf32>, vector<256x1024xf32>, vector<2x1024xf32> -> vector<2x1024xf32>
    %607 = arith.addf %605, %606 : vector<2x1024xf32>
    %608 = vector.extract_strided_slice %607 {offsets = [0, 0], sizes = [2, 512], strides = [1, 1]} : vector<2x1024xf32> to vector<2x512xf32>
    %609 = vector.extract_strided_slice %608 {offsets = [0, 0], sizes = [2, 384], strides = [1, 1]} : vector<2x512xf32> to vector<2x384xf32>
    %610 = arith.negf %609 : vector<2x384xf32>
    %611 = math.exp %610 : vector<2x384xf32>
    %cst_208 = arith.constant 1.000000e+00 : f32
    %612 = vector.broadcast %cst_208 : f32 to vector<2x384xf32>
    %613 = arith.addf %612, %611 : vector<2x384xf32>
    %614 = arith.divf %612, %613 : vector<2x384xf32>
    %615 = vector.extract_strided_slice %608 {offsets = [0, 384], sizes = [2, 128], strides = [1, 1]} : vector<2x512xf32> to vector<2x128xf32>
    %616 = math.tanh %615 : vector<2x128xf32>
    %617 = vector.extract_strided_slice %614 {offsets = [0, 128], sizes = [2, 128], strides = [1, 1]} : vector<2x384xf32> to vector<2x128xf32>
    %618 = arith.mulf %617, %573 : vector<2x128xf32>
    %619 = vector.extract_strided_slice %614 {offsets = [0, 0], sizes = [2, 128], strides = [1, 1]} : vector<2x384xf32> to vector<2x128xf32>
    %620 = arith.mulf %619, %616 : vector<2x128xf32>
    %621 = arith.addf %618, %620 : vector<2x128xf32>
    %622 = vector.extract_strided_slice %614 {offsets = [0, 256], sizes = [2, 128], strides = [1, 1]} : vector<2x384xf32> to vector<2x128xf32>
    %623 = math.tanh %621 : vector<2x128xf32>
    %624 = arith.mulf %622, %623 : vector<2x128xf32>
    %625 = vector.extract_strided_slice %607 {offsets = [0, 512], sizes = [2, 512], strides = [1, 1]} : vector<2x1024xf32> to vector<2x512xf32>
    %626 = vector.extract_strided_slice %625 {offsets = [0, 0], sizes = [2, 384], strides = [1, 1]} : vector<2x512xf32> to vector<2x384xf32>
    %627 = arith.negf %626 : vector<2x384xf32>
    %628 = math.exp %627 : vector<2x384xf32>
    %cst_209 = arith.constant 1.000000e+00 : f32
    %629 = vector.broadcast %cst_209 : f32 to vector<2x384xf32>
    %630 = arith.addf %629, %628 : vector<2x384xf32>
    %631 = arith.divf %629, %630 : vector<2x384xf32>
    %632 = vector.extract_strided_slice %625 {offsets = [0, 384], sizes = [2, 128], strides = [1, 1]} : vector<2x512xf32> to vector<2x128xf32>
    %633 = math.tanh %632 : vector<2x128xf32>
    %634 = vector.extract_strided_slice %631 {offsets = [0, 128], sizes = [2, 128], strides = [1, 1]} : vector<2x384xf32> to vector<2x128xf32>
    %635 = arith.mulf %634, %590 : vector<2x128xf32>
    %636 = vector.extract_strided_slice %631 {offsets = [0, 0], sizes = [2, 128], strides = [1, 1]} : vector<2x384xf32> to vector<2x128xf32>
    %637 = arith.mulf %636, %633 : vector<2x128xf32>
    %638 = arith.addf %635, %637 : vector<2x128xf32>
    %639 = vector.extract_strided_slice %631 {offsets = [0, 256], sizes = [2, 128], strides = [1, 1]} : vector<2x384xf32> to vector<2x128xf32>
    %640 = math.tanh %638 : vector<2x128xf32>
    %641 = arith.mulf %639, %640 : vector<2x128xf32>
    %642 = tpu.concatenate %624, %641 in 1 : vector<2x128xf32>, vector<2x128xf32> -> vector<2x256xf32>
    %c0_210 = arith.constant 0 : index
    %c4_211 = arith.constant 4 : index
    %c0_212 = arith.constant 0 : index
    %643 = vector.load %arg10[%c0_210, %c4_211, %c0_212] : memref<2x8x256xf32, #tpu.memory_space<vmem>>, vector<2x1x128xf32>
    %644 = vector.shape_cast %643 : vector<2x1x128xf32> to vector<2x128xf32>
    %645 = vector.shape_cast %624 : vector<2x128xf32> to vector<2x1x128xf32>
    tpu.vector_store %arg10[%c0_210, %c4_211, %c0_212], %645 {strides = array<i32>} : memref<2x8x256xf32, #tpu.memory_space<vmem>>, vector<2x1x128xf32>,
    %c0_213 = arith.constant 0 : index
    %c3_214 = arith.constant 3 : index
    %c128_215 = arith.constant 128 : index
    %646 = vector.load %arg10[%c0_213, %c3_214, %c128_215] : memref<2x8x256xf32, #tpu.memory_space<vmem>>, vector<2x1x128xf32>
    %647 = vector.shape_cast %646 : vector<2x1x128xf32> to vector<2x128xf32>
    %648 = vector.shape_cast %641 : vector<2x128xf32> to vector<2x1x128xf32>
    tpu.vector_store %arg10[%c0_213, %c3_214, %c128_215], %648 {strides = array<i32>} : memref<2x8x256xf32, #tpu.memory_space<vmem>>, vector<2x1x128xf32>,
    %c0_216 = arith.constant 0 : index
    %c5_217 = arith.constant 5 : index
    %c0_218 = arith.constant 0 : index
    %649 = vector.load %arg9[%c0_216, %c5_217, %c0_218] : memref<2x8x1024xf32, #tpu.memory_space<vmem>>, vector<2x1x512xf32>
    %650 = vector.shape_cast %649 : vector<2x1x512xf32> to vector<2x512xf32>
    %c0_219 = arith.constant 0 : index
    %c2_220 = arith.constant 2 : index
    %c512_221 = arith.constant 512 : index
    %651 = vector.load %arg9[%c0_219, %c2_220, %c512_221] : memref<2x8x1024xf32, #tpu.memory_space<vmem>>, vector<2x1x512xf32>
    %652 = vector.shape_cast %651 : vector<2x1x512xf32> to vector<2x512xf32>
    %653 = tpu.concatenate %650, %652 in 1 : vector<2x512xf32>, vector<2x512xf32> -> vector<2x1024xf32>
    %cst_222 = arith.constant dense<0.000000e+00> : vector<2x1024xf32>
    %654 = tpu.matmul %642, %405, %cst_222 {dimension_numbers = #tpu.dot_dimension_numbers<[1], [0], [0], [1], [0, 0, 1, 1], [], []>} : vector<2x256xf32>, vector<256x1024xf32>, vector<2x1024xf32> -> vector<2x1024xf32>
    %655 = arith.addf %653, %654 : vector<2x1024xf32>
    %656 = vector.extract_strided_slice %655 {offsets = [0, 0], sizes = [2, 512], strides = [1, 1]} : vector<2x1024xf32> to vector<2x512xf32>
    %657 = vector.extract_strided_slice %656 {offsets = [0, 0], sizes = [2, 384], strides = [1, 1]} : vector<2x512xf32> to vector<2x384xf32>
    %658 = arith.negf %657 : vector<2x384xf32>
    %659 = math.exp %658 : vector<2x384xf32>
    %cst_223 = arith.constant 1.000000e+00 : f32
    %660 = vector.broadcast %cst_223 : f32 to vector<2x384xf32>
    %661 = arith.addf %660, %659 : vector<2x384xf32>
    %662 = arith.divf %660, %661 : vector<2x384xf32>
    %663 = vector.extract_strided_slice %656 {offsets = [0, 384], sizes = [2, 128], strides = [1, 1]} : vector<2x512xf32> to vector<2x128xf32>
    %664 = math.tanh %663 : vector<2x128xf32>
    %665 = vector.extract_strided_slice %662 {offsets = [0, 128], sizes = [2, 128], strides = [1, 1]} : vector<2x384xf32> to vector<2x128xf32>
    %666 = arith.mulf %665, %621 : vector<2x128xf32>
    %667 = vector.extract_strided_slice %662 {offsets = [0, 0], sizes = [2, 128], strides = [1, 1]} : vector<2x384xf32> to vector<2x128xf32>
    %668 = arith.mulf %667, %664 : vector<2x128xf32>
    %669 = arith.addf %666, %668 : vector<2x128xf32>
    %670 = vector.extract_strided_slice %662 {offsets = [0, 256], sizes = [2, 128], strides = [1, 1]} : vector<2x384xf32> to vector<2x128xf32>
    %671 = math.tanh %669 : vector<2x128xf32>
    %672 = arith.mulf %670, %671 : vector<2x128xf32>
    %673 = vector.extract_strided_slice %655 {offsets = [0, 512], sizes = [2, 512], strides = [1, 1]} : vector<2x1024xf32> to vector<2x512xf32>
    %674 = vector.extract_strided_slice %673 {offsets = [0, 0], sizes = [2, 384], strides = [1, 1]} : vector<2x512xf32> to vector<2x384xf32>
    %675 = arith.negf %674 : vector<2x384xf32>
    %676 = math.exp %675 : vector<2x384xf32>
    %cst_224 = arith.constant 1.000000e+00 : f32
    %677 = vector.broadcast %cst_224 : f32 to vector<2x384xf32>
    %678 = arith.addf %677, %676 : vector<2x384xf32>
    %679 = arith.divf %677, %678 : vector<2x384xf32>
    %680 = vector.extract_strided_slice %673 {offsets = [0, 384], sizes = [2, 128], strides = [1, 1]} : vector<2x512xf32> to vector<2x128xf32>
    %681 = math.tanh %680 : vector<2x128xf32>
    %682 = vector.extract_strided_slice %679 {offsets = [0, 128], sizes = [2, 128], strides = [1, 1]} : vector<2x384xf32> to vector<2x128xf32>
    %683 = arith.mulf %682, %638 : vector<2x128xf32>
    %684 = vector.extract_strided_slice %679 {offsets = [0, 0], sizes = [2, 128], strides = [1, 1]} : vector<2x384xf32> to vector<2x128xf32>
    %685 = arith.mulf %684, %681 : vector<2x128xf32>
    %686 = arith.addf %683, %685 : vector<2x128xf32>
    %687 = vector.extract_strided_slice %679 {offsets = [0, 256], sizes = [2, 128], strides = [1, 1]} : vector<2x384xf32> to vector<2x128xf32>
    %688 = math.tanh %686 : vector<2x128xf32>
    %689 = arith.mulf %687, %688 : vector<2x128xf32>
    %690 = tpu.concatenate %672, %689 in 1 : vector<2x128xf32>, vector<2x128xf32> -> vector<2x256xf32>
    %c0_225 = arith.constant 0 : index
    %c5_226 = arith.constant 5 : index
    %c0_227 = arith.constant 0 : index
    %691 = vector.load %arg10[%c0_225, %c5_226, %c0_227] : memref<2x8x256xf32, #tpu.memory_space<vmem>>, vector<2x1x128xf32>
    %692 = vector.shape_cast %691 : vector<2x1x128xf32> to vector<2x128xf32>
    %693 = vector.shape_cast %672 : vector<2x128xf32> to vector<2x1x128xf32>
    tpu.vector_store %arg10[%c0_225, %c5_226, %c0_227], %693 {strides = array<i32>} : memref<2x8x256xf32, #tpu.memory_space<vmem>>, vector<2x1x128xf32>,
    %c0_228 = arith.constant 0 : index
    %c2_229 = arith.constant 2 : index
    %c128_230 = arith.constant 128 : index
    %694 = vector.load %arg10[%c0_228, %c2_229, %c128_230] : memref<2x8x256xf32, #tpu.memory_space<vmem>>, vector<2x1x128xf32>
    %695 = vector.shape_cast %694 : vector<2x1x128xf32> to vector<2x128xf32>
    %696 = vector.shape_cast %689 : vector<2x128xf32> to vector<2x1x128xf32>
    tpu.vector_store %arg10[%c0_228, %c2_229, %c128_230], %696 {strides = array<i32>} : memref<2x8x256xf32, #tpu.memory_space<vmem>>, vector<2x1x128xf32>,
    %c0_231 = arith.constant 0 : index
    %c6_232 = arith.constant 6 : index
    %c0_233 = arith.constant 0 : index
    %697 = vector.load %arg9[%c0_231, %c6_232, %c0_233] : memref<2x8x1024xf32, #tpu.memory_space<vmem>>, vector<2x1x512xf32>
    %698 = vector.shape_cast %697 : vector<2x1x512xf32> to vector<2x512xf32>
    %c0_234 = arith.constant 0 : index
    %c1_235 = arith.constant 1 : index
    %c512_236 = arith.constant 512 : index
    %699 = vector.load %arg9[%c0_234, %c1_235, %c512_236] : memref<2x8x1024xf32, #tpu.memory_space<vmem>>, vector<2x1x512xf32>
    %700 = vector.shape_cast %699 : vector<2x1x512xf32> to vector<2x512xf32>
    %701 = tpu.concatenate %698, %700 in 1 : vector<2x512xf32>, vector<2x512xf32> -> vector<2x1024xf32>
    %cst_237 = arith.constant dense<0.000000e+00> : vector<2x1024xf32>
    %702 = tpu.matmul %690, %405, %cst_237 {dimension_numbers = #tpu.dot_dimension_numbers<[1], [0], [0], [1], [0, 0, 1, 1], [], []>} : vector<2x256xf32>, vector<256x1024xf32>, vector<2x1024xf32> -> vector<2x1024xf32>
    %703 = arith.addf %701, %702 : vector<2x1024xf32>
    %704 = vector.extract_strided_slice %703 {offsets = [0, 0], sizes = [2, 512], strides = [1, 1]} : vector<2x1024xf32> to vector<2x512xf32>
    %705 = vector.extract_strided_slice %704 {offsets = [0, 0], sizes = [2, 384], strides = [1, 1]} : vector<2x512xf32> to vector<2x384xf32>
    %706 = arith.negf %705 : vector<2x384xf32>
    %707 = math.exp %706 : vector<2x384xf32>
    %cst_238 = arith.constant 1.000000e+00 : f32
    %708 = vector.broadcast %cst_238 : f32 to vector<2x384xf32>
    %709 = arith.addf %708, %707 : vector<2x384xf32>
    %710 = arith.divf %708, %709 : vector<2x384xf32>
    %711 = vector.extract_strided_slice %704 {offsets = [0, 384], sizes = [2, 128], strides = [1, 1]} : vector<2x512xf32> to vector<2x128xf32>
    %712 = math.tanh %711 : vector<2x128xf32>
    %713 = vector.extract_strided_slice %710 {offsets = [0, 128], sizes = [2, 128], strides = [1, 1]} : vector<2x384xf32> to vector<2x128xf32>
    %714 = arith.mulf %713, %669 : vector<2x128xf32>
    %715 = vector.extract_strided_slice %710 {offsets = [0, 0], sizes = [2, 128], strides = [1, 1]} : vector<2x384xf32> to vector<2x128xf32>
    %716 = arith.mulf %715, %712 : vector<2x128xf32>
    %717 = arith.addf %714, %716 : vector<2x128xf32>
    %718 = vector.extract_strided_slice %710 {offsets = [0, 256], sizes = [2, 128], strides = [1, 1]} : vector<2x384xf32> to vector<2x128xf32>
    %719 = math.tanh %717 : vector<2x128xf32>
    %720 = arith.mulf %718, %719 : vector<2x128xf32>
    %721 = vector.extract_strided_slice %703 {offsets = [0, 512], sizes = [2, 512], strides = [1, 1]} : vector<2x1024xf32> to vector<2x512xf32>
    %722 = vector.extract_strided_slice %721 {offsets = [0, 0], sizes = [2, 384], strides = [1, 1]} : vector<2x512xf32> to vector<2x384xf32>
    %723 = arith.negf %722 : vector<2x384xf32>
    %724 = math.exp %723 : vector<2x384xf32>
    %cst_239 = arith.constant 1.000000e+00 : f32
    %725 = vector.broadcast %cst_239 : f32 to vector<2x384xf32>
    %726 = arith.addf %725, %724 : vector<2x384xf32>
    %727 = arith.divf %725, %726 : vector<2x384xf32>
    %728 = vector.extract_strided_slice %721 {offsets = [0, 384], sizes = [2, 128], strides = [1, 1]} : vector<2x512xf32> to vector<2x128xf32>
    %729 = math.tanh %728 : vector<2x128xf32>
    %730 = vector.extract_strided_slice %727 {offsets = [0, 128], sizes = [2, 128], strides = [1, 1]} : vector<2x384xf32> to vector<2x128xf32>
    %731 = arith.mulf %730, %686 : vector<2x128xf32>
    %732 = vector.extract_strided_slice %727 {offsets = [0, 0], sizes = [2, 128], strides = [1, 1]} : vector<2x384xf32> to vector<2x128xf32>
    %733 = arith.mulf %732, %729 : vector<2x128xf32>
    %734 = arith.addf %731, %733 : vector<2x128xf32>
    %735 = vector.extract_strided_slice %727 {offsets = [0, 256], sizes = [2, 128], strides = [1, 1]} : vector<2x384xf32> to vector<2x128xf32>
    %736 = math.tanh %734 : vector<2x128xf32>
    %737 = arith.mulf %735, %736 : vector<2x128xf32>
    %738 = tpu.concatenate %720, %737 in 1 : vector<2x128xf32>, vector<2x128xf32> -> vector<2x256xf32>
    %c0_240 = arith.constant 0 : index
    %c6_241 = arith.constant 6 : index
    %c0_242 = arith.constant 0 : index
    %739 = vector.load %arg10[%c0_240, %c6_241, %c0_242] : memref<2x8x256xf32, #tpu.memory_space<vmem>>, vector<2x1x128xf32>
    %740 = vector.shape_cast %739 : vector<2x1x128xf32> to vector<2x128xf32>
    %741 = vector.shape_cast %720 : vector<2x128xf32> to vector<2x1x128xf32>
    tpu.vector_store %arg10[%c0_240, %c6_241, %c0_242], %741 {strides = array<i32>} : memref<2x8x256xf32, #tpu.memory_space<vmem>>, vector<2x1x128xf32>,
    %c0_243 = arith.constant 0 : index
    %c1_244 = arith.constant 1 : index
    %c128_245 = arith.constant 128 : index
    %742 = vector.load %arg10[%c0_243, %c1_244, %c128_245] : memref<2x8x256xf32, #tpu.memory_space<vmem>>, vector<2x1x128xf32>
    %743 = vector.shape_cast %742 : vector<2x1x128xf32> to vector<2x128xf32>
    %744 = vector.shape_cast %737 : vector<2x128xf32> to vector<2x1x128xf32>
    tpu.vector_store %arg10[%c0_243, %c1_244, %c128_245], %744 {strides = array<i32>} : memref<2x8x256xf32, #tpu.memory_space<vmem>>, vector<2x1x128xf32>,
    %c0_246 = arith.constant 0 : index
    %c7_247 = arith.constant 7 : index
    %c0_248 = arith.constant 0 : index
    %745 = vector.load %arg9[%c0_246, %c7_247, %c0_248] : memref<2x8x1024xf32, #tpu.memory_space<vmem>>, vector<2x1x512xf32>
    %746 = vector.shape_cast %745 : vector<2x1x512xf32> to vector<2x512xf32>
    %c0_249 = arith.constant 0 : index
    %c0_250 = arith.constant 0 : index
    %c512_251 = arith.constant 512 : index
    %747 = vector.load %arg9[%c0_249, %c0_250, %c512_251] : memref<2x8x1024xf32, #tpu.memory_space<vmem>>, vector<2x1x512xf32>
    %748 = vector.shape_cast %747 : vector<2x1x512xf32> to vector<2x512xf32>
    %749 = tpu.concatenate %746, %748 in 1 : vector<2x512xf32>, vector<2x512xf32> -> vector<2x1024xf32>
    %cst_252 = arith.constant dense<0.000000e+00> : vector<2x1024xf32>
    %750 = tpu.matmul %738, %405, %cst_252 {dimension_numbers = #tpu.dot_dimension_numbers<[1], [0], [0], [1], [0, 0, 1, 1], [], []>} : vector<2x256xf32>, vector<256x1024xf32>, vector<2x1024xf32> -> vector<2x1024xf32>
    %751 = arith.addf %749, %750 : vector<2x1024xf32>
    %752 = vector.extract_strided_slice %751 {offsets = [0, 0], sizes = [2, 512], strides = [1, 1]} : vector<2x1024xf32> to vector<2x512xf32>
    %753 = vector.extract_strided_slice %752 {offsets = [0, 0], sizes = [2, 384], strides = [1, 1]} : vector<2x512xf32> to vector<2x384xf32>
    %754 = arith.negf %753 : vector<2x384xf32>
    %755 = math.exp %754 : vector<2x384xf32>
    %cst_253 = arith.constant 1.000000e+00 : f32
    %756 = vector.broadcast %cst_253 : f32 to vector<2x384xf32>
    %757 = arith.addf %756, %755 : vector<2x384xf32>
    %758 = arith.divf %756, %757 : vector<2x384xf32>
    %759 = vector.extract_strided_slice %752 {offsets = [0, 384], sizes = [2, 128], strides = [1, 1]} : vector<2x512xf32> to vector<2x128xf32>
    %760 = math.tanh %759 : vector<2x128xf32>
    %761 = vector.extract_strided_slice %758 {offsets = [0, 128], sizes = [2, 128], strides = [1, 1]} : vector<2x384xf32> to vector<2x128xf32>
    %762 = arith.mulf %761, %717 : vector<2x128xf32>
    %763 = vector.extract_strided_slice %758 {offsets = [0, 0], sizes = [2, 128], strides = [1, 1]} : vector<2x384xf32> to vector<2x128xf32>
    %764 = arith.mulf %763, %760 : vector<2x128xf32>
    %765 = arith.addf %762, %764 : vector<2x128xf32>
    %766 = vector.extract_strided_slice %758 {offsets = [0, 256], sizes = [2, 128], strides = [1, 1]} : vector<2x384xf32> to vector<2x128xf32>
    %767 = math.tanh %765 : vector<2x128xf32>
    %768 = arith.mulf %766, %767 : vector<2x128xf32>
    %769 = vector.extract_strided_slice %751 {offsets = [0, 512], sizes = [2, 512], strides = [1, 1]} : vector<2x1024xf32> to vector<2x512xf32>
    %770 = vector.extract_strided_slice %769 {offsets = [0, 0], sizes = [2, 384], strides = [1, 1]} : vector<2x512xf32> to vector<2x384xf32>
    %771 = arith.negf %770 : vector<2x384xf32>
    %772 = math.exp %771 : vector<2x384xf32>
    %cst_254 = arith.constant 1.000000e+00 : f32
    %773 = vector.broadcast %cst_254 : f32 to vector<2x384xf32>
    %774 = arith.addf %773, %772 : vector<2x384xf32>
    %775 = arith.divf %773, %774 : vector<2x384xf32>
    %776 = vector.extract_strided_slice %769 {offsets = [0, 384], sizes = [2, 128], strides = [1, 1]} : vector<2x512xf32> to vector<2x128xf32>
    %777 = math.tanh %776 : vector<2x128xf32>
    %778 = vector.extract_strided_slice %775 {offsets = [0, 128], sizes = [2, 128], strides = [1, 1]} : vector<2x384xf32> to vector<2x128xf32>
    %779 = arith.mulf %778, %734 : vector<2x128xf32>
    %780 = vector.extract_strided_slice %775 {offsets = [0, 0], sizes = [2, 128], strides = [1, 1]} : vector<2x384xf32> to vector<2x128xf32>
    %781 = arith.mulf %780, %777 : vector<2x128xf32>
    %782 = arith.addf %779, %781 : vector<2x128xf32>
    %783 = vector.extract_strided_slice %775 {offsets = [0, 256], sizes = [2, 128], strides = [1, 1]} : vector<2x384xf32> to vector<2x128xf32>
    %784 = math.tanh %782 : vector<2x128xf32>
    %785 = arith.mulf %783, %784 : vector<2x128xf32>
    %c0_255 = arith.constant 0 : index
    %c7_256 = arith.constant 7 : index
    %c0_257 = arith.constant 0 : index
    %786 = vector.load %arg10[%c0_255, %c7_256, %c0_257] : memref<2x8x256xf32, #tpu.memory_space<vmem>>, vector<2x1x128xf32>
    %787 = vector.shape_cast %786 : vector<2x1x128xf32> to vector<2x128xf32>
    %788 = vector.shape_cast %768 : vector<2x128xf32> to vector<2x1x128xf32>
    tpu.vector_store %arg10[%c0_255, %c7_256, %c0_257], %788 {strides = array<i32>} : memref<2x8x256xf32, #tpu.memory_space<vmem>>, vector<2x1x128xf32>,
    %c0_258 = arith.constant 0 : index
    %c0_259 = arith.constant 0 : index
    %c128_260 = arith.constant 128 : index
    %789 = vector.load %arg10[%c0_258, %c0_259, %c128_260] : memref<2x8x256xf32, #tpu.memory_space<vmem>>, vector<2x1x128xf32>
    %790 = vector.shape_cast %789 : vector<2x1x128xf32> to vector<2x128xf32>
    %791 = vector.shape_cast %785 : vector<2x128xf32> to vector<2x1x128xf32>
    tpu.vector_store %arg10[%c0_258, %c0_259, %c128_260], %791 {strides = array<i32>} : memref<2x8x256xf32, #tpu.memory_space<vmem>>, vector<2x1x128xf32>,
    %c0_261 = arith.constant 0 : index
    %c0_262 = arith.constant 0 : index
    %c0_263 = arith.constant 0 : index
    %792 = vector.load %arg10[%c0_261, %c0_262, %c0_263] : memref<2x8x256xf32, #tpu.memory_space<vmem>>, vector<2x8x256xf32>
    %793 = vector.extract_strided_slice %792 {offsets = [0, 0, 0], sizes = [2, 8, 64], strides = [1, 1, 1]} : vector<2x8x256xf32> to vector<2x8x64xf32>
    %794 = vector.extract_strided_slice %792 {offsets = [0, 0, 128], sizes = [2, 8, 64], strides = [1, 1, 1]} : vector<2x8x256xf32> to vector<2x8x64xf32>
    %795 = tpu.concatenate %793, %794 in 2 : vector<2x8x64xf32>, vector<2x8x64xf32> -> vector<2x8x128xf32>
    %c0_264 = arith.constant 0 : index
    %c0_265 = arith.constant 0 : index
    %c0_266 = arith.constant 0 : index
    %796 = vector.load %arg8[%c0_264, %c0_265, %c0_266] : memref<2x8x128xf32, #tpu.memory_space<vmem>>, vector<2x8x128xf32>
    tpu.vector_store %arg8[%c0_264, %c0_265, %c0_266], %795 {strides = array<i32>} : memref<2x8x128xf32, #tpu.memory_space<vmem>>, vector<2x8x128xf32>,
    return
  }
  func.func @transform_0(%arg0: i32) -> (i32, i32, i32) {
    %c0_i32 = arith.constant 0 : i32
    %c0_i32_0 = arith.constant 0 : i32
    %c0_i32_1 = arith.constant 0 : i32
    return %arg0, %c0_i32, %c0_i32_0 : i32, i32, i32
  }
  func.func @transform_1(%arg0: i32) -> (i32, i32) {
    %c0_i32 = arith.constant 0 : i32
    %c0_i32_0 = arith.constant 0 : i32
    %c0_i32_1 = arith.constant 0 : i32
    return %c0_i32, %c0_i32_0 : i32, i32
  }
  func.func @transform_2(%arg0: i32) -> (i32, i32) {
    %c0_i32 = arith.constant 0 : i32
    %c0_i32_0 = arith.constant 0 : i32
    %c0_i32_1 = arith.constant 0 : i32
    return %c0_i32, %c0_i32_0 : i32, i32
  }
  func.func @transform_3(%arg0: i32) -> (i32, i32) {
    %c0_i32 = arith.constant 0 : i32
    %c0_i32_0 = arith.constant 0 : i32
    %c0_i32_1 = arith.constant 0 : i32
    return %c0_i32, %c0_i32_0 : i32, i32
  }
  func.func @transform_4(%arg0: i32) -> (i32, i32) {
    %c0_i32 = arith.constant 0 : i32
    %c0_i32_0 = arith.constant 0 : i32
    %c0_i32_1 = arith.constant 0 : i32
    return %c0_i32, %c0_i32_0 : i32, i32
  }
  func.func @transform_5(%arg0: i32) -> (i32, i32) {
    %c0_i32 = arith.constant 0 : i32
    %c0_i32_0 = arith.constant 0 : i32
    %c0_i32_1 = arith.constant 0 : i32
    return %c0_i32, %c0_i32_0 : i32, i32
  }
  func.func @transform_6(%arg0: i32) -> (i32, i32) {
    %c0_i32 = arith.constant 0 : i32
    %c0_i32_0 = arith.constant 0 : i32
    %c0_i32_1 = arith.constant 0 : i32
    return %c0_i32, %c0_i32_0 : i32, i32
  }
  func.func @transform_7(%arg0: i32) -> (i32, i32, i32) {
    %c0_i32 = arith.constant 0 : i32
    %c0_i32_0 = arith.constant 0 : i32
    %c0_i32_1 = arith.constant 0 : i32
    return %arg0, %c0_i32, %c0_i32_0 : i32, i32, i32
  }
}

</mosaic_0001>

<llo_original>
// kernel: tpu_custom_call.1
$region0: #{tpu_custom_call.1}
  #allocation0 [shape = 'u32[]', space=smem, size = 0x4, offset = 0x4, fixed_abs, tag = 'smem constant byte address 0x4 - core index']
  #allocation1 [shape = 'u32[144,128]{1,0:T(1,128)}', space=vmem, size = 0x12000, scoped, tag = 'internal scratch']
  #allocation2 [shape = 'f32[2,8,1024]{2,1,0:T(8,128)}', space=vmem, size = 0x10000, scoped, tag = 'scratch operand']
  #allocation3 [shape = 'f32[2,8,256]{2,1,0:T(8,128)}', space=vmem, size = 0x4000, scoped, tag = 'scratch operand']
  %s0 = inlined_call_operand.hbm [shape: f32[2,8,128], index: 0, kind: input, shape index: {}]
  %s1 = inlined_call_operand.hbm [shape: f32[128,1024], index: 1, kind: input, shape index: {}]
  %s2 = inlined_call_operand.hbm [shape: f32[256,1024], index: 2, kind: input, shape index: {}]
  %s3 = inlined_call_operand.vmem [shape: f32[1,1024], index: 3, kind: input, shape index: {}]
  %s4 = inlined_call_operand.hbm [shape: f32[256,1024], index: 4, kind: input, shape index: {}]
  %s5 = inlined_call_operand.hbm [shape: f32[256,1024], index: 5, kind: input, shape index: {}]
  %s6 = inlined_call_operand.vmem [shape: f32[1,1024], index: 6, kind: input, shape index: {}]
  %s7 = inlined_call_operand.hbm [shape: f32[2,8,128], index: 7, kind: output, shape index: {}]
  %s8 = sld [smem:[#allocation0]]
  $region58: #{tpu_custom_call.1} parent=0
    _
  %s10 = ssub.s32 1, %s8
  %s11 = scalar_select 0, %s10, %s8
  $region1: #{tpu_custom_call.1} parent=0
    #allocation4 [shape = 'u8[8192]{0}', space=vmem, size = 0x2000, scoped, tag = 'input window, operand 0, single buffered']
    #allocation5 [shape = 's32[1]{0}', space=sflag, size = 0x4, scoped, tag = 'scoped memory for tpu_custom_call.1']
    #allocation6 [shape = 's32[1]{0}', space=sflag, size = 0x4, scoped, tag = 'scoped memory for tpu_custom_call.1']
    #allocation7 [shape = 'u8[524288]{0}', space=vmem, size = 0x80000, scoped, tag = 'input window, operand 1, single buffered']
    #allocation8 [shape = 's32[1]{0}', space=sflag, size = 0x4, scoped, tag = 'scoped memory for tpu_custom_call.1']
    #allocation9 [shape = 'u8[1048576]{0}', space=vmem, size = 0x100000, scoped, tag = 'input window, operand 2, single buffered']
    #allocation10 [shape = 'u8[1048576]{0}', space=vmem, size = 0x100000, scoped, tag = 'input window, operand 4, single buffered']
    #allocation11 [shape = 's32[1]{0}', space=sflag, size = 0x4, scoped, tag = 'scoped memory for tpu_custom_call.1']
    #allocation12 [shape = 'u8[1048576]{0}', space=vmem, size = 0x100000, scoped, tag = 'input window, operand 5, single buffered']
    #allocation13 [shape = 'u8[8192]{0}', space=vmem, size = 0x2000, scoped, tag = 'output window, operand 0, single buffered']
    %12 = vsyncpa [#allocation5], 0
    %13 = vsyncpa [#allocation8], 0
    %14 = vsyncpa [#allocation11], 0
    %15 = vsyncpa [#allocation6], 0
    // Predicated region
    $region2: #{tpu_custom_call.1} parent=1 // pred_check
      _
    $region3: #{tpu_custom_call.1} parent=1 // pred_check_branch
      %17 = sbr.rel (0) target = $region5
    $region4: #{tpu_custom_call.1} parent=1 // pred_region
      %s19 = ssub.s32 256, 256
      %20 = vsyncadd [#allocation5], %s19
      %s21 = sshll.u32 [#allocation4], 4
      %s22 = int_to_ptr.vmem [resolvable:$true] %s21
      %27 = dma.hbm_to_vmem [thread:$0]  %s0, 256, %s22, [#allocation5], 128, 128, 8
    $region5: #{tpu_custom_call.1} parent=1 // pred_fallthru
      _
    // Predicated region
    $region6: #{tpu_custom_call.1} parent=1 // pred_check
      _
    $region7: #{tpu_custom_call.1} parent=1 // pred_check_branch
      %29 = sbr.rel (0) target = $region9
    $region8: #{tpu_custom_call.1} parent=1 // pred_region
      %s31 = ssub.s32 16384, 16384
      %32 = vsyncadd [#allocation8], %s31
      %s33 = sshll.u32 [#allocation7], 4
      %s34 = int_to_ptr.vmem [resolvable:$true] %s33
      %39 = dma.hbm_to_vmem [thread:$0]  %s1, 16384, %s34, [#allocation8], 1024, 1024, 64
    $region9: #{tpu_custom_call.1} parent=1 // pred_fallthru
      _
    // Predicated region
    $region10: #{tpu_custom_call.1} parent=1 // pred_check
      _
    $region11: #{tpu_custom_call.1} parent=1 // pred_check_branch
      %41 = sbr.rel (0) target = $region13
    $region12: #{tpu_custom_call.1} parent=1 // pred_region
      %s43 = ssub.s32 32768, 32768
      %44 = vsyncadd [#allocation8], %s43
      %s45 = sshll.u32 [#allocation9], 4
      %s46 = int_to_ptr.vmem [resolvable:$true] %s45
      %51 = dma.hbm_to_vmem [thread:$0]  %s2, 32768, %s46, [#allocation8], 1024, 1024, 64
    $region13: #{tpu_custom_call.1} parent=1 // pred_fallthru
      _
    // Predicated region
    $region14: #{tpu_custom_call.1} parent=1 // pred_check
      _
    $region15: #{tpu_custom_call.1} parent=1 // pred_check_branch
      %53 = sbr.rel (0) target = $region17
    $region16: #{tpu_custom_call.1} parent=1 // pred_region
      _
    $region17: #{tpu_custom_call.1} parent=1 // pred_fallthru
      _
    // Predicated region
    $region18: #{tpu_custom_call.1} parent=1 // pred_check
      _
    $region19: #{tpu_custom_call.1} parent=1 // pred_check_branch
      %55 = sbr.rel (0) target = $region21
    $region20: #{tpu_custom_call.1} parent=1 // pred_region
      %s57 = ssub.s32 32768, 32768
      %58 = vsyncadd [#allocation11], %s57
      %s59 = sshll.u32 [#allocation10], 4
      %s60 = int_to_ptr.vmem [resolvable:$true] %s59
      %65 = dma.hbm_to_vmem [thread:$0]  %s4, 32768, %s60, [#allocation11], 1024, 1024, 64
    $region21: #{tpu_custom_call.1} parent=1 // pred_fallthru
      _
    // Predicated region
    $region22: #{tpu_custom_call.1} parent=1 // pred_check
      _
    $region23: #{tpu_custom_call.1} parent=1 // pred_check_branch
      %67 = sbr.rel (0) target = $region25
    $region24: #{tpu_custom_call.1} parent=1 // pred_region
      %s69 = ssub.s32 32768, 32768
      %70 = vsyncadd [#allocation11], %s69
      %s71 = sshll.u32 [#allocation12], 4
      %s72 = int_to_ptr.vmem [resolvable:$true] %s71
      %77 = dma.hbm_to_vmem [thread:$0]  %s5, 32768, %s72, [#allocation11], 1024, 1024, 64
    $region25: #{tpu_custom_call.1} parent=1 // pred_fallthru
      _
    // Predicated region
    $region26: #{tpu_custom_call.1} parent=1 // pred_check
      _
    $region27: #{tpu_custom_call.1} parent=1 // pred_check_branch
      %79 = sbr.rel (0) target = $region29
    $region28: #{tpu_custom_call.1} parent=1 // pred_region
      _
    $region29: #{tpu_custom_call.1} parent=1 // pred_fallthru
      _
    // Predicated region
    $region30: #{tpu_custom_call.1} parent=1 // pred_check
      _
    $region31: #{tpu_custom_call.1} parent=1 // pred_check_branch
      %81 = sbr.rel (0) target = $region33
    $region32: #{tpu_custom_call.1} parent=1 // pred_region
      %82 = dma.done [#allocation5], 256
    $region33: #{tpu_custom_call.1} parent=1 // pred_fallthru
      _
    // Predicated region
    $region34: #{tpu_custom_call.1} parent=1 // pred_check
      _
    $region35: #{tpu_custom_call.1} parent=1 // pred_check_branch
      %84 = sbr.rel (0) target = $region37
    $region36: #{tpu_custom_call.1} parent=1 // pred_region
      %85 = dma.done [#allocation8], 16384
    $region37: #{tpu_custom_call.1} parent=1 // pred_fallthru
      _
    // Predicated region
    $region38: #{tpu_custom_call.1} parent=1 // pred_check
      _
    $region39: #{tpu_custom_call.1} parent=1 // pred_check_branch
      %87 = sbr.rel (0) target = $region41
    $region40: #{tpu_custom_call.1} parent=1 // pred_region
      %88 = dma.done [#allocation8], 32768
    $region41: #{tpu_custom_call.1} parent=1 // pred_fallthru
      _
    // Predicated region
    $region42: #{tpu_custom_call.1} parent=1 // pred_check
      _
    $region43: #{tpu_custom_call.1} parent=1 // pred_check_branch
      %90 = sbr.rel (0) target = $region45
    $region44: #{tpu_custom_call.1} parent=1 // pred_region
      %91 = dma.done [#allocation11], 32768
    $region45: #{tpu_custom_call.1} parent=1 // pred_fallthru
      _
    // Predicated region
    $region46: #{tpu_custom_call.1} parent=1 // pred_check
      _
    $region47: #{tpu_custom_call.1} parent=1 // pred_check_branch
      %93 = sbr.rel (0) target = $region49
    $region48: #{tpu_custom_call.1} parent=1 // pred_region
      %94 = dma.done [#allocation11], 32768
    $region49: #{tpu_custom_call.1} parent=1 // pred_fallthru
      _
    %v95 = vld [vmem:[#allocation4] sm:$0xff]
    %v96 = vld [vmem:[#allocation4 + $0x8] sm:$0xff]
    %v97 = vld [vmem:[#allocation7] sm:$0xff]
    %v98 = vld [vmem:[#allocation7 + $0x8] sm:$0xff]
    %v99 = vld [vmem:[#allocation7 + $0x10] sm:$0xff]
    %v100 = vld [vmem:[#allocation7 + $0x18] sm:$0xff]
    %v101 = vld [vmem:[#allocation7 + $0x20] sm:$0xff]
    %v102 = vld [vmem:[#allocation7 + $0x28] sm:$0xff]
    %v103 = vld [vmem:[#allocation7 + $0x30] sm:$0xff]
    %v104 = vld [vmem:[#allocation7 + $0x38] sm:$0xff]
    %v105 = vld [vmem:[#allocation7 + $0x40] sm:$0xff]
    %v106 = vld [vmem:[#allocation7 + $0x48] sm:$0xff]
    %v107 = vld [vmem:[#allocation7 + $0x50] sm:$0xff]
    %v108 = vld [vmem:[#allocation7 + $0x58] sm:$0xff]
    %v109 = vld [vmem:[#allocation7 + $0x60] sm:$0xff]
    %v110 = vld [vmem:[#allocation7 + $0x68] sm:$0xff]
    %v111 = vld [vmem:[#allocation7 + $0x70] sm:$0xff]
    %v112 = vld [vmem:[#allocation7 + $0x78] sm:$0xff]
    %v113 = vld [vmem:[#allocation7 + $0x80] sm:$0xff]
    %v114 = vld [vmem:[#allocation7 + $0x88] sm:$0xff]
    %v115 = vld [vmem:[#allocation7 + $0x90] sm:$0xff]
    %v116 = vld [vmem:[#allocation7 + $0x98] sm:$0xff]
    %v117 = vld [vmem:[#allocation7 + $0xa0] sm:$0xff]
    %v118 = vld [vmem:[#allocation7 + $0xa8] sm:$0xff]
    %v119 = vld [vmem:[#allocation7 + $0xb0] sm:$0xff]
    %v120 = vld [vmem:[#allocation7 + $0xb8] sm:$0xff]
    %v121 = vld [vmem:[#allocation7 + $0xc0] sm:$0xff]
    %v122 = vld [vmem:[#allocation7 + $0xc8] sm:$0xff]
    %v123 = vld [vmem:[#allocation7 + $0xd0] sm:$0xff]
    %v124 = vld [vmem:[#allocation7 + $0xd8] sm:$0xff]
    %v125 = vld [vmem:[#allocation7 + $0xe0] sm:$0xff]
    %v126 = vld [vmem:[#allocation7 + $0xe8] sm:$0xff]
    %v127 = vld [vmem:[#allocation7 + $0xf0] sm:$0xff]
    %v128 = vld [vmem:[#allocation7 + $0xf8] sm:$0xff]
    %v129 = vld [vmem:[#allocation7 + $0x100] sm:$0xff]
    %v130 = vld [vmem:[#allocation7 + $0x108] sm:$0xff]
    %v131 = vld [vmem:[#allocation7 + $0x110] sm:$0xff]
    %v132 = vld [vmem:[#allocation7 + $0x118] sm:$0xff]
    %v133 = vld [vmem:[#allocation7 + $0x120] sm:$0xff]
    %v134 = vld [vmem:[#allocation7 + $0x128] sm:$0xff]
    %v135 = vld [vmem:[#allocation7 + $0x130] sm:$0xff]
    %v136 = vld [vmem:[#allocation7 + $0x138] sm:$0xff]
    %v137 = vld [vmem:[#allocation7 + $0x140] sm:$0xff]
    %v138 = vld [vmem:[#allocation7 + $0x148] sm:$0xff]
    %v139 = vld [vmem:[#allocation7 + $0x150] sm:$0xff]
    %v140 = vld [vmem:[#allocation7 + $0x158] sm:$0xff]
    %v141 = vld [vmem:[#allocation7 + $0x160] sm:$0xff]
    %v142 = vld [vmem:[#allocation7 + $0x168] sm:$0xff]
    %v143 = vld [vmem:[#allocation7 + $0x170] sm:$0xff]
    %v144 = vld [vmem:[#allocation7 + $0x178] sm:$0xff]
    %v145 = vld [vmem:[#allocation7 + $0x180] sm:$0xff]
    %v146 = vld [vmem:[#allocation7 + $0x188] sm:$0xff]
    %v147 = vld [vmem:[#allocation7 + $0x190] sm:$0xff]
    %v148 = vld [vmem:[#allocation7 + $0x198] sm:$0xff]
    %v149 = vld [vmem:[#allocation7 + $0x1a0] sm:$0xff]
    %v150 = vld [vmem:[#allocation7 + $0x1a8] sm:$0xff]
    %v151 = vld [vmem:[#allocation7 + $0x1b0] sm:$0xff]
    %v152 = vld [vmem:[#allocation7 + $0x1b8] sm:$0xff]
    %v153 = vld [vmem:[#allocation7 + $0x1c0] sm:$0xff]
    %v154 = vld [vmem:[#allocation7 + $0x1c8] sm:$0xff]
    %v155 = vld [vmem:[#allocation7 + $0x1d0] sm:$0xff]
    %v156 = vld [vmem:[#allocation7 + $0x1d8] sm:$0xff]
    %v157 = vld [vmem:[#allocation7 + $0x1e0] sm:$0xff]
    %v158 = vld [vmem:[#allocation7 + $0x1e8] sm:$0xff]
    %v159 = vld [vmem:[#allocation7 + $0x1f0] sm:$0xff]
    %v160 = vld [vmem:[#allocation7 + $0x1f8] sm:$0xff]
    %v161 = vld [vmem:[#allocation7 + $0x200] sm:$0xff]
    %v162 = vld [vmem:[#allocation7 + $0x208] sm:$0xff]
    %v163 = vld [vmem:[#allocation7 + $0x210] sm:$0xff]
    %v164 = vld [vmem:[#allocation7 + $0x218] sm:$0xff]
    %v165 = vld [vmem:[#allocation7 + $0x220] sm:$0xff]
    %v166 = vld [vmem:[#allocation7 + $0x228] sm:$0xff]
    %v167 = vld [vmem:[#allocation7 + $0x230] sm:$0xff]
    %v168 = vld [vmem:[#allocation7 + $0x238] sm:$0xff]
    %v169 = vld [vmem:[#allocation7 + $0x240] sm:$0xff]
    %v170 = vld [vmem:[#allocation7 + $0x248] sm:$0xff]
    %v171 = vld [vmem:[#allocation7 + $0x250] sm:$0xff]
    %v172 = vld [vmem:[#allocation7 + $0x258] sm:$0xff]
    %v173 = vld [vmem:[#allocation7 + $0x260] sm:$0xff]
    %v174 = vld [vmem:[#allocation7 + $0x268] sm:$0xff]
    %v175 = vld [vmem:[#allocation7 + $0x270] sm:$0xff]
    %v176 = vld [vmem:[#allocation7 + $0x278] sm:$0xff]
    %v177 = vld [vmem:[#allocation7 + $0x280] sm:$0xff]
    %v178 = vld [vmem:[#allocation7 + $0x288] sm:$0xff]
    %v179 = vld [vmem:[#allocation7 + $0x290] sm:$0xff]
    %v180 = vld [vmem:[#allocation7 + $0x298] sm:$0xff]
    %v181 = vld [vmem:[#allocation7 + $0x2a0] sm:$0xff]
    %v182 = vld [vmem:[#allocation7 + $0x2a8] sm:$0xff]
    %v183 = vld [vmem:[#allocation7 + $0x2b0] sm:$0xff]
    %v184 = vld [vmem:[#allocation7 + $0x2b8] sm:$0xff]
    %v185 = vld [vmem:[#allocation7 + $0x2c0] sm:$0xff]
    %v186 = vld [vmem:[#allocation7 + $0x2c8] sm:$0xff]
    %v187 = vld [vmem:[#allocation7 + $0x2d0] sm:$0xff]
    %v188 = vld [vmem:[#allocation7 + $0x2d8] sm:$0xff]
    %v189 = vld [vmem:[#allocation7 + $0x2e0] sm:$0xff]
    %v190 = vld [vmem:[#allocation7 + $0x2e8] sm:$0xff]
    %v191 = vld [vmem:[#allocation7 + $0x2f0] sm:$0xff]
    %v192 = vld [vmem:[#allocation7 + $0x2f8] sm:$0xff]
    %v193 = vld [vmem:[#allocation7 + $0x300] sm:$0xff]
    %v194 = vld [vmem:[#allocation7 + $0x308] sm:$0xff]
    %v195 = vld [vmem:[#allocation7 + $0x310] sm:$0xff]
    %v196 = vld [vmem:[#allocation7 + $0x318] sm:$0xff]
    %v197 = vld [vmem:[#allocation7 + $0x320] sm:$0xff]
    %v198 = vld [vmem:[#allocation7 + $0x328] sm:$0xff]
    %v199 = vld [vmem:[#allocation7 + $0x330] sm:$0xff]
    %v200 = vld [vmem:[#allocation7 + $0x338] sm:$0xff]
    %v201 = vld [vmem:[#allocation7 + $0x340] sm:$0xff]
    %v202 = vld [vmem:[#allocation7 + $0x348] sm:$0xff]
    %v203 = vld [vmem:[#allocation7 + $0x350] sm:$0xff]
    %v204 = vld [vmem:[#allocation7 + $0x358] sm:$0xff]
    %v205 = vld [vmem:[#allocation7 + $0x360] sm:$0xff]
    %v206 = vld [vmem:[#allocation7 + $0x368] sm:$0xff]
    %v207 = vld [vmem:[#allocation7 + $0x370] sm:$0xff]
    %v208 = vld [vmem:[#allocation7 + $0x378] sm:$0xff]
    %v209 = vld [vmem:[#allocation7 + $0x380] sm:$0xff]
    %v210 = vld [vmem:[#allocation7 + $0x388] sm:$0xff]
    %v211 = vld [vmem:[#allocation7 + $0x390] sm:$0xff]
    %v212 = vld [vmem:[#allocation7 + $0x398] sm:$0xff]
    %v213 = vld [vmem:[#allocation7 + $0x3a0] sm:$0xff]
    %v214 = vld [vmem:[#allocation7 + $0x3a8] sm:$0xff]
    %v215 = vld [vmem:[#allocation7 + $0x3b0] sm:$0xff]
    %v216 = vld [vmem:[#allocation7 + $0x3b8] sm:$0xff]
    %v217 = vld [vmem:[#allocation7 + $0x3c0] sm:$0xff]
    %v218 = vld [vmem:[#allocation7 + $0x3c8] sm:$0xff]
    %v219 = vld [vmem:[#allocation7 + $0x3d0] sm:$0xff]
    %v220 = vld [vmem:[#allocation7 + $0x3d8] sm:$0xff]
    %v221 = vld [vmem:[#allocation7 + $0x3e0] sm:$0xff]
    %v222 = vld [vmem:[#allocation7 + $0x3e8] sm:$0xff]
    %v223 = vld [vmem:[#allocation7 + $0x3f0] sm:$0xff]
    %v224 = vld [vmem:[#allocation7 + $0x3f8] sm:$0xff]
    %v225 = vld [vmem:[%s3] sm:$0xff]
    %v227 = vlaneseq
    %v228 = vshrl.u32 %v227, 7
    %v229 = vsub.s32 0, %v228
    %v230 = vrot.slane %v225, %v229
    %v231 = vlaneseq
    %v232 = vshrl.u32 %v231, 7
    %v233 = vsub.s32 1, %v232
    %v234 = vrot.slane %v225, %v233
    %v235 = vlaneseq
    %v236 = vshrl.u32 %v235, 7
    %v237 = vsub.s32 2, %v236
    %v238 = vrot.slane %v225, %v237
    %v239 = vlaneseq
    %v240 = vshrl.u32 %v239, 7
    %v241 = vsub.s32 3, %v240
    %v242 = vrot.slane %v225, %v241
    %v243 = vlaneseq
    %v244 = vshrl.u32 %v243, 7
    %v245 = vsub.s32 4, %v244
    %v246 = vrot.slane %v225, %v245
    %v247 = vlaneseq
    %v248 = vshrl.u32 %v247, 7
    %v249 = vsub.s32 5, %v248
    %v250 = vrot.slane %v225, %v249
    %v251 = vlaneseq
    %v252 = vshrl.u32 %v251, 7
    %v253 = vsub.s32 6, %v252
    %v254 = vrot.slane %v225, %v253
    %v255 = vlaneseq
    %v256 = vshrl.u32 %v255, 7
    %v257 = vsub.s32 7, %v256
    %v258 = vrot.slane %v225, %v257
    %267 = vmatprep.subr.mxu0 %v98
    %268 = vmatpush1.msra.mxu0 %v97
    %269 = vmatprep.subr.mxu0 %v106
    %270 = vmatpush1.msra.mxu0 %v105
    %271 = vmatprep.subr.mxu0 %v114
    %272 = vmatpush1.msra.mxu0 %v113
    %273 = vmatprep.subr.mxu0 %v122
    %274 = vmatpush1.msra.mxu0 %v121
    %275 = vmatprep.subr.mxu0 %v130
    %276 = vmatpush1.msra.mxu0 %v129
    %277 = vmatprep.subr.mxu0 %v138
    %278 = vmatpush1.msra.mxu0 %v137
    %279 = vmatprep.subr.mxu0 %v146
    %280 = vmatpush1.msra.mxu0 %v145
    %281 = vmatprep.subr.mxu0 %v154
    %282 = vmatpush1.msra.mxu0 %v153
    %283 = vmatprep.subr.mxu0 %v162
    %284 = vmatpush1.msra.mxu0 %v161
    %285 = vmatprep.subr.mxu0 %v170
    %286 = vmatpush1.msra.mxu0 %v169
    %287 = vmatprep.subr.mxu0 %v178
    %288 = vmatpush1.msra.mxu0 %v177
    %289 = vmatprep.subr.mxu0 %v186
    %290 = vmatpush1.msra.mxu0 %v185
    %291 = vmatprep.subr.mxu0 %v194
    %292 = vmatpush1.msra.mxu0 %v193
    %293 = vmatprep.subr.mxu0 %v202
    %294 = vmatpush1.msra.mxu0 %v201
    %295 = vmatprep.subr.mxu0 %v210
    %296 = vmatpush1.msra.mxu0 %v209
    %297 = vmatprep.subr.mxu0 %v218
    %298 = vmatpush1.msra.mxu0 %v217
    %299 = vmatprep.subr.mxu0 0.0
    %300 = vmatpush1.msra.mxu0 0.0
    %301 = vmatprep.subr.mxu0 0.0
    %302 = vmatpush1.msra.mxu0 0.0
    %303 = vmatprep.subr.mxu0 0.0
    %304 = vmatpush1.msra.mxu0 0.0
    %305 = vmatprep.subr.mxu0 0.0
    %306 = vmatpush1.msra.mxu0 0.0
    %307 = vmatprep.subr.mxu0 0.0
    %308 = vmatpush1.msra.mxu0 0.0
    %309 = vmatprep.subr.mxu0 0.0
    %310 = vmatpush1.msra.mxu0 0.0
    %311 = vmatprep.subr.mxu0 0.0
    %312 = vmatpush1.msra.mxu0 0.0
    %313 = vmatprep.subr.mxu0 0.0
    %314 = vmatpush1.msra.mxu0 0.0
    %315 = vmatprep.subr.mxu0 0.0
    %316 = vmatpush1.msra.mxu0 0.0
    %317 = vmatprep.subr.mxu0 0.0
    %318 = vmatpush1.msra.mxu0 0.0
    %319 = vmatprep.subr.mxu0 0.0
    %320 = vmatpush1.msra.mxu0 0.0
    %321 = vmatprep.subr.mxu0 0.0
    %322 = vmatpush1.msra.mxu0 0.0
    %323 = vmatprep.subr.mxu0 0.0
    %324 = vmatpush1.msra.mxu0 0.0
    %325 = vmatprep.subr.mxu0 0.0
    %326 = vmatpush1.msra.mxu0 0.0
    %327 = vmatprep.subr.mxu0 0.0
    %328 = vmatpush1.msra.mxu0 0.0
    %329 = vmatprep.subr.mxu0 0.0
    %330 = vmatpush1.msra.mxu0 0.0
    %331 = vmatprep.mubr.f32.mxu0 0.0
    %332 = vmatmul.mubr.f32.gmra.mrb[0].mxu0 %v95
    %v333 = vpop.f32.mrb[0].mxu0
    %v334 = vadd.f32 %v230, %v333
    %v335 = vpop.f32.mrb[0].mxu0
    %v336 = vadd.f32 %v234, %v335
    %337 = vmatprep.mubr.f32.mxu0 0.0
    %338 = vmatmul.mubr.f32.gmra.mrb[0].mxu0 %v96
    %v339 = vpop.f32.mrb[0].mxu0
    %v340 = vadd.f32 %v230, %v339
    %v341 = vpop.f32.mrb[0].mxu0
    %v342 = vadd.f32 %v234, %v341
    %343 = vdwg.mxu0
    %344 = vmatprep.subr.mxu0 %v100
    %345 = vmatpush1.msra.mxu0 %v99
    %346 = vmatprep.subr.mxu0 %v108
    %347 = vmatpush1.msra.mxu0 %v107
    %348 = vmatprep.subr.mxu0 %v116
    %349 = vmatpush1.msra.mxu0 %v115
    %350 = vmatprep.subr.mxu0 %v124
    %351 = vmatpush1.msra.mxu0 %v123
    %352 = vmatprep.subr.mxu0 %v132
    %353 = vmatpush1.msra.mxu0 %v131
    %354 = vmatprep.subr.mxu0 %v140
    %355 = vmatpush1.msra.mxu0 %v139
    %356 = vmatprep.subr.mxu0 %v148
    %357 = vmatpush1.msra.mxu0 %v147
    %358 = vmatprep.subr.mxu0 %v156
    %359 = vmatpush1.msra.mxu0 %v155
    %360 = vmatprep.subr.mxu0 %v164
    %361 = vmatpush1.msra.mxu0 %v163
    %362 = vmatprep.subr.mxu0 %v172
    %363 = vmatpush1.msra.mxu0 %v171
    %364 = vmatprep.subr.mxu0 %v180
    %365 = vmatpush1.msra.mxu0 %v179
    %366 = vmatprep.subr.mxu0 %v188
    %367 = vmatpush1.msra.mxu0 %v187
    %368 = vmatprep.subr.mxu0 %v196
    %369 = vmatpush1.msra.mxu0 %v195
    %370 = vmatprep.subr.mxu0 %v204
    %371 = vmatpush1.msra.mxu0 %v203
    %372 = vmatprep.subr.mxu0 %v212
    %373 = vmatpush1.msra.mxu0 %v211
    %374 = vmatprep.subr.mxu0 %v220
    %375 = vmatpush1.msra.mxu0 %v219
    %376 = vmatprep.subr.mxu0 0.0
    %377 = vmatpush1.msra.mxu0 0.0
    %378 = vmatprep.subr.mxu0 0.0
    %379 = vmatpush1.msra.mxu0 0.0
    %380 = vmatprep.subr.mxu0 0.0
    %381 = vmatpush1.msra.mxu0 0.0
    %382 = vmatprep.subr.mxu0 0.0
    %383 = vmatpush1.msra.mxu0 0.0
    %384 = vmatprep.subr.mxu0 0.0
    %385 = vmatpush1.msra.mxu0 0.0
    %386 = vmatprep.subr.mxu0 0.0
    %387 = vmatpush1.msra.mxu0 0.0
    %388 = vmatprep.subr.mxu0 0.0
    %389 = vmatpush1.msra.mxu0 0.0
    %390 = vmatprep.subr.mxu0 0.0
    %391 = vmatpush1.msra.mxu0 0.0
    %392 = vmatprep.subr.mxu0 0.0
    %393 = vmatpush1.msra.mxu0 0.0
    %394 = vmatprep.subr.mxu0 0.0
    %395 = vmatpush1.msra.mxu0 0.0
    %396 = vmatprep.subr.mxu0 0.0
    %397 = vmatpush1.msra.mxu0 0.0
    %398 = vmatprep.subr.mxu0 0.0
    %399 = vmatpush1.msra.mxu0 0.0
    %400 = vmatprep.subr.mxu0 0.0
    %401 = vmatpush1.msra.mxu0 0.0
    %402 = vmatprep.subr.mxu0 0.0
    %403 = vmatpush1.msra.mxu0 0.0
    %404 = vmatprep.subr.mxu0 0.0
    %405 = vmatpush1.msra.mxu0 0.0
    %406 = vmatprep.subr.mxu0 0.0
    %407 = vmatpush1.msra.mxu0 0.0
    %408 = vmatprep.mubr.f32.mxu0 0.0
    %409 = vmatmul.mubr.f32.gmra.mrb[0].mxu0 %v95
    %v410 = vpop.f32.mrb[0].mxu0
    %v411 = vadd.f32 %v238, %v410
    %v412 = vpop.f32.mrb[0].mxu0
    %v413 = vadd.f32 %v242, %v412
    %414 = vmatprep.mubr.f32.mxu0 0.0
    %415 = vmatmul.mubr.f32.gmra.mrb[0].mxu0 %v96
    %v416 = vpop.f32.mrb[0].mxu0
    %v417 = vadd.f32 %v238, %v416
    %v418 = vpop.f32.mrb[0].mxu0
    %v419 = vadd.f32 %v242, %v418
    %420 = vdwg.mxu0
    %421 = vmatprep.subr.mxu0 %v102
    %422 = vmatpush1.msra.mxu0 %v101
    %423 = vmatprep.subr.mxu0 %v110
    %424 = vmatpush1.msra.mxu0 %v109
    %425 = vmatprep.subr.mxu0 %v118
    %426 = vmatpush1.msra.mxu0 %v117
    %427 = vmatprep.subr.mxu0 %v126
    %428 = vmatpush1.msra.mxu0 %v125
    %429 = vmatprep.subr.mxu0 %v134
    %430 = vmatpush1.msra.mxu0 %v133
    %431 = vmatprep.subr.mxu0 %v142
    %432 = vmatpush1.msra.mxu0 %v141
    %433 = vmatprep.subr.mxu0 %v150
    %434 = vmatpush1.msra.mxu0 %v149
    %435 = vmatprep.subr.mxu0 %v158
    %436 = vmatpush1.msra.mxu0 %v157
    %437 = vmatprep.subr.mxu0 %v166
    %438 = vmatpush1.msra.mxu0 %v165
    %439 = vmatprep.subr.mxu0 %v174
    %440 = vmatpush1.msra.mxu0 %v173
    %441 = vmatprep.subr.mxu0 %v182
    %442 = vmatpush1.msra.mxu0 %v181
    %443 = vmatprep.subr.mxu0 %v190
    %444 = vmatpush1.msra.mxu0 %v189
    %445 = vmatprep.subr.mxu0 %v198
    %446 = vmatpush1.msra.mxu0 %v197
    %447 = vmatprep.subr.mxu0 %v206
    %448 = vmatpush1.msra.mxu0 %v205
    %449 = vmatprep.subr.mxu0 %v214
    %450 = vmatpush1.msra.mxu0 %v213
    %451 = vmatprep.subr.mxu0 %v222
    %452 = vmatpush1.msra.mxu0 %v221
    %453 = vmatprep.subr.mxu0 0.0
    %454 = vmatpush1.msra.mxu0 0.0
    %455 = vmatprep.subr.mxu0 0.0
    %456 = vmatpush1.msra.mxu0 0.0
    %457 = vmatprep.subr.mxu0 0.0
    %458 = vmatpush1.msra.mxu0 0.0
    %459 = vmatprep.subr.mxu0 0.0
    %460 = vmatpush1.msra.mxu0 0.0
    %461 = vmatprep.subr.mxu0 0.0
    %462 = vmatpush1.msra.mxu0 0.0
    %463 = vmatprep.subr.mxu0 0.0
    %464 = vmatpush1.msra.mxu0 0.0
    %465 = vmatprep.subr.mxu0 0.0
    %466 = vmatpush1.msra.mxu0 0.0
    %467 = vmatprep.subr.mxu0 0.0
    %468 = vmatpush1.msra.mxu0 0.0
    %469 = vmatprep.subr.mxu0 0.0
    %470 = vmatpush1.msra.mxu0 0.0
    %471 = vmatprep.subr.mxu0 0.0
    %472 = vmatpush1.msra.mxu0 0.0
    %473 = vmatprep.subr.mxu0 0.0
    %474 = vmatpush1.msra.mxu0 0.0
    %475 = vmatprep.subr.mxu0 0.0
    %476 = vmatpush1.msra.mxu0 0.0
    %477 = vmatprep.subr.mxu0 0.0
    %478 = vmatpush1.msra.mxu0 0.0
    %479 = vmatprep.subr.mxu0 0.0
    %480 = vmatpush1.msra.mxu0 0.0
    %481 = vmatprep.subr.mxu0 0.0
    %482 = vmatpush1.msra.mxu0 0.0
    %483 = vmatprep.subr.mxu0 0.0
    %484 = vmatpush1.msra.mxu0 0.0
    %485 = vmatprep.mubr.f32.mxu0 0.0
    %486 = vmatmul.mubr.f32.gmra.mrb[0].mxu0 %v95
    %v487 = vpop.f32.mrb[0].mxu0
    %v488 = vadd.f32 %v246, %v487
    %v489 = vpop.f32.mrb[0].mxu0
    %v490 = vadd.f32 %v250, %v489
    %491 = vmatprep.mubr.f32.mxu0 0.0
    %492 = vmatmul.mubr.f32.gmra.mrb[0].mxu0 %v96
    %v493 = vpop.f32.mrb[0].mxu0
    %v494 = vadd.f32 %v246, %v493
    %v495 = vpop.f32.mrb[0].mxu0
    %v496 = vadd.f32 %v250, %v495
    %497 = vdwg.mxu0
    %498 = vmatprep.subr.mxu0 %v104
    %499 = vmatpush1.msra.mxu0 %v103
    %500 = vmatprep.subr.mxu0 %v112
    %501 = vmatpush1.msra.mxu0 %v111
    %502 = vmatprep.subr.mxu0 %v120
    %503 = vmatpush1.msra.mxu0 %v119
    %504 = vmatprep.subr.mxu0 %v128
    %505 = vmatpush1.msra.mxu0 %v127
    %506 = vmatprep.subr.mxu0 %v136
    %507 = vmatpush1.msra.mxu0 %v135
    %508 = vmatprep.subr.mxu0 %v144
    %509 = vmatpush1.msra.mxu0 %v143
    %510 = vmatprep.subr.mxu0 %v152
    %511 = vmatpush1.msra.mxu0 %v151
    %512 = vmatprep.subr.mxu0 %v160
    %513 = vmatpush1.msra.mxu0 %v159
    %514 = vmatprep.subr.mxu0 %v168
    %515 = vmatpush1.msra.mxu0 %v167
    %516 = vmatprep.subr.mxu0 %v176
    %517 = vmatpush1.msra.mxu0 %v175
    %518 = vmatprep.subr.mxu0 %v184
    %519 = vmatpush1.msra.mxu0 %v183
    %520 = vmatprep.subr.mxu0 %v192
    %521 = vmatpush1.msra.mxu0 %v191
    %522 = vmatprep.subr.mxu0 %v200
    %523 = vmatpush1.msra.mxu0 %v199
    %524 = vmatprep.subr.mxu0 %v208
    %525 = vmatpush1.msra.mxu0 %v207
    %526 = vmatprep.subr.mxu0 %v216
    %527 = vmatpush1.msra.mxu0 %v215
    %528 = vmatprep.subr.mxu0 %v224
    %529 = vmatpush1.msra.mxu0 %v223
    %530 = vmatprep.subr.mxu0 0.0
    %531 = vmatpush1.msra.mxu0 0.0
    %532 = vmatprep.subr.mxu0 0.0
    %533 = vmatpush1.msra.mxu0 0.0
    %534 = vmatprep.subr.mxu0 0.0
    %535 = vmatpush1.msra.mxu0 0.0
    %536 = vmatprep.subr.mxu0 0.0
    %537 = vmatpush1.msra.mxu0 0.0
    %538 = vmatprep.subr.mxu0 0.0
    %539 = vmatpush1.msra.mxu0 0.0
    %540 = vmatprep.subr.mxu0 0.0
    %541 = vmatpush1.msra.mxu0 0.0
    %542 = vmatprep.subr.mxu0 0.0
    %543 = vmatpush1.msra.mxu0 0.0
    %544 = vmatprep.subr.mxu0 0.0
    %545 = vmatpush1.msra.mxu0 0.0
    %546 = vmatprep.subr.mxu0 0.0
    %547 = vmatpush1.msra.mxu0 0.0
    %548 = vmatprep.subr.mxu0 0.0
    %549 = vmatpush1.msra.mxu0 0.0
    %550 = vmatprep.subr.mxu0 0.0
    %551 = vmatpush1.msra.mxu0 0.0
    %552 = vmatprep.subr.mxu0 0.0
    %553 = vmatpush1.msra.mxu0 0.0
    %554 = vmatprep.subr.mxu0 0.0
    %555 = vmatpush1.msra.mxu0 0.0
    %556 = vmatprep.subr.mxu0 0.0
    %557 = vmatpush1.msra.mxu0 0.0
    %558 = vmatprep.subr.mxu0 0.0
    %559 = vmatpush1.msra.mxu0 0.0
    %560 = vmatprep.subr.mxu0 0.0
    %561 = vmatpush1.msra.mxu0 0.0
    %562 = vmatprep.mubr.f32.mxu0 0.0
    %563 = vmatmul.mubr.f32.gmra.mrb[0].mxu0 %v95
    %v564 = vpop.f32.mrb[0].mxu0
    %v565 = vadd.f32 %v254, %v564
    %v566 = vpop.f32.mrb[0].mxu0
    %v567 = vadd.f32 %v258, %v566
    %568 = vmatprep.mubr.f32.mxu0 0.0
    %569 = vmatmul.mubr.f32.gmra.mrb[0].mxu0 %v96
    %v570 = vpop.f32.mrb[0].mxu0
    %v571 = vadd.f32 %v254, %v570
    %v572 = vpop.f32.mrb[0].mxu0
    %v573 = vadd.f32 %v258, %v572
    %574 = vdwg.mxu0
    %575 = vst [vmem:[#allocation2] sm:$0xff] %v334
    %576 = vst [vmem:[#allocation2 + $0x8] sm:$0xff] %v336
    %577 = vst [vmem:[#allocation2 + $0x10] sm:$0xff] %v411
    %578 = vst [vmem:[#allocation2 + $0x18] sm:$0xff] %v413
    %579 = vst [vmem:[#allocation2 + $0x20] sm:$0xff] %v488
    %580 = vst [vmem:[#allocation2 + $0x28] sm:$0xff] %v490
    %581 = vst [vmem:[#allocation2 + $0x30] sm:$0xff] %v565
    %582 = vst [vmem:[#allocation2 + $0x38] sm:$0xff] %v567
    %583 = vst [vmem:[#allocation2 + $0x40] sm:$0xff] %v340
    %584 = vst [vmem:[#allocation2 + $0x48] sm:$0xff] %v342
    %585 = vst [vmem:[#allocation2 + $0x50] sm:$0xff] %v417
    %586 = vst [vmem:[#allocation2 + $0x58] sm:$0xff] %v419
    %587 = vst [vmem:[#allocation2 + $0x60] sm:$0xff] %v494
    %588 = vst [vmem:[#allocation2 + $0x68] sm:$0xff] %v496
    %589 = vst [vmem:[#allocation2 + $0x70] sm:$0xff] %v571
    %590 = vst [vmem:[#allocation2 + $0x78] sm:$0xff] %v573
    %v591 = vld [vmem:[#allocation9] sm:$0xff]
    %v592 = vld [vmem:[#allocation9 + $0x8] sm:$0xff]
    %v593 = vld [vmem:[#allocation9 + $0x10] sm:$0xff]
    %v594 = vld [vmem:[#allocation9 + $0x18] sm:$0xff]
    %v595 = vld [vmem:[#allocation9 + $0x20] sm:$0xff]
    %v596 = vld [vmem:[#allocation9 + $0x28] sm:$0xff]
    %v597 = vld [vmem:[#allocation9 + $0x30] sm:$0xff]
    %v598 = vld [vmem:[#allocation9 + $0x38] sm:$0xff]
    %v599 = vld [vmem:[#allocation9 + $0x40] sm:$0xff]
    %v600 = vld [vmem:[#allocation9 + $0x48] sm:$0xff]
    %v601 = vld [vmem:[#allocation9 + $0x50] sm:$0xff]
    %v602 = vld [vmem:[#allocation9 + $0x58] sm:$0xff]
    %v603 = vld [vmem:[#allocation9 + $0x60] sm:$0xff]
    %v604 = vld [vmem:[#allocation9 + $0x68] sm:$0xff]
    %v605 = vld [vmem:[#allocation9 + $0x70] sm:$0xff]
    %v606 = vld [vmem:[#allocation9 + $0x78] sm:$0xff]
    %v607 = vld [vmem:[#allocation9 + $0x80] sm:$0xff]
    %v608 = vld [vmem:[#allocation9 + $0x88] sm:$0xff]
    %v609 = vld [vmem:[#allocation9 + $0x90] sm:$0xff]
    %v610 = vld [vmem:[#allocation9 + $0x98] sm:$0xff]
    %v611 = vld [vmem:[#allocation9 + $0xa0] sm:$0xff]
    %v612 = vld [vmem:[#allocation9 + $0xa8] sm:$0xff]
    %v613 = vld [vmem:[#allocation9 + $0xb0] sm:$0xff]
    %v614 = vld [vmem:[#allocation9 + $0xb8] sm:$0xff]
    %v615 = vld [vmem:[#allocation9 + $0xc0] sm:$0xff]
    %v616 = vld [vmem:[#allocation9 + $0xc8] sm:$0xff]
    %v617 = vld [vmem:[#allocation9 + $0xd0] sm:$0xff]
    %v618 = vld [vmem:[#allocation9 + $0xd8] sm:$0xff]
    %v619 = vld [vmem:[#allocation9 + $0xe0] sm:$0xff]
    %v620 = vld [vmem:[#allocation9 + $0xe8] sm:$0xff]
    %v621 = vld [vmem:[#allocation9 + $0xf0] sm:$0xff]
    %v622 = vld [vmem:[#allocation9 + $0xf8] sm:$0xff]
    %v623 = vld [vmem:[#allocation9 + $0x100] sm:$0xff]
    %v624 = vld [vmem:[#allocation9 + $0x108] sm:$0xff]
    %v625 = vld [vmem:[#allocation9 + $0x110] sm:$0xff]
    %v626 = vld [vmem:[#allocation9 + $0x118] sm:$0xff]
    %v627 = vld [vmem:[#allocation9 + $0x120] sm:$0xff]
    %v628 = vld [vmem:[#allocation9 + $0x128] sm:$0xff]
    %v629 = vld [vmem:[#allocation9 + $0x130] sm:$0xff]
    %v630 = vld [vmem:[#allocation9 + $0x138] sm:$0xff]
    %v631 = vld [vmem:[#allocation9 + $0x140] sm:$0xff]
    %v632 = vld [vmem:[#allocation9 + $0x148] sm:$0xff]
    %v633 = vld [vmem:[#allocation9 + $0x150] sm:$0xff]
    %v634 = vld [vmem:[#allocation9 + $0x158] sm:$0xff]
    %v635 = vld [vmem:[#allocation9 + $0x160] sm:$0xff]
    %v636 = vld [vmem:[#allocation9 + $0x168] sm:$0xff]
    %v637 = vld [vmem:[#allocation9 + $0x170] sm:$0xff]
    %v638 = vld [vmem:[#allocation9 + $0x178] sm:$0xff]
    %v639 = vld [vmem:[#allocation9 + $0x180] sm:$0xff]
    %v640 = vld [vmem:[#allocation9 + $0x188] sm:$0xff]
    %v641 = vld [vmem:[#allocation9 + $0x190] sm:$0xff]
    %v642 = vld [vmem:[#allocation9 + $0x198] sm:$0xff]
    %v643 = vld [vmem:[#allocation9 + $0x1a0] sm:$0xff]
    %v644 = vld [vmem:[#allocation9 + $0x1a8] sm:$0xff]
    %v645 = vld [vmem:[#allocation9 + $0x1b0] sm:$0xff]
    %v646 = vld [vmem:[#allocation9 + $0x1b8] sm:$0xff]
    %v647 = vld [vmem:[#allocation9 + $0x1c0] sm:$0xff]
    %v648 = vld [vmem:[#allocation9 + $0x1c8] sm:$0xff]
    %v649 = vld [vmem:[#allocation9 + $0x1d0] sm:$0xff]
    %v650 = vld [vmem:[#allocation9 + $0x1d8] sm:$0xff]
    %v651 = vld [vmem:[#allocation9 + $0x1e0] sm:$0xff]
    %v652 = vld [vmem:[#allocation9 + $0x1e8] sm:$0xff]
    %v653 = vld [vmem:[#allocation9 + $0x1f0] sm:$0xff]
    %v654 = vld [vmem:[#allocation9 + $0x1f8] sm:$0xff]
    %v655 = vld [vmem:[#allocation9 + $0x200] sm:$0xff]
    %v656 = vld [vmem:[#allocation9 + $0x208] sm:$0xff]
    %v657 = vld [vmem:[#allocation9 + $0x210] sm:$0xff]
    %v658 = vld [vmem:[#allocation9 + $0x218] sm:$0xff]
    %v659 = vld [vmem:[#allocation9 + $0x220] sm:$0xff]
    %v660 = vld [vmem:[#allocation9 + $0x228] sm:$0xff]
    %v661 = vld [vmem:[#allocation9 + $0x230] sm:$0xff]
    %v662 = vld [vmem:[#allocation9 + $0x238] sm:$0xff]
    %v663 = vld [vmem:[#allocation9 + $0x240] sm:$0xff]
    %v664 = vld [vmem:[#allocation9 + $0x248] sm:$0xff]
    %v665 = vld [vmem:[#allocation9 + $0x250] sm:$0xff]
    %v666 = vld [vmem:[#allocation9 + $0x258] sm:$0xff]
    %v667 = vld [vmem:[#allocation9 + $0x260] sm:$0xff]
    %v668 = vld [vmem:[#allocation9 + $0x268] sm:$0xff]
    %v669 = vld [vmem:[#allocation9 + $0x270] sm:$0xff]
    %v670 = vld [vmem:[#allocation9 + $0x278] sm:$0xff]
    %v671 = vld [vmem:[#allocation9 + $0x280] sm:$0xff]
    %v672 = vld [vmem:[#allocation9 + $0x288] sm:$0xff]
    %v673 = vld [vmem:[#allocation9 + $0x290] sm:$0xff]
    %v674 = vld [vmem:[#allocation9 + $0x298] sm:$0xff]
    %v675 = vld [vmem:[#allocation9 + $0x2a0] sm:$0xff]
    %v676 = vld [vmem:[#allocation9 + $0x2a8] sm:$0xff]
    %v677 = vld [vmem:[#allocation9 + $0x2b0] sm:$0xff]
    %v678 = vld [vmem:[#allocation9 + $0x2b8] sm:$0xff]
    %v679 = vld [vmem:[#allocation9 + $0x2c0] sm:$0xff]
    %v680 = vld [vmem:[#allocation9 + $0x2c8] sm:$0xff]
    %v681 = vld [vmem:[#allocation9 + $0x2d0] sm:$0xff]
    %v682 = vld [vmem:[#allocation9 + $0x2d8] sm:$0xff]
    %v683 = vld [vmem:[#allocation9 + $0x2e0] sm:$0xff]
    %v684 = vld [vmem:[#allocation9 + $0x2e8] sm:$0xff]
    %v685 = vld [vmem:[#allocation9 + $0x2f0] sm:$0xff]
    %v686 = vld [vmem:[#allocation9 + $0x2f8] sm:$0xff]
    %v687 = vld [vmem:[#allocation9 + $0x300] sm:$0xff]
    %v688 = vld [vmem:[#allocation9 + $0x308] sm:$0xff]
    %v689 = vld [vmem:[#allocation9 + $0x310] sm:$0xff]
    %v690 = vld [vmem:[#allocation9 + $0x318] sm:$0xff]
    %v691 = vld [vmem:[#allocation9 + $0x320] sm:$0xff]
    %v692 = vld [vmem:[#allocation9 + $0x328] sm:$0xff]
    %v693 = vld [vmem:[#allocation9 + $0x330] sm:$0xff]
    %v694 = vld [vmem:[#allocation9 + $0x338] sm:$0xff]
    %v695 = vld [vmem:[#allocation9 + $0x340] sm:$0xff]
    %v696 = vld [vmem:[#allocation9 + $0x348] sm:$0xff]
    %v697 = vld [vmem:[#allocation9 + $0x350] sm:$0xff]
    %v698 = vld [vmem:[#allocation9 + $0x358] sm:$0xff]
    %v699 = vld [vmem:[#allocation9 + $0x360] sm:$0xff]
    %v700 = vld [vmem:[#allocation9 + $0x368] sm:$0xff]
    %v701 = vld [vmem:[#allocation9 + $0x370] sm:$0xff]
    %v702 = vld [vmem:[#allocation9 + $0x378] sm:$0xff]
    %v703 = vld [vmem:[#allocation9 + $0x380] sm:$0xff]
    %v704 = vld [vmem:[#allocation9 + $0x388] sm:$0xff]
    %v705 = vld [vmem:[#allocation9 + $0x390] sm:$0xff]
    %v706 = vld [vmem:[#allocation9 + $0x398] sm:$0xff]
    %v707 = vld [vmem:[#allocation9 + $0x3a0] sm:$0xff]
    %v708 = vld [vmem:[#allocation9 + $0x3a8] sm:$0xff]
    %v709 = vld [vmem:[#allocation9 + $0x3b0] sm:$0xff]
    %v710 = vld [vmem:[#allocation9 + $0x3b8] sm:$0xff]
    %v711 = vld [vmem:[#allocation9 + $0x3c0] sm:$0xff]
    %v712 = vld [vmem:[#allocation9 + $0x3c8] sm:$0xff]
    %v713 = vld [vmem:[#allocation9 + $0x3d0] sm:$0xff]
    %v714 = vld [vmem:[#allocation9 + $0x3d8] sm:$0xff]
    %v715 = vld [vmem:[#allocation9 + $0x3e0] sm:$0xff]
    %v716 = vld [vmem:[#allocation9 + $0x3e8] sm:$0xff]
    %v717 = vld [vmem:[#allocation9 + $0x3f0] sm:$0xff]
    %v718 = vld [vmem:[#allocation9 + $0x3f8] sm:$0xff]
    %v719 = vld [vmem:[#allocation9 + $0x400] sm:$0xff]
    %v720 = vld [vmem:[#allocation9 + $0x408] sm:$0xff]
    %v721 = vld [vmem:[#allocation9 + $0x410] sm:$0xff]
    %v722 = vld [vmem:[#allocation9 + $0x418] sm:$0xff]
    %v723 = vld [vmem:[#allocation9 + $0x420] sm:$0xff]
    %v724 = vld [vmem:[#allocation9 + $0x428] sm:$0xff]
    %v725 = vld [vmem:[#allocation9 + $0x430] sm:$0xff]
    %v726 = vld [vmem:[#allocation9 + $0x438] sm:$0xff]
    %v727 = vld [vmem:[#allocation9 + $0x440] sm:$0xff]
    %v728 = vld [vmem:[#allocation9 + $0x448] sm:$0xff]
    %v729 = vld [vmem:[#allocation9 + $0x450] sm:$0xff]
    %v730 = vld [vmem:[#allocation9 + $0x458] sm:$0xff]
    %v731 = vld [vmem:[#allocation9 + $0x460] sm:$0xff]
    %v732 = vld [vmem:[#allocation9 + $0x468] sm:$0xff]
    %v733 = vld [vmem:[#allocation9 + $0x470] sm:$0xff]
    %v734 = vld [vmem:[#allocation9 + $0x478] sm:$0xff]
    %v735 = vld [vmem:[#allocation9 + $0x480] sm:$0xff]
    %v736 = vld [vmem:[#allocation9 + $0x488] sm:$0xff]
    %v737 = vld [vmem:[#allocation9 + $0x490] sm:$0xff]
    %v738 = vld [vmem:[#allocation9 + $0x498] sm:$0xff]
    %v739 = vld [vmem:[#allocation9 + $0x4a0] sm:$0xff]
    %v740 = vld [vmem:[#allocation9 + $0x4a8] sm:$0xff]
    %v741 = vld [vmem:[#allocation9 + $0x4b0] sm:$0xff]
    %v742 = vld [vmem:[#allocation9 + $0x4b8] sm:$0xff]
    %v743 = vld [vmem:[#allocation9 + $0x4c0] sm:$0xff]
    %v744 = vld [vmem:[#allocation9 + $0x4c8] sm:$0xff]
    %v745 = vld [vmem:[#allocation9 + $0x4d0] sm:$0xff]
    %v746 = vld [vmem:[#allocation9 + $0x4d8] sm:$0xff]
    %v747 = vld [vmem:[#allocation9 + $0x4e0] sm:$0xff]
    %v748 = vld [vmem:[#allocation9 + $0x4e8] sm:$0xff]
    %v749 = vld [vmem:[#allocation9 + $0x4f0] sm:$0xff]
    %v750 = vld [vmem:[#allocation9 + $0x4f8] sm:$0xff]
    %v751 = vld [vmem:[#allocation9 + $0x500] sm:$0xff]
    %v752 = vld [vmem:[#allocation9 + $0x508] sm:$0xff]
    %v753 = vld [vmem:[#allocation9 + $0x510] sm:$0xff]
    %v754 = vld [vmem:[#allocation9 + $0x518] sm:$0xff]
    %v755 = vld [vmem:[#allocation9 + $0x520] sm:$0xff]
    %v756 = vld [vmem:[#allocation9 + $0x528] sm:$0xff]
    %v757 = vld [vmem:[#allocation9 + $0x530] sm:$0xff]
    %v758 = vld [vmem:[#allocation9 + $0x538] sm:$0xff]
    %v759 = vld [vmem:[#allocation9 + $0x540] sm:$0xff]
    %v760 = vld [vmem:[#allocation9 + $0x548] sm:$0xff]
    %v761 = vld [vmem:[#allocation9 + $0x550] sm:$0xff]
    %v762 = vld [vmem:[#allocation9 + $0x558] sm:$0xff]
    %v763 = vld [vmem:[#allocation9 + $0x560] sm:$0xff]
    %v764 = vld [vmem:[#allocation9 + $0x568] sm:$0xff]
    %v765 = vld [vmem:[#allocation9 + $0x570] sm:$0xff]
    %v766 = vld [vmem:[#allocation9 + $0x578] sm:$0xff]
    %v767 = vld [vmem:[#allocation9 + $0x580] sm:$0xff]
    %v768 = vld [vmem:[#allocation9 + $0x588] sm:$0xff]
    %v769 = vld [vmem:[#allocation9 + $0x590] sm:$0xff]
    %v770 = vld [vmem:[#allocation9 + $0x598] sm:$0xff]
    %v771 = vld [vmem:[#allocation9 + $0x5a0] sm:$0xff]
    %v772 = vld [vmem:[#allocation9 + $0x5a8] sm:$0xff]
    %v773 = vld [vmem:[#allocation9 + $0x5b0] sm:$0xff]
    %v774 = vld [vmem:[#allocation9 + $0x5b8] sm:$0xff]
    %v775 = vld [vmem:[#allocation9 + $0x5c0] sm:$0xff]
    %v776 = vld [vmem:[#allocation9 + $0x5c8] sm:$0xff]
    %v777 = vld [vmem:[#allocation9 + $0x5d0] sm:$0xff]
    %v778 = vld [vmem:[#allocation9 + $0x5d8] sm:$0xff]
    %v779 = vld [vmem:[#allocation9 + $0x5e0] sm:$0xff]
    %v780 = vld [vmem:[#allocation9 + $0x5e8] sm:$0xff]
    %v781 = vld [vmem:[#allocation9 + $0x5f0] sm:$0xff]
    %v782 = vld [vmem:[#allocation9 + $0x5f8] sm:$0xff]
    %v783 = vld [vmem:[#allocation9 + $0x600] sm:$0xff]
    %v784 = vld [vmem:[#allocation9 + $0x608] sm:$0xff]
    %v785 = vld [vmem:[#allocation9 + $0x610] sm:$0xff]
    %v786 = vld [vmem:[#allocation9 + $0x618] sm:$0xff]
    %v787 = vld [vmem:[#allocation9 + $0x620] sm:$0xff]
    %v788 = vld [vmem:[#allocation9 + $0x628] sm:$0xff]
    %v789 = vld [vmem:[#allocation9 + $0x630] sm:$0xff]
    %v790 = vld [vmem:[#allocation9 + $0x638] sm:$0xff]
    %v791 = vld [vmem:[#allocation9 + $0x640] sm:$0xff]
    %v792 = vld [vmem:[#allocation9 + $0x648] sm:$0xff]
    %v793 = vld [vmem:[#allocation9 + $0x650] sm:$0xff]
    %v794 = vld [vmem:[#allocation9 + $0x658] sm:$0xff]
    %v795 = vld [vmem:[#allocation9 + $0x660] sm:$0xff]
    %v796 = vld [vmem:[#allocation9 + $0x668] sm:$0xff]
    %v797 = vld [vmem:[#allocation9 + $0x670] sm:$0xff]
    %v798 = vld [vmem:[#allocation9 + $0x678] sm:$0xff]
    %v799 = vld [vmem:[#allocation9 + $0x680] sm:$0xff]
    %v800 = vld [vmem:[#allocation9 + $0x688] sm:$0xff]
    %v801 = vld [vmem:[#allocation9 + $0x690] sm:$0xff]
    %v802 = vld [vmem:[#allocation9 + $0x698] sm:$0xff]
    %v803 = vld [vmem:[#allocation9 + $0x6a0] sm:$0xff]
    %v804 = vld [vmem:[#allocation9 + $0x6a8] sm:$0xff]
    %v805 = vld [vmem:[#allocation9 + $0x6b0] sm:$0xff]
    %v806 = vld [vmem:[#allocation9 + $0x6b8] sm:$0xff]
    %v807 = vld [vmem:[#allocation9 + $0x6c0] sm:$0xff]
    %v808 = vld [vmem:[#allocation9 + $0x6c8] sm:$0xff]
    %v809 = vld [vmem:[#allocation9 + $0x6d0] sm:$0xff]
    %v810 = vld [vmem:[#allocation9 + $0x6d8] sm:$0xff]
    %v811 = vld [vmem:[#allocation9 + $0x6e0] sm:$0xff]
    %v812 = vld [vmem:[#allocation9 + $0x6e8] sm:$0xff]
    %v813 = vld [vmem:[#allocation9 + $0x6f0] sm:$0xff]
    %v814 = vld [vmem:[#allocation9 + $0x6f8] sm:$0xff]
    %v815 = vld [vmem:[#allocation9 + $0x700] sm:$0xff]
    %v816 = vld [vmem:[#allocation9 + $0x708] sm:$0xff]
    %v817 = vld [vmem:[#allocation9 + $0x710] sm:$0xff]
    %v818 = vld [vmem:[#allocation9 + $0x718] sm:$0xff]
    %v819 = vld [vmem:[#allocation9 + $0x720] sm:$0xff]
    %v820 = vld [vmem:[#allocation9 + $0x728] sm:$0xff]
    %v821 = vld [vmem:[#allocation9 + $0x730] sm:$0xff]
    %v822 = vld [vmem:[#allocation9 + $0x738] sm:$0xff]
    %v823 = vld [vmem:[#allocation9 + $0x740] sm:$0xff]
    %v824 = vld [vmem:[#allocation9 + $0x748] sm:$0xff]
    %v825 = vld [vmem:[#allocation9 + $0x750] sm:$0xff]
    %v826 = vld [vmem:[#allocation9 + $0x758] sm:$0xff]
    %v827 = vld [vmem:[#allocation9 + $0x760] sm:$0xff]
    %v828 = vld [vmem:[#allocation9 + $0x768] sm:$0xff]
    %v829 = vld [vmem:[#allocation9 + $0x770] sm:$0xff]
    %v830 = vld [vmem:[#allocation9 + $0x778] sm:$0xff]
    %v831 = vld [vmem:[#allocation9 + $0x780] sm:$0xff]
    %v832 = vld [vmem:[#allocation9 + $0x788] sm:$0xff]
    %v833 = vld [vmem:[#allocation9 + $0x790] sm:$0xff]
    %v834 = vld [vmem:[#allocation9 + $0x798] sm:$0xff]
    %v835 = vld [vmem:[#allocation9 + $0x7a0] sm:$0xff]
    %v836 = vld [vmem:[#allocation9 + $0x7a8] sm:$0xff]
    %v837 = vld [vmem:[#allocation9 + $0x7b0] sm:$0xff]
    %v838 = vld [vmem:[#allocation9 + $0x7b8] sm:$0xff]
    %v839 = vld [vmem:[#allocation9 + $0x7c0] sm:$0xff]
    %v840 = vld [vmem:[#allocation9 + $0x7c8] sm:$0xff]
    %v841 = vld [vmem:[#allocation9 + $0x7d0] sm:$0xff]
    %v842 = vld [vmem:[#allocation9 + $0x7d8] sm:$0xff]
    %v843 = vld [vmem:[#allocation9 + $0x7e0] sm:$0xff]
    %v844 = vld [vmem:[#allocation9 + $0x7e8] sm:$0xff]
    %v845 = vld [vmem:[#allocation9 + $0x7f0] sm:$0xff]
    %v846 = vld [vmem:[#allocation9 + $0x7f8] sm:$0xff]
    %v847 = vld [vmem:[#allocation2] ss:$8 sm:$0xf]
    %s848 = scalar_lea.vmem [#allocation2], 64
    %v849 = vld [vmem:[%s848] ss:$8 sm:$0xf]
    %s850 = scalar_lea.vmem [#allocation2], 39
    %v851 = vld [vmem:[%s850] ss:$8 sm:$0xf]
    %s852 = scalar_lea.vmem [#allocation2], 103
    %v853 = vld [vmem:[%s852] ss:$8 sm:$0xf]
    %v856 = vcombine.low %v847, %v849
    %v858 = vunpack.c.l.s4 1966171168
    %v859 = vunpack.c.0.s8 %v858
    %v860 = vlaneseq
    %v861 = vshrl.u32 %v860, 7
    %v862 = vsub.s32 %v859, %v861
    %v863 = vrot.slane %v856, %v862
    %v864 = vcombine.high %v863, %v863
    %v866 = vunpack.c.l.s4 1966171168
    %v867 = vunpack.c.0.s8 %v866
    %v868 = vlaneseq
    %v869 = vshrl.u32 %v868, 7
    %v870 = vsub.s32 %v867, %v869
    %v871 = vrot.slane %v863, %v870
    %v873 = vunpack.c.l.s4 1966171168
    %v874 = vunpack.c.0.s8 %v873
    %v875 = vlaneseq
    %v876 = vshrl.u32 %v875, 7
    %v877 = vsub.s32 %v874, %v876
    %v878 = vrot.slane %v864, %v877
    %v879 = vcombine.high %v871, %v871
    %v880 = vcombine.high %v878, %v878
    %v887 = vcombine.low %v851, %v853
    %v889 = vunpack.c.l.s4 1966171168
    %v890 = vunpack.c.0.s8 %v889
    %v891 = vlaneseq
    %v892 = vshrl.u32 %v891, 7
    %v893 = vsub.s32 %v890, %v892
    %v894 = vrot.slane %v887, %v893
    %v895 = vcombine.high %v894, %v894
    %v897 = vunpack.c.l.s4 1966171168
    %v898 = vunpack.c.0.s8 %v897
    %v899 = vlaneseq
    %v900 = vshrl.u32 %v899, 7
    %v901 = vsub.s32 %v898, %v900
    %v902 = vrot.slane %v894, %v901
    %v904 = vunpack.c.l.s4 1966171168
    %v905 = vunpack.c.0.s8 %v904
    %v906 = vlaneseq
    %v907 = vshrl.u32 %v906, 7
    %v908 = vsub.s32 %v905, %v907
    %v909 = vrot.slane %v895, %v908
    %v910 = vcombine.high %v902, %v902
    %v911 = vcombine.high %v909, %v909
    %916 = vmatprep.subr.mxu0 %v592
    %917 = vmatpush1.msra.mxu0 %v591
    %918 = vmatprep.subr.mxu0 %v600
    %919 = vmatpush1.msra.mxu0 %v599
    %920 = vmatprep.subr.mxu0 %v608
    %921 = vmatpush1.msra.mxu0 %v607
    %922 = vmatprep.subr.mxu0 %v616
    %923 = vmatpush1.msra.mxu0 %v615
    %924 = vmatprep.subr.mxu0 %v624
    %925 = vmatpush1.msra.mxu0 %v623
    %926 = vmatprep.subr.mxu0 %v632
    %927 = vmatpush1.msra.mxu0 %v631
    %928 = vmatprep.subr.mxu0 %v640
    %929 = vmatpush1.msra.mxu0 %v639
    %930 = vmatprep.subr.mxu0 %v648
    %931 = vmatpush1.msra.mxu0 %v647
    %932 = vmatprep.subr.mxu0 %v656
    %933 = vmatpush1.msra.mxu0 %v655
    %934 = vmatprep.subr.mxu0 %v664
    %935 = vmatpush1.msra.mxu0 %v663
    %936 = vmatprep.subr.mxu0 %v672
    %937 = vmatpush1.msra.mxu0 %v671
    %938 = vmatprep.subr.mxu0 %v680
    %939 = vmatpush1.msra.mxu0 %v679
    %940 = vmatprep.subr.mxu0 %v688
    %941 = vmatpush1.msra.mxu0 %v687
    %942 = vmatprep.subr.mxu0 %v696
    %943 = vmatpush1.msra.mxu0 %v695
    %944 = vmatprep.subr.mxu0 %v704
    %945 = vmatpush1.msra.mxu0 %v703
    %946 = vmatprep.subr.mxu0 %v712
    %947 = vmatpush1.msra.mxu0 %v711
    %948 = vmatprep.subr.mxu0 %v720
    %949 = vmatpush1.msra.mxu0 %v719
    %950 = vmatprep.subr.mxu0 %v728
    %951 = vmatpush1.msra.mxu0 %v727
    %952 = vmatprep.subr.mxu0 %v736
    %953 = vmatpush1.msra.mxu0 %v735
    %954 = vmatprep.subr.mxu0 %v744
    %955 = vmatpush1.msra.mxu0 %v743
    %956 = vmatprep.subr.mxu0 %v752
    %957 = vmatpush1.msra.mxu0 %v751
    %958 = vmatprep.subr.mxu0 %v760
    %959 = vmatpush1.msra.mxu0 %v759
    %960 = vmatprep.subr.mxu0 %v768
    %961 = vmatpush1.msra.mxu0 %v767
    %962 = vmatprep.subr.mxu0 %v776
    %963 = vmatpush1.msra.mxu0 %v775
    %964 = vmatprep.subr.mxu0 %v784
    %965 = vmatpush1.msra.mxu0 %v783
    %966 = vmatprep.subr.mxu0 %v792
    %967 = vmatpush1.msra.mxu0 %v791
    %968 = vmatprep.subr.mxu0 %v800
    %969 = vmatpush1.msra.mxu0 %v799
    %970 = vmatprep.subr.mxu0 %v808
    %971 = vmatpush1.msra.mxu0 %v807
    %972 = vmatprep.subr.mxu0 %v816
    %973 = vmatpush1.msra.mxu0 %v815
    %974 = vmatprep.subr.mxu0 %v824
    %975 = vmatpush1.msra.mxu0 %v823
    %976 = vmatprep.subr.mxu0 %v832
    %977 = vmatpush1.msra.mxu0 %v831
    %978 = vmatprep.subr.mxu0 %v840
    %979 = vmatpush1.msra.mxu0 %v839
    %980 = vmatprep.mubr.f32.mxu0 0.0
    %981 = vmatmul.mubr.f32.gmra.mrb[0].mxu0 0.0
    %v982 = vpop.f32.mrb[0].mxu0
    %v983 = vadd.f32 0.0, %v982
    %v984 = vpop.f32.mrb[0].mxu0
    %v985 = vadd.f32 0.0, %v984
    %986 = vdwg.mxu0
    %987 = vmatprep.subr.mxu0 %v594
    %988 = vmatpush1.msra.mxu0 %v593
    %989 = vmatprep.subr.mxu0 %v602
    %990 = vmatpush1.msra.mxu0 %v601
    %991 = vmatprep.subr.mxu0 %v610
    %992 = vmatpush1.msra.mxu0 %v609
    %993 = vmatprep.subr.mxu0 %v618
    %994 = vmatpush1.msra.mxu0 %v617
    %995 = vmatprep.subr.mxu0 %v626
    %996 = vmatpush1.msra.mxu0 %v625
    %997 = vmatprep.subr.mxu0 %v634
    %998 = vmatpush1.msra.mxu0 %v633
    %999 = vmatprep.subr.mxu0 %v642
    %1000 = vmatpush1.msra.mxu0 %v641
    %1001 = vmatprep.subr.mxu0 %v650
    %1002 = vmatpush1.msra.mxu0 %v649
    %1003 = vmatprep.subr.mxu0 %v658
    %1004 = vmatpush1.msra.mxu0 %v657
    %1005 = vmatprep.subr.mxu0 %v666
    %1006 = vmatpush1.msra.mxu0 %v665
    %1007 = vmatprep.subr.mxu0 %v674
    %1008 = vmatpush1.msra.mxu0 %v673
    %1009 = vmatprep.subr.mxu0 %v682
    %1010 = vmatpush1.msra.mxu0 %v681
    %1011 = vmatprep.subr.mxu0 %v690
    %1012 = vmatpush1.msra.mxu0 %v689
    %1013 = vmatprep.subr.mxu0 %v698
    %1014 = vmatpush1.msra.mxu0 %v697
    %1015 = vmatprep.subr.mxu0 %v706
    %1016 = vmatpush1.msra.mxu0 %v705
    %1017 = vmatprep.subr.mxu0 %v714
    %1018 = vmatpush1.msra.mxu0 %v713
    %1019 = vmatprep.subr.mxu0 %v722
    %1020 = vmatpush1.msra.mxu0 %v721
    %1021 = vmatprep.subr.mxu0 %v730
    %1022 = vmatpush1.msra.mxu0 %v729
    %1023 = vmatprep.subr.mxu0 %v738
    %1024 = vmatpush1.msra.mxu0 %v737
    %1025 = vmatprep.subr.mxu0 %v746
    %1026 = vmatpush1.msra.mxu0 %v745
    %1027 = vmatprep.subr.mxu0 %v754
    %1028 = vmatpush1.msra.mxu0 %v753
    %1029 = vmatprep.subr.mxu0 %v762
    %1030 = vmatpush1.msra.mxu0 %v761
    %1031 = vmatprep.subr.mxu0 %v770
    %1032 = vmatpush1.msra.mxu0 %v769
    %1033 = vmatprep.subr.mxu0 %v778
    %1034 = vmatpush1.msra.mxu0 %v777
    %1035 = vmatprep.subr.mxu0 %v786
    %1036 = vmatpush1.msra.mxu0 %v785
    %1037 = vmatprep.subr.mxu0 %v794
    %1038 = vmatpush1.msra.mxu0 %v793
    %1039 = vmatprep.subr.mxu0 %v802
    %1040 = vmatpush1.msra.mxu0 %v801
    %1041 = vmatprep.subr.mxu0 %v810
    %1042 = vmatpush1.msra.mxu0 %v809
    %1043 = vmatprep.subr.mxu0 %v818
    %1044 = vmatpush1.msra.mxu0 %v817
    %1045 = vmatprep.subr.mxu0 %v826
    %1046 = vmatpush1.msra.mxu0 %v825
    %1047 = vmatprep.subr.mxu0 %v834
    %1048 = vmatpush1.msra.mxu0 %v833
    %1049 = vmatprep.subr.mxu0 %v842
    %1050 = vmatpush1.msra.mxu0 %v841
    %1051 = vmatprep.mubr.f32.mxu0 0.0
    %1052 = vmatmul.mubr.f32.gmra.mrb[0].mxu0 0.0
    %v1053 = vpop.f32.mrb[0].mxu0
    %v1054 = vadd.f32 0.0, %v1053
    %v1055 = vpop.f32.mrb[0].mxu0
    %v1056 = vadd.f32 0.0, %v1055
    %1057 = vdwg.mxu0
    %1058 = vmatprep.subr.mxu0 %v596
    %1059 = vmatpush1.msra.mxu0 %v595
    %1060 = vmatprep.subr.mxu0 %v604
    %1061 = vmatpush1.msra.mxu0 %v603
    %1062 = vmatprep.subr.mxu0 %v612
    %1063 = vmatpush1.msra.mxu0 %v611
    %1064 = vmatprep.subr.mxu0 %v620
    %1065 = vmatpush1.msra.mxu0 %v619
    %1066 = vmatprep.subr.mxu0 %v628
    %1067 = vmatpush1.msra.mxu0 %v627
    %1068 = vmatprep.subr.mxu0 %v636
    %1069 = vmatpush1.msra.mxu0 %v635
    %1070 = vmatprep.subr.mxu0 %v644
    %1071 = vmatpush1.msra.mxu0 %v643
    %1072 = vmatprep.subr.mxu0 %v652
    %1073 = vmatpush1.msra.mxu0 %v651
    %1074 = vmatprep.subr.mxu0 %v660
    %1075 = vmatpush1.msra.mxu0 %v659
    %1076 = vmatprep.subr.mxu0 %v668
    %1077 = vmatpush1.msra.mxu0 %v667
    %1078 = vmatprep.subr.mxu0 %v676
    %1079 = vmatpush1.msra.mxu0 %v675
    %1080 = vmatprep.subr.mxu0 %v684
    %1081 = vmatpush1.msra.mxu0 %v683
    %1082 = vmatprep.subr.mxu0 %v692
    %1083 = vmatpush1.msra.mxu0 %v691
    %1084 = vmatprep.subr.mxu0 %v700
    %1085 = vmatpush1.msra.mxu0 %v699
    %1086 = vmatprep.subr.mxu0 %v708
    %1087 = vmatpush1.msra.mxu0 %v707
    %1088 = vmatprep.subr.mxu0 %v716
    %1089 = vmatpush1.msra.mxu0 %v715
    %1090 = vmatprep.subr.mxu0 %v724
    %1091 = vmatpush1.msra.mxu0 %v723
    %1092 = vmatprep.subr.mxu0 %v732
    %1093 = vmatpush1.msra.mxu0 %v731
    %1094 = vmatprep.subr.mxu0 %v740
    %1095 = vmatpush1.msra.mxu0 %v739
    %1096 = vmatprep.subr.mxu0 %v748
    %1097 = vmatpush1.msra.mxu0 %v747
    %1098 = vmatprep.subr.mxu0 %v756
    %1099 = vmatpush1.msra.mxu0 %v755
    %1100 = vmatprep.subr.mxu0 %v764
    %1101 = vmatpush1.msra.mxu0 %v763
    %1102 = vmatprep.subr.mxu0 %v772
    %1103 = vmatpush1.msra.mxu0 %v771
    %1104 = vmatprep.subr.mxu0 %v780
    %1105 = vmatpush1.msra.mxu0 %v779
    %1106 = vmatprep.subr.mxu0 %v788
    %1107 = vmatpush1.msra.mxu0 %v787
    %1108 = vmatprep.subr.mxu0 %v796
    %1109 = vmatpush1.msra.mxu0 %v795
    %1110 = vmatprep.subr.mxu0 %v804
    %1111 = vmatpush1.msra.mxu0 %v803
    %1112 = vmatprep.subr.mxu0 %v812
    %1113 = vmatpush1.msra.mxu0 %v811
    %1114 = vmatprep.subr.mxu0 %v820
    %1115 = vmatpush1.msra.mxu0 %v819
    %1116 = vmatprep.subr.mxu0 %v828
    %1117 = vmatpush1.msra.mxu0 %v827
    %1118 = vmatprep.subr.mxu0 %v836
    %1119 = vmatpush1.msra.mxu0 %v835
    %1120 = vmatprep.subr.mxu0 %v844
    %1121 = vmatpush1.msra.mxu0 %v843
    %1122 = vmatprep.mubr.f32.mxu0 0.0
    %1123 = vmatmul.mubr.f32.gmra.mrb[0].mxu0 0.0
    %v1124 = vpop.f32.mrb[0].mxu0
    %v1125 = vadd.f32 0.0, %v1124
    %v1126 = vpop.f32.mrb[0].mxu0
    %v1127 = vadd.f32 0.0, %v1126
    %1128 = vdwg.mxu0
    %1129 = vmatprep.subr.mxu0 %v598
    %1130 = vmatpush1.msra.mxu0 %v597
    %1131 = vmatprep.subr.mxu0 %v606
    %1132 = vmatpush1.msra.mxu0 %v605
    %1133 = vmatprep.subr.mxu0 %v614
    %1134 = vmatpush1.msra.mxu0 %v613
    %1135 = vmatprep.subr.mxu0 %v622
    %1136 = vmatpush1.msra.mxu0 %v621
    %1137 = vmatprep.subr.mxu0 %v630
    %1138 = vmatpush1.msra.mxu0 %v629
    %1139 = vmatprep.subr.mxu0 %v638
    %1140 = vmatpush1.msra.mxu0 %v637
    %1141 = vmatprep.subr.mxu0 %v646
    %1142 = vmatpush1.msra.mxu0 %v645
    %1143 = vmatprep.subr.mxu0 %v654
    %1144 = vmatpush1.msra.mxu0 %v653
    %1145 = vmatprep.subr.mxu0 %v662
    %1146 = vmatpush1.msra.mxu0 %v661
    %1147 = vmatprep.subr.mxu0 %v670
    %1148 = vmatpush1.msra.mxu0 %v669
    %1149 = vmatprep.subr.mxu0 %v678
    %1150 = vmatpush1.msra.mxu0 %v677
    %1151 = vmatprep.subr.mxu0 %v686
    %1152 = vmatpush1.msra.mxu0 %v685
    %1153 = vmatprep.subr.mxu0 %v694
    %1154 = vmatpush1.msra.mxu0 %v693
    %1155 = vmatprep.subr.mxu0 %v702
    %1156 = vmatpush1.msra.mxu0 %v701
    %1157 = vmatprep.subr.mxu0 %v710
    %1158 = vmatpush1.msra.mxu0 %v709
    %1159 = vmatprep.subr.mxu0 %v718
    %1160 = vmatpush1.msra.mxu0 %v717
    %1161 = vmatprep.subr.mxu0 %v726
    %1162 = vmatpush1.msra.mxu0 %v725
    %1163 = vmatprep.subr.mxu0 %v734
    %1164 = vmatpush1.msra.mxu0 %v733
    %1165 = vmatprep.subr.mxu0 %v742
    %1166 = vmatpush1.msra.mxu0 %v741
    %1167 = vmatprep.subr.mxu0 %v750
    %1168 = vmatpush1.msra.mxu0 %v749
    %1169 = vmatprep.subr.mxu0 %v758
    %1170 = vmatpush1.msra.mxu0 %v757
    %1171 = vmatprep.subr.mxu0 %v766
    %1172 = vmatpush1.msra.mxu0 %v765
    %1173 = vmatprep.subr.mxu0 %v774
    %1174 = vmatpush1.msra.mxu0 %v773
    %1175 = vmatprep.subr.mxu0 %v782
    %1176 = vmatpush1.msra.mxu0 %v781
    %1177 = vmatprep.subr.mxu0 %v790
    %1178 = vmatpush1.msra.mxu0 %v789
    %1179 = vmatprep.subr.mxu0 %v798
    %1180 = vmatpush1.msra.mxu0 %v797
    %1181 = vmatprep.subr.mxu0 %v806
    %1182 = vmatpush1.msra.mxu0 %v805
    %1183 = vmatprep.subr.mxu0 %v814
    %1184 = vmatpush1.msra.mxu0 %v813
    %1185 = vmatprep.subr.mxu0 %v822
    %1186 = vmatpush1.msra.mxu0 %v821
    %1187 = vmatprep.subr.mxu0 %v830
    %1188 = vmatpush1.msra.mxu0 %v829
    %1189 = vmatprep.subr.mxu0 %v838
    %1190 = vmatpush1.msra.mxu0 %v837
    %1191 = vmatprep.subr.mxu0 %v846
    %1192 = vmatpush1.msra.mxu0 %v845
    %1193 = vmatprep.mubr.f32.mxu0 0.0
    %1194 = vmatmul.mubr.f32.gmra.mrb[0].mxu0 0.0
    %v1195 = vpop.f32.mrb[0].mxu0
    %v1196 = vadd.f32 0.0, %v1195
    %v1197 = vpop.f32.mrb[0].mxu0
    %v1198 = vadd.f32 0.0, %v1197
    %1199 = vdwg.mxu0
    %v1200 = vadd.f32 %v871, %v983
    %v1201 = vadd.f32 %v878, %v985
    %v1202 = vadd.f32 %v879, %v1054
    %v1203 = vadd.f32 %v880, %v1056
    %v1204 = vadd.f32 %v902, %v1125
    %v1205 = vadd.f32 %v909, %v1127
    %v1206 = vadd.f32 %v910, %v1196
    %v1207 = vadd.f32 %v911, %v1198
    %v1208 = vxor.u32 %v1200, 2147483648
    %v1209 = vxor.u32 %v1201, 2147483648
    %v1210 = vxor.u32 %v1202, 2147483648
    %v1211 = vmul.f32 %v1208, 1.442695
    %v1212 = vpow.pop %v1211
    %v1213 = vmul.f32 %v1209, 1.442695
    %v1214 = vpow.pop %v1213
    %v1215 = vmul.f32 %v1210, 1.442695
    %v1216 = vpow.pop %v1215
    %v1217 = vadd.f32 %v1212, 1.0
    %v1218 = vadd.f32 %v1214, 1.0
    %v1219 = vadd.f32 %v1216, 1.0
    %v1220 = vrcp.pop %v1217
    %v1221 = vmul.f32 1.0, %v1220
    %v1222 = vrcp.pop %v1218
    %v1223 = vmul.f32 1.0, %v1222
    %v1224 = vrcp.pop %v1219
    %v1225 = vmul.f32 1.0, %v1224
    %v1226 = vtanh.pop %v1203
    %v1227 = vmul.f32 %v1223, 0.0
    %v1228 = vmul.f32 %v1221, %v1226
    %v1229 = vadd.f32 %v1227, %v1228
    %v1230 = vtanh.pop %v1229
    %v1231 = vmul.f32 %v1225, %v1230
    %v1232 = vxor.u32 %v1204, 2147483648
    %v1233 = vxor.u32 %v1205, 2147483648
    %v1234 = vxor.u32 %v1206, 2147483648
    %v1235 = vmul.f32 %v1232, 1.442695
    %v1236 = vpow.pop %v1235
    %v1237 = vmul.f32 %v1233, 1.442695
    %v1238 = vpow.pop %v1237
    %v1239 = vmul.f32 %v1234, 1.442695
    %v1240 = vpow.pop %v1239
    %v1241 = vadd.f32 %v1236, 1.0
    %v1242 = vadd.f32 %v1238, 1.0
    %v1243 = vadd.f32 %v1240, 1.0
    %v1244 = vrcp.pop %v1241
    %v1245 = vmul.f32 1.0, %v1244
    %v1246 = vrcp.pop %v1242
    %v1247 = vmul.f32 1.0, %v1246
    %v1248 = vrcp.pop %v1243
    %v1249 = vmul.f32 1.0, %v1248
    %v1250 = vtanh.pop %v1207
    %v1251 = vmul.f32 %v1247, 0.0
    %v1252 = vmul.f32 %v1245, %v1250
    %v1253 = vadd.f32 %v1251, %v1252
    %v1254 = vtanh.pop %v1253
    %v1255 = vmul.f32 %v1249, %v1254
    %v1258 = vunpack.c.l.s4 1966171168
    %v1259 = vunpack.c.0.s8 %v1258
    %v1260 = vlaneseq
    %v1261 = vshrl.u32 %v1260, 7
    %v1262 = vsub.s32 %v1259, %v1261
    %v1263 = vrot.slane %v1231, %v1262
    %v1264 = vcombine.high %v1263, %v1263
    %v1266 = vunpack.c.l.s4 1966171168
    %v1267 = vunpack.c.0.s8 %v1266
    %v1268 = vlaneseq
    %v1269 = vshrl.u32 %v1268, 7
    %v1270 = vsub.s32 %v1267, %v1269
    %v1271 = vrot.slane %v1263, %v1270
    %v1273 = vunpack.c.l.s4 1966171168
    %v1274 = vunpack.c.0.s8 %v1273
    %v1275 = vlaneseq
    %v1276 = vshrl.u32 %v1275, 7
    %v1277 = vsub.s32 %v1274, %v1276
    %v1278 = vrot.slane %v1264, %v1277
    %1281 = vst [vmem:[#allocation3] sm:$0x1] %v1271
    %1282 = vst [vmem:[#allocation3 + $0x10] sm:$0x1] %v1278
    %v1285 = vunpack.c.l.s4 1966171168
    %v1286 = vunpack.c.0.s8 %v1285
    %v1287 = vlaneseq
    %v1288 = vshrl.u32 %v1287, 7
    %v1289 = vsub.s32 %v1286, %v1288
    %v1290 = vrot.slane %v1255, %v1289
    %v1291 = vcombine.high %v1290, %v1290
    %v1293 = vunpack.c.l.s4 1966171168
    %v1294 = vunpack.c.0.s8 %v1293
    %v1295 = vlaneseq
    %v1296 = vshrl.u32 %v1295, 7
    %v1297 = vsub.s32 %v1294, %v1296
    %v1298 = vrot.slane %v1290, %v1297
    %v1300 = vunpack.c.l.s4 1966171168
    %v1301 = vunpack.c.0.s8 %v1300
    %v1302 = vlaneseq
    %v1303 = vshrl.u32 %v1302, 7
    %v1304 = vsub.s32 %v1301, %v1303
    %v1305 = vrot.slane %v1291, %v1304
    %1308 = vst [vmem:[#allocation3 + $0xf] sm:$0x1] %v1298
    %1309 = vst [vmem:[#allocation3 + $0x1f] sm:$0x1] %v1305
    %s1310 = scalar_lea.vmem [#allocation2], 1
    %v1311 = vld [vmem:[%s1310] ss:$8 sm:$0xf]
    %s1312 = scalar_lea.vmem [#allocation2], 65
    %v1313 = vld [vmem:[%s1312] ss:$8 sm:$0xf]
    %s1314 = scalar_lea.vmem [#allocation2], 38
    %v1315 = vld [vmem:[%s1314] ss:$8 sm:$0xf]
    %s1316 = scalar_lea.vmem [#allocation2], 102
    %v1317 = vld [vmem:[%s1316] ss:$8 sm:$0xf]
    %v1320 = vcombine.low %v1311, %v1313
    %v1322 = vunpack.c.l.s4 1966171168
    %v1323 = vunpack.c.0.s8 %v1322
    %v1324 = vlaneseq
    %v1325 = vshrl.u32 %v1324, 7
    %v1326 = vsub.s32 %v1323, %v1325
    %v1327 = vrot.slane %v1320, %v1326
    %v1328 = vcombine.high %v1327, %v1327
    %v1330 = vunpack.c.l.s4 1966171168
    %v1331 = vunpack.c.0.s8 %v1330
    %v1332 = vlaneseq
    %v1333 = vshrl.u32 %v1332, 7
    %v1334 = vsub.s32 %v1331, %v1333
    %v1335 = vrot.slane %v1327, %v1334
    %v1337 = vunpack.c.l.s4 1966171168
    %v1338 = vunpack.c.0.s8 %v1337
    %v1339 = vlaneseq
    %v1340 = vshrl.u32 %v1339, 7
    %v1341 = vsub.s32 %v1338, %v1340
    %v1342 = vrot.slane %v1328, %v1341
    %v1343 = vcombine.high %v1335, %v1335
    %v1344 = vcombine.high %v1342, %v1342
    %v1351 = vcombine.low %v1315, %v1317
    %v1353 = vunpack.c.l.s4 1966171168
    %v1354 = vunpack.c.0.s8 %v1353
    %v1355 = vlaneseq
    %v1356 = vshrl.u32 %v1355, 7
    %v1357 = vsub.s32 %v1354, %v1356
    %v1358 = vrot.slane %v1351, %v1357
    %v1359 = vcombine.high %v1358, %v1358
    %v1361 = vunpack.c.l.s4 1966171168
    %v1362 = vunpack.c.0.s8 %v1361
    %v1363 = vlaneseq
    %v1364 = vshrl.u32 %v1363, 7
    %v1365 = vsub.s32 %v1362, %v1364
    %v1366 = vrot.slane %v1358, %v1365
    %v1368 = vunpack.c.l.s4 1966171168
    %v1369 = vunpack.c.0.s8 %v1368
    %v1370 = vlaneseq
    %v1371 = vshrl.u32 %v1370, 7
    %v1372 = vsub.s32 %v1369, %v1371
    %v1373 = vrot.slane %v1359, %v1372
    %v1374 = vcombine.high %v1366, %v1366
    %v1375 = vcombine.high %v1373, %v1373
    %1380 = vmatprep.subr.mxu0 %v592
    %1381 = vmatpush1.msra.mxu0 %v591
    %1382 = vmatprep.subr.mxu0 %v600
    %1383 = vmatpush1.msra.mxu0 %v599
    %1384 = vmatprep.subr.mxu0 %v608
    %1385 = vmatpush1.msra.mxu0 %v607
    %1386 = vmatprep.subr.mxu0 %v616
    %1387 = vmatpush1.msra.mxu0 %v615
    %1388 = vmatprep.subr.mxu0 %v624
    %1389 = vmatpush1.msra.mxu0 %v623
    %1390 = vmatprep.subr.mxu0 %v632
    %1391 = vmatpush1.msra.mxu0 %v631
    %1392 = vmatprep.subr.mxu0 %v640
    %1393 = vmatpush1.msra.mxu0 %v639
    %1394 = vmatprep.subr.mxu0 %v648
    %1395 = vmatpush1.msra.mxu0 %v647
    %1396 = vmatprep.subr.mxu0 %v656
    %1397 = vmatpush1.msra.mxu0 %v655
    %1398 = vmatprep.subr.mxu0 %v664
    %1399 = vmatpush1.msra.mxu0 %v663
    %1400 = vmatprep.subr.mxu0 %v672
    %1401 = vmatpush1.msra.mxu0 %v671
    %1402 = vmatprep.subr.mxu0 %v680
    %1403 = vmatpush1.msra.mxu0 %v679
    %1404 = vmatprep.subr.mxu0 %v688
    %1405 = vmatpush1.msra.mxu0 %v687
    %1406 = vmatprep.subr.mxu0 %v696
    %1407 = vmatpush1.msra.mxu0 %v695
    %1408 = vmatprep.subr.mxu0 %v704
    %1409 = vmatpush1.msra.mxu0 %v703
    %1410 = vmatprep.subr.mxu0 %v712
    %1411 = vmatpush1.msra.mxu0 %v711
    %1412 = vmatprep.subr.mxu0 %v720
    %1413 = vmatpush1.msra.mxu0 %v719
    %1414 = vmatprep.subr.mxu0 %v728
    %1415 = vmatpush1.msra.mxu0 %v727
    %1416 = vmatprep.subr.mxu0 %v736
    %1417 = vmatpush1.msra.mxu0 %v735
    %1418 = vmatprep.subr.mxu0 %v744
    %1419 = vmatpush1.msra.mxu0 %v743
    %1420 = vmatprep.subr.mxu0 %v752
    %1421 = vmatpush1.msra.mxu0 %v751
    %1422 = vmatprep.subr.mxu0 %v760
    %1423 = vmatpush1.msra.mxu0 %v759
    %1424 = vmatprep.subr.mxu0 %v768
    %1425 = vmatpush1.msra.mxu0 %v767
    %1426 = vmatprep.subr.mxu0 %v776
    %1427 = vmatpush1.msra.mxu0 %v775
    %1428 = vmatprep.subr.mxu0 %v784
    %1429 = vmatpush1.msra.mxu0 %v783
    %1430 = vmatprep.subr.mxu0 %v792
    %1431 = vmatpush1.msra.mxu0 %v791
    %1432 = vmatprep.subr.mxu0 %v800
    %1433 = vmatpush1.msra.mxu0 %v799
    %1434 = vmatprep.subr.mxu0 %v808
    %1435 = vmatpush1.msra.mxu0 %v807
    %1436 = vmatprep.subr.mxu0 %v816
    %1437 = vmatpush1.msra.mxu0 %v815
    %1438 = vmatprep.subr.mxu0 %v824
    %1439 = vmatpush1.msra.mxu0 %v823
    %1440 = vmatprep.subr.mxu0 %v832
    %1441 = vmatpush1.msra.mxu0 %v831
    %1442 = vmatprep.subr.mxu0 %v840
    %1443 = vmatpush1.msra.mxu0 %v839
    %1444 = vmatprep.mubr.f32.mxu0 %v1255
    %1445 = vmatmul.mubr.f32.gmra.mrb[0].mxu0 %v1231
    %v1446 = vpop.f32.mrb[0].mxu0
    %v1447 = vadd.f32 0.0, %v1446
    %v1448 = vpop.f32.mrb[0].mxu0
    %v1449 = vadd.f32 0.0, %v1448
    %1450 = vdwg.mxu0
    %1451 = vmatprep.subr.mxu0 %v594
    %1452 = vmatpush1.msra.mxu0 %v593
    %1453 = vmatprep.subr.mxu0 %v602
    %1454 = vmatpush1.msra.mxu0 %v601
    %1455 = vmatprep.subr.mxu0 %v610
    %1456 = vmatpush1.msra.mxu0 %v609
    %1457 = vmatprep.subr.mxu0 %v618
    %1458 = vmatpush1.msra.mxu0 %v617
    %1459 = vmatprep.subr.mxu0 %v626
    %1460 = vmatpush1.msra.mxu0 %v625
    %1461 = vmatprep.subr.mxu0 %v634
    %1462 = vmatpush1.msra.mxu0 %v633
    %1463 = vmatprep.subr.mxu0 %v642
    %1464 = vmatpush1.msra.mxu0 %v641
    %1465 = vmatprep.subr.mxu0 %v650
    %1466 = vmatpush1.msra.mxu0 %v649
    %1467 = vmatprep.subr.mxu0 %v658
    %1468 = vmatpush1.msra.mxu0 %v657
    %1469 = vmatprep.subr.mxu0 %v666
    %1470 = vmatpush1.msra.mxu0 %v665
    %1471 = vmatprep.subr.mxu0 %v674
    %1472 = vmatpush1.msra.mxu0 %v673
    %1473 = vmatprep.subr.mxu0 %v682
    %1474 = vmatpush1.msra.mxu0 %v681
    %1475 = vmatprep.subr.mxu0 %v690
    %1476 = vmatpush1.msra.mxu0 %v689
    %1477 = vmatprep.subr.mxu0 %v698
    %1478 = vmatpush1.msra.mxu0 %v697
    %1479 = vmatprep.subr.mxu0 %v706
    %1480 = vmatpush1.msra.mxu0 %v705
    %1481 = vmatprep.subr.mxu0 %v714
    %1482 = vmatpush1.msra.mxu0 %v713
    %1483 = vmatprep.subr.mxu0 %v722
    %1484 = vmatpush1.msra.mxu0 %v721
    %1485 = vmatprep.subr.mxu0 %v730
    %1486 = vmatpush1.msra.mxu0 %v729
    %1487 = vmatprep.subr.mxu0 %v738
    %1488 = vmatpush1.msra.mxu0 %v737
    %1489 = vmatprep.subr.mxu0 %v746
    %1490 = vmatpush1.msra.mxu0 %v745
    %1491 = vmatprep.subr.mxu0 %v754
    %1492 = vmatpush1.msra.mxu0 %v753
    %1493 = vmatprep.subr.mxu0 %v762
    %1494 = vmatpush1.msra.mxu0 %v761
    %1495 = vmatprep.subr.mxu0 %v770
    %1496 = vmatpush1.msra.mxu0 %v769
    %1497 = vmatprep.subr.mxu0 %v778
    %1498 = vmatpush1.msra.mxu0 %v777
    %1499 = vmatprep.subr.mxu0 %v786
    %1500 = vmatpush1.msra.mxu0 %v785
    %1501 = vmatprep.subr.mxu0 %v794
    %1502 = vmatpush1.msra.mxu0 %v793
    %1503 = vmatprep.subr.mxu0 %v802
    %1504 = vmatpush1.msra.mxu0 %v801
    %1505 = vmatprep.subr.mxu0 %v810
    %1506 = vmatpush1.msra.mxu0 %v809
    %1507 = vmatprep.subr.mxu0 %v818
    %1508 = vmatpush1.msra.mxu0 %v817
    %1509 = vmatprep.subr.mxu0 %v826
    %1510 = vmatpush1.msra.mxu0 %v825
    %1511 = vmatprep.subr.mxu0 %v834
    %1512 = vmatpush1.msra.mxu0 %v833
    %1513 = vmatprep.subr.mxu0 %v842
    %1514 = vmatpush1.msra.mxu0 %v841
    %1515 = vmatprep.mubr.f32.mxu0 %v1255
    %1516 = vmatmul.mubr.f32.gmra.mrb[0].mxu0 %v1231
    %v1517 = vpop.f32.mrb[0].mxu0
    %v1518 = vadd.f32 0.0, %v1517
    %v1519 = vpop.f32.mrb[0].mxu0
    %v1520 = vadd.f32 0.0, %v1519
    %1521 = vdwg.mxu0
    %1522 = vmatprep.subr.mxu0 %v596
    %1523 = vmatpush1.msra.mxu0 %v595
    %1524 = vmatprep.subr.mxu0 %v604
    %1525 = vmatpush1.msra.mxu0 %v603
    %1526 = vmatprep.subr.mxu0 %v612
    %1527 = vmatpush1.msra.mxu0 %v611
    %1528 = vmatprep.subr.mxu0 %v620
    %1529 = vmatpush1.msra.mxu0 %v619
    %1530 = vmatprep.subr.mxu0 %v628
    %1531 = vmatpush1.msra.mxu0 %v627
    %1532 = vmatprep.subr.mxu0 %v636
    %1533 = vmatpush1.msra.mxu0 %v635
    %1534 = vmatprep.subr.mxu0 %v644
    %1535 = vmatpush1.msra.mxu0 %v643
    %1536 = vmatprep.subr.mxu0 %v652
    %1537 = vmatpush1.msra.mxu0 %v651
    %1538 = vmatprep.subr.mxu0 %v660
    %1539 = vmatpush1.msra.mxu0 %v659
    %1540 = vmatprep.subr.mxu0 %v668
    %1541 = vmatpush1.msra.mxu0 %v667
    %1542 = vmatprep.subr.mxu0 %v676
    %1543 = vmatpush1.msra.mxu0 %v675
    %1544 = vmatprep.subr.mxu0 %v684
    %1545 = vmatpush1.msra.mxu0 %v683
    %1546 = vmatprep.subr.mxu0 %v692
    %1547 = vmatpush1.msra.mxu0 %v691
    %1548 = vmatprep.subr.mxu0 %v700
    %1549 = vmatpush1.msra.mxu0 %v699
    %1550 = vmatprep.subr.mxu0 %v708
    %1551 = vmatpush1.msra.mxu0 %v707
    %1552 = vmatprep.subr.mxu0 %v716
    %1553 = vmatpush1.msra.mxu0 %v715
    %1554 = vmatprep.subr.mxu0 %v724
    %1555 = vmatpush1.msra.mxu0 %v723
    %1556 = vmatprep.subr.mxu0 %v732
    %1557 = vmatpush1.msra.mxu0 %v731
    %1558 = vmatprep.subr.mxu0 %v740
    %1559 = vmatpush1.msra.mxu0 %v739
    %1560 = vmatprep.subr.mxu0 %v748
    %1561 = vmatpush1.msra.mxu0 %v747
    %1562 = vmatprep.subr.mxu0 %v756
    %1563 = vmatpush1.msra.mxu0 %v755
    %1564 = vmatprep.subr.mxu0 %v764
    %1565 = vmatpush1.msra.mxu0 %v763
    %1566 = vmatprep.subr.mxu0 %v772
    %1567 = vmatpush1.msra.mxu0 %v771
    %1568 = vmatprep.subr.mxu0 %v780
    %1569 = vmatpush1.msra.mxu0 %v779
    %1570 = vmatprep.subr.mxu0 %v788
    %1571 = vmatpush1.msra.mxu0 %v787
    %1572 = vmatprep.subr.mxu0 %v796
    %1573 = vmatpush1.msra.mxu0 %v795
    %1574 = vmatprep.subr.mxu0 %v804
    %1575 = vmatpush1.msra.mxu0 %v803
    %1576 = vmatprep.subr.mxu0 %v812
    %1577 = vmatpush1.msra.mxu0 %v811
    %1578 = vmatprep.subr.mxu0 %v820
    %1579 = vmatpush1.msra.mxu0 %v819
    %1580 = vmatprep.subr.mxu0 %v828
    %1581 = vmatpush1.msra.mxu0 %v827
    %1582 = vmatprep.subr.mxu0 %v836
    %1583 = vmatpush1.msra.mxu0 %v835
    %1584 = vmatprep.subr.mxu0 %v844
    %1585 = vmatpush1.msra.mxu0 %v843
    %1586 = vmatprep.mubr.f32.mxu0 %v1255
    %1587 = vmatmul.mubr.f32.gmra.mrb[0].mxu0 %v1231
    %v1588 = vpop.f32.mrb[0].mxu0
    %v1589 = vadd.f32 0.0, %v1588
    %v1590 = vpop.f32.mrb[0].mxu0
    %v1591 = vadd.f32 0.0, %v1590
    %1592 = vdwg.mxu0
    %1593 = vmatprep.subr.mxu0 %v598
    %1594 = vmatpush1.msra.mxu0 %v597
    %1595 = vmatprep.subr.mxu0 %v606
    %1596 = vmatpush1.msra.mxu0 %v605
    %1597 = vmatprep.subr.mxu0 %v614
    %1598 = vmatpush1.msra.mxu0 %v613
    %1599 = vmatprep.subr.mxu0 %v622
    %1600 = vmatpush1.msra.mxu0 %v621
    %1601 = vmatprep.subr.mxu0 %v630
    %1602 = vmatpush1.msra.mxu0 %v629
    %1603 = vmatprep.subr.mxu0 %v638
    %1604 = vmatpush1.msra.mxu0 %v637
    %1605 = vmatprep.subr.mxu0 %v646
    %1606 = vmatpush1.msra.mxu0 %v645
    %1607 = vmatprep.subr.mxu0 %v654
    %1608 = vmatpush1.msra.mxu0 %v653
    %1609 = vmatprep.subr.mxu0 %v662
    %1610 = vmatpush1.msra.mxu0 %v661
    %1611 = vmatprep.subr.mxu0 %v670
    %1612 = vmatpush1.msra.mxu0 %v669
    %1613 = vmatprep.subr.mxu0 %v678
    %1614 = vmatpush1.msra.mxu0 %v677
    %1615 = vmatprep.subr.mxu0 %v686
    %1616 = vmatpush1.msra.mxu0 %v685
    %1617 = vmatprep.subr.mxu0 %v694
    %1618 = vmatpush1.msra.mxu0 %v693
    %1619 = vmatprep.subr.mxu0 %v702
    %1620 = vmatpush1.msra.mxu0 %v701
    %1621 = vmatprep.subr.mxu0 %v710
    %1622 = vmatpush1.msra.mxu0 %v709
    %1623 = vmatprep.subr.mxu0 %v718
    %1624 = vmatpush1.msra.mxu0 %v717
    %1625 = vmatprep.subr.mxu0 %v726
    %1626 = vmatpush1.msra.mxu0 %v725
    %1627 = vmatprep.subr.mxu0 %v734
    %1628 = vmatpush1.msra.mxu0 %v733
    %1629 = vmatprep.subr.mxu0 %v742
    %1630 = vmatpush1.msra.mxu0 %v741
    %1631 = vmatprep.subr.mxu0 %v750
    %1632 = vmatpush1.msra.mxu0 %v749
    %1633 = vmatprep.subr.mxu0 %v758
    %1634 = vmatpush1.msra.mxu0 %v757
    %1635 = vmatprep.subr.mxu0 %v766
    %1636 = vmatpush1.msra.mxu0 %v765
    %1637 = vmatprep.subr.mxu0 %v774
    %1638 = vmatpush1.msra.mxu0 %v773
    %1639 = vmatprep.subr.mxu0 %v782
    %1640 = vmatpush1.msra.mxu0 %v781
    %1641 = vmatprep.subr.mxu0 %v790
    %1642 = vmatpush1.msra.mxu0 %v789
    %1643 = vmatprep.subr.mxu0 %v798
    %1644 = vmatpush1.msra.mxu0 %v797
    %1645 = vmatprep.subr.mxu0 %v806
    %1646 = vmatpush1.msra.mxu0 %v805
    %1647 = vmatprep.subr.mxu0 %v814
    %1648 = vmatpush1.msra.mxu0 %v813
    %1649 = vmatprep.subr.mxu0 %v822
    %1650 = vmatpush1.msra.mxu0 %v821
    %1651 = vmatprep.subr.mxu0 %v830
    %1652 = vmatpush1.msra.mxu0 %v829
    %1653 = vmatprep.subr.mxu0 %v838
    %1654 = vmatpush1.msra.mxu0 %v837
    %1655 = vmatprep.subr.mxu0 %v846
    %1656 = vmatpush1.msra.mxu0 %v845
    %1657 = vmatprep.mubr.f32.mxu0 %v1255
    %1658 = vmatmul.mubr.f32.gmra.mrb[0].mxu0 %v1231
    %v1659 = vpop.f32.mrb[0].mxu0
    %v1660 = vadd.f32 0.0, %v1659
    %v1661 = vpop.f32.mrb[0].mxu0
    %v1662 = vadd.f32 0.0, %v1661
    %1663 = vdwg.mxu0
    %v1664 = vadd.f32 %v1335, %v1447
    %v1665 = vadd.f32 %v1342, %v1449
    %v1666 = vadd.f32 %v1343, %v1518
    %v1667 = vadd.f32 %v1344, %v1520
    %v1668 = vadd.f32 %v1366, %v1589
    %v1669 = vadd.f32 %v1373, %v1591
    %v1670 = vadd.f32 %v1374, %v1660
    %v1671 = vadd.f32 %v1375, %v1662
    %v1672 = vxor.u32 %v1664, 2147483648
    %v1673 = vxor.u32 %v1665, 2147483648
    %v1674 = vxor.u32 %v1666, 2147483648
    %v1675 = vmul.f32 %v1672, 1.442695
    %v1676 = vpow.pop %v1675
    %v1677 = vmul.f32 %v1673, 1.442695
    %v1678 = vpow.pop %v1677
    %v1679 = vmul.f32 %v1674, 1.442695
    %v1680 = vpow.pop %v1679
    %v1681 = vadd.f32 %v1676, 1.0
    %v1682 = vadd.f32 %v1678, 1.0
    %v1683 = vadd.f32 %v1680, 1.0
    %v1684 = vrcp.pop %v1681
    %v1685 = vmul.f32 1.0, %v1684
    %v1686 = vrcp.pop %v1682
    %v1687 = vmul.f32 1.0, %v1686
    %v1688 = vrcp.pop %v1683
    %v1689 = vmul.f32 1.0, %v1688
    %v1690 = vtanh.pop %v1667
    %v1691 = vmul.f32 %v1687, %v1229
    %v1692 = vmul.f32 %v1685, %v1690
    %v1693 = vadd.f32 %v1691, %v1692
    %v1694 = vtanh.pop %v1693
    %v1695 = vmul.f32 %v1689, %v1694
    %v1696 = vxor.u32 %v1668, 2147483648
    %v1697 = vxor.u32 %v1669, 2147483648
    %v1698 = vxor.u32 %v1670, 2147483648
    %v1699 = vmul.f32 %v1696, 1.442695
    %v1700 = vpow.pop %v1699
    %v1701 = vmul.f32 %v1697, 1.442695
    %v1702 = vpow.pop %v1701
    %v1703 = vmul.f32 %v1698, 1.442695
    %v1704 = vpow.pop %v1703
    %v1705 = vadd.f32 %v1700, 1.0
    %v1706 = vadd.f32 %v1702, 1.0
    %v1707 = vadd.f32 %v1704, 1.0
    %v1708 = vrcp.pop %v1705
    %v1709 = vmul.f32 1.0, %v1708
    %v1710 = vrcp.pop %v1706
    %v1711 = vmul.f32 1.0, %v1710
    %v1712 = vrcp.pop %v1707
    %v1713 = vmul.f32 1.0, %v1712
    %v1714 = vtanh.pop %v1671
    %v1715 = vmul.f32 %v1711, %v1253
    %v1716 = vmul.f32 %v1709, %v1714
    %v1717 = vadd.f32 %v1715, %v1716
    %v1718 = vtanh.pop %v1717
    %v1719 = vmul.f32 %v1713, %v1718
    %v1722 = vunpack.c.l.s4 1966171168
    %v1723 = vunpack.c.0.s8 %v1722
    %v1724 = vlaneseq
    %v1725 = vshrl.u32 %v1724, 7
    %v1726 = vsub.s32 %v1723, %v1725
    %v1727 = vrot.slane %v1695, %v1726
    %v1728 = vcombine.high %v1727, %v1727
    %v1730 = vunpack.c.l.s4 1966171168
    %v1731 = vunpack.c.0.s8 %v1730
    %v1732 = vlaneseq
    %v1733 = vshrl.u32 %v1732, 7
    %v1734 = vsub.s32 %v1731, %v1733
    %v1735 = vrot.slane %v1727, %v1734
    %v1737 = vunpack.c.l.s4 1966171168
    %v1738 = vunpack.c.0.s8 %v1737
    %v1739 = vlaneseq
    %v1740 = vshrl.u32 %v1739, 7
    %v1741 = vsub.s32 %v1738, %v1740
    %v1742 = vrot.slane %v1728, %v1741
    %1745 = vst [vmem:[#allocation3 + $0x1] sm:$0x1] %v1735
    %1746 = vst [vmem:[#allocation3 + $0x11] sm:$0x1] %v1742
    %v1749 = vunpack.c.l.s4 1966171168
    %v1750 = vunpack.c.0.s8 %v1749
    %v1751 = vlaneseq
    %v1752 = vshrl.u32 %v1751, 7
    %v1753 = vsub.s32 %v1750, %v1752
    %v1754 = vrot.slane %v1719, %v1753
    %v1755 = vcombine.high %v1754, %v1754
    %v1757 = vunpack.c.l.s4 1966171168
    %v1758 = vunpack.c.0.s8 %v1757
    %v1759 = vlaneseq
    %v1760 = vshrl.u32 %v1759, 7
    %v1761 = vsub.s32 %v1758, %v1760
    %v1762 = vrot.slane %v1754, %v1761
    %v1764 = vunpack.c.l.s4 1966171168
    %v1765 = vunpack.c.0.s8 %v1764
    %v1766 = vlaneseq
    %v1767 = vshrl.u32 %v1766, 7
    %v1768 = vsub.s32 %v1765, %v1767
    %v1769 = vrot.slane %v1755, %v1768
    %1772 = vst [vmem:[#allocation3 + $0xe] sm:$0x1] %v1762
    %1773 = vst [vmem:[#allocation3 + $0x1e] sm:$0x1] %v1769
    %s1774 = scalar_lea.vmem [#allocation2], 2
    %v1775 = vld [vmem:[%s1774] ss:$8 sm:$0xf]
    %s1776 = scalar_lea.vmem [#allocation2], 66
    %v1777 = vld [vmem:[%s1776] ss:$8 sm:$0xf]
    %s1778 = scalar_lea.vmem [#allocation2], 37
    %v1779 = vld [vmem:[%s1778] ss:$8 sm:$0xf]
    %s1780 = scalar_lea.vmem [#allocation2], 101
    %v1781 = vld [vmem:[%s1780] ss:$8 sm:$0xf]
    %v1784 = vcombine.low %v1775, %v1777
    %v1786 = vunpack.c.l.s4 1966171168
    %v1787 = vunpack.c.0.s8 %v1786
    %v1788 = vlaneseq
    %v1789 = vshrl.u32 %v1788, 7
    %v1790 = vsub.s32 %v1787, %v1789
    %v1791 = vrot.slane %v1784, %v1790
    %v1792 = vcombine.high %v1791, %v1791
    %v1794 = vunpack.c.l.s4 1966171168
    %v1795 = vunpack.c.0.s8 %v1794
    %v1796 = vlaneseq
    %v1797 = vshrl.u32 %v1796, 7
    %v1798 = vsub.s32 %v1795, %v1797
    %v1799 = vrot.slane %v1791, %v1798
    %v1801 = vunpack.c.l.s4 1966171168
    %v1802 = vunpack.c.0.s8 %v1801
    %v1803 = vlaneseq
    %v1804 = vshrl.u32 %v1803, 7
    %v1805 = vsub.s32 %v1802, %v1804
    %v1806 = vrot.slane %v1792, %v1805
    %v1807 = vcombine.high %v1799, %v1799
    %v1808 = vcombine.high %v1806, %v1806
    %v1815 = vcombine.low %v1779, %v1781
    %v1817 = vunpack.c.l.s4 1966171168
    %v1818 = vunpack.c.0.s8 %v1817
    %v1819 = vlaneseq
    %v1820 = vshrl.u32 %v1819, 7
    %v1821 = vsub.s32 %v1818, %v1820
    %v1822 = vrot.slane %v1815, %v1821
    %v1823 = vcombine.high %v1822, %v1822
    %v1825 = vunpack.c.l.s4 1966171168
    %v1826 = vunpack.c.0.s8 %v1825
    %v1827 = vlaneseq
    %v1828 = vshrl.u32 %v1827, 7
    %v1829 = vsub.s32 %v1826, %v1828
    %v1830 = vrot.slane %v1822, %v1829
    %v1832 = vunpack.c.l.s4 1966171168
    %v1833 = vunpack.c.0.s8 %v1832
    %v1834 = vlaneseq
    %v1835 = vshrl.u32 %v1834, 7
    %v1836 = vsub.s32 %v1833, %v1835
    %v1837 = vrot.slane %v1823, %v1836
    %v1838 = vcombine.high %v1830, %v1830
    %v1839 = vcombine.high %v1837, %v1837
    %1844 = vmatprep.subr.mxu0 %v592
    %1845 = vmatpush1.msra.mxu0 %v591
    %1846 = vmatprep.subr.mxu0 %v600
    %1847 = vmatpush1.msra.mxu0 %v599
    %1848 = vmatprep.subr.mxu0 %v608
    %1849 = vmatpush1.msra.mxu0 %v607
    %1850 = vmatprep.subr.mxu0 %v616
    %1851 = vmatpush1.msra.mxu0 %v615
    %1852 = vmatprep.subr.mxu0 %v624
    %1853 = vmatpush1.msra.mxu0 %v623
    %1854 = vmatprep.subr.mxu0 %v632
    %1855 = vmatpush1.msra.mxu0 %v631
    %1856 = vmatprep.subr.mxu0 %v640
    %1857 = vmatpush1.msra.mxu0 %v639
    %1858 = vmatprep.subr.mxu0 %v648
    %1859 = vmatpush1.msra.mxu0 %v647
    %1860 = vmatprep.subr.mxu0 %v656
    %1861 = vmatpush1.msra.mxu0 %v655
    %1862 = vmatprep.subr.mxu0 %v664
    %1863 = vmatpush1.msra.mxu0 %v663
    %1864 = vmatprep.subr.mxu0 %v672
    %1865 = vmatpush1.msra.mxu0 %v671
    %1866 = vmatprep.subr.mxu0 %v680
    %1867 = vmatpush1.msra.mxu0 %v679
    %1868 = vmatprep.subr.mxu0 %v688
    %1869 = vmatpush1.msra.mxu0 %v687
    %1870 = vmatprep.subr.mxu0 %v696
    %1871 = vmatpush1.msra.mxu0 %v695
    %1872 = vmatprep.subr.mxu0 %v704
    %1873 = vmatpush1.msra.mxu0 %v703
    %1874 = vmatprep.subr.mxu0 %v712
    %1875 = vmatpush1.msra.mxu0 %v711
    %1876 = vmatprep.subr.mxu0 %v720
    %1877 = vmatpush1.msra.mxu0 %v719
    %1878 = vmatprep.subr.mxu0 %v728
    %1879 = vmatpush1.msra.mxu0 %v727
    %1880 = vmatprep.subr.mxu0 %v736
    %1881 = vmatpush1.msra.mxu0 %v735
    %1882 = vmatprep.subr.mxu0 %v744
    %1883 = vmatpush1.msra.mxu0 %v743
    %1884 = vmatprep.subr.mxu0 %v752
    %1885 = vmatpush1.msra.mxu0 %v751
    %1886 = vmatprep.subr.mxu0 %v760
    %1887 = vmatpush1.msra.mxu0 %v759
    %1888 = vmatprep.subr.mxu0 %v768
    %1889 = vmatpush1.msra.mxu0 %v767
    %1890 = vmatprep.subr.mxu0 %v776
    %1891 = vmatpush1.msra.mxu0 %v775
    %1892 = vmatprep.subr.mxu0 %v784
    %1893 = vmatpush1.msra.mxu0 %v783
    %1894 = vmatprep.subr.mxu0 %v792
    %1895 = vmatpush1.msra.mxu0 %v791
    %1896 = vmatprep.subr.mxu0 %v800
    %1897 = vmatpush1.msra.mxu0 %v799
    %1898 = vmatprep.subr.mxu0 %v808
    %1899 = vmatpush1.msra.mxu0 %v807
    %1900 = vmatprep.subr.mxu0 %v816
    %1901 = vmatpush1.msra.mxu0 %v815
    %1902 = vmatprep.subr.mxu0 %v824
    %1903 = vmatpush1.msra.mxu0 %v823
    %1904 = vmatprep.subr.mxu0 %v832
    %1905 = vmatpush1.msra.mxu0 %v831
    %1906 = vmatprep.subr.mxu0 %v840
    %1907 = vmatpush1.msra.mxu0 %v839
    %1908 = vmatprep.mubr.f32.mxu0 %v1719
    %1909 = vmatmul.mubr.f32.gmra.mrb[0].mxu0 %v1695
    %v1910 = vpop.f32.mrb[0].mxu0
    %v1911 = vadd.f32 0.0, %v1910
    %v1912 = vpop.f32.mrb[0].mxu0
    %v1913 = vadd.f32 0.0, %v1912
    %1914 = vdwg.mxu0
    %1915 = vmatprep.subr.mxu0 %v594
    %1916 = vmatpush1.msra.mxu0 %v593
    %1917 = vmatprep.subr.mxu0 %v602
    %1918 = vmatpush1.msra.mxu0 %v601
    %1919 = vmatprep.subr.mxu0 %v610
    %1920 = vmatpush1.msra.mxu0 %v609
    %1921 = vmatprep.subr.mxu0 %v618
    %1922 = vmatpush1.msra.mxu0 %v617
    %1923 = vmatprep.subr.mxu0 %v626
    %1924 = vmatpush1.msra.mxu0 %v625
    %1925 = vmatprep.subr.mxu0 %v634
    %1926 = vmatpush1.msra.mxu0 %v633
    %1927 = vmatprep.subr.mxu0 %v642
    %1928 = vmatpush1.msra.mxu0 %v641
    %1929 = vmatprep.subr.mxu0 %v650
    %1930 = vmatpush1.msra.mxu0 %v649
    %1931 = vmatprep.subr.mxu0 %v658
    %1932 = vmatpush1.msra.mxu0 %v657
    %1933 = vmatprep.subr.mxu0 %v666
    %1934 = vmatpush1.msra.mxu0 %v665
    %1935 = vmatprep.subr.mxu0 %v674
    %1936 = vmatpush1.msra.mxu0 %v673
    %1937 = vmatprep.subr.mxu0 %v682
    %1938 = vmatpush1.msra.mxu0 %v681
    %1939 = vmatprep.subr.mxu0 %v690
    %1940 = vmatpush1.msra.mxu0 %v689
    %1941 = vmatprep.subr.mxu0 %v698
    %1942 = vmatpush1.msra.mxu0 %v697
    %1943 = vmatprep.subr.mxu0 %v706
    %1944 = vmatpush1.msra.mxu0 %v705
    %1945 = vmatprep.subr.mxu0 %v714
    %1946 = vmatpush1.msra.mxu0 %v713
    %1947 = vmatprep.subr.mxu0 %v722
    %1948 = vmatpush1.msra.mxu0 %v721
    %1949 = vmatprep.subr.mxu0 %v730
    %1950 = vmatpush1.msra.mxu0 %v729
    %1951 = vmatprep.subr.mxu0 %v738
    %1952 = vmatpush1.msra.mxu0 %v737
    %1953 = vmatprep.subr.mxu0 %v746
    %1954 = vmatpush1.msra.mxu0 %v745
    %1955 = vmatprep.subr.mxu0 %v754
    %1956 = vmatpush1.msra.mxu0 %v753
    %1957 = vmatprep.subr.mxu0 %v762
    %1958 = vmatpush1.msra.mxu0 %v761
    %1959 = vmatprep.subr.mxu0 %v770
    %1960 = vmatpush1.msra.mxu0 %v769
    %1961 = vmatprep.subr.mxu0 %v778
    %1962 = vmatpush1.msra.mxu0 %v777
    %1963 = vmatprep.subr.mxu0 %v786
    %1964 = vmatpush1.msra.mxu0 %v785
    %1965 = vmatprep.subr.mxu0 %v794
    %1966 = vmatpush1.msra.mxu0 %v793
    %1967 = vmatprep.subr.mxu0 %v802
    %1968 = vmatpush1.msra.mxu0 %v801
    %1969 = vmatprep.subr.mxu0 %v810
    %1970 = vmatpush1.msra.mxu0 %v809
    %1971 = vmatprep.subr.mxu0 %v818
    %1972 = vmatpush1.msra.mxu0 %v817
    %1973 = vmatprep.subr.mxu0 %v826
    %1974 = vmatpush1.msra.mxu0 %v825
    %1975 = vmatprep.subr.mxu0 %v834
    %1976 = vmatpush1.msra.mxu0 %v833
    %1977 = vmatprep.subr.mxu0 %v842
    %1978 = vmatpush1.msra.mxu0 %v841
    %1979 = vmatprep.mubr.f32.mxu0 %v1719
    %1980 = vmatmul.mubr.f32.gmra.mrb[0].mxu0 %v1695
    %v1981 = vpop.f32.mrb[0].mxu0
    %v1982 = vadd.f32 0.0, %v1981
    %v1983 = vpop.f32.mrb[0].mxu0
    %v1984 = vadd.f32 0.0, %v1983
    %1985 = vdwg.mxu0
    %1986 = vmatprep.subr.mxu0 %v596
    %1987 = vmatpush1.msra.mxu0 %v595
    %1988 = vmatprep.subr.mxu0 %v604
    %1989 = vmatpush1.msra.mxu0 %v603
    %1990 = vmatprep.subr.mxu0 %v612
    %1991 = vmatpush1.msra.mxu0 %v611
    %1992 = vmatprep.subr.mxu0 %v620
    %1993 = vmatpush1.msra.mxu0 %v619
    %1994 = vmatprep.subr.mxu0 %v628
    %1995 = vmatpush1.msra.mxu0 %v627
    %1996 = vmatprep.subr.mxu0 %v636
    %1997 = vmatpush1.msra.mxu0 %v635
    %1998 = vmatprep.subr.mxu0 %v644
    %1999 = vmatpush1.msra.mxu0 %v643
    %2000 = vmatprep.subr.mxu0 %v652
    %2001 = vmatpush1.msra.mxu0 %v651
    %2002 = vmatprep.subr.mxu0 %v660
    %2003 = vmatpush1.msra.mxu0 %v659
    %2004 = vmatprep.subr.mxu0 %v668
    %2005 = vmatpush1.msra.mxu0 %v667
    %2006 = vmatprep.subr.mxu0 %v676
    %2007 = vmatpush1.msra.mxu0 %v675
    %2008 = vmatprep.subr.mxu0 %v684
    %2009 = vmatpush1.msra.mxu0 %v683
    %2010 = vmatprep.subr.mxu0 %v692
    %2011 = vmatpush1.msra.mxu0 %v691
    %2012 = vmatprep.subr.mxu0 %v700
    %2013 = vmatpush1.msra.mxu0 %v699
    %2014 = vmatprep.subr.mxu0 %v708
    %2015 = vmatpush1.msra.mxu0 %v707
    %2016 = vmatprep.subr.mxu0 %v716
    %2017 = vmatpush1.msra.mxu0 %v715
    %2018 = vmatprep.subr.mxu0 %v724
    %2019 = vmatpush1.msra.mxu0 %v723
    %2020 = vmatprep.subr.mxu0 %v732
    %2021 = vmatpush1.msra.mxu0 %v731
    %2022 = vmatprep.subr.mxu0 %v740
    %2023 = vmatpush1.msra.mxu0 %v739
    %2024 = vmatprep.subr.mxu0 %v748
    %2025 = vmatpush1.msra.mxu0 %v747
    %2026 = vmatprep.subr.mxu0 %v756
    %2027 = vmatpush1.msra.mxu0 %v755
    %2028 = vmatprep.subr.mxu0 %v764
    %2029 = vmatpush1.msra.mxu0 %v763
    %2030 = vmatprep.subr.mxu0 %v772
    %2031 = vmatpush1.msra.mxu0 %v771
    %2032 = vmatprep.subr.mxu0 %v780
    %2033 = vmatpush1.msra.mxu0 %v779
    %2034 = vmatprep.subr.mxu0 %v788
    %2035 = vmatpush1.msra.mxu0 %v787
    %2036 = vmatprep.subr.mxu0 %v796
    %2037 = vmatpush1.msra.mxu0 %v795
    %2038 = vmatprep.subr.mxu0 %v804
    %2039 = vmatpush1.msra.mxu0 %v803
    %2040 = vmatprep.subr.mxu0 %v812
    %2041 = vmatpush1.msra.mxu0 %v811
    %2042 = vmatprep.subr.mxu0 %v820
    %2043 = vmatpush1.msra.mxu0 %v819
    %2044 = vmatprep.subr.mxu0 %v828
    %2045 = vmatpush1.msra.mxu0 %v827
    %2046 = vmatprep.subr.mxu0 %v836
    %2047 = vmatpush1.msra.mxu0 %v835
    %2048 = vmatprep.subr.mxu0 %v844
    %2049 = vmatpush1.msra.mxu0 %v843
    %2050 = vmatprep.mubr.f32.mxu0 %v1719
    %2051 = vmatmul.mubr.f32.gmra.mrb[0].mxu0 %v1695
    %v2052 = vpop.f32.mrb[0].mxu0
    %v2053 = vadd.f32 0.0, %v2052
    %v2054 = vpop.f32.mrb[0].mxu0
    %v2055 = vadd.f32 0.0, %v2054
    %2056 = vdwg.mxu0
    %2057 = vmatprep.subr.mxu0 %v598
    %2058 = vmatpush1.msra.mxu0 %v597
    %2059 = vmatprep.subr.mxu0 %v606
    %2060 = vmatpush1.msra.mxu0 %v605
    %2061 = vmatprep.subr.mxu0 %v614
    %2062 = vmatpush1.msra.mxu0 %v613
    %2063 = vmatprep.subr.mxu0 %v622
    %2064 = vmatpush1.msra.mxu0 %v621
    %2065 = vmatprep.subr.mxu0 %v630
    %2066 = vmatpush1.msra.mxu0 %v629
    %2067 = vmatprep.subr.mxu0 %v638
    %2068 = vmatpush1.msra.mxu0 %v637
    %2069 = vmatprep.subr.mxu0 %v646
    %2070 = vmatpush1.msra.mxu0 %v645
    %2071 = vmatprep.subr.mxu0 %v654
    %2072 = vmatpush1.msra.mxu0 %v653
    %2073 = vmatprep.subr.mxu0 %v662
    %2074 = vmatpush1.msra.mxu0 %v661
    %2075 = vmatprep.subr.mxu0 %v670
    %2076 = vmatpush1.msra.mxu0 %v669
    %2077 = vmatprep.subr.mxu0 %v678
    %2078 = vmatpush1.msra.mxu0 %v677
    %2079 = vmatprep.subr.mxu0 %v686
    %2080 = vmatpush1.msra.mxu0 %v685
    %2081 = vmatprep.subr.mxu0 %v694
    %2082 = vmatpush1.msra.mxu0 %v693
    %2083 = vmatprep.subr.mxu0 %v702
    %2084 = vmatpush1.msra.mxu0 %v701
    %2085 = vmatprep.subr.mxu0 %v710
    %2086 = vmatpush1.msra.mxu0 %v709
    %2087 = vmatprep.subr.mxu0 %v718
    %2088 = vmatpush1.msra.mxu0 %v717
    %2089 = vmatprep.subr.mxu0 %v726
    %2090 = vmatpush1.msra.mxu0 %v725
    %2091 = vmatprep.subr.mxu0 %v734
    %2092 = vmatpush1.msra.mxu0 %v733
    %2093 = vmatprep.subr.mxu0 %v742
    %2094 = vmatpush1.msra.mxu0 %v741
    %2095 = vmatprep.subr.mxu0 %v750
    %2096 = vmatpush1.msra.mxu0 %v749
    %2097 = vmatprep.subr.mxu0 %v758
    %2098 = vmatpush1.msra.mxu0 %v757
    %2099 = vmatprep.subr.mxu0 %v766
    %2100 = vmatpush1.msra.mxu0 %v765
    %2101 = vmatprep.subr.mxu0 %v774
    %2102 = vmatpush1.msra.mxu0 %v773
    %2103 = vmatprep.subr.mxu0 %v782
    %2104 = vmatpush1.msra.mxu0 %v781
    %2105 = vmatprep.subr.mxu0 %v790
    %2106 = vmatpush1.msra.mxu0 %v789
    %2107 = vmatprep.subr.mxu0 %v798
    %2108 = vmatpush1.msra.mxu0 %v797
    %2109 = vmatprep.subr.mxu0 %v806
    %2110 = vmatpush1.msra.mxu0 %v805
    %2111 = vmatprep.subr.mxu0 %v814
    %2112 = vmatpush1.msra.mxu0 %v813
    %2113 = vmatprep.subr.mxu0 %v822
    %2114 = vmatpush1.msra.mxu0 %v821
    %2115 = vmatprep.subr.mxu0 %v830
    %2116 = vmatpush1.msra.mxu0 %v829
    %2117 = vmatprep.subr.mxu0 %v838
    %2118 = vmatpush1.msra.mxu0 %v837
    %2119 = vmatprep.subr.mxu0 %v846
    %2120 = vmatpush1.msra.mxu0 %v845
    %2121 = vmatprep.mubr.f32.mxu0 %v1719
    %2122 = vmatmul.mubr.f32.gmra.mrb[0].mxu0 %v1695
    %v2123 = vpop.f32.mrb[0].mxu0
    %v2124 = vadd.f32 0.0, %v2123
    %v2125 = vpop.f32.mrb[0].mxu0
    %v2126 = vadd.f32 0.0, %v2125
    %2127 = vdwg.mxu0
    %v2128 = vadd.f32 %v1799, %v1911
    %v2129 = vadd.f32 %v1806, %v1913
    %v2130 = vadd.f32 %v1807, %v1982
    %v2131 = vadd.f32 %v1808, %v1984
    %v2132 = vadd.f32 %v1830, %v2053
    %v2133 = vadd.f32 %v1837, %v2055
    %v2134 = vadd.f32 %v1838, %v2124
    %v2135 = vadd.f32 %v1839, %v2126
    %v2136 = vxor.u32 %v2128, 2147483648
    %v2137 = vxor.u32 %v2129, 2147483648
    %v2138 = vxor.u32 %v2130, 2147483648
    %v2139 = vmul.f32 %v2136, 1.442695
    %v2140 = vpow.pop %v2139
    %v2141 = vmul.f32 %v2137, 1.442695
    %v2142 = vpow.pop %v2141
    %v2143 = vmul.f32 %v2138, 1.442695
    %v2144 = vpow.pop %v2143
    %v2145 = vadd.f32 %v2140, 1.0
    %v2146 = vadd.f32 %v2142, 1.0
    %v2147 = vadd.f32 %v2144, 1.0
    %v2148 = vrcp.pop %v2145
    %v2149 = vmul.f32 1.0, %v2148
    %v2150 = vrcp.pop %v2146
    %v2151 = vmul.f32 1.0, %v2150
    %v2152 = vrcp.pop %v2147
    %v2153 = vmul.f32 1.0, %v2152
    %v2154 = vtanh.pop %v2131
    %v2155 = vmul.f32 %v2151, %v1693
    %v2156 = vmul.f32 %v2149, %v2154
    %v2157 = vadd.f32 %v2155, %v2156
    %v2158 = vtanh.pop %v2157
    %v2159 = vmul.f32 %v2153, %v2158
    %v2160 = vxor.u32 %v2132, 2147483648
    %v2161 = vxor.u32 %v2133, 2147483648
    %v2162 = vxor.u32 %v2134, 2147483648
    %v2163 = vmul.f32 %v2160, 1.442695
    %v2164 = vpow.pop %v2163
    %v2165 = vmul.f32 %v2161, 1.442695
    %v2166 = vpow.pop %v2165
    %v2167 = vmul.f32 %v2162, 1.442695
    %v2168 = vpow.pop %v2167
    %v2169 = vadd.f32 %v2164, 1.0
    %v2170 = vadd.f32 %v2166, 1.0
    %v2171 = vadd.f32 %v2168, 1.0
    %v2172 = vrcp.pop %v2169
    %v2173 = vmul.f32 1.0, %v2172
    %v2174 = vrcp.pop %v2170
    %v2175 = vmul.f32 1.0, %v2174
    %v2176 = vrcp.pop %v2171
    %v2177 = vmul.f32 1.0, %v2176
    %v2178 = vtanh.pop %v2135
    %v2179 = vmul.f32 %v2175, %v1717
    %v2180 = vmul.f32 %v2173, %v2178
    %v2181 = vadd.f32 %v2179, %v2180
    %v2182 = vtanh.pop %v2181
    %v2183 = vmul.f32 %v2177, %v2182
    %v2186 = vunpack.c.l.s4 1966171168
    %v2187 = vunpack.c.0.s8 %v2186
    %v2188 = vlaneseq
    %v2189 = vshrl.u32 %v2188, 7
    %v2190 = vsub.s32 %v2187, %v2189
    %v2191 = vrot.slane %v2159, %v2190
    %v2192 = vcombine.high %v2191, %v2191
    %v2194 = vunpack.c.l.s4 1966171168
    %v2195 = vunpack.c.0.s8 %v2194
    %v2196 = vlaneseq
    %v2197 = vshrl.u32 %v2196, 7
    %v2198 = vsub.s32 %v2195, %v2197
    %v2199 = vrot.slane %v2191, %v2198
    %v2201 = vunpack.c.l.s4 1966171168
    %v2202 = vunpack.c.0.s8 %v2201
    %v2203 = vlaneseq
    %v2204 = vshrl.u32 %v2203, 7
    %v2205 = vsub.s32 %v2202, %v2204
    %v2206 = vrot.slane %v2192, %v2205
    %2209 = vst [vmem:[#allocation3 + $0x2] sm:$0x1] %v2199
    %2210 = vst [vmem:[#allocation3 + $0x12] sm:$0x1] %v2206
    %v2213 = vunpack.c.l.s4 1966171168
    %v2214 = vunpack.c.0.s8 %v2213
    %v2215 = vlaneseq
    %v2216 = vshrl.u32 %v2215, 7
    %v2217 = vsub.s32 %v2214, %v2216
    %v2218 = vrot.slane %v2183, %v2217
    %v2219 = vcombine.high %v2218, %v2218
    %v2221 = vunpack.c.l.s4 1966171168
    %v2222 = vunpack.c.0.s8 %v2221
    %v2223 = vlaneseq
    %v2224 = vshrl.u32 %v2223, 7
    %v2225 = vsub.s32 %v2222, %v2224
    %v2226 = vrot.slane %v2218, %v2225
    %v2228 = vunpack.c.l.s4 1966171168
    %v2229 = vunpack.c.0.s8 %v2228
    %v2230 = vlaneseq
    %v2231 = vshrl.u32 %v2230, 7
    %v2232 = vsub.s32 %v2229, %v2231
    %v2233 = vrot.slane %v2219, %v2232
    %2236 = vst [vmem:[#allocation3 + $0xd] sm:$0x1] %v2226
    %2237 = vst [vmem:[#allocation3 + $0x1d] sm:$0x1] %v2233
    %s2238 = scalar_lea.vmem [#allocation2], 3
    %v2239 = vld [vmem:[%s2238] ss:$8 sm:$0xf]
    %s2240 = scalar_lea.vmem [#allocation2], 67
    %v2241 = vld [vmem:[%s2240] ss:$8 sm:$0xf]
    %s2242 = scalar_lea.vmem [#allocation2], 36
    %v2243 = vld [vmem:[%s2242] ss:$8 sm:$0xf]
    %s2244 = scalar_lea.vmem [#allocation2], 100
    %v2245 = vld [vmem:[%s2244] ss:$8 sm:$0xf]
    %v2248 = vcombine.low %v2239, %v2241
    %v2250 = vunpack.c.l.s4 1966171168
    %v2251 = vunpack.c.0.s8 %v2250
    %v2252 = vlaneseq
    %v2253 = vshrl.u32 %v2252, 7
    %v2254 = vsub.s32 %v2251, %v2253
    %v2255 = vrot.slane %v2248, %v2254
    %v2256 = vcombine.high %v2255, %v2255
    %v2258 = vunpack.c.l.s4 1966171168
    %v2259 = vunpack.c.0.s8 %v2258
    %v2260 = vlaneseq
    %v2261 = vshrl.u32 %v2260, 7
    %v2262 = vsub.s32 %v2259, %v2261
    %v2263 = vrot.slane %v2255, %v2262
    %v2265 = vunpack.c.l.s4 1966171168
    %v2266 = vunpack.c.0.s8 %v2265
    %v2267 = vlaneseq
    %v2268 = vshrl.u32 %v2267, 7
    %v2269 = vsub.s32 %v2266, %v2268
    %v2270 = vrot.slane %v2256, %v2269
    %v2271 = vcombine.high %v2263, %v2263
    %v2272 = vcombine.high %v2270, %v2270
    %v2279 = vcombine.low %v2243, %v2245
    %v2281 = vunpack.c.l.s4 1966171168
    %v2282 = vunpack.c.0.s8 %v2281
    %v2283 = vlaneseq
    %v2284 = vshrl.u32 %v2283, 7
    %v2285 = vsub.s32 %v2282, %v2284
    %v2286 = vrot.slane %v2279, %v2285
    %v2287 = vcombine.high %v2286, %v2286
    %v2289 = vunpack.c.l.s4 1966171168
    %v2290 = vunpack.c.0.s8 %v2289
    %v2291 = vlaneseq
    %v2292 = vshrl.u32 %v2291, 7
    %v2293 = vsub.s32 %v2290, %v2292
    %v2294 = vrot.slane %v2286, %v2293
    %v2296 = vunpack.c.l.s4 1966171168
    %v2297 = vunpack.c.0.s8 %v2296
    %v2298 = vlaneseq
    %v2299 = vshrl.u32 %v2298, 7
    %v2300 = vsub.s32 %v2297, %v2299
    %v2301 = vrot.slane %v2287, %v2300
    %v2302 = vcombine.high %v2294, %v2294
    %v2303 = vcombine.high %v2301, %v2301
    %2308 = vmatprep.subr.mxu0 %v592
    %2309 = vmatpush1.msra.mxu0 %v591
    %2310 = vmatprep.subr.mxu0 %v600
    %2311 = vmatpush1.msra.mxu0 %v599
    %2312 = vmatprep.subr.mxu0 %v608
    %2313 = vmatpush1.msra.mxu0 %v607
    %2314 = vmatprep.subr.mxu0 %v616
    %2315 = vmatpush1.msra.mxu0 %v615
    %2316 = vmatprep.subr.mxu0 %v624
    %2317 = vmatpush1.msra.mxu0 %v623
    %2318 = vmatprep.subr.mxu0 %v632
    %2319 = vmatpush1.msra.mxu0 %v631
    %2320 = vmatprep.subr.mxu0 %v640
    %2321 = vmatpush1.msra.mxu0 %v639
    %2322 = vmatprep.subr.mxu0 %v648
    %2323 = vmatpush1.msra.mxu0 %v647
    %2324 = vmatprep.subr.mxu0 %v656
    %2325 = vmatpush1.msra.mxu0 %v655
    %2326 = vmatprep.subr.mxu0 %v664
    %2327 = vmatpush1.msra.mxu0 %v663
    %2328 = vmatprep.subr.mxu0 %v672
    %2329 = vmatpush1.msra.mxu0 %v671
    %2330 = vmatprep.subr.mxu0 %v680
    %2331 = vmatpush1.msra.mxu0 %v679
    %2332 = vmatprep.subr.mxu0 %v688
    %2333 = vmatpush1.msra.mxu0 %v687
    %2334 = vmatprep.subr.mxu0 %v696
    %2335 = vmatpush1.msra.mxu0 %v695
    %2336 = vmatprep.subr.mxu0 %v704
    %2337 = vmatpush1.msra.mxu0 %v703
    %2338 = vmatprep.subr.mxu0 %v712
    %2339 = vmatpush1.msra.mxu0 %v711
    %2340 = vmatprep.subr.mxu0 %v720
    %2341 = vmatpush1.msra.mxu0 %v719
    %2342 = vmatprep.subr.mxu0 %v728
    %2343 = vmatpush1.msra.mxu0 %v727
    %2344 = vmatprep.subr.mxu0 %v736
    %2345 = vmatpush1.msra.mxu0 %v735
    %2346 = vmatprep.subr.mxu0 %v744
    %2347 = vmatpush1.msra.mxu0 %v743
    %2348 = vmatprep.subr.mxu0 %v752
    %2349 = vmatpush1.msra.mxu0 %v751
    %2350 = vmatprep.subr.mxu0 %v760
    %2351 = vmatpush1.msra.mxu0 %v759
    %2352 = vmatprep.subr.mxu0 %v768
    %2353 = vmatpush1.msra.mxu0 %v767
    %2354 = vmatprep.subr.mxu0 %v776
    %2355 = vmatpush1.msra.mxu0 %v775
    %2356 = vmatprep.subr.mxu0 %v784
    %2357 = vmatpush1.msra.mxu0 %v783
    %2358 = vmatprep.subr.mxu0 %v792
    %2359 = vmatpush1.msra.mxu0 %v791
    %2360 = vmatprep.subr.mxu0 %v800
    %2361 = vmatpush1.msra.mxu0 %v799
    %2362 = vmatprep.subr.mxu0 %v808
    %2363 = vmatpush1.msra.mxu0 %v807
    %2364 = vmatprep.subr.mxu0 %v816
    %2365 = vmatpush1.msra.mxu0 %v815
    %2366 = vmatprep.subr.mxu0 %v824
    %2367 = vmatpush1.msra.mxu0 %v823
    %2368 = vmatprep.subr.mxu0 %v832
    %2369 = vmatpush1.msra.mxu0 %v831
    %2370 = vmatprep.subr.mxu0 %v840
    %2371 = vmatpush1.msra.mxu0 %v839
    %2372 = vmatprep.mubr.f32.mxu0 %v2183
    %2373 = vmatmul.mubr.f32.gmra.mrb[0].mxu0 %v2159
    %v2374 = vpop.f32.mrb[0].mxu0
    %v2375 = vadd.f32 0.0, %v2374
    %v2376 = vpop.f32.mrb[0].mxu0
    %v2377 = vadd.f32 0.0, %v2376
    %2378 = vdwg.mxu0
    %2379 = vmatprep.subr.mxu0 %v594
    %2380 = vmatpush1.msra.mxu0 %v593
    %2381 = vmatprep.subr.mxu0 %v602
    %2382 = vmatpush1.msra.mxu0 %v601
    %2383 = vmatprep.subr.mxu0 %v610
    %2384 = vmatpush1.msra.mxu0 %v609
    %2385 = vmatprep.subr.mxu0 %v618
    %2386 = vmatpush1.msra.mxu0 %v617
    %2387 = vmatprep.subr.mxu0 %v626
    %2388 = vmatpush1.msra.mxu0 %v625
    %2389 = vmatprep.subr.mxu0 %v634
    %2390 = vmatpush1.msra.mxu0 %v633
    %2391 = vmatprep.subr.mxu0 %v642
    %2392 = vmatpush1.msra.mxu0 %v641
    %2393 = vmatprep.subr.mxu0 %v650
    %2394 = vmatpush1.msra.mxu0 %v649
    %2395 = vmatprep.subr.mxu0 %v658
    %2396 = vmatpush1.msra.mxu0 %v657
    %2397 = vmatprep.subr.mxu0 %v666
    %2398 = vmatpush1.msra.mxu0 %v665
    %2399 = vmatprep.subr.mxu0 %v674
    %2400 = vmatpush1.msra.mxu0 %v673
    %2401 = vmatprep.subr.mxu0 %v682
    %2402 = vmatpush1.msra.mxu0 %v681
    %2403 = vmatprep.subr.mxu0 %v690
    %2404 = vmatpush1.msra.mxu0 %v689
    %2405 = vmatprep.subr.mxu0 %v698
    %2406 = vmatpush1.msra.mxu0 %v697
    %2407 = vmatprep.subr.mxu0 %v706
    %2408 = vmatpush1.msra.mxu0 %v705
    %2409 = vmatprep.subr.mxu0 %v714
    %2410 = vmatpush1.msra.mxu0 %v713
    %2411 = vmatprep.subr.mxu0 %v722
    %2412 = vmatpush1.msra.mxu0 %v721
    %2413 = vmatprep.subr.mxu0 %v730
    %2414 = vmatpush1.msra.mxu0 %v729
    %2415 = vmatprep.subr.mxu0 %v738
    %2416 = vmatpush1.msra.mxu0 %v737
    %2417 = vmatprep.subr.mxu0 %v746
    %2418 = vmatpush1.msra.mxu0 %v745
    %2419 = vmatprep.subr.mxu0 %v754
    %2420 = vmatpush1.msra.mxu0 %v753
    %2421 = vmatprep.subr.mxu0 %v762
    %2422 = vmatpush1.msra.mxu0 %v761
    %2423 = vmatprep.subr.mxu0 %v770
    %2424 = vmatpush1.msra.mxu0 %v769
    %2425 = vmatprep.subr.mxu0 %v778
    %2426 = vmatpush1.msra.mxu0 %v777
    %2427 = vmatprep.subr.mxu0 %v786
    %2428 = vmatpush1.msra.mxu0 %v785
    %2429 = vmatprep.subr.mxu0 %v794
    %2430 = vmatpush1.msra.mxu0 %v793
    %2431 = vmatprep.subr.mxu0 %v802
    %2432 = vmatpush1.msra.mxu0 %v801
    %2433 = vmatprep.subr.mxu0 %v810
    %2434 = vmatpush1.msra.mxu0 %v809
    %2435 = vmatprep.subr.mxu0 %v818
    %2436 = vmatpush1.msra.mxu0 %v817
    %2437 = vmatprep.subr.mxu0 %v826
    %2438 = vmatpush1.msra.mxu0 %v825
    %2439 = vmatprep.subr.mxu0 %v834
    %2440 = vmatpush1.msra.mxu0 %v833
    %2441 = vmatprep.subr.mxu0 %v842
    %2442 = vmatpush1.msra.mxu0 %v841
    %2443 = vmatprep.mubr.f32.mxu0 %v2183
    %2444 = vmatmul.mubr.f32.gmra.mrb[0].mxu0 %v2159
    %v2445 = vpop.f32.mrb[0].mxu0
    %v2446 = vadd.f32 0.0, %v2445
    %v2447 = vpop.f32.mrb[0].mxu0
    %v2448 = vadd.f32 0.0, %v2447
    %2449 = vdwg.mxu0
    %2450 = vmatprep.subr.mxu0 %v596
    %2451 = vmatpush1.msra.mxu0 %v595
    %2452 = vmatprep.subr.mxu0 %v604
    %2453 = vmatpush1.msra.mxu0 %v603
    %2454 = vmatprep.subr.mxu0 %v612
    %2455 = vmatpush1.msra.mxu0 %v611
    %2456 = vmatprep.subr.mxu0 %v620
    %2457 = vmatpush1.msra.mxu0 %v619
    %2458 = vmatprep.subr.mxu0 %v628
    %2459 = vmatpush1.msra.mxu0 %v627
    %2460 = vmatprep.subr.mxu0 %v636
    %2461 = vmatpush1.msra.mxu0 %v635
    %2462 = vmatprep.subr.mxu0 %v644
    %2463 = vmatpush1.msra.mxu0 %v643
    %2464 = vmatprep.subr.mxu0 %v652
    %2465 = vmatpush1.msra.mxu0 %v651
    %2466 = vmatprep.subr.mxu0 %v660
    %2467 = vmatpush1.msra.mxu0 %v659
    %2468 = vmatprep.subr.mxu0 %v668
    %2469 = vmatpush1.msra.mxu0 %v667
    %2470 = vmatprep.subr.mxu0 %v676
    %2471 = vmatpush1.msra.mxu0 %v675
    %2472 = vmatprep.subr.mxu0 %v684
    %2473 = vmatpush1.msra.mxu0 %v683
    %2474 = vmatprep.subr.mxu0 %v692
    %2475 = vmatpush1.msra.mxu0 %v691
    %2476 = vmatprep.subr.mxu0 %v700
    %2477 = vmatpush1.msra.mxu0 %v699
    %2478 = vmatprep.subr.mxu0 %v708
    %2479 = vmatpush1.msra.mxu0 %v707
    %2480 = vmatprep.subr.mxu0 %v716
    %2481 = vmatpush1.msra.mxu0 %v715
    %2482 = vmatprep.subr.mxu0 %v724
    %2483 = vmatpush1.msra.mxu0 %v723
    %2484 = vmatprep.subr.mxu0 %v732
    %2485 = vmatpush1.msra.mxu0 %v731
    %2486 = vmatprep.subr.mxu0 %v740
    %2487 = vmatpush1.msra.mxu0 %v739
    %2488 = vmatprep.subr.mxu0 %v748
    %2489 = vmatpush1.msra.mxu0 %v747
    %2490 = vmatprep.subr.mxu0 %v756
    %2491 = vmatpush1.msra.mxu0 %v755
    %2492 = vmatprep.subr.mxu0 %v764
    %2493 = vmatpush1.msra.mxu0 %v763
    %2494 = vmatprep.subr.mxu0 %v772
    %2495 = vmatpush1.msra.mxu0 %v771
    %2496 = vmatprep.subr.mxu0 %v780
    %2497 = vmatpush1.msra.mxu0 %v779
    %2498 = vmatprep.subr.mxu0 %v788
    %2499 = vmatpush1.msra.mxu0 %v787
    %2500 = vmatprep.subr.mxu0 %v796
    %2501 = vmatpush1.msra.mxu0 %v795
    %2502 = vmatprep.subr.mxu0 %v804
    %2503 = vmatpush1.msra.mxu0 %v803
    %2504 = vmatprep.subr.mxu0 %v812
    %2505 = vmatpush1.msra.mxu0 %v811
    %2506 = vmatprep.subr.mxu0 %v820
    %2507 = vmatpush1.msra.mxu0 %v819
    %2508 = vmatprep.subr.mxu0 %v828
    %2509 = vmatpush1.msra.mxu0 %v827
    %2510 = vmatprep.subr.mxu0 %v836
    %2511 = vmatpush1.msra.mxu0 %v835
    %2512 = vmatprep.subr.mxu0 %v844
    %2513 = vmatpush1.msra.mxu0 %v843
    %2514 = vmatprep.mubr.f32.mxu0 %v2183
    %2515 = vmatmul.mubr.f32.gmra.mrb[0].mxu0 %v2159
    %v2516 = vpop.f32.mrb[0].mxu0
    %v2517 = vadd.f32 0.0, %v2516
    %v2518 = vpop.f32.mrb[0].mxu0
    %v2519 = vadd.f32 0.0, %v2518
    %2520 = vdwg.mxu0
    %2521 = vmatprep.subr.mxu0 %v598
    %2522 = vmatpush1.msra.mxu0 %v597
    %2523 = vmatprep.subr.mxu0 %v606
    %2524 = vmatpush1.msra.mxu0 %v605
    %2525 = vmatprep.subr.mxu0 %v614
    %2526 = vmatpush1.msra.mxu0 %v613
    %2527 = vmatprep.subr.mxu0 %v622
    %2528 = vmatpush1.msra.mxu0 %v621
    %2529 = vmatprep.subr.mxu0 %v630
    %2530 = vmatpush1.msra.mxu0 %v629
    %2531 = vmatprep.subr.mxu0 %v638
    %2532 = vmatpush1.msra.mxu0 %v637
    %2533 = vmatprep.subr.mxu0 %v646
    %2534 = vmatpush1.msra.mxu0 %v645
    %2535 = vmatprep.subr.mxu0 %v654
    %2536 = vmatpush1.msra.mxu0 %v653
    %2537 = vmatprep.subr.mxu0 %v662
    %2538 = vmatpush1.msra.mxu0 %v661
    %2539 = vmatprep.subr.mxu0 %v670
    %2540 = vmatpush1.msra.mxu0 %v669
    %2541 = vmatprep.subr.mxu0 %v678
    %2542 = vmatpush1.msra.mxu0 %v677
    %2543 = vmatprep.subr.mxu0 %v686
    %2544 = vmatpush1.msra.mxu0 %v685
    %2545 = vmatprep.subr.mxu0 %v694
    %2546 = vmatpush1.msra.mxu0 %v693
    %2547 = vmatprep.subr.mxu0 %v702
    %2548 = vmatpush1.msra.mxu0 %v701
    %2549 = vmatprep.subr.mxu0 %v710
    %2550 = vmatpush1.msra.mxu0 %v709
    %2551 = vmatprep.subr.mxu0 %v718
    %2552 = vmatpush1.msra.mxu0 %v717
    %2553 = vmatprep.subr.mxu0 %v726
    %2554 = vmatpush1.msra.mxu0 %v725
    %2555 = vmatprep.subr.mxu0 %v734
    %2556 = vmatpush1.msra.mxu0 %v733
    %2557 = vmatprep.subr.mxu0 %v742
    %2558 = vmatpush1.msra.mxu0 %v741
    %2559 = vmatprep.subr.mxu0 %v750
    %2560 = vmatpush1.msra.mxu0 %v749
    %2561 = vmatprep.subr.mxu0 %v758
    %2562 = vmatpush1.msra.mxu0 %v757
    %2563 = vmatprep.subr.mxu0 %v766
    %2564 = vmatpush1.msra.mxu0 %v765
    %2565 = vmatprep.subr.mxu0 %v774
    %2566 = vmatpush1.msra.mxu0 %v773
    %2567 = vmatprep.subr.mxu0 %v782
    %2568 = vmatpush1.msra.mxu0 %v781
    %2569 = vmatprep.subr.mxu0 %v790
    %2570 = vmatpush1.msra.mxu0 %v789
    %2571 = vmatprep.subr.mxu0 %v798
    %2572 = vmatpush1.msra.mxu0 %v797
    %2573 = vmatprep.subr.mxu0 %v806
    %2574 = vmatpush1.msra.mxu0 %v805
    %2575 = vmatprep.subr.mxu0 %v814
    %2576 = vmatpush1.msra.mxu0 %v813
    %2577 = vmatprep.subr.mxu0 %v822
    %2578 = vmatpush1.msra.mxu0 %v821
    %2579 = vmatprep.subr.mxu0 %v830
    %2580 = vmatpush1.msra.mxu0 %v829
    %2581 = vmatprep.subr.mxu0 %v838
    %2582 = vmatpush1.msra.mxu0 %v837
    %2583 = vmatprep.subr.mxu0 %v846
    %2584 = vmatpush1.msra.mxu0 %v845
    %2585 = vmatprep.mubr.f32.mxu0 %v2183
    %2586 = vmatmul.mubr.f32.gmra.mrb[0].mxu0 %v2159
    %v2587 = vpop.f32.mrb[0].mxu0
    %v2588 = vadd.f32 0.0, %v2587
    %v2589 = vpop.f32.mrb[0].mxu0
    %v2590 = vadd.f32 0.0, %v2589
    %2591 = vdwg.mxu0
    %v2592 = vadd.f32 %v2263, %v2375
    %v2593 = vadd.f32 %v2270, %v2377
    %v2594 = vadd.f32 %v2271, %v2446
    %v2595 = vadd.f32 %v2272, %v2448
    %v2596 = vadd.f32 %v2294, %v2517
    %v2597 = vadd.f32 %v2301, %v2519
    %v2598 = vadd.f32 %v2302, %v2588
    %v2599 = vadd.f32 %v2303, %v2590
    %v2600 = vxor.u32 %v2592, 2147483648
    %v2601 = vxor.u32 %v2593, 2147483648
    %v2602 = vxor.u32 %v2594, 2147483648
    %v2603 = vmul.f32 %v2600, 1.442695
    %v2604 = vpow.pop %v2603
    %v2605 = vmul.f32 %v2601, 1.442695
    %v2606 = vpow.pop %v2605
    %v2607 = vmul.f32 %v2602, 1.442695
    %v2608 = vpow.pop %v2607
    %v2609 = vadd.f32 %v2604, 1.0
    %v2610 = vadd.f32 %v2606, 1.0
    %v2611 = vadd.f32 %v2608, 1.0
    %v2612 = vrcp.pop %v2609
    %v2613 = vmul.f32 1.0, %v2612
    %v2614 = vrcp.pop %v2610
    %v2615 = vmul.f32 1.0, %v2614
    %v2616 = vrcp.pop %v2611
    %v2617 = vmul.f32 1.0, %v2616
    %v2618 = vtanh.pop %v2595
    %v2619 = vmul.f32 %v2615, %v2157
    %v2620 = vmul.f32 %v2613, %v2618
    %v2621 = vadd.f32 %v2619, %v2620
    %v2622 = vtanh.pop %v2621
    %v2623 = vmul.f32 %v2617, %v2622
    %v2624 = vxor.u32 %v2596, 2147483648
    %v2625 = vxor.u32 %v2597, 2147483648
    %v2626 = vxor.u32 %v2598, 2147483648
    %v2627 = vmul.f32 %v2624, 1.442695
    %v2628 = vpow.pop %v2627
    %v2629 = vmul.f32 %v2625, 1.442695
    %v2630 = vpow.pop %v2629
    %v2631 = vmul.f32 %v2626, 1.442695
    %v2632 = vpow.pop %v2631
    %v2633 = vadd.f32 %v2628, 1.0
    %v2634 = vadd.f32 %v2630, 1.0
    %v2635 = vadd.f32 %v2632, 1.0
    %v2636 = vrcp.pop %v2633
    %v2637 = vmul.f32 1.0, %v2636
    %v2638 = vrcp.pop %v2634
    %v2639 = vmul.f32 1.0, %v2638
    %v2640 = vrcp.pop %v2635
    %v2641 = vmul.f32 1.0, %v2640
    %v2642 = vtanh.pop %v2599
    %v2643 = vmul.f32 %v2639, %v2181
    %v2644 = vmul.f32 %v2637, %v2642
    %v2645 = vadd.f32 %v2643, %v2644
    %v2646 = vtanh.pop %v2645
    %v2647 = vmul.f32 %v2641, %v2646
    %v2650 = vunpack.c.l.s4 1966171168
    %v2651 = vunpack.c.0.s8 %v2650
    %v2652 = vlaneseq
    %v2653 = vshrl.u32 %v2652, 7
    %v2654 = vsub.s32 %v2651, %v2653
    %v2655 = vrot.slane %v2623, %v2654
    %v2656 = vcombine.high %v2655, %v2655
    %v2658 = vunpack.c.l.s4 1966171168
    %v2659 = vunpack.c.0.s8 %v2658
    %v2660 = vlaneseq
    %v2661 = vshrl.u32 %v2660, 7
    %v2662 = vsub.s32 %v2659, %v2661
    %v2663 = vrot.slane %v2655, %v2662
    %v2665 = vunpack.c.l.s4 1966171168
    %v2666 = vunpack.c.0.s8 %v2665
    %v2667 = vlaneseq
    %v2668 = vshrl.u32 %v2667, 7
    %v2669 = vsub.s32 %v2666, %v2668
    %v2670 = vrot.slane %v2656, %v2669
    %2673 = vst [vmem:[#allocation3 + $0x3] sm:$0x1] %v2663
    %2674 = vst [vmem:[#allocation3 + $0x13] sm:$0x1] %v2670
    %v2677 = vunpack.c.l.s4 1966171168
    %v2678 = vunpack.c.0.s8 %v2677
    %v2679 = vlaneseq
    %v2680 = vshrl.u32 %v2679, 7
    %v2681 = vsub.s32 %v2678, %v2680
    %v2682 = vrot.slane %v2647, %v2681
    %v2683 = vcombine.high %v2682, %v2682
    %v2685 = vunpack.c.l.s4 1966171168
    %v2686 = vunpack.c.0.s8 %v2685
    %v2687 = vlaneseq
    %v2688 = vshrl.u32 %v2687, 7
    %v2689 = vsub.s32 %v2686, %v2688
    %v2690 = vrot.slane %v2682, %v2689
    %v2692 = vunpack.c.l.s4 1966171168
    %v2693 = vunpack.c.0.s8 %v2692
    %v2694 = vlaneseq
    %v2695 = vshrl.u32 %v2694, 7
    %v2696 = vsub.s32 %v2693, %v2695
    %v2697 = vrot.slane %v2683, %v2696
    %2700 = vst [vmem:[#allocation3 + $0xc] sm:$0x1] %v2690
    %2701 = vst [vmem:[#allocation3 + $0x1c] sm:$0x1] %v2697
    %s2702 = scalar_lea.vmem [#allocation2], 4
    %v2703 = vld [vmem:[%s2702] ss:$8 sm:$0xf]
    %s2704 = scalar_lea.vmem [#allocation2], 68
    %v2705 = vld [vmem:[%s2704] ss:$8 sm:$0xf]
    %s2706 = scalar_lea.vmem [#allocation2], 35
    %v2707 = vld [vmem:[%s2706] ss:$8 sm:$0xf]
    %s2708 = scalar_lea.vmem [#allocation2], 99
    %v2709 = vld [vmem:[%s2708] ss:$8 sm:$0xf]
    %v2712 = vcombine.low %v2703, %v2705
    %v2714 = vunpack.c.l.s4 1966171168
    %v2715 = vunpack.c.0.s8 %v2714
    %v2716 = vlaneseq
    %v2717 = vshrl.u32 %v2716, 7
    %v2718 = vsub.s32 %v2715, %v2717
    %v2719 = vrot.slane %v2712, %v2718
    %v2720 = vcombine.high %v2719, %v2719
    %v2722 = vunpack.c.l.s4 1966171168
    %v2723 = vunpack.c.0.s8 %v2722
    %v2724 = vlaneseq
    %v2725 = vshrl.u32 %v2724, 7
    %v2726 = vsub.s32 %v2723, %v2725
    %v2727 = vrot.slane %v2719, %v2726
    %v2729 = vunpack.c.l.s4 1966171168
    %v2730 = vunpack.c.0.s8 %v2729
    %v2731 = vlaneseq
    %v2732 = vshrl.u32 %v2731, 7
    %v2733 = vsub.s32 %v2730, %v2732
    %v2734 = vrot.slane %v2720, %v2733
    %v2735 = vcombine.high %v2727, %v2727
    %v2736 = vcombine.high %v2734, %v2734
    %v2743 = vcombine.low %v2707, %v2709
    %v2745 = vunpack.c.l.s4 1966171168
    %v2746 = vunpack.c.0.s8 %v2745
    %v2747 = vlaneseq
    %v2748 = vshrl.u32 %v2747, 7
    %v2749 = vsub.s32 %v2746, %v2748
    %v2750 = vrot.slane %v2743, %v2749
    %v2751 = vcombine.high %v2750, %v2750
    %v2753 = vunpack.c.l.s4 1966171168
    %v2754 = vunpack.c.0.s8 %v2753
    %v2755 = vlaneseq
    %v2756 = vshrl.u32 %v2755, 7
    %v2757 = vsub.s32 %v2754, %v2756
    %v2758 = vrot.slane %v2750, %v2757
    %v2760 = vunpack.c.l.s4 1966171168
    %v2761 = vunpack.c.0.s8 %v2760
    %v2762 = vlaneseq
    %v2763 = vshrl.u32 %v2762, 7
    %v2764 = vsub.s32 %v2761, %v2763
    %v2765 = vrot.slane %v2751, %v2764
    %v2766 = vcombine.high %v2758, %v2758
    %v2767 = vcombine.high %v2765, %v2765
    %2772 = vmatprep.subr.mxu0 %v592
    %2773 = vmatpush1.msra.mxu0 %v591
    %2774 = vmatprep.subr.mxu0 %v600
    %2775 = vmatpush1.msra.mxu0 %v599
    %2776 = vmatprep.subr.mxu0 %v608
    %2777 = vmatpush1.msra.mxu0 %v607
    %2778 = vmatprep.subr.mxu0 %v616
    %2779 = vmatpush1.msra.mxu0 %v615
    %2780 = vmatprep.subr.mxu0 %v624
    %2781 = vmatpush1.msra.mxu0 %v623
    %2782 = vmatprep.subr.mxu0 %v632
    %2783 = vmatpush1.msra.mxu0 %v631
    %2784 = vmatprep.subr.mxu0 %v640
    %2785 = vmatpush1.msra.mxu0 %v639
    %2786 = vmatprep.subr.mxu0 %v648
    %2787 = vmatpush1.msra.mxu0 %v647
    %2788 = vmatprep.subr.mxu0 %v656
    %2789 = vmatpush1.msra.mxu0 %v655
    %2790 = vmatprep.subr.mxu0 %v664
    %2791 = vmatpush1.msra.mxu0 %v663
    %2792 = vmatprep.subr.mxu0 %v672
    %2793 = vmatpush1.msra.mxu0 %v671
    %2794 = vmatprep.subr.mxu0 %v680
    %2795 = vmatpush1.msra.mxu0 %v679
    %2796 = vmatprep.subr.mxu0 %v688
    %2797 = vmatpush1.msra.mxu0 %v687
    %2798 = vmatprep.subr.mxu0 %v696
    %2799 = vmatpush1.msra.mxu0 %v695
    %2800 = vmatprep.subr.mxu0 %v704
    %2801 = vmatpush1.msra.mxu0 %v703
    %2802 = vmatprep.subr.mxu0 %v712
    %2803 = vmatpush1.msra.mxu0 %v711
    %2804 = vmatprep.subr.mxu0 %v720
    %2805 = vmatpush1.msra.mxu0 %v719
    %2806 = vmatprep.subr.mxu0 %v728
    %2807 = vmatpush1.msra.mxu0 %v727
    %2808 = vmatprep.subr.mxu0 %v736
    %2809 = vmatpush1.msra.mxu0 %v735
    %2810 = vmatprep.subr.mxu0 %v744
    %2811 = vmatpush1.msra.mxu0 %v743
    %2812 = vmatprep.subr.mxu0 %v752
    %2813 = vmatpush1.msra.mxu0 %v751
    %2814 = vmatprep.subr.mxu0 %v760
    %2815 = vmatpush1.msra.mxu0 %v759
    %2816 = vmatprep.subr.mxu0 %v768
    %2817 = vmatpush1.msra.mxu0 %v767
    %2818 = vmatprep.subr.mxu0 %v776
    %2819 = vmatpush1.msra.mxu0 %v775
    %2820 = vmatprep.subr.mxu0 %v784
    %2821 = vmatpush1.msra.mxu0 %v783
    %2822 = vmatprep.subr.mxu0 %v792
    %2823 = vmatpush1.msra.mxu0 %v791
    %2824 = vmatprep.subr.mxu0 %v800
    %2825 = vmatpush1.msra.mxu0 %v799
    %2826 = vmatprep.subr.mxu0 %v808
    %2827 = vmatpush1.msra.mxu0 %v807
    %2828 = vmatprep.subr.mxu0 %v816
    %2829 = vmatpush1.msra.mxu0 %v815
    %2830 = vmatprep.subr.mxu0 %v824
    %2831 = vmatpush1.msra.mxu0 %v823
    %2832 = vmatprep.subr.mxu0 %v832
    %2833 = vmatpush1.msra.mxu0 %v831
    %2834 = vmatprep.subr.mxu0 %v840
    %2835 = vmatpush1.msra.mxu0 %v839
    %2836 = vmatprep.mubr.f32.mxu0 %v2647
    %2837 = vmatmul.mubr.f32.gmra.mrb[0].mxu0 %v2623
    %v2838 = vpop.f32.mrb[0].mxu0
    %v2839 = vadd.f32 0.0, %v2838
    %v2840 = vpop.f32.mrb[0].mxu0
    %v2841 = vadd.f32 0.0, %v2840
    %2842 = vdwg.mxu0
    %2843 = vmatprep.subr.mxu0 %v594
    %2844 = vmatpush1.msra.mxu0 %v593
    %2845 = vmatprep.subr.mxu0 %v602
    %2846 = vmatpush1.msra.mxu0 %v601
    %2847 = vmatprep.subr.mxu0 %v610
    %2848 = vmatpush1.msra.mxu0 %v609
    %2849 = vmatprep.subr.mxu0 %v618
    %2850 = vmatpush1.msra.mxu0 %v617
    %2851 = vmatprep.subr.mxu0 %v626
    %2852 = vmatpush1.msra.mxu0 %v625
    %2853 = vmatprep.subr.mxu0 %v634
    %2854 = vmatpush1.msra.mxu0 %v633
    %2855 = vmatprep.subr.mxu0 %v642
    %2856 = vmatpush1.msra.mxu0 %v641
    %2857 = vmatprep.subr.mxu0 %v650
    %2858 = vmatpush1.msra.mxu0 %v649
    %2859 = vmatprep.subr.mxu0 %v658
    %2860 = vmatpush1.msra.mxu0 %v657
    %2861 = vmatprep.subr.mxu0 %v666
    %2862 = vmatpush1.msra.mxu0 %v665
    %2863 = vmatprep.subr.mxu0 %v674
    %2864 = vmatpush1.msra.mxu0 %v673
    %2865 = vmatprep.subr.mxu0 %v682
    %2866 = vmatpush1.msra.mxu0 %v681
    %2867 = vmatprep.subr.mxu0 %v690
    %2868 = vmatpush1.msra.mxu0 %v689
    %2869 = vmatprep.subr.mxu0 %v698
    %2870 = vmatpush1.msra.mxu0 %v697
    %2871 = vmatprep.subr.mxu0 %v706
    %2872 = vmatpush1.msra.mxu0 %v705
    %2873 = vmatprep.subr.mxu0 %v714
    %2874 = vmatpush1.msra.mxu0 %v713
    %2875 = vmatprep.subr.mxu0 %v722
    %2876 = vmatpush1.msra.mxu0 %v721
    %2877 = vmatprep.subr.mxu0 %v730
    %2878 = vmatpush1.msra.mxu0 %v729
    %2879 = vmatprep.subr.mxu0 %v738
    %2880 = vmatpush1.msra.mxu0 %v737
    %2881 = vmatprep.subr.mxu0 %v746
    %2882 = vmatpush1.msra.mxu0 %v745
    %2883 = vmatprep.subr.mxu0 %v754
    %2884 = vmatpush1.msra.mxu0 %v753
    %2885 = vmatprep.subr.mxu0 %v762
    %2886 = vmatpush1.msra.mxu0 %v761
    %2887 = vmatprep.subr.mxu0 %v770
    %2888 = vmatpush1.msra.mxu0 %v769
    %2889 = vmatprep.subr.mxu0 %v778
    %2890 = vmatpush1.msra.mxu0 %v777
    %2891 = vmatprep.subr.mxu0 %v786
    %2892 = vmatpush1.msra.mxu0 %v785
    %2893 = vmatprep.subr.mxu0 %v794
    %2894 = vmatpush1.msra.mxu0 %v793
    %2895 = vmatprep.subr.mxu0 %v802
    %2896 = vmatpush1.msra.mxu0 %v801
    %2897 = vmatprep.subr.mxu0 %v810
    %2898 = vmatpush1.msra.mxu0 %v809
    %2899 = vmatprep.subr.mxu0 %v818
    %2900 = vmatpush1.msra.mxu0 %v817
    %2901 = vmatprep.subr.mxu0 %v826
    %2902 = vmatpush1.msra.mxu0 %v825
    %2903 = vmatprep.subr.mxu0 %v834
    %2904 = vmatpush1.msra.mxu0 %v833
    %2905 = vmatprep.subr.mxu0 %v842
    %2906 = vmatpush1.msra.mxu0 %v841
    %2907 = vmatprep.mubr.f32.mxu0 %v2647
    %2908 = vmatmul.mubr.f32.gmra.mrb[0].mxu0 %v2623
    %v2909 = vpop.f32.mrb[0].mxu0
    %v2910 = vadd.f32 0.0, %v2909
    %v2911 = vpop.f32.mrb[0].mxu0
    %v2912 = vadd.f32 0.0, %v2911
    %2913 = vdwg.mxu0
    %2914 = vmatprep.subr.mxu0 %v596
    %2915 = vmatpush1.msra.mxu0 %v595
    %2916 = vmatprep.subr.mxu0 %v604
    %2917 = vmatpush1.msra.mxu0 %v603
    %2918 = vmatprep.subr.mxu0 %v612
    %2919 = vmatpush1.msra.mxu0 %v611
    %2920 = vmatprep.subr.mxu0 %v620
    %2921 = vmatpush1.msra.mxu0 %v619
    %2922 = vmatprep.subr.mxu0 %v628
    %2923 = vmatpush1.msra.mxu0 %v627
    %2924 = vmatprep.subr.mxu0 %v636
    %2925 = vmatpush1.msra.mxu0 %v635
    %2926 = vmatprep.subr.mxu0 %v644
    %2927 = vmatpush1.msra.mxu0 %v643
    %2928 = vmatprep.subr.mxu0 %v652
    %2929 = vmatpush1.msra.mxu0 %v651
    %2930 = vmatprep.subr.mxu0 %v660
    %2931 = vmatpush1.msra.mxu0 %v659
    %2932 = vmatprep.subr.mxu0 %v668
    %2933 = vmatpush1.msra.mxu0 %v667
    %2934 = vmatprep.subr.mxu0 %v676
    %2935 = vmatpush1.msra.mxu0 %v675
    %2936 = vmatprep.subr.mxu0 %v684
    %2937 = vmatpush1.msra.mxu0 %v683
    %2938 = vmatprep.subr.mxu0 %v692
    %2939 = vmatpush1.msra.mxu0 %v691
    %2940 = vmatprep.subr.mxu0 %v700
    %2941 = vmatpush1.msra.mxu0 %v699
    %2942 = vmatprep.subr.mxu0 %v708
    %2943 = vmatpush1.msra.mxu0 %v707
    %2944 = vmatprep.subr.mxu0 %v716
    %2945 = vmatpush1.msra.mxu0 %v715
    %2946 = vmatprep.subr.mxu0 %v724
    %2947 = vmatpush1.msra.mxu0 %v723
    %2948 = vmatprep.subr.mxu0 %v732
    %2949 = vmatpush1.msra.mxu0 %v731
    %2950 = vmatprep.subr.mxu0 %v740
    %2951 = vmatpush1.msra.mxu0 %v739
    %2952 = vmatprep.subr.mxu0 %v748
    %2953 = vmatpush1.msra.mxu0 %v747
    %2954 = vmatprep.subr.mxu0 %v756
    %2955 = vmatpush1.msra.mxu0 %v755
    %2956 = vmatprep.subr.mxu0 %v764
    %2957 = vmatpush1.msra.mxu0 %v763
    %2958 = vmatprep.subr.mxu0 %v772
    %2959 = vmatpush1.msra.mxu0 %v771
    %2960 = vmatprep.subr.mxu0 %v780
    %2961 = vmatpush1.msra.mxu0 %v779
    %2962 = vmatprep.subr.mxu0 %v788
    %2963 = vmatpush1.msra.mxu0 %v787
    %2964 = vmatprep.subr.mxu0 %v796
    %2965 = vmatpush1.msra.mxu0 %v795
    %2966 = vmatprep.subr.mxu0 %v804
    %2967 = vmatpush1.msra.mxu0 %v803
    %2968 = vmatprep.subr.mxu0 %v812
    %2969 = vmatpush1.msra.mxu0 %v811
    %2970 = vmatprep.subr.mxu0 %v820
    %2971 = vmatpush1.msra.mxu0 %v819
    %2972 = vmatprep.subr.mxu0 %v828
    %2973 = vmatpush1.msra.mxu0 %v827
    %2974 = vmatprep.subr.mxu0 %v836
    %2975 = vmatpush1.msra.mxu0 %v835
    %2976 = vmatprep.subr.mxu0 %v844
    %2977 = vmatpush1.msra.mxu0 %v843
    %2978 = vmatprep.mubr.f32.mxu0 %v2647
    %2979 = vmatmul.mubr.f32.gmra.mrb[0].mxu0 %v2623
    %v2980 = vpop.f32.mrb[0].mxu0
    %v2981 = vadd.f32 0.0, %v2980
    %v2982 = vpop.f32.mrb[0].mxu0
    %v2983 = vadd.f32 0.0, %v2982
    %2984 = vdwg.mxu0
    %2985 = vmatprep.subr.mxu0 %v598
    %2986 = vmatpush1.msra.mxu0 %v597
    %2987 = vmatprep.subr.mxu0 %v606
    %2988 = vmatpush1.msra.mxu0 %v605
    %2989 = vmatprep.subr.mxu0 %v614
    %2990 = vmatpush1.msra.mxu0 %v613
    %2991 = vmatprep.subr.mxu0 %v622
    %2992 = vmatpush1.msra.mxu0 %v621
    %2993 = vmatprep.subr.mxu0 %v630
    %2994 = vmatpush1.msra.mxu0 %v629
    %2995 = vmatprep.subr.mxu0 %v638
    %2996 = vmatpush1.msra.mxu0 %v637
    %2997 = vmatprep.subr.mxu0 %v646
    %2998 = vmatpush1.msra.mxu0 %v645
    %2999 = vmatprep.subr.mxu0 %v654
    %3000 = vmatpush1.msra.mxu0 %v653
    %3001 = vmatprep.subr.mxu0 %v662
    %3002 = vmatpush1.msra.mxu0 %v661
    %3003 = vmatprep.subr.mxu0 %v670
    %3004 = vmatpush1.msra.mxu0 %v669
    %3005 = vmatprep.subr.mxu0 %v678
    %3006 = vmatpush1.msra.mxu0 %v677
    %3007 = vmatprep.subr.mxu0 %v686
    %3008 = vmatpush1.msra.mxu0 %v685
    %3009 = vmatprep.subr.mxu0 %v694
    %3010 = vmatpush1.msra.mxu0 %v693
    %3011 = vmatprep.subr.mxu0 %v702
    %3012 = vmatpush1.msra.mxu0 %v701
    %3013 = vmatprep.subr.mxu0 %v710
    %3014 = vmatpush1.msra.mxu0 %v709
    %3015 = vmatprep.subr.mxu0 %v718
    %3016 = vmatpush1.msra.mxu0 %v717
    %3017 = vmatprep.subr.mxu0 %v726
    %3018 = vmatpush1.msra.mxu0 %v725
    %3019 = vmatprep.subr.mxu0 %v734
    %3020 = vmatpush1.msra.mxu0 %v733
    %3021 = vmatprep.subr.mxu0 %v742
    %3022 = vmatpush1.msra.mxu0 %v741
    %3023 = vmatprep.subr.mxu0 %v750
    %3024 = vmatpush1.msra.mxu0 %v749
    %3025 = vmatprep.subr.mxu0 %v758
    %3026 = vmatpush1.msra.mxu0 %v757
    %3027 = vmatprep.subr.mxu0 %v766
    %3028 = vmatpush1.msra.mxu0 %v765
    %3029 = vmatprep.subr.mxu0 %v774
    %3030 = vmatpush1.msra.mxu0 %v773
    %3031 = vmatprep.subr.mxu0 %v782
    %3032 = vmatpush1.msra.mxu0 %v781
    %3033 = vmatprep.subr.mxu0 %v790
    %3034 = vmatpush1.msra.mxu0 %v789
    %3035 = vmatprep.subr.mxu0 %v798
    %3036 = vmatpush1.msra.mxu0 %v797
    %3037 = vmatprep.subr.mxu0 %v806
    %3038 = vmatpush1.msra.mxu0 %v805
    %3039 = vmatprep.subr.mxu0 %v814
    %3040 = vmatpush1.msra.mxu0 %v813
    %3041 = vmatprep.subr.mxu0 %v822
    %3042 = vmatpush1.msra.mxu0 %v821
    %3043 = vmatprep.subr.mxu0 %v830
    %3044 = vmatpush1.msra.mxu0 %v829
    %3045 = vmatprep.subr.mxu0 %v838
    %3046 = vmatpush1.msra.mxu0 %v837
    %3047 = vmatprep.subr.mxu0 %v846
    %3048 = vmatpush1.msra.mxu0 %v845
    %3049 = vmatprep.mubr.f32.mxu0 %v2647
    %3050 = vmatmul.mubr.f32.gmra.mrb[0].mxu0 %v2623
    %v3051 = vpop.f32.mrb[0].mxu0
    %v3052 = vadd.f32 0.0, %v3051
    %v3053 = vpop.f32.mrb[0].mxu0
    %v3054 = vadd.f32 0.0, %v3053
    %3055 = vdwg.mxu0
    %v3056 = vadd.f32 %v2727, %v2839
    %v3057 = vadd.f32 %v2734, %v2841
    %v3058 = vadd.f32 %v2735, %v2910
    %v3059 = vadd.f32 %v2736, %v2912
    %v3060 = vadd.f32 %v2758, %v2981
    %v3061 = vadd.f32 %v2765, %v2983
    %v3062 = vadd.f32 %v2766, %v3052
    %v3063 = vadd.f32 %v2767, %v3054
    %v3064 = vxor.u32 %v3056, 2147483648
    %v3065 = vxor.u32 %v3057, 2147483648
    %v3066 = vxor.u32 %v3058, 2147483648
    %v3067 = vmul.f32 %v3064, 1.442695
    %v3068 = vpow.pop %v3067
    %v3069 = vmul.f32 %v3065, 1.442695
    %v3070 = vpow.pop %v3069
    %v3071 = vmul.f32 %v3066, 1.442695
    %v3072 = vpow.pop %v3071
    %v3073 = vadd.f32 %v3068, 1.0
    %v3074 = vadd.f32 %v3070, 1.0
    %v3075 = vadd.f32 %v3072, 1.0
    %v3076 = vrcp.pop %v3073
    %v3077 = vmul.f32 1.0, %v3076
    %v3078 = vrcp.pop %v3074
    %v3079 = vmul.f32 1.0, %v3078
    %v3080 = vrcp.pop %v3075
    %v3081 = vmul.f32 1.0, %v3080
    %v3082 = vtanh.pop %v3059
    %v3083 = vmul.f32 %v3079, %v2621
    %v3084 = vmul.f32 %v3077, %v3082
    %v3085 = vadd.f32 %v3083, %v3084
    %v3086 = vtanh.pop %v3085
    %v3087 = vmul.f32 %v3081, %v3086
    %v3088 = vxor.u32 %v3060, 2147483648
    %v3089 = vxor.u32 %v3061, 2147483648
    %v3090 = vxor.u32 %v3062, 2147483648
    %v3091 = vmul.f32 %v3088, 1.442695
    %v3092 = vpow.pop %v3091
    %v3093 = vmul.f32 %v3089, 1.442695
    %v3094 = vpow.pop %v3093
    %v3095 = vmul.f32 %v3090, 1.442695
    %v3096 = vpow.pop %v3095
    %v3097 = vadd.f32 %v3092, 1.0
    %v3098 = vadd.f32 %v3094, 1.0
    %v3099 = vadd.f32 %v3096, 1.0
    %v3100 = vrcp.pop %v3097
    %v3101 = vmul.f32 1.0, %v3100
    %v3102 = vrcp.pop %v3098
    %v3103 = vmul.f32 1.0, %v3102
    %v3104 = vrcp.pop %v3099
    %v3105 = vmul.f32 1.0, %v3104
    %v3106 = vtanh.pop %v3063
    %v3107 = vmul.f32 %v3103, %v2645
    %v3108 = vmul.f32 %v3101, %v3106
    %v3109 = vadd.f32 %v3107, %v3108
    %v3110 = vtanh.pop %v3109
    %v3111 = vmul.f32 %v3105, %v3110
    %v3114 = vunpack.c.l.s4 1966171168
    %v3115 = vunpack.c.0.s8 %v3114
    %v3116 = vlaneseq
    %v3117 = vshrl.u32 %v3116, 7
    %v3118 = vsub.s32 %v3115, %v3117
    %v3119 = vrot.slane %v3087, %v3118
    %v3120 = vcombine.high %v3119, %v3119
    %v3122 = vunpack.c.l.s4 1966171168
    %v3123 = vunpack.c.0.s8 %v3122
    %v3124 = vlaneseq
    %v3125 = vshrl.u32 %v3124, 7
    %v3126 = vsub.s32 %v3123, %v3125
    %v3127 = vrot.slane %v3119, %v3126
    %v3129 = vunpack.c.l.s4 1966171168
    %v3130 = vunpack.c.0.s8 %v3129
    %v3131 = vlaneseq
    %v3132 = vshrl.u32 %v3131, 7
    %v3133 = vsub.s32 %v3130, %v3132
    %v3134 = vrot.slane %v3120, %v3133
    %3137 = vst [vmem:[#allocation3 + $0x4] sm:$0x1] %v3127
    %3138 = vst [vmem:[#allocation3 + $0x14] sm:$0x1] %v3134
    %v3141 = vunpack.c.l.s4 1966171168
    %v3142 = vunpack.c.0.s8 %v3141
    %v3143 = vlaneseq
    %v3144 = vshrl.u32 %v3143, 7
    %v3145 = vsub.s32 %v3142, %v3144
    %v3146 = vrot.slane %v3111, %v3145
    %v3147 = vcombine.high %v3146, %v3146
    %v3149 = vunpack.c.l.s4 1966171168
    %v3150 = vunpack.c.0.s8 %v3149
    %v3151 = vlaneseq
    %v3152 = vshrl.u32 %v3151, 7
    %v3153 = vsub.s32 %v3150, %v3152
    %v3154 = vrot.slane %v3146, %v3153
    %v3156 = vunpack.c.l.s4 1966171168
    %v3157 = vunpack.c.0.s8 %v3156
    %v3158 = vlaneseq
    %v3159 = vshrl.u32 %v3158, 7
    %v3160 = vsub.s32 %v3157, %v3159
    %v3161 = vrot.slane %v3147, %v3160
    %3164 = vst [vmem:[#allocation3 + $0xb] sm:$0x1] %v3154
    %3165 = vst [vmem:[#allocation3 + $0x1b] sm:$0x1] %v3161
    %s3166 = scalar_lea.vmem [#allocation2], 5
    %v3167 = vld [vmem:[%s3166] ss:$8 sm:$0xf]
    %s3168 = scalar_lea.vmem [#allocation2], 69
    %v3169 = vld [vmem:[%s3168] ss:$8 sm:$0xf]
    %s3170 = scalar_lea.vmem [#allocation2], 34
    %v3171 = vld [vmem:[%s3170] ss:$8 sm:$0xf]
    %s3172 = scalar_lea.vmem [#allocation2], 98
    %v3173 = vld [vmem:[%s3172] ss:$8 sm:$0xf]
    %v3176 = vcombine.low %v3167, %v3169
    %v3178 = vunpack.c.l.s4 1966171168
    %v3179 = vunpack.c.0.s8 %v3178
    %v3180 = vlaneseq
    %v3181 = vshrl.u32 %v3180, 7
    %v3182 = vsub.s32 %v3179, %v3181
    %v3183 = vrot.slane %v3176, %v3182
    %v3184 = vcombine.high %v3183, %v3183
    %v3186 = vunpack.c.l.s4 1966171168
    %v3187 = vunpack.c.0.s8 %v3186
    %v3188 = vlaneseq
    %v3189 = vshrl.u32 %v3188, 7
    %v3190 = vsub.s32 %v3187, %v3189
    %v3191 = vrot.slane %v3183, %v3190
    %v3193 = vunpack.c.l.s4 1966171168
    %v3194 = vunpack.c.0.s8 %v3193
    %v3195 = vlaneseq
    %v3196 = vshrl.u32 %v3195, 7
    %v3197 = vsub.s32 %v3194, %v3196
    %v3198 = vrot.slane %v3184, %v3197
    %v3199 = vcombine.high %v3191, %v3191
    %v3200 = vcombine.high %v3198, %v3198
    %v3207 = vcombine.low %v3171, %v3173
    %v3209 = vunpack.c.l.s4 1966171168
    %v3210 = vunpack.c.0.s8 %v3209
    %v3211 = vlaneseq
    %v3212 = vshrl.u32 %v3211, 7
    %v3213 = vsub.s32 %v3210, %v3212
    %v3214 = vrot.slane %v3207, %v3213
    %v3215 = vcombine.high %v3214, %v3214
    %v3217 = vunpack.c.l.s4 1966171168
    %v3218 = vunpack.c.0.s8 %v3217
    %v3219 = vlaneseq
    %v3220 = vshrl.u32 %v3219, 7
    %v3221 = vsub.s32 %v3218, %v3220
    %v3222 = vrot.slane %v3214, %v3221
    %v3224 = vunpack.c.l.s4 1966171168
    %v3225 = vunpack.c.0.s8 %v3224
    %v3226 = vlaneseq
    %v3227 = vshrl.u32 %v3226, 7
    %v3228 = vsub.s32 %v3225, %v3227
    %v3229 = vrot.slane %v3215, %v3228
    %v3230 = vcombine.high %v3222, %v3222
    %v3231 = vcombine.high %v3229, %v3229
    %3236 = vmatprep.subr.mxu0 %v592
    %3237 = vmatpush1.msra.mxu0 %v591
    %3238 = vmatprep.subr.mxu0 %v600
    %3239 = vmatpush1.msra.mxu0 %v599
    %3240 = vmatprep.subr.mxu0 %v608
    %3241 = vmatpush1.msra.mxu0 %v607
    %3242 = vmatprep.subr.mxu0 %v616
    %3243 = vmatpush1.msra.mxu0 %v615
    %3244 = vmatprep.subr.mxu0 %v624
    %3245 = vmatpush1.msra.mxu0 %v623
    %3246 = vmatprep.subr.mxu0 %v632
    %3247 = vmatpush1.msra.mxu0 %v631
    %3248 = vmatprep.subr.mxu0 %v640
    %3249 = vmatpush1.msra.mxu0 %v639
    %3250 = vmatprep.subr.mxu0 %v648
    %3251 = vmatpush1.msra.mxu0 %v647
    %3252 = vmatprep.subr.mxu0 %v656
    %3253 = vmatpush1.msra.mxu0 %v655
    %3254 = vmatprep.subr.mxu0 %v664
    %3255 = vmatpush1.msra.mxu0 %v663
    %3256 = vmatprep.subr.mxu0 %v672
    %3257 = vmatpush1.msra.mxu0 %v671
    %3258 = vmatprep.subr.mxu0 %v680
    %3259 = vmatpush1.msra.mxu0 %v679
    %3260 = vmatprep.subr.mxu0 %v688
    %3261 = vmatpush1.msra.mxu0 %v687
    %3262 = vmatprep.subr.mxu0 %v696
    %3263 = vmatpush1.msra.mxu0 %v695
    %3264 = vmatprep.subr.mxu0 %v704
    %3265 = vmatpush1.msra.mxu0 %v703
    %3266 = vmatprep.subr.mxu0 %v712
    %3267 = vmatpush1.msra.mxu0 %v711
    %3268 = vmatprep.subr.mxu0 %v720
    %3269 = vmatpush1.msra.mxu0 %v719
    %3270 = vmatprep.subr.mxu0 %v728
    %3271 = vmatpush1.msra.mxu0 %v727
    %3272 = vmatprep.subr.mxu0 %v736
    %3273 = vmatpush1.msra.mxu0 %v735
    %3274 = vmatprep.subr.mxu0 %v744
    %3275 = vmatpush1.msra.mxu0 %v743
    %3276 = vmatprep.subr.mxu0 %v752
    %3277 = vmatpush1.msra.mxu0 %v751
    %3278 = vmatprep.subr.mxu0 %v760
    %3279 = vmatpush1.msra.mxu0 %v759
    %3280 = vmatprep.subr.mxu0 %v768
    %3281 = vmatpush1.msra.mxu0 %v767
    %3282 = vmatprep.subr.mxu0 %v776
    %3283 = vmatpush1.msra.mxu0 %v775
    %3284 = vmatprep.subr.mxu0 %v784
    %3285 = vmatpush1.msra.mxu0 %v783
    %3286 = vmatprep.subr.mxu0 %v792
    %3287 = vmatpush1.msra.mxu0 %v791
    %3288 = vmatprep.subr.mxu0 %v800
    %3289 = vmatpush1.msra.mxu0 %v799
    %3290 = vmatprep.subr.mxu0 %v808
    %3291 = vmatpush1.msra.mxu0 %v807
    %3292 = vmatprep.subr.mxu0 %v816
    %3293 = vmatpush1.msra.mxu0 %v815
    %3294 = vmatprep.subr.mxu0 %v824
    %3295 = vmatpush1.msra.mxu0 %v823
    %3296 = vmatprep.subr.mxu0 %v832
    %3297 = vmatpush1.msra.mxu0 %v831
    %3298 = vmatprep.subr.mxu0 %v840
    %3299 = vmatpush1.msra.mxu0 %v839
    %3300 = vmatprep.mubr.f32.mxu0 %v3111
    %3301 = vmatmul.mubr.f32.gmra.mrb[0].mxu0 %v3087
    %v3302 = vpop.f32.mrb[0].mxu0
    %v3303 = vadd.f32 0.0, %v3302
    %v3304 = vpop.f32.mrb[0].mxu0
    %v3305 = vadd.f32 0.0, %v3304
    %3306 = vdwg.mxu0
    %3307 = vmatprep.subr.mxu0 %v594
    %3308 = vmatpush1.msra.mxu0 %v593
    %3309 = vmatprep.subr.mxu0 %v602
    %3310 = vmatpush1.msra.mxu0 %v601
    %3311 = vmatprep.subr.mxu0 %v610
    %3312 = vmatpush1.msra.mxu0 %v609
    %3313 = vmatprep.subr.mxu0 %v618
    %3314 = vmatpush1.msra.mxu0 %v617
    %3315 = vmatprep.subr.mxu0 %v626
    %3316 = vmatpush1.msra.mxu0 %v625
    %3317 = vmatprep.subr.mxu0 %v634
    %3318 = vmatpush1.msra.mxu0 %v633
    %3319 = vmatprep.subr.mxu0 %v642
    %3320 = vmatpush1.msra.mxu0 %v641
    %3321 = vmatprep.subr.mxu0 %v650
    %3322 = vmatpush1.msra.mxu0 %v649
    %3323 = vmatprep.subr.mxu0 %v658
    %3324 = vmatpush1.msra.mxu0 %v657
    %3325 = vmatprep.subr.mxu0 %v666
    %3326 = vmatpush1.msra.mxu0 %v665
    %3327 = vmatprep.subr.mxu0 %v674
    %3328 = vmatpush1.msra.mxu0 %v673
    %3329 = vmatprep.subr.mxu0 %v682
    %3330 = vmatpush1.msra.mxu0 %v681
    %3331 = vmatprep.subr.mxu0 %v690
    %3332 = vmatpush1.msra.mxu0 %v689
    %3333 = vmatprep.subr.mxu0 %v698
    %3334 = vmatpush1.msra.mxu0 %v697
    %3335 = vmatprep.subr.mxu0 %v706
    %3336 = vmatpush1.msra.mxu0 %v705
    %3337 = vmatprep.subr.mxu0 %v714
    %3338 = vmatpush1.msra.mxu0 %v713
    %3339 = vmatprep.subr.mxu0 %v722
    %3340 = vmatpush1.msra.mxu0 %v721
    %3341 = vmatprep.subr.mxu0 %v730
    %3342 = vmatpush1.msra.mxu0 %v729
    %3343 = vmatprep.subr.mxu0 %v738
    %3344 = vmatpush1.msra.mxu0 %v737
    %3345 = vmatprep.subr.mxu0 %v746
    %3346 = vmatpush1.msra.mxu0 %v745
    %3347 = vmatprep.subr.mxu0 %v754
    %3348 = vmatpush1.msra.mxu0 %v753
    %3349 = vmatprep.subr.mxu0 %v762
    %3350 = vmatpush1.msra.mxu0 %v761
    %3351 = vmatprep.subr.mxu0 %v770
    %3352 = vmatpush1.msra.mxu0 %v769
    %3353 = vmatprep.subr.mxu0 %v778
    %3354 = vmatpush1.msra.mxu0 %v777
    %3355 = vmatprep.subr.mxu0 %v786
    %3356 = vmatpush1.msra.mxu0 %v785
    %3357 = vmatprep.subr.mxu0 %v794
    %3358 = vmatpush1.msra.mxu0 %v793
    %3359 = vmatprep.subr.mxu0 %v802
    %3360 = vmatpush1.msra.mxu0 %v801
    %3361 = vmatprep.subr.mxu0 %v810
    %3362 = vmatpush1.msra.mxu0 %v809
    %3363 = vmatprep.subr.mxu0 %v818
    %3364 = vmatpush1.msra.mxu0 %v817
    %3365 = vmatprep.subr.mxu0 %v826
    %3366 = vmatpush1.msra.mxu0 %v825
    %3367 = vmatprep.subr.mxu0 %v834
    %3368 = vmatpush1.msra.mxu0 %v833
    %3369 = vmatprep.subr.mxu0 %v842
    %3370 = vmatpush1.msra.mxu0 %v841
    %3371 = vmatprep.mubr.f32.mxu0 %v3111
    %3372 = vmatmul.mubr.f32.gmra.mrb[0].mxu0 %v3087
    %v3373 = vpop.f32.mrb[0].mxu0
    %v3374 = vadd.f32 0.0, %v3373
    %v3375 = vpop.f32.mrb[0].mxu0
    %v3376 = vadd.f32 0.0, %v3375
    %3377 = vdwg.mxu0
    %3378 = vmatprep.subr.mxu0 %v596
    %3379 = vmatpush1.msra.mxu0 %v595
    %3380 = vmatprep.subr.mxu0 %v604
    %3381 = vmatpush1.msra.mxu0 %v603
    %3382 = vmatprep.subr.mxu0 %v612
    %3383 = vmatpush1.msra.mxu0 %v611
    %3384 = vmatprep.subr.mxu0 %v620
    %3385 = vmatpush1.msra.mxu0 %v619
    %3386 = vmatprep.subr.mxu0 %v628
    %3387 = vmatpush1.msra.mxu0 %v627
    %3388 = vmatprep.subr.mxu0 %v636
    %3389 = vmatpush1.msra.mxu0 %v635
    %3390 = vmatprep.subr.mxu0 %v644
    %3391 = vmatpush1.msra.mxu0 %v643
    %3392 = vmatprep.subr.mxu0 %v652
    %3393 = vmatpush1.msra.mxu0 %v651
    %3394 = vmatprep.subr.mxu0 %v660
    %3395 = vmatpush1.msra.mxu0 %v659
    %3396 = vmatprep.subr.mxu0 %v668
    %3397 = vmatpush1.msra.mxu0 %v667
    %3398 = vmatprep.subr.mxu0 %v676
    %3399 = vmatpush1.msra.mxu0 %v675
    %3400 = vmatprep.subr.mxu0 %v684
    %3401 = vmatpush1.msra.mxu0 %v683
    %3402 = vmatprep.subr.mxu0 %v692
    %3403 = vmatpush1.msra.mxu0 %v691
    %3404 = vmatprep.subr.mxu0 %v700
    %3405 = vmatpush1.msra.mxu0 %v699
    %3406 = vmatprep.subr.mxu0 %v708
    %3407 = vmatpush1.msra.mxu0 %v707
    %3408 = vmatprep.subr.mxu0 %v716
    %3409 = vmatpush1.msra.mxu0 %v715
    %3410 = vmatprep.subr.mxu0 %v724
    %3411 = vmatpush1.msra.mxu0 %v723
    %3412 = vmatprep.subr.mxu0 %v732
    %3413 = vmatpush1.msra.mxu0 %v731
    %3414 = vmatprep.subr.mxu0 %v740
    %3415 = vmatpush1.msra.mxu0 %v739
    %3416 = vmatprep.subr.mxu0 %v748
    %3417 = vmatpush1.msra.mxu0 %v747
    %3418 = vmatprep.subr.mxu0 %v756
    %3419 = vmatpush1.msra.mxu0 %v755
    %3420 = vmatprep.subr.mxu0 %v764
    %3421 = vmatpush1.msra.mxu0 %v763
    %3422 = vmatprep.subr.mxu0 %v772
    %3423 = vmatpush1.msra.mxu0 %v771
    %3424 = vmatprep.subr.mxu0 %v780
    %3425 = vmatpush1.msra.mxu0 %v779
    %3426 = vmatprep.subr.mxu0 %v788
    %3427 = vmatpush1.msra.mxu0 %v787
    %3428 = vmatprep.subr.mxu0 %v796
    %3429 = vmatpush1.msra.mxu0 %v795
    %3430 = vmatprep.subr.mxu0 %v804
    %3431 = vmatpush1.msra.mxu0 %v803
    %3432 = vmatprep.subr.mxu0 %v812
    %3433 = vmatpush1.msra.mxu0 %v811
    %3434 = vmatprep.subr.mxu0 %v820
    %3435 = vmatpush1.msra.mxu0 %v819
    %3436 = vmatprep.subr.mxu0 %v828
    %3437 = vmatpush1.msra.mxu0 %v827
    %3438 = vmatprep.subr.mxu0 %v836
    %3439 = vmatpush1.msra.mxu0 %v835
    %3440 = vmatprep.subr.mxu0 %v844
    %3441 = vmatpush1.msra.mxu0 %v843
    %3442 = vmatprep.mubr.f32.mxu0 %v3111
    %3443 = vmatmul.mubr.f32.gmra.mrb[0].mxu0 %v3087
    %v3444 = vpop.f32.mrb[0].mxu0
    %v3445 = vadd.f32 0.0, %v3444
    %v3446 = vpop.f32.mrb[0].mxu0
    %v3447 = vadd.f32 0.0, %v3446
    %3448 = vdwg.mxu0
    %3449 = vmatprep.subr.mxu0 %v598
    %3450 = vmatpush1.msra.mxu0 %v597
    %3451 = vmatprep.subr.mxu0 %v606
    %3452 = vmatpush1.msra.mxu0 %v605
    %3453 = vmatprep.subr.mxu0 %v614
    %3454 = vmatpush1.msra.mxu0 %v613
    %3455 = vmatprep.subr.mxu0 %v622
    %3456 = vmatpush1.msra.mxu0 %v621
    %3457 = vmatprep.subr.mxu0 %v630
    %3458 = vmatpush1.msra.mxu0 %v629
    %3459 = vmatprep.subr.mxu0 %v638
    %3460 = vmatpush1.msra.mxu0 %v637
    %3461 = vmatprep.subr.mxu0 %v646
    %3462 = vmatpush1.msra.mxu0 %v645
    %3463 = vmatprep.subr.mxu0 %v654
    %3464 = vmatpush1.msra.mxu0 %v653
    %3465 = vmatprep.subr.mxu0 %v662
    %3466 = vmatpush1.msra.mxu0 %v661
    %3467 = vmatprep.subr.mxu0 %v670
    %3468 = vmatpush1.msra.mxu0 %v669
    %3469 = vmatprep.subr.mxu0 %v678
    %3470 = vmatpush1.msra.mxu0 %v677
    %3471 = vmatprep.subr.mxu0 %v686
    %3472 = vmatpush1.msra.mxu0 %v685
    %3473 = vmatprep.subr.mxu0 %v694
    %3474 = vmatpush1.msra.mxu0 %v693
    %3475 = vmatprep.subr.mxu0 %v702
    %3476 = vmatpush1.msra.mxu0 %v701
    %3477 = vmatprep.subr.mxu0 %v710
    %3478 = vmatpush1.msra.mxu0 %v709
    %3479 = vmatprep.subr.mxu0 %v718
    %3480 = vmatpush1.msra.mxu0 %v717
    %3481 = vmatprep.subr.mxu0 %v726
    %3482 = vmatpush1.msra.mxu0 %v725
    %3483 = vmatprep.subr.mxu0 %v734
    %3484 = vmatpush1.msra.mxu0 %v733
    %3485 = vmatprep.subr.mxu0 %v742
    %3486 = vmatpush1.msra.mxu0 %v741
    %3487 = vmatprep.subr.mxu0 %v750
    %3488 = vmatpush1.msra.mxu0 %v749
    %3489 = vmatprep.subr.mxu0 %v758
    %3490 = vmatpush1.msra.mxu0 %v757
    %3491 = vmatprep.subr.mxu0 %v766
    %3492 = vmatpush1.msra.mxu0 %v765
    %3493 = vmatprep.subr.mxu0 %v774
    %3494 = vmatpush1.msra.mxu0 %v773
    %3495 = vmatprep.subr.mxu0 %v782
    %3496 = vmatpush1.msra.mxu0 %v781
    %3497 = vmatprep.subr.mxu0 %v790
    %3498 = vmatpush1.msra.mxu0 %v789
    %3499 = vmatprep.subr.mxu0 %v798
    %3500 = vmatpush1.msra.mxu0 %v797
    %3501 = vmatprep.subr.mxu0 %v806
    %3502 = vmatpush1.msra.mxu0 %v805
    %3503 = vmatprep.subr.mxu0 %v814
    %3504 = vmatpush1.msra.mxu0 %v813
    %3505 = vmatprep.subr.mxu0 %v822
    %3506 = vmatpush1.msra.mxu0 %v821
    %3507 = vmatprep.subr.mxu0 %v830
    %3508 = vmatpush1.msra.mxu0 %v829
    %3509 = vmatprep.subr.mxu0 %v838
    %3510 = vmatpush1.msra.mxu0 %v837
    %3511 = vmatprep.subr.mxu0 %v846
    %3512 = vmatpush1.msra.mxu0 %v845
    %3513 = vmatprep.mubr.f32.mxu0 %v3111
    %3514 = vmatmul.mubr.f32.gmra.mrb[0].mxu0 %v3087
    %v3515 = vpop.f32.mrb[0].mxu0
    %v3516 = vadd.f32 0.0, %v3515
    %v3517 = vpop.f32.mrb[0].mxu0
    %v3518 = vadd.f32 0.0, %v3517
    %3519 = vdwg.mxu0
    %v3520 = vadd.f32 %v3191, %v3303
    %v3521 = vadd.f32 %v3198, %v3305
    %v3522 = vadd.f32 %v3199, %v3374
    %v3523 = vadd.f32 %v3200, %v3376
    %v3524 = vadd.f32 %v3222, %v3445
    %v3525 = vadd.f32 %v3229, %v3447
    %v3526 = vadd.f32 %v3230, %v3516
    %v3527 = vadd.f32 %v3231, %v3518
    %v3528 = vxor.u32 %v3520, 2147483648
    %v3529 = vxor.u32 %v3521, 2147483648
    %v3530 = vxor.u32 %v3522, 2147483648
    %v3531 = vmul.f32 %v3528, 1.442695
    %v3532 = vpow.pop %v3531
    %v3533 = vmul.f32 %v3529, 1.442695
    %v3534 = vpow.pop %v3533
    %v3535 = vmul.f32 %v3530, 1.442695
    %v3536 = vpow.pop %v3535
    %v3537 = vadd.f32 %v3532, 1.0
    %v3538 = vadd.f32 %v3534, 1.0
    %v3539 = vadd.f32 %v3536, 1.0
    %v3540 = vrcp.pop %v3537
    %v3541 = vmul.f32 1.0, %v3540
    %v3542 = vrcp.pop %v3538
    %v3543 = vmul.f32 1.0, %v3542
    %v3544 = vrcp.pop %v3539
    %v3545 = vmul.f32 1.0, %v3544
    %v3546 = vtanh.pop %v3523
    %v3547 = vmul.f32 %v3543, %v3085
    %v3548 = vmul.f32 %v3541, %v3546
    %v3549 = vadd.f32 %v3547, %v3548
    %v3550 = vtanh.pop %v3549
    %v3551 = vmul.f32 %v3545, %v3550
    %v3552 = vxor.u32 %v3524, 2147483648
    %v3553 = vxor.u32 %v3525, 2147483648
    %v3554 = vxor.u32 %v3526, 2147483648
    %v3555 = vmul.f32 %v3552, 1.442695
    %v3556 = vpow.pop %v3555
    %v3557 = vmul.f32 %v3553, 1.442695
    %v3558 = vpow.pop %v3557
    %v3559 = vmul.f32 %v3554, 1.442695
    %v3560 = vpow.pop %v3559
    %v3561 = vadd.f32 %v3556, 1.0
    %v3562 = vadd.f32 %v3558, 1.0
    %v3563 = vadd.f32 %v3560, 1.0
    %v3564 = vrcp.pop %v3561
    %v3565 = vmul.f32 1.0, %v3564
    %v3566 = vrcp.pop %v3562
    %v3567 = vmul.f32 1.0, %v3566
    %v3568 = vrcp.pop %v3563
    %v3569 = vmul.f32 1.0, %v3568
    %v3570 = vtanh.pop %v3527
    %v3571 = vmul.f32 %v3567, %v3109
    %v3572 = vmul.f32 %v3565, %v3570
    %v3573 = vadd.f32 %v3571, %v3572
    %v3574 = vtanh.pop %v3573
    %v3575 = vmul.f32 %v3569, %v3574
    %v3578 = vunpack.c.l.s4 1966171168
    %v3579 = vunpack.c.0.s8 %v3578
    %v3580 = vlaneseq
    %v3581 = vshrl.u32 %v3580, 7
    %v3582 = vsub.s32 %v3579, %v3581
    %v3583 = vrot.slane %v3551, %v3582
    %v3584 = vcombine.high %v3583, %v3583
    %v3586 = vunpack.c.l.s4 1966171168
    %v3587 = vunpack.c.0.s8 %v3586
    %v3588 = vlaneseq
    %v3589 = vshrl.u32 %v3588, 7
    %v3590 = vsub.s32 %v3587, %v3589
    %v3591 = vrot.slane %v3583, %v3590
    %v3593 = vunpack.c.l.s4 1966171168
    %v3594 = vunpack.c.0.s8 %v3593
    %v3595 = vlaneseq
    %v3596 = vshrl.u32 %v3595, 7
    %v3597 = vsub.s32 %v3594, %v3596
    %v3598 = vrot.slane %v3584, %v3597
    %3601 = vst [vmem:[#allocation3 + $0x5] sm:$0x1] %v3591
    %3602 = vst [vmem:[#allocation3 + $0x15] sm:$0x1] %v3598
    %v3605 = vunpack.c.l.s4 1966171168
    %v3606 = vunpack.c.0.s8 %v3605
    %v3607 = vlaneseq
    %v3608 = vshrl.u32 %v3607, 7
    %v3609 = vsub.s32 %v3606, %v3608
    %v3610 = vrot.slane %v3575, %v3609
    %v3611 = vcombine.high %v3610, %v3610
    %v3613 = vunpack.c.l.s4 1966171168
    %v3614 = vunpack.c.0.s8 %v3613
    %v3615 = vlaneseq
    %v3616 = vshrl.u32 %v3615, 7
    %v3617 = vsub.s32 %v3614, %v3616
    %v3618 = vrot.slane %v3610, %v3617
    %v3620 = vunpack.c.l.s4 1966171168
    %v3621 = vunpack.c.0.s8 %v3620
    %v3622 = vlaneseq
    %v3623 = vshrl.u32 %v3622, 7
    %v3624 = vsub.s32 %v3621, %v3623
    %v3625 = vrot.slane %v3611, %v3624
    %3628 = vst [vmem:[#allocation3 + $0xa] sm:$0x1] %v3618
    %3629 = vst [vmem:[#allocation3 + $0x1a] sm:$0x1] %v3625
    %s3630 = scalar_lea.vmem [#allocation2], 6
    %v3631 = vld [vmem:[%s3630] ss:$8 sm:$0xf]
    %s3632 = scalar_lea.vmem [#allocation2], 70
    %v3633 = vld [vmem:[%s3632] ss:$8 sm:$0xf]
    %s3634 = scalar_lea.vmem [#allocation2], 33
    %v3635 = vld [vmem:[%s3634] ss:$8 sm:$0xf]
    %s3636 = scalar_lea.vmem [#allocation2], 97
    %v3637 = vld [vmem:[%s3636] ss:$8 sm:$0xf]
    %v3640 = vcombine.low %v3631, %v3633
    %v3642 = vunpack.c.l.s4 1966171168
    %v3643 = vunpack.c.0.s8 %v3642
    %v3644 = vlaneseq
    %v3645 = vshrl.u32 %v3644, 7
    %v3646 = vsub.s32 %v3643, %v3645
    %v3647 = vrot.slane %v3640, %v3646
    %v3648 = vcombine.high %v3647, %v3647
    %v3650 = vunpack.c.l.s4 1966171168
    %v3651 = vunpack.c.0.s8 %v3650
    %v3652 = vlaneseq
    %v3653 = vshrl.u32 %v3652, 7
    %v3654 = vsub.s32 %v3651, %v3653
    %v3655 = vrot.slane %v3647, %v3654
    %v3657 = vunpack.c.l.s4 1966171168
    %v3658 = vunpack.c.0.s8 %v3657
    %v3659 = vlaneseq
    %v3660 = vshrl.u32 %v3659, 7
    %v3661 = vsub.s32 %v3658, %v3660
    %v3662 = vrot.slane %v3648, %v3661
    %v3663 = vcombine.high %v3655, %v3655
    %v3664 = vcombine.high %v3662, %v3662
    %v3671 = vcombine.low %v3635, %v3637
    %v3673 = vunpack.c.l.s4 1966171168
    %v3674 = vunpack.c.0.s8 %v3673
    %v3675 = vlaneseq
    %v3676 = vshrl.u32 %v3675, 7
    %v3677 = vsub.s32 %v3674, %v3676
    %v3678 = vrot.slane %v3671, %v3677
    %v3679 = vcombine.high %v3678, %v3678
    %v3681 = vunpack.c.l.s4 1966171168
    %v3682 = vunpack.c.0.s8 %v3681
    %v3683 = vlaneseq
    %v3684 = vshrl.u32 %v3683, 7
    %v3685 = vsub.s32 %v3682, %v3684
    %v3686 = vrot.slane %v3678, %v3685
    %v3688 = vunpack.c.l.s4 1966171168
    %v3689 = vunpack.c.0.s8 %v3688
    %v3690 = vlaneseq
    %v3691 = vshrl.u32 %v3690, 7
    %v3692 = vsub.s32 %v3689, %v3691
    %v3693 = vrot.slane %v3679, %v3692
    %v3694 = vcombine.high %v3686, %v3686
    %v3695 = vcombine.high %v3693, %v3693
    %3700 = vmatprep.subr.mxu0 %v592
    %3701 = vmatpush1.msra.mxu0 %v591
    %3702 = vmatprep.subr.mxu0 %v600
    %3703 = vmatpush1.msra.mxu0 %v599
    %3704 = vmatprep.subr.mxu0 %v608
    %3705 = vmatpush1.msra.mxu0 %v607
    %3706 = vmatprep.subr.mxu0 %v616
    %3707 = vmatpush1.msra.mxu0 %v615
    %3708 = vmatprep.subr.mxu0 %v624
    %3709 = vmatpush1.msra.mxu0 %v623
    %3710 = vmatprep.subr.mxu0 %v632
    %3711 = vmatpush1.msra.mxu0 %v631
    %3712 = vmatprep.subr.mxu0 %v640
    %3713 = vmatpush1.msra.mxu0 %v639
    %3714 = vmatprep.subr.mxu0 %v648
    %3715 = vmatpush1.msra.mxu0 %v647
    %3716 = vmatprep.subr.mxu0 %v656
    %3717 = vmatpush1.msra.mxu0 %v655
    %3718 = vmatprep.subr.mxu0 %v664
    %3719 = vmatpush1.msra.mxu0 %v663
    %3720 = vmatprep.subr.mxu0 %v672
    %3721 = vmatpush1.msra.mxu0 %v671
    %3722 = vmatprep.subr.mxu0 %v680
    %3723 = vmatpush1.msra.mxu0 %v679
    %3724 = vmatprep.subr.mxu0 %v688
    %3725 = vmatpush1.msra.mxu0 %v687
    %3726 = vmatprep.subr.mxu0 %v696
    %3727 = vmatpush1.msra.mxu0 %v695
    %3728 = vmatprep.subr.mxu0 %v704
    %3729 = vmatpush1.msra.mxu0 %v703
    %3730 = vmatprep.subr.mxu0 %v712
    %3731 = vmatpush1.msra.mxu0 %v711
    %3732 = vmatprep.subr.mxu0 %v720
    %3733 = vmatpush1.msra.mxu0 %v719
    %3734 = vmatprep.subr.mxu0 %v728
    %3735 = vmatpush1.msra.mxu0 %v727
    %3736 = vmatprep.subr.mxu0 %v736
    %3737 = vmatpush1.msra.mxu0 %v735
    %3738 = vmatprep.subr.mxu0 %v744
    %3739 = vmatpush1.msra.mxu0 %v743
    %3740 = vmatprep.subr.mxu0 %v752
    %3741 = vmatpush1.msra.mxu0 %v751
    %3742 = vmatprep.subr.mxu0 %v760
    %3743 = vmatpush1.msra.mxu0 %v759
    %3744 = vmatprep.subr.mxu0 %v768
    %3745 = vmatpush1.msra.mxu0 %v767
    %3746 = vmatprep.subr.mxu0 %v776
    %3747 = vmatpush1.msra.mxu0 %v775
    %3748 = vmatprep.subr.mxu0 %v784
    %3749 = vmatpush1.msra.mxu0 %v783
    %3750 = vmatprep.subr.mxu0 %v792
    %3751 = vmatpush1.msra.mxu0 %v791
    %3752 = vmatprep.subr.mxu0 %v800
    %3753 = vmatpush1.msra.mxu0 %v799
    %3754 = vmatprep.subr.mxu0 %v808
    %3755 = vmatpush1.msra.mxu0 %v807
    %3756 = vmatprep.subr.mxu0 %v816
    %3757 = vmatpush1.msra.mxu0 %v815
    %3758 = vmatprep.subr.mxu0 %v824
    %3759 = vmatpush1.msra.mxu0 %v823
    %3760 = vmatprep.subr.mxu0 %v832
    %3761 = vmatpush1.msra.mxu0 %v831
    %3762 = vmatprep.subr.mxu0 %v840
    %3763 = vmatpush1.msra.mxu0 %v839
    %3764 = vmatprep.mubr.f32.mxu0 %v3575
    %3765 = vmatmul.mubr.f32.gmra.mrb[0].mxu0 %v3551
    %v3766 = vpop.f32.mrb[0].mxu0
    %v3767 = vadd.f32 0.0, %v3766
    %v3768 = vpop.f32.mrb[0].mxu0
    %v3769 = vadd.f32 0.0, %v3768
    %3770 = vdwg.mxu0
    %3771 = vmatprep.subr.mxu0 %v594
    %3772 = vmatpush1.msra.mxu0 %v593
    %3773 = vmatprep.subr.mxu0 %v602
    %3774 = vmatpush1.msra.mxu0 %v601
    %3775 = vmatprep.subr.mxu0 %v610
    %3776 = vmatpush1.msra.mxu0 %v609
    %3777 = vmatprep.subr.mxu0 %v618
    %3778 = vmatpush1.msra.mxu0 %v617
    %3779 = vmatprep.subr.mxu0 %v626
    %3780 = vmatpush1.msra.mxu0 %v625
    %3781 = vmatprep.subr.mxu0 %v634
    %3782 = vmatpush1.msra.mxu0 %v633
    %3783 = vmatprep.subr.mxu0 %v642
    %3784 = vmatpush1.msra.mxu0 %v641
    %3785 = vmatprep.subr.mxu0 %v650
    %3786 = vmatpush1.msra.mxu0 %v649
    %3787 = vmatprep.subr.mxu0 %v658
    %3788 = vmatpush1.msra.mxu0 %v657
    %3789 = vmatprep.subr.mxu0 %v666
    %3790 = vmatpush1.msra.mxu0 %v665
    %3791 = vmatprep.subr.mxu0 %v674
    %3792 = vmatpush1.msra.mxu0 %v673
    %3793 = vmatprep.subr.mxu0 %v682
    %3794 = vmatpush1.msra.mxu0 %v681
    %3795 = vmatprep.subr.mxu0 %v690
    %3796 = vmatpush1.msra.mxu0 %v689
    %3797 = vmatprep.subr.mxu0 %v698
    %3798 = vmatpush1.msra.mxu0 %v697
    %3799 = vmatprep.subr.mxu0 %v706
    %3800 = vmatpush1.msra.mxu0 %v705
    %3801 = vmatprep.subr.mxu0 %v714
    %3802 = vmatpush1.msra.mxu0 %v713
    %3803 = vmatprep.subr.mxu0 %v722
    %3804 = vmatpush1.msra.mxu0 %v721
    %3805 = vmatprep.subr.mxu0 %v730
    %3806 = vmatpush1.msra.mxu0 %v729
    %3807 = vmatprep.subr.mxu0 %v738
    %3808 = vmatpush1.msra.mxu0 %v737
    %3809 = vmatprep.subr.mxu0 %v746
    %3810 = vmatpush1.msra.mxu0 %v745
    %3811 = vmatprep.subr.mxu0 %v754
    %3812 = vmatpush1.msra.mxu0 %v753
    %3813 = vmatprep.subr.mxu0 %v762
    %3814 = vmatpush1.msra.mxu0 %v761
    %3815 = vmatprep.subr.mxu0 %v770
    %3816 = vmatpush1.msra.mxu0 %v769
    %3817 = vmatprep.subr.mxu0 %v778
    %3818 = vmatpush1.msra.mxu0 %v777
    %3819 = vmatprep.subr.mxu0 %v786
    %3820 = vmatpush1.msra.mxu0 %v785
    %3821 = vmatprep.subr.mxu0 %v794
    %3822 = vmatpush1.msra.mxu0 %v793
    %3823 = vmatprep.subr.mxu0 %v802
    %3824 = vmatpush1.msra.mxu0 %v801
    %3825 = vmatprep.subr.mxu0 %v810
    %3826 = vmatpush1.msra.mxu0 %v809
    %3827 = vmatprep.subr.mxu0 %v818
    %3828 = vmatpush1.msra.mxu0 %v817
    %3829 = vmatprep.subr.mxu0 %v826
    %3830 = vmatpush1.msra.mxu0 %v825
    %3831 = vmatprep.subr.mxu0 %v834
    %3832 = vmatpush1.msra.mxu0 %v833
    %3833 = vmatprep.subr.mxu0 %v842
    %3834 = vmatpush1.msra.mxu0 %v841
    %3835 = vmatprep.mubr.f32.mxu0 %v3575
    %3836 = vmatmul.mubr.f32.gmra.mrb[0].mxu0 %v3551
    %v3837 = vpop.f32.mrb[0].mxu0
    %v3838 = vadd.f32 0.0, %v3837
    %v3839 = vpop.f32.mrb[0].mxu0
    %v3840 = vadd.f32 0.0, %v3839
    %3841 = vdwg.mxu0
    %3842 = vmatprep.subr.mxu0 %v596
    %3843 = vmatpush1.msra.mxu0 %v595
    %3844 = vmatprep.subr.mxu0 %v604
    %3845 = vmatpush1.msra.mxu0 %v603
    %3846 = vmatprep.subr.mxu0 %v612
    %3847 = vmatpush1.msra.mxu0 %v611
    %3848 = vmatprep.subr.mxu0 %v620
    %3849 = vmatpush1.msra.mxu0 %v619
    %3850 = vmatprep.subr.mxu0 %v628
    %3851 = vmatpush1.msra.mxu0 %v627
    %3852 = vmatprep.subr.mxu0 %v636
    %3853 = vmatpush1.msra.mxu0 %v635
    %3854 = vmatprep.subr.mxu0 %v644
    %3855 = vmatpush1.msra.mxu0 %v643
    %3856 = vmatprep.subr.mxu0 %v652
    %3857 = vmatpush1.msra.mxu0 %v651
    %3858 = vmatprep.subr.mxu0 %v660
    %3859 = vmatpush1.msra.mxu0 %v659
    %3860 = vmatprep.subr.mxu0 %v668
    %3861 = vmatpush1.msra.mxu0 %v667
    %3862 = vmatprep.subr.mxu0 %v676
    %3863 = vmatpush1.msra.mxu0 %v675
    %3864 = vmatprep.subr.mxu0 %v684
    %3865 = vmatpush1.msra.mxu0 %v683
    %3866 = vmatprep.subr.mxu0 %v692
    %3867 = vmatpush1.msra.mxu0 %v691
    %3868 = vmatprep.subr.mxu0 %v700
    %3869 = vmatpush1.msra.mxu0 %v699
    %3870 = vmatprep.subr.mxu0 %v708
    %3871 = vmatpush1.msra.mxu0 %v707
    %3872 = vmatprep.subr.mxu0 %v716
    %3873 = vmatpush1.msra.mxu0 %v715
    %3874 = vmatprep.subr.mxu0 %v724
    %3875 = vmatpush1.msra.mxu0 %v723
    %3876 = vmatprep.subr.mxu0 %v732
    %3877 = vmatpush1.msra.mxu0 %v731
    %3878 = vmatprep.subr.mxu0 %v740
    %3879 = vmatpush1.msra.mxu0 %v739
    %3880 = vmatprep.subr.mxu0 %v748
    %3881 = vmatpush1.msra.mxu0 %v747
    %3882 = vmatprep.subr.mxu0 %v756
    %3883 = vmatpush1.msra.mxu0 %v755
    %3884 = vmatprep.subr.mxu0 %v764
    %3885 = vmatpush1.msra.mxu0 %v763
    %3886 = vmatprep.subr.mxu0 %v772
    %3887 = vmatpush1.msra.mxu0 %v771
    %3888 = vmatprep.subr.mxu0 %v780
    %3889 = vmatpush1.msra.mxu0 %v779
    %3890 = vmatprep.subr.mxu0 %v788
    %3891 = vmatpush1.msra.mxu0 %v787
    %3892 = vmatprep.subr.mxu0 %v796
    %3893 = vmatpush1.msra.mxu0 %v795
    %3894 = vmatprep.subr.mxu0 %v804
    %3895 = vmatpush1.msra.mxu0 %v803
    %3896 = vmatprep.subr.mxu0 %v812
    %3897 = vmatpush1.msra.mxu0 %v811
    %3898 = vmatprep.subr.mxu0 %v820
    %3899 = vmatpush1.msra.mxu0 %v819
    %3900 = vmatprep.subr.mxu0 %v828
    %3901 = vmatpush1.msra.mxu0 %v827
    %3902 = vmatprep.subr.mxu0 %v836
    %3903 = vmatpush1.msra.mxu0 %v835
    %3904 = vmatprep.subr.mxu0 %v844
    %3905 = vmatpush1.msra.mxu0 %v843
    %3906 = vmatprep.mubr.f32.mxu0 %v3575
    %3907 = vmatmul.mubr.f32.gmra.mrb[0].mxu0 %v3551
    %v3908 = vpop.f32.mrb[0].mxu0
    %v3909 = vadd.f32 0.0, %v3908
    %v3910 = vpop.f32.mrb[0].mxu0
    %v3911 = vadd.f32 0.0, %v3910
    %3912 = vdwg.mxu0
    %3913 = vmatprep.subr.mxu0 %v598
    %3914 = vmatpush1.msra.mxu0 %v597
    %3915 = vmatprep.subr.mxu0 %v606
    %3916 = vmatpush1.msra.mxu0 %v605
    %3917 = vmatprep.subr.mxu0 %v614
    %3918 = vmatpush1.msra.mxu0 %v613
    %3919 = vmatprep.subr.mxu0 %v622
    %3920 = vmatpush1.msra.mxu0 %v621
    %3921 = vmatprep.subr.mxu0 %v630
    %3922 = vmatpush1.msra.mxu0 %v629
    %3923 = vmatprep.subr.mxu0 %v638
    %3924 = vmatpush1.msra.mxu0 %v637
    %3925 = vmatprep.subr.mxu0 %v646
    %3926 = vmatpush1.msra.mxu0 %v645
    %3927 = vmatprep.subr.mxu0 %v654
    %3928 = vmatpush1.msra.mxu0 %v653
    %3929 = vmatprep.subr.mxu0 %v662
    %3930 = vmatpush1.msra.mxu0 %v661
    %3931 = vmatprep.subr.mxu0 %v670
    %3932 = vmatpush1.msra.mxu0 %v669
    %3933 = vmatprep.subr.mxu0 %v678
    %3934 = vmatpush1.msra.mxu0 %v677
    %3935 = vmatprep.subr.mxu0 %v686
    %3936 = vmatpush1.msra.mxu0 %v685
    %3937 = vmatprep.subr.mxu0 %v694
    %3938 = vmatpush1.msra.mxu0 %v693
    %3939 = vmatprep.subr.mxu0 %v702
    %3940 = vmatpush1.msra.mxu0 %v701
    %3941 = vmatprep.subr.mxu0 %v710
    %3942 = vmatpush1.msra.mxu0 %v709
    %3943 = vmatprep.subr.mxu0 %v718
    %3944 = vmatpush1.msra.mxu0 %v717
    %3945 = vmatprep.subr.mxu0 %v726
    %3946 = vmatpush1.msra.mxu0 %v725
    %3947 = vmatprep.subr.mxu0 %v734
    %3948 = vmatpush1.msra.mxu0 %v733
    %3949 = vmatprep.subr.mxu0 %v742
    %3950 = vmatpush1.msra.mxu0 %v741
    %3951 = vmatprep.subr.mxu0 %v750
    %3952 = vmatpush1.msra.mxu0 %v749
    %3953 = vmatprep.subr.mxu0 %v758
    %3954 = vmatpush1.msra.mxu0 %v757
    %3955 = vmatprep.subr.mxu0 %v766
    %3956 = vmatpush1.msra.mxu0 %v765
    %3957 = vmatprep.subr.mxu0 %v774
    %3958 = vmatpush1.msra.mxu0 %v773
    %3959 = vmatprep.subr.mxu0 %v782
    %3960 = vmatpush1.msra.mxu0 %v781
    %3961 = vmatprep.subr.mxu0 %v790
    %3962 = vmatpush1.msra.mxu0 %v789
    %3963 = vmatprep.subr.mxu0 %v798
    %3964 = vmatpush1.msra.mxu0 %v797
    %3965 = vmatprep.subr.mxu0 %v806
    %3966 = vmatpush1.msra.mxu0 %v805
    %3967 = vmatprep.subr.mxu0 %v814
    %3968 = vmatpush1.msra.mxu0 %v813
    %3969 = vmatprep.subr.mxu0 %v822
    %3970 = vmatpush1.msra.mxu0 %v821
    %3971 = vmatprep.subr.mxu0 %v830
    %3972 = vmatpush1.msra.mxu0 %v829
    %3973 = vmatprep.subr.mxu0 %v838
    %3974 = vmatpush1.msra.mxu0 %v837
    %3975 = vmatprep.subr.mxu0 %v846
    %3976 = vmatpush1.msra.mxu0 %v845
    %3977 = vmatprep.mubr.f32.mxu0 %v3575
    %3978 = vmatmul.mubr.f32.gmra.mrb[0].mxu0 %v3551
    %v3979 = vpop.f32.mrb[0].mxu0
    %v3980 = vadd.f32 0.0, %v3979
    %v3981 = vpop.f32.mrb[0].mxu0
    %v3982 = vadd.f32 0.0, %v3981
    %3983 = vdwg.mxu0
    %v3984 = vadd.f32 %v3655, %v3767
    %v3985 = vadd.f32 %v3662, %v3769
    %v3986 = vadd.f32 %v3663, %v3838
    %v3987 = vadd.f32 %v3664, %v3840
    %v3988 = vadd.f32 %v3686, %v3909
    %v3989 = vadd.f32 %v3693, %v3911
    %v3990 = vadd.f32 %v3694, %v3980
    %v3991 = vadd.f32 %v3695, %v3982
    %v3992 = vxor.u32 %v3984, 2147483648
    %v3993 = vxor.u32 %v3985, 2147483648
    %v3994 = vxor.u32 %v3986, 2147483648
    %v3995 = vmul.f32 %v3992, 1.442695
    %v3996 = vpow.pop %v3995
    %v3997 = vmul.f32 %v3993, 1.442695
    %v3998 = vpow.pop %v3997
    %v3999 = vmul.f32 %v3994, 1.442695
    %v4000 = vpow.pop %v3999
    %v4001 = vadd.f32 %v3996, 1.0
    %v4002 = vadd.f32 %v3998, 1.0
    %v4003 = vadd.f32 %v4000, 1.0
    %v4004 = vrcp.pop %v4001
    %v4005 = vmul.f32 1.0, %v4004
    %v4006 = vrcp.pop %v4002
    %v4007 = vmul.f32 1.0, %v4006
    %v4008 = vrcp.pop %v4003
    %v4009 = vmul.f32 1.0, %v4008
    %v4010 = vtanh.pop %v3987
    %v4011 = vmul.f32 %v4007, %v3549
    %v4012 = vmul.f32 %v4005, %v4010
    %v4013 = vadd.f32 %v4011, %v4012
    %v4014 = vtanh.pop %v4013
    %v4015 = vmul.f32 %v4009, %v4014
    %v4016 = vxor.u32 %v3988, 2147483648
    %v4017 = vxor.u32 %v3989, 2147483648
    %v4018 = vxor.u32 %v3990, 2147483648
    %v4019 = vmul.f32 %v4016, 1.442695
    %v4020 = vpow.pop %v4019
    %v4021 = vmul.f32 %v4017, 1.442695
    %v4022 = vpow.pop %v4021
    %v4023 = vmul.f32 %v4018, 1.442695
    %v4024 = vpow.pop %v4023
    %v4025 = vadd.f32 %v4020, 1.0
    %v4026 = vadd.f32 %v4022, 1.0
    %v4027 = vadd.f32 %v4024, 1.0
    %v4028 = vrcp.pop %v4025
    %v4029 = vmul.f32 1.0, %v4028
    %v4030 = vrcp.pop %v4026
    %v4031 = vmul.f32 1.0, %v4030
    %v4032 = vrcp.pop %v4027
    %v4033 = vmul.f32 1.0, %v4032
    %v4034 = vtanh.pop %v3991
    %v4035 = vmul.f32 %v4031, %v3573
    %v4036 = vmul.f32 %v4029, %v4034
    %v4037 = vadd.f32 %v4035, %v4036
    %v4038 = vtanh.pop %v4037
    %v4039 = vmul.f32 %v4033, %v4038
    %v4042 = vunpack.c.l.s4 1966171168
    %v4043 = vunpack.c.0.s8 %v4042
    %v4044 = vlaneseq
    %v4045 = vshrl.u32 %v4044, 7
    %v4046 = vsub.s32 %v4043, %v4045
    %v4047 = vrot.slane %v4015, %v4046
    %v4048 = vcombine.high %v4047, %v4047
    %v4050 = vunpack.c.l.s4 1966171168
    %v4051 = vunpack.c.0.s8 %v4050
    %v4052 = vlaneseq
    %v4053 = vshrl.u32 %v4052, 7
    %v4054 = vsub.s32 %v4051, %v4053
    %v4055 = vrot.slane %v4047, %v4054
    %v4057 = vunpack.c.l.s4 1966171168
    %v4058 = vunpack.c.0.s8 %v4057
    %v4059 = vlaneseq
    %v4060 = vshrl.u32 %v4059, 7
    %v4061 = vsub.s32 %v4058, %v4060
    %v4062 = vrot.slane %v4048, %v4061
    %4065 = vst [vmem:[#allocation3 + $0x6] sm:$0x1] %v4055
    %4066 = vst [vmem:[#allocation3 + $0x16] sm:$0x1] %v4062
    %v4069 = vunpack.c.l.s4 1966171168
    %v4070 = vunpack.c.0.s8 %v4069
    %v4071 = vlaneseq
    %v4072 = vshrl.u32 %v4071, 7
    %v4073 = vsub.s32 %v4070, %v4072
    %v4074 = vrot.slane %v4039, %v4073
    %v4075 = vcombine.high %v4074, %v4074
    %v4077 = vunpack.c.l.s4 1966171168
    %v4078 = vunpack.c.0.s8 %v4077
    %v4079 = vlaneseq
    %v4080 = vshrl.u32 %v4079, 7
    %v4081 = vsub.s32 %v4078, %v4080
    %v4082 = vrot.slane %v4074, %v4081
    %v4084 = vunpack.c.l.s4 1966171168
    %v4085 = vunpack.c.0.s8 %v4084
    %v4086 = vlaneseq
    %v4087 = vshrl.u32 %v4086, 7
    %v4088 = vsub.s32 %v4085, %v4087
    %v4089 = vrot.slane %v4075, %v4088
    %4092 = vst [vmem:[#allocation3 + $0x9] sm:$0x1] %v4082
    %4093 = vst [vmem:[#allocation3 + $0x19] sm:$0x1] %v4089
    %s4094 = scalar_lea.vmem [#allocation2], 7
    %v4095 = vld [vmem:[%s4094] ss:$8 sm:$0xf]
    %s4096 = scalar_lea.vmem [#allocation2], 71
    %v4097 = vld [vmem:[%s4096] ss:$8 sm:$0xf]
    %s4098 = scalar_lea.vmem [#allocation2], 32
    %v4099 = vld [vmem:[%s4098] ss:$8 sm:$0xf]
    %s4100 = scalar_lea.vmem [#allocation2], 96
    %v4101 = vld [vmem:[%s4100] ss:$8 sm:$0xf]
    %v4104 = vcombine.low %v4095, %v4097
    %v4106 = vunpack.c.l.s4 1966171168
    %v4107 = vunpack.c.0.s8 %v4106
    %v4108 = vlaneseq
    %v4109 = vshrl.u32 %v4108, 7
    %v4110 = vsub.s32 %v4107, %v4109
    %v4111 = vrot.slane %v4104, %v4110
    %v4112 = vcombine.high %v4111, %v4111
    %v4114 = vunpack.c.l.s4 1966171168
    %v4115 = vunpack.c.0.s8 %v4114
    %v4116 = vlaneseq
    %v4117 = vshrl.u32 %v4116, 7
    %v4118 = vsub.s32 %v4115, %v4117
    %v4119 = vrot.slane %v4111, %v4118
    %v4121 = vunpack.c.l.s4 1966171168
    %v4122 = vunpack.c.0.s8 %v4121
    %v4123 = vlaneseq
    %v4124 = vshrl.u32 %v4123, 7
    %v4125 = vsub.s32 %v4122, %v4124
    %v4126 = vrot.slane %v4112, %v4125
    %v4127 = vcombine.high %v4119, %v4119
    %v4128 = vcombine.high %v4126, %v4126
    %v4135 = vcombine.low %v4099, %v4101
    %v4137 = vunpack.c.l.s4 1966171168
    %v4138 = vunpack.c.0.s8 %v4137
    %v4139 = vlaneseq
    %v4140 = vshrl.u32 %v4139, 7
    %v4141 = vsub.s32 %v4138, %v4140
    %v4142 = vrot.slane %v4135, %v4141
    %v4143 = vcombine.high %v4142, %v4142
    %v4145 = vunpack.c.l.s4 1966171168
    %v4146 = vunpack.c.0.s8 %v4145
    %v4147 = vlaneseq
    %v4148 = vshrl.u32 %v4147, 7
    %v4149 = vsub.s32 %v4146, %v4148
    %v4150 = vrot.slane %v4142, %v4149
    %v4152 = vunpack.c.l.s4 1966171168
    %v4153 = vunpack.c.0.s8 %v4152
    %v4154 = vlaneseq
    %v4155 = vshrl.u32 %v4154, 7
    %v4156 = vsub.s32 %v4153, %v4155
    %v4157 = vrot.slane %v4143, %v4156
    %v4158 = vcombine.high %v4150, %v4150
    %v4159 = vcombine.high %v4157, %v4157
    %4164 = vmatprep.subr.mxu0 %v592
    %4165 = vmatpush1.msra.mxu0 %v591
    %4166 = vmatprep.subr.mxu0 %v600
    %4167 = vmatpush1.msra.mxu0 %v599
    %4168 = vmatprep.subr.mxu0 %v608
    %4169 = vmatpush1.msra.mxu0 %v607
    %4170 = vmatprep.subr.mxu0 %v616
    %4171 = vmatpush1.msra.mxu0 %v615
    %4172 = vmatprep.subr.mxu0 %v624
    %4173 = vmatpush1.msra.mxu0 %v623
    %4174 = vmatprep.subr.mxu0 %v632
    %4175 = vmatpush1.msra.mxu0 %v631
    %4176 = vmatprep.subr.mxu0 %v640
    %4177 = vmatpush1.msra.mxu0 %v639
    %4178 = vmatprep.subr.mxu0 %v648
    %4179 = vmatpush1.msra.mxu0 %v647
    %4180 = vmatprep.subr.mxu0 %v656
    %4181 = vmatpush1.msra.mxu0 %v655
    %4182 = vmatprep.subr.mxu0 %v664
    %4183 = vmatpush1.msra.mxu0 %v663
    %4184 = vmatprep.subr.mxu0 %v672
    %4185 = vmatpush1.msra.mxu0 %v671
    %4186 = vmatprep.subr.mxu0 %v680
    %4187 = vmatpush1.msra.mxu0 %v679
    %4188 = vmatprep.subr.mxu0 %v688
    %4189 = vmatpush1.msra.mxu0 %v687
    %4190 = vmatprep.subr.mxu0 %v696
    %4191 = vmatpush1.msra.mxu0 %v695
    %4192 = vmatprep.subr.mxu0 %v704
    %4193 = vmatpush1.msra.mxu0 %v703
    %4194 = vmatprep.subr.mxu0 %v712
    %4195 = vmatpush1.msra.mxu0 %v711
    %4196 = vmatprep.subr.mxu0 %v720
    %4197 = vmatpush1.msra.mxu0 %v719
    %4198 = vmatprep.subr.mxu0 %v728
    %4199 = vmatpush1.msra.mxu0 %v727
    %4200 = vmatprep.subr.mxu0 %v736
    %4201 = vmatpush1.msra.mxu0 %v735
    %4202 = vmatprep.subr.mxu0 %v744
    %4203 = vmatpush1.msra.mxu0 %v743
    %4204 = vmatprep.subr.mxu0 %v752
    %4205 = vmatpush1.msra.mxu0 %v751
    %4206 = vmatprep.subr.mxu0 %v760
    %4207 = vmatpush1.msra.mxu0 %v759
    %4208 = vmatprep.subr.mxu0 %v768
    %4209 = vmatpush1.msra.mxu0 %v767
    %4210 = vmatprep.subr.mxu0 %v776
    %4211 = vmatpush1.msra.mxu0 %v775
    %4212 = vmatprep.subr.mxu0 %v784
    %4213 = vmatpush1.msra.mxu0 %v783
    %4214 = vmatprep.subr.mxu0 %v792
    %4215 = vmatpush1.msra.mxu0 %v791
    %4216 = vmatprep.subr.mxu0 %v800
    %4217 = vmatpush1.msra.mxu0 %v799
    %4218 = vmatprep.subr.mxu0 %v808
    %4219 = vmatpush1.msra.mxu0 %v807
    %4220 = vmatprep.subr.mxu0 %v816
    %4221 = vmatpush1.msra.mxu0 %v815
    %4222 = vmatprep.subr.mxu0 %v824
    %4223 = vmatpush1.msra.mxu0 %v823
    %4224 = vmatprep.subr.mxu0 %v832
    %4225 = vmatpush1.msra.mxu0 %v831
    %4226 = vmatprep.subr.mxu0 %v840
    %4227 = vmatpush1.msra.mxu0 %v839
    %4228 = vmatprep.mubr.f32.mxu0 %v4039
    %4229 = vmatmul.mubr.f32.gmra.mrb[0].mxu0 %v4015
    %v4230 = vpop.f32.mrb[0].mxu0
    %v4231 = vadd.f32 0.0, %v4230
    %v4232 = vpop.f32.mrb[0].mxu0
    %v4233 = vadd.f32 0.0, %v4232
    %4234 = vdwg.mxu0
    %4235 = vmatprep.subr.mxu0 %v594
    %4236 = vmatpush1.msra.mxu0 %v593
    %4237 = vmatprep.subr.mxu0 %v602
    %4238 = vmatpush1.msra.mxu0 %v601
    %4239 = vmatprep.subr.mxu0 %v610
    %4240 = vmatpush1.msra.mxu0 %v609
    %4241 = vmatprep.subr.mxu0 %v618
    %4242 = vmatpush1.msra.mxu0 %v617
    %4243 = vmatprep.subr.mxu0 %v626
    %4244 = vmatpush1.msra.mxu0 %v625
    %4245 = vmatprep.subr.mxu0 %v634
    %4246 = vmatpush1.msra.mxu0 %v633
    %4247 = vmatprep.subr.mxu0 %v642
    %4248 = vmatpush1.msra.mxu0 %v641
    %4249 = vmatprep.subr.mxu0 %v650
    %4250 = vmatpush1.msra.mxu0 %v649
    %4251 = vmatprep.subr.mxu0 %v658
    %4252 = vmatpush1.msra.mxu0 %v657
    %4253 = vmatprep.subr.mxu0 %v666
    %4254 = vmatpush1.msra.mxu0 %v665
    %4255 = vmatprep.subr.mxu0 %v674
    %4256 = vmatpush1.msra.mxu0 %v673
    %4257 = vmatprep.subr.mxu0 %v682
    %4258 = vmatpush1.msra.mxu0 %v681
    %4259 = vmatprep.subr.mxu0 %v690
    %4260 = vmatpush1.msra.mxu0 %v689
    %4261 = vmatprep.subr.mxu0 %v698
    %4262 = vmatpush1.msra.mxu0 %v697
    %4263 = vmatprep.subr.mxu0 %v706
    %4264 = vmatpush1.msra.mxu0 %v705
    %4265 = vmatprep.subr.mxu0 %v714
    %4266 = vmatpush1.msra.mxu0 %v713
    %4267 = vmatprep.subr.mxu0 %v722
    %4268 = vmatpush1.msra.mxu0 %v721
    %4269 = vmatprep.subr.mxu0 %v730
    %4270 = vmatpush1.msra.mxu0 %v729
    %4271 = vmatprep.subr.mxu0 %v738
    %4272 = vmatpush1.msra.mxu0 %v737
    %4273 = vmatprep.subr.mxu0 %v746
    %4274 = vmatpush1.msra.mxu0 %v745
    %4275 = vmatprep.subr.mxu0 %v754
    %4276 = vmatpush1.msra.mxu0 %v753
    %4277 = vmatprep.subr.mxu0 %v762
    %4278 = vmatpush1.msra.mxu0 %v761
    %4279 = vmatprep.subr.mxu0 %v770
    %4280 = vmatpush1.msra.mxu0 %v769
    %4281 = vmatprep.subr.mxu0 %v778
    %4282 = vmatpush1.msra.mxu0 %v777
    %4283 = vmatprep.subr.mxu0 %v786
    %4284 = vmatpush1.msra.mxu0 %v785
    %4285 = vmatprep.subr.mxu0 %v794
    %4286 = vmatpush1.msra.mxu0 %v793
    %4287 = vmatprep.subr.mxu0 %v802
    %4288 = vmatpush1.msra.mxu0 %v801
    %4289 = vmatprep.subr.mxu0 %v810
    %4290 = vmatpush1.msra.mxu0 %v809
    %4291 = vmatprep.subr.mxu0 %v818
    %4292 = vmatpush1.msra.mxu0 %v817
    %4293 = vmatprep.subr.mxu0 %v826
    %4294 = vmatpush1.msra.mxu0 %v825
    %4295 = vmatprep.subr.mxu0 %v834
    %4296 = vmatpush1.msra.mxu0 %v833
    %4297 = vmatprep.subr.mxu0 %v842
    %4298 = vmatpush1.msra.mxu0 %v841
    %4299 = vmatprep.mubr.f32.mxu0 %v4039
    %4300 = vmatmul.mubr.f32.gmra.mrb[0].mxu0 %v4015
    %v4301 = vpop.f32.mrb[0].mxu0
    %v4302 = vadd.f32 0.0, %v4301
    %v4303 = vpop.f32.mrb[0].mxu0
    %v4304 = vadd.f32 0.0, %v4303
    %4305 = vdwg.mxu0
    %4306 = vmatprep.subr.mxu0 %v596
    %4307 = vmatpush1.msra.mxu0 %v595
    %4308 = vmatprep.subr.mxu0 %v604
    %4309 = vmatpush1.msra.mxu0 %v603
    %4310 = vmatprep.subr.mxu0 %v612
    %4311 = vmatpush1.msra.mxu0 %v611
    %4312 = vmatprep.subr.mxu0 %v620
    %4313 = vmatpush1.msra.mxu0 %v619
    %4314 = vmatprep.subr.mxu0 %v628
    %4315 = vmatpush1.msra.mxu0 %v627
    %4316 = vmatprep.subr.mxu0 %v636
    %4317 = vmatpush1.msra.mxu0 %v635
    %4318 = vmatprep.subr.mxu0 %v644
    %4319 = vmatpush1.msra.mxu0 %v643
    %4320 = vmatprep.subr.mxu0 %v652
    %4321 = vmatpush1.msra.mxu0 %v651
    %4322 = vmatprep.subr.mxu0 %v660
    %4323 = vmatpush1.msra.mxu0 %v659
    %4324 = vmatprep.subr.mxu0 %v668
    %4325 = vmatpush1.msra.mxu0 %v667
    %4326 = vmatprep.subr.mxu0 %v676
    %4327 = vmatpush1.msra.mxu0 %v675
    %4328 = vmatprep.subr.mxu0 %v684
    %4329 = vmatpush1.msra.mxu0 %v683
    %4330 = vmatprep.subr.mxu0 %v692
    %4331 = vmatpush1.msra.mxu0 %v691
    %4332 = vmatprep.subr.mxu0 %v700
    %4333 = vmatpush1.msra.mxu0 %v699
    %4334 = vmatprep.subr.mxu0 %v708
    %4335 = vmatpush1.msra.mxu0 %v707
    %4336 = vmatprep.subr.mxu0 %v716
    %4337 = vmatpush1.msra.mxu0 %v715
    %4338 = vmatprep.subr.mxu0 %v724
    %4339 = vmatpush1.msra.mxu0 %v723
    %4340 = vmatprep.subr.mxu0 %v732
    %4341 = vmatpush1.msra.mxu0 %v731
    %4342 = vmatprep.subr.mxu0 %v740
    %4343 = vmatpush1.msra.mxu0 %v739
    %4344 = vmatprep.subr.mxu0 %v748
    %4345 = vmatpush1.msra.mxu0 %v747
    %4346 = vmatprep.subr.mxu0 %v756
    %4347 = vmatpush1.msra.mxu0 %v755
    %4348 = vmatprep.subr.mxu0 %v764
    %4349 = vmatpush1.msra.mxu0 %v763
    %4350 = vmatprep.subr.mxu0 %v772
    %4351 = vmatpush1.msra.mxu0 %v771
    %4352 = vmatprep.subr.mxu0 %v780
    %4353 = vmatpush1.msra.mxu0 %v779
    %4354 = vmatprep.subr.mxu0 %v788
    %4355 = vmatpush1.msra.mxu0 %v787
    %4356 = vmatprep.subr.mxu0 %v796
    %4357 = vmatpush1.msra.mxu0 %v795
    %4358 = vmatprep.subr.mxu0 %v804
    %4359 = vmatpush1.msra.mxu0 %v803
    %4360 = vmatprep.subr.mxu0 %v812
    %4361 = vmatpush1.msra.mxu0 %v811
    %4362 = vmatprep.subr.mxu0 %v820
    %4363 = vmatpush1.msra.mxu0 %v819
    %4364 = vmatprep.subr.mxu0 %v828
    %4365 = vmatpush1.msra.mxu0 %v827
    %4366 = vmatprep.subr.mxu0 %v836
    %4367 = vmatpush1.msra.mxu0 %v835
    %4368 = vmatprep.subr.mxu0 %v844
    %4369 = vmatpush1.msra.mxu0 %v843
    %4370 = vmatprep.mubr.f32.mxu0 %v4039
    %4371 = vmatmul.mubr.f32.gmra.mrb[0].mxu0 %v4015
    %v4372 = vpop.f32.mrb[0].mxu0
    %v4373 = vadd.f32 0.0, %v4372
    %v4374 = vpop.f32.mrb[0].mxu0
    %v4375 = vadd.f32 0.0, %v4374
    %4376 = vdwg.mxu0
    %4377 = vmatprep.subr.mxu0 %v598
    %4378 = vmatpush1.msra.mxu0 %v597
    %4379 = vmatprep.subr.mxu0 %v606
    %4380 = vmatpush1.msra.mxu0 %v605
    %4381 = vmatprep.subr.mxu0 %v614
    %4382 = vmatpush1.msra.mxu0 %v613
    %4383 = vmatprep.subr.mxu0 %v622
    %4384 = vmatpush1.msra.mxu0 %v621
    %4385 = vmatprep.subr.mxu0 %v630
    %4386 = vmatpush1.msra.mxu0 %v629
    %4387 = vmatprep.subr.mxu0 %v638
    %4388 = vmatpush1.msra.mxu0 %v637
    %4389 = vmatprep.subr.mxu0 %v646
    %4390 = vmatpush1.msra.mxu0 %v645
    %4391 = vmatprep.subr.mxu0 %v654
    %4392 = vmatpush1.msra.mxu0 %v653
    %4393 = vmatprep.subr.mxu0 %v662
    %4394 = vmatpush1.msra.mxu0 %v661
    %4395 = vmatprep.subr.mxu0 %v670
    %4396 = vmatpush1.msra.mxu0 %v669
    %4397 = vmatprep.subr.mxu0 %v678
    %4398 = vmatpush1.msra.mxu0 %v677
    %4399 = vmatprep.subr.mxu0 %v686
    %4400 = vmatpush1.msra.mxu0 %v685
    %4401 = vmatprep.subr.mxu0 %v694
    %4402 = vmatpush1.msra.mxu0 %v693
    %4403 = vmatprep.subr.mxu0 %v702
    %4404 = vmatpush1.msra.mxu0 %v701
    %4405 = vmatprep.subr.mxu0 %v710
    %4406 = vmatpush1.msra.mxu0 %v709
    %4407 = vmatprep.subr.mxu0 %v718
    %4408 = vmatpush1.msra.mxu0 %v717
    %4409 = vmatprep.subr.mxu0 %v726
    %4410 = vmatpush1.msra.mxu0 %v725
    %4411 = vmatprep.subr.mxu0 %v734
    %4412 = vmatpush1.msra.mxu0 %v733
    %4413 = vmatprep.subr.mxu0 %v742
    %4414 = vmatpush1.msra.mxu0 %v741
    %4415 = vmatprep.subr.mxu0 %v750
    %4416 = vmatpush1.msra.mxu0 %v749
    %4417 = vmatprep.subr.mxu0 %v758
    %4418 = vmatpush1.msra.mxu0 %v757
    %4419 = vmatprep.subr.mxu0 %v766
    %4420 = vmatpush1.msra.mxu0 %v765
    %4421 = vmatprep.subr.mxu0 %v774
    %4422 = vmatpush1.msra.mxu0 %v773
    %4423 = vmatprep.subr.mxu0 %v782
    %4424 = vmatpush1.msra.mxu0 %v781
    %4425 = vmatprep.subr.mxu0 %v790
    %4426 = vmatpush1.msra.mxu0 %v789
    %4427 = vmatprep.subr.mxu0 %v798
    %4428 = vmatpush1.msra.mxu0 %v797
    %4429 = vmatprep.subr.mxu0 %v806
    %4430 = vmatpush1.msra.mxu0 %v805
    %4431 = vmatprep.subr.mxu0 %v814
    %4432 = vmatpush1.msra.mxu0 %v813
    %4433 = vmatprep.subr.mxu0 %v822
    %4434 = vmatpush1.msra.mxu0 %v821
    %4435 = vmatprep.subr.mxu0 %v830
    %4436 = vmatpush1.msra.mxu0 %v829
    %4437 = vmatprep.subr.mxu0 %v838
    %4438 = vmatpush1.msra.mxu0 %v837
    %4439 = vmatprep.subr.mxu0 %v846
    %4440 = vmatpush1.msra.mxu0 %v845
    %4441 = vmatprep.mubr.f32.mxu0 %v4039
    %4442 = vmatmul.mubr.f32.gmra.mrb[0].mxu0 %v4015
    %v4443 = vpop.f32.mrb[0].mxu0
    %v4444 = vadd.f32 0.0, %v4443
    %v4445 = vpop.f32.mrb[0].mxu0
    %v4446 = vadd.f32 0.0, %v4445
    %4447 = vdwg.mxu0
    %v4448 = vadd.f32 %v4119, %v4231
    %v4449 = vadd.f32 %v4126, %v4233
    %v4450 = vadd.f32 %v4127, %v4302
    %v4451 = vadd.f32 %v4128, %v4304
    %v4452 = vadd.f32 %v4150, %v4373
    %v4453 = vadd.f32 %v4157, %v4375
    %v4454 = vadd.f32 %v4158, %v4444
    %v4455 = vadd.f32 %v4159, %v4446
    %v4456 = vxor.u32 %v4448, 2147483648
    %v4457 = vxor.u32 %v4449, 2147483648
    %v4458 = vxor.u32 %v4450, 2147483648
    %v4459 = vmul.f32 %v4456, 1.442695
    %v4460 = vpow.pop %v4459
    %v4461 = vmul.f32 %v4457, 1.442695
    %v4462 = vpow.pop %v4461
    %v4463 = vmul.f32 %v4458, 1.442695
    %v4464 = vpow.pop %v4463
    %v4465 = vadd.f32 %v4460, 1.0
    %v4466 = vadd.f32 %v4462, 1.0
    %v4467 = vadd.f32 %v4464, 1.0
    %v4468 = vrcp.pop %v4465
    %v4469 = vmul.f32 1.0, %v4468
    %v4470 = vrcp.pop %v4466
    %v4471 = vmul.f32 1.0, %v4470
    %v4472 = vrcp.pop %v4467
    %v4473 = vmul.f32 1.0, %v4472
    %v4474 = vtanh.pop %v4451
    %v4475 = vmul.f32 %v4471, %v4013
    %v4476 = vmul.f32 %v4469, %v4474
    %v4477 = vadd.f32 %v4475, %v4476
    %v4478 = vtanh.pop %v4477
    %v4479 = vmul.f32 %v4473, %v4478
    %v4480 = vxor.u32 %v4452, 2147483648
    %v4481 = vxor.u32 %v4453, 2147483648
    %v4482 = vxor.u32 %v4454, 2147483648
    %v4483 = vmul.f32 %v4480, 1.442695
    %v4484 = vpow.pop %v4483
    %v4485 = vmul.f32 %v4481, 1.442695
    %v4486 = vpow.pop %v4485
    %v4487 = vmul.f32 %v4482, 1.442695
    %v4488 = vpow.pop %v4487
    %v4489 = vadd.f32 %v4484, 1.0
    %v4490 = vadd.f32 %v4486, 1.0
    %v4491 = vadd.f32 %v4488, 1.0
    %v4492 = vrcp.pop %v4489
    %v4493 = vmul.f32 1.0, %v4492
    %v4494 = vrcp.pop %v4490
    %v4495 = vmul.f32 1.0, %v4494
    %v4496 = vrcp.pop %v4491
    %v4497 = vmul.f32 1.0, %v4496
    %v4498 = vtanh.pop %v4455
    %v4499 = vmul.f32 %v4495, %v4037
    %v4500 = vmul.f32 %v4493, %v4498
    %v4501 = vadd.f32 %v4499, %v4500
    %v4502 = vtanh.pop %v4501
    %v4503 = vmul.f32 %v4497, %v4502
    %v4506 = vunpack.c.l.s4 1966171168
    %v4507 = vunpack.c.0.s8 %v4506
    %v4508 = vlaneseq
    %v4509 = vshrl.u32 %v4508, 7
    %v4510 = vsub.s32 %v4507, %v4509
    %v4511 = vrot.slane %v4479, %v4510
    %v4512 = vcombine.high %v4511, %v4511
    %v4514 = vunpack.c.l.s4 1966171168
    %v4515 = vunpack.c.0.s8 %v4514
    %v4516 = vlaneseq
    %v4517 = vshrl.u32 %v4516, 7
    %v4518 = vsub.s32 %v4515, %v4517
    %v4519 = vrot.slane %v4511, %v4518
    %v4521 = vunpack.c.l.s4 1966171168
    %v4522 = vunpack.c.0.s8 %v4521
    %v4523 = vlaneseq
    %v4524 = vshrl.u32 %v4523, 7
    %v4525 = vsub.s32 %v4522, %v4524
    %v4526 = vrot.slane %v4512, %v4525
    %4529 = vst [vmem:[#allocation3 + $0x7] sm:$0x1] %v4519
    %4530 = vst [vmem:[#allocation3 + $0x17] sm:$0x1] %v4526
    %v4533 = vunpack.c.l.s4 1966171168
    %v4534 = vunpack.c.0.s8 %v4533
    %v4535 = vlaneseq
    %v4536 = vshrl.u32 %v4535, 7
    %v4537 = vsub.s32 %v4534, %v4536
    %v4538 = vrot.slane %v4503, %v4537
    %v4539 = vcombine.high %v4538, %v4538
    %v4541 = vunpack.c.l.s4 1966171168
    %v4542 = vunpack.c.0.s8 %v4541
    %v4543 = vlaneseq
    %v4544 = vshrl.u32 %v4543, 7
    %v4545 = vsub.s32 %v4542, %v4544
    %v4546 = vrot.slane %v4538, %v4545
    %v4548 = vunpack.c.l.s4 1966171168
    %v4549 = vunpack.c.0.s8 %v4548
    %v4550 = vlaneseq
    %v4551 = vshrl.u32 %v4550, 7
    %v4552 = vsub.s32 %v4549, %v4551
    %v4553 = vrot.slane %v4539, %v4552
    %4556 = vst [vmem:[#allocation3 + $0x8] sm:$0x1] %v4546
    %4557 = vst [vmem:[#allocation3 + $0x18] sm:$0x1] %v4553
    %v4558 = vld [vmem:[#allocation3] sm:$0xff]
    %v4559 = vld [vmem:[#allocation3 + $0x8] sm:$0xff]
    %v4560 = vld [vmem:[#allocation3 + $0x10] sm:$0xff]
    %v4561 = vld [vmem:[#allocation3 + $0x18] sm:$0xff]
    %v4562 = vld [vmem:[#allocation10] sm:$0xff]
    %v4563 = vld [vmem:[#allocation10 + $0x8] sm:$0xff]
    %v4564 = vld [vmem:[#allocation10 + $0x10] sm:$0xff]
    %v4565 = vld [vmem:[#allocation10 + $0x18] sm:$0xff]
    %v4566 = vld [vmem:[#allocation10 + $0x20] sm:$0xff]
    %v4567 = vld [vmem:[#allocation10 + $0x28] sm:$0xff]
    %v4568 = vld [vmem:[#allocation10 + $0x30] sm:$0xff]
    %v4569 = vld [vmem:[#allocation10 + $0x38] sm:$0xff]
    %v4570 = vld [vmem:[#allocation10 + $0x40] sm:$0xff]
    %v4571 = vld [vmem:[#allocation10 + $0x48] sm:$0xff]
    %v4572 = vld [vmem:[#allocation10 + $0x50] sm:$0xff]
    %v4573 = vld [vmem:[#allocation10 + $0x58] sm:$0xff]
    %v4574 = vld [vmem:[#allocation10 + $0x60] sm:$0xff]
    %v4575 = vld [vmem:[#allocation10 + $0x68] sm:$0xff]
    %v4576 = vld [vmem:[#allocation10 + $0x70] sm:$0xff]
    %v4577 = vld [vmem:[#allocation10 + $0x78] sm:$0xff]
    %v4578 = vld [vmem:[#allocation10 + $0x80] sm:$0xff]
    %v4579 = vld [vmem:[#allocation10 + $0x88] sm:$0xff]
    %v4580 = vld [vmem:[#allocation10 + $0x90] sm:$0xff]
    %v4581 = vld [vmem:[#allocation10 + $0x98] sm:$0xff]
    %v4582 = vld [vmem:[#allocation10 + $0xa0] sm:$0xff]
    %v4583 = vld [vmem:[#allocation10 + $0xa8] sm:$0xff]
    %v4584 = vld [vmem:[#allocation10 + $0xb0] sm:$0xff]
    %v4585 = vld [vmem:[#allocation10 + $0xb8] sm:$0xff]
    %v4586 = vld [vmem:[#allocation10 + $0xc0] sm:$0xff]
    %v4587 = vld [vmem:[#allocation10 + $0xc8] sm:$0xff]
    %v4588 = vld [vmem:[#allocation10 + $0xd0] sm:$0xff]
    %v4589 = vld [vmem:[#allocation10 + $0xd8] sm:$0xff]
    %v4590 = vld [vmem:[#allocation10 + $0xe0] sm:$0xff]
    %v4591 = vld [vmem:[#allocation10 + $0xe8] sm:$0xff]
    %v4592 = vld [vmem:[#allocation10 + $0xf0] sm:$0xff]
    %v4593 = vld [vmem:[#allocation10 + $0xf8] sm:$0xff]
    %v4594 = vld [vmem:[#allocation10 + $0x100] sm:$0xff]
    %v4595 = vld [vmem:[#allocation10 + $0x108] sm:$0xff]
    %v4596 = vld [vmem:[#allocation10 + $0x110] sm:$0xff]
    %v4597 = vld [vmem:[#allocation10 + $0x118] sm:$0xff]
    %v4598 = vld [vmem:[#allocation10 + $0x120] sm:$0xff]
    %v4599 = vld [vmem:[#allocation10 + $0x128] sm:$0xff]
    %v4600 = vld [vmem:[#allocation10 + $0x130] sm:$0xff]
    %v4601 = vld [vmem:[#allocation10 + $0x138] sm:$0xff]
    %v4602 = vld [vmem:[#allocation10 + $0x140] sm:$0xff]
    %v4603 = vld [vmem:[#allocation10 + $0x148] sm:$0xff]
    %v4604 = vld [vmem:[#allocation10 + $0x150] sm:$0xff]
    %v4605 = vld [vmem:[#allocation10 + $0x158] sm:$0xff]
    %v4606 = vld [vmem:[#allocation10 + $0x160] sm:$0xff]
    %v4607 = vld [vmem:[#allocation10 + $0x168] sm:$0xff]
    %v4608 = vld [vmem:[#allocation10 + $0x170] sm:$0xff]
    %v4609 = vld [vmem:[#allocation10 + $0x178] sm:$0xff]
    %v4610 = vld [vmem:[#allocation10 + $0x180] sm:$0xff]
    %v4611 = vld [vmem:[#allocation10 + $0x188] sm:$0xff]
    %v4612 = vld [vmem:[#allocation10 + $0x190] sm:$0xff]
    %v4613 = vld [vmem:[#allocation10 + $0x198] sm:$0xff]
    %v4614 = vld [vmem:[#allocation10 + $0x1a0] sm:$0xff]
    %v4615 = vld [vmem:[#allocation10 + $0x1a8] sm:$0xff]
    %v4616 = vld [vmem:[#allocation10 + $0x1b0] sm:$0xff]
    %v4617 = vld [vmem:[#allocation10 + $0x1b8] sm:$0xff]
    %v4618 = vld [vmem:[#allocation10 + $0x1c0] sm:$0xff]
    %v4619 = vld [vmem:[#allocation10 + $0x1c8] sm:$0xff]
    %v4620 = vld [vmem:[#allocation10 + $0x1d0] sm:$0xff]
    %v4621 = vld [vmem:[#allocation10 + $0x1d8] sm:$0xff]
    %v4622 = vld [vmem:[#allocation10 + $0x1e0] sm:$0xff]
    %v4623 = vld [vmem:[#allocation10 + $0x1e8] sm:$0xff]
    %v4624 = vld [vmem:[#allocation10 + $0x1f0] sm:$0xff]
    %v4625 = vld [vmem:[#allocation10 + $0x1f8] sm:$0xff]
    %v4626 = vld [vmem:[#allocation10 + $0x200] sm:$0xff]
    %v4627 = vld [vmem:[#allocation10 + $0x208] sm:$0xff]
    %v4628 = vld [vmem:[#allocation10 + $0x210] sm:$0xff]
    %v4629 = vld [vmem:[#allocation10 + $0x218] sm:$0xff]
    %v4630 = vld [vmem:[#allocation10 + $0x220] sm:$0xff]
    %v4631 = vld [vmem:[#allocation10 + $0x228] sm:$0xff]
    %v4632 = vld [vmem:[#allocation10 + $0x230] sm:$0xff]
    %v4633 = vld [vmem:[#allocation10 + $0x238] sm:$0xff]
    %v4634 = vld [vmem:[#allocation10 + $0x240] sm:$0xff]
    %v4635 = vld [vmem:[#allocation10 + $0x248] sm:$0xff]
    %v4636 = vld [vmem:[#allocation10 + $0x250] sm:$0xff]
    %v4637 = vld [vmem:[#allocation10 + $0x258] sm:$0xff]
    %v4638 = vld [vmem:[#allocation10 + $0x260] sm:$0xff]
    %v4639 = vld [vmem:[#allocation10 + $0x268] sm:$0xff]
    %v4640 = vld [vmem:[#allocation10 + $0x270] sm:$0xff]
    %v4641 = vld [vmem:[#allocation10 + $0x278] sm:$0xff]
    %v4642 = vld [vmem:[#allocation10 + $0x280] sm:$0xff]
    %v4643 = vld [vmem:[#allocation10 + $0x288] sm:$0xff]
    %v4644 = vld [vmem:[#allocation10 + $0x290] sm:$0xff]
    %v4645 = vld [vmem:[#allocation10 + $0x298] sm:$0xff]
    %v4646 = vld [vmem:[#allocation10 + $0x2a0] sm:$0xff]
    %v4647 = vld [vmem:[#allocation10 + $0x2a8] sm:$0xff]
    %v4648 = vld [vmem:[#allocation10 + $0x2b0] sm:$0xff]
    %v4649 = vld [vmem:[#allocation10 + $0x2b8] sm:$0xff]
    %v4650 = vld [vmem:[#allocation10 + $0x2c0] sm:$0xff]
    %v4651 = vld [vmem:[#allocation10 + $0x2c8] sm:$0xff]
    %v4652 = vld [vmem:[#allocation10 + $0x2d0] sm:$0xff]
    %v4653 = vld [vmem:[#allocation10 + $0x2d8] sm:$0xff]
    %v4654 = vld [vmem:[#allocation10 + $0x2e0] sm:$0xff]
    %v4655 = vld [vmem:[#allocation10 + $0x2e8] sm:$0xff]
    %v4656 = vld [vmem:[#allocation10 + $0x2f0] sm:$0xff]
    %v4657 = vld [vmem:[#allocation10 + $0x2f8] sm:$0xff]
    %v4658 = vld [vmem:[#allocation10 + $0x300] sm:$0xff]
    %v4659 = vld [vmem:[#allocation10 + $0x308] sm:$0xff]
    %v4660 = vld [vmem:[#allocation10 + $0x310] sm:$0xff]
    %v4661 = vld [vmem:[#allocation10 + $0x318] sm:$0xff]
    %v4662 = vld [vmem:[#allocation10 + $0x320] sm:$0xff]
    %v4663 = vld [vmem:[#allocation10 + $0x328] sm:$0xff]
    %v4664 = vld [vmem:[#allocation10 + $0x330] sm:$0xff]
    %v4665 = vld [vmem:[#allocation10 + $0x338] sm:$0xff]
    %v4666 = vld [vmem:[#allocation10 + $0x340] sm:$0xff]
    %v4667 = vld [vmem:[#allocation10 + $0x348] sm:$0xff]
    %v4668 = vld [vmem:[#allocation10 + $0x350] sm:$0xff]
    %v4669 = vld [vmem:[#allocation10 + $0x358] sm:$0xff]
    %v4670 = vld [vmem:[#allocation10 + $0x360] sm:$0xff]
    %v4671 = vld [vmem:[#allocation10 + $0x368] sm:$0xff]
    %v4672 = vld [vmem:[#allocation10 + $0x370] sm:$0xff]
    %v4673 = vld [vmem:[#allocation10 + $0x378] sm:$0xff]
    %v4674 = vld [vmem:[#allocation10 + $0x380] sm:$0xff]
    %v4675 = vld [vmem:[#allocation10 + $0x388] sm:$0xff]
    %v4676 = vld [vmem:[#allocation10 + $0x390] sm:$0xff]
    %v4677 = vld [vmem:[#allocation10 + $0x398] sm:$0xff]
    %v4678 = vld [vmem:[#allocation10 + $0x3a0] sm:$0xff]
    %v4679 = vld [vmem:[#allocation10 + $0x3a8] sm:$0xff]
    %v4680 = vld [vmem:[#allocation10 + $0x3b0] sm:$0xff]
    %v4681 = vld [vmem:[#allocation10 + $0x3b8] sm:$0xff]
    %v4682 = vld [vmem:[#allocation10 + $0x3c0] sm:$0xff]
    %v4683 = vld [vmem:[#allocation10 + $0x3c8] sm:$0xff]
    %v4684 = vld [vmem:[#allocation10 + $0x3d0] sm:$0xff]
    %v4685 = vld [vmem:[#allocation10 + $0x3d8] sm:$0xff]
    %v4686 = vld [vmem:[#allocation10 + $0x3e0] sm:$0xff]
    %v4687 = vld [vmem:[#allocation10 + $0x3e8] sm:$0xff]
    %v4688 = vld [vmem:[#allocation10 + $0x3f0] sm:$0xff]
    %v4689 = vld [vmem:[#allocation10 + $0x3f8] sm:$0xff]
    %v4690 = vld [vmem:[#allocation10 + $0x400] sm:$0xff]
    %v4691 = vld [vmem:[#allocation10 + $0x408] sm:$0xff]
    %v4692 = vld [vmem:[#allocation10 + $0x410] sm:$0xff]
    %v4693 = vld [vmem:[#allocation10 + $0x418] sm:$0xff]
    %v4694 = vld [vmem:[#allocation10 + $0x420] sm:$0xff]
    %v4695 = vld [vmem:[#allocation10 + $0x428] sm:$0xff]
    %v4696 = vld [vmem:[#allocation10 + $0x430] sm:$0xff]
    %v4697 = vld [vmem:[#allocation10 + $0x438] sm:$0xff]
    %v4698 = vld [vmem:[#allocation10 + $0x440] sm:$0xff]
    %v4699 = vld [vmem:[#allocation10 + $0x448] sm:$0xff]
    %v4700 = vld [vmem:[#allocation10 + $0x450] sm:$0xff]
    %v4701 = vld [vmem:[#allocation10 + $0x458] sm:$0xff]
    %v4702 = vld [vmem:[#allocation10 + $0x460] sm:$0xff]
    %v4703 = vld [vmem:[#allocation10 + $0x468] sm:$0xff]
    %v4704 = vld [vmem:[#allocation10 + $0x470] sm:$0xff]
    %v4705 = vld [vmem:[#allocation10 + $0x478] sm:$0xff]
    %v4706 = vld [vmem:[#allocation10 + $0x480] sm:$0xff]
    %v4707 = vld [vmem:[#allocation10 + $0x488] sm:$0xff]
    %v4708 = vld [vmem:[#allocation10 + $0x490] sm:$0xff]
    %v4709 = vld [vmem:[#allocation10 + $0x498] sm:$0xff]
    %v4710 = vld [vmem:[#allocation10 + $0x4a0] sm:$0xff]
    %v4711 = vld [vmem:[#allocation10 + $0x4a8] sm:$0xff]
    %v4712 = vld [vmem:[#allocation10 + $0x4b0] sm:$0xff]
    %v4713 = vld [vmem:[#allocation10 + $0x4b8] sm:$0xff]
    %v4714 = vld [vmem:[#allocation10 + $0x4c0] sm:$0xff]
    %v4715 = vld [vmem:[#allocation10 + $0x4c8] sm:$0xff]
    %v4716 = vld [vmem:[#allocation10 + $0x4d0] sm:$0xff]
    %v4717 = vld [vmem:[#allocation10 + $0x4d8] sm:$0xff]
    %v4718 = vld [vmem:[#allocation10 + $0x4e0] sm:$0xff]
    %v4719 = vld [vmem:[#allocation10 + $0x4e8] sm:$0xff]
    %v4720 = vld [vmem:[#allocation10 + $0x4f0] sm:$0xff]
    %v4721 = vld [vmem:[#allocation10 + $0x4f8] sm:$0xff]
    %v4722 = vld [vmem:[#allocation10 + $0x500] sm:$0xff]
    %v4723 = vld [vmem:[#allocation10 + $0x508] sm:$0xff]
    %v4724 = vld [vmem:[#allocation10 + $0x510] sm:$0xff]
    %v4725 = vld [vmem:[#allocation10 + $0x518] sm:$0xff]
    %v4726 = vld [vmem:[#allocation10 + $0x520] sm:$0xff]
    %v4727 = vld [vmem:[#allocation10 + $0x528] sm:$0xff]
    %v4728 = vld [vmem:[#allocation10 + $0x530] sm:$0xff]
    %v4729 = vld [vmem:[#allocation10 + $0x538] sm:$0xff]
    %v4730 = vld [vmem:[#allocation10 + $0x540] sm:$0xff]
    %v4731 = vld [vmem:[#allocation10 + $0x548] sm:$0xff]
    %v4732 = vld [vmem:[#allocation10 + $0x550] sm:$0xff]
    %v4733 = vld [vmem:[#allocation10 + $0x558] sm:$0xff]
    %v4734 = vld [vmem:[#allocation10 + $0x560] sm:$0xff]
    %v4735 = vld [vmem:[#allocation10 + $0x568] sm:$0xff]
    %v4736 = vld [vmem:[#allocation10 + $0x570] sm:$0xff]
    %v4737 = vld [vmem:[#allocation10 + $0x578] sm:$0xff]
    %v4738 = vld [vmem:[#allocation10 + $0x580] sm:$0xff]
    %v4739 = vld [vmem:[#allocation10 + $0x588] sm:$0xff]
    %v4740 = vld [vmem:[#allocation10 + $0x590] sm:$0xff]
    %v4741 = vld [vmem:[#allocation10 + $0x598] sm:$0xff]
    %v4742 = vld [vmem:[#allocation10 + $0x5a0] sm:$0xff]
    %v4743 = vld [vmem:[#allocation10 + $0x5a8] sm:$0xff]
    %v4744 = vld [vmem:[#allocation10 + $0x5b0] sm:$0xff]
    %v4745 = vld [vmem:[#allocation10 + $0x5b8] sm:$0xff]
    %v4746 = vld [vmem:[#allocation10 + $0x5c0] sm:$0xff]
    %v4747 = vld [vmem:[#allocation10 + $0x5c8] sm:$0xff]
    %v4748 = vld [vmem:[#allocation10 + $0x5d0] sm:$0xff]
    %v4749 = vld [vmem:[#allocation10 + $0x5d8] sm:$0xff]
    %v4750 = vld [vmem:[#allocation10 + $0x5e0] sm:$0xff]
    %v4751 = vld [vmem:[#allocation10 + $0x5e8] sm:$0xff]
    %v4752 = vld [vmem:[#allocation10 + $0x5f0] sm:$0xff]
    %v4753 = vld [vmem:[#allocation10 + $0x5f8] sm:$0xff]
    %v4754 = vld [vmem:[#allocation10 + $0x600] sm:$0xff]
    %v4755 = vld [vmem:[#allocation10 + $0x608] sm:$0xff]
    %v4756 = vld [vmem:[#allocation10 + $0x610] sm:$0xff]
    %v4757 = vld [vmem:[#allocation10 + $0x618] sm:$0xff]
    %v4758 = vld [vmem:[#allocation10 + $0x620] sm:$0xff]
    %v4759 = vld [vmem:[#allocation10 + $0x628] sm:$0xff]
    %v4760 = vld [vmem:[#allocation10 + $0x630] sm:$0xff]
    %v4761 = vld [vmem:[#allocation10 + $0x638] sm:$0xff]
    %v4762 = vld [vmem:[#allocation10 + $0x640] sm:$0xff]
    %v4763 = vld [vmem:[#allocation10 + $0x648] sm:$0xff]
    %v4764 = vld [vmem:[#allocation10 + $0x650] sm:$0xff]
    %v4765 = vld [vmem:[#allocation10 + $0x658] sm:$0xff]
    %v4766 = vld [vmem:[#allocation10 + $0x660] sm:$0xff]
    %v4767 = vld [vmem:[#allocation10 + $0x668] sm:$0xff]
    %v4768 = vld [vmem:[#allocation10 + $0x670] sm:$0xff]
    %v4769 = vld [vmem:[#allocation10 + $0x678] sm:$0xff]
    %v4770 = vld [vmem:[#allocation10 + $0x680] sm:$0xff]
    %v4771 = vld [vmem:[#allocation10 + $0x688] sm:$0xff]
    %v4772 = vld [vmem:[#allocation10 + $0x690] sm:$0xff]
    %v4773 = vld [vmem:[#allocation10 + $0x698] sm:$0xff]
    %v4774 = vld [vmem:[#allocation10 + $0x6a0] sm:$0xff]
    %v4775 = vld [vmem:[#allocation10 + $0x6a8] sm:$0xff]
    %v4776 = vld [vmem:[#allocation10 + $0x6b0] sm:$0xff]
    %v4777 = vld [vmem:[#allocation10 + $0x6b8] sm:$0xff]
    %v4778 = vld [vmem:[#allocation10 + $0x6c0] sm:$0xff]
    %v4779 = vld [vmem:[#allocation10 + $0x6c8] sm:$0xff]
    %v4780 = vld [vmem:[#allocation10 + $0x6d0] sm:$0xff]
    %v4781 = vld [vmem:[#allocation10 + $0x6d8] sm:$0xff]
    %v4782 = vld [vmem:[#allocation10 + $0x6e0] sm:$0xff]
    %v4783 = vld [vmem:[#allocation10 + $0x6e8] sm:$0xff]
    %v4784 = vld [vmem:[#allocation10 + $0x6f0] sm:$0xff]
    %v4785 = vld [vmem:[#allocation10 + $0x6f8] sm:$0xff]
    %v4786 = vld [vmem:[#allocation10 + $0x700] sm:$0xff]
    %v4787 = vld [vmem:[#allocation10 + $0x708] sm:$0xff]
    %v4788 = vld [vmem:[#allocation10 + $0x710] sm:$0xff]
    %v4789 = vld [vmem:[#allocation10 + $0x718] sm:$0xff]
    %v4790 = vld [vmem:[#allocation10 + $0x720] sm:$0xff]
    %v4791 = vld [vmem:[#allocation10 + $0x728] sm:$0xff]
    %v4792 = vld [vmem:[#allocation10 + $0x730] sm:$0xff]
    %v4793 = vld [vmem:[#allocation10 + $0x738] sm:$0xff]
    %v4794 = vld [vmem:[#allocation10 + $0x740] sm:$0xff]
    %v4795 = vld [vmem:[#allocation10 + $0x748] sm:$0xff]
    %v4796 = vld [vmem:[#allocation10 + $0x750] sm:$0xff]
    %v4797 = vld [vmem:[#allocation10 + $0x758] sm:$0xff]
    %v4798 = vld [vmem:[#allocation10 + $0x760] sm:$0xff]
    %v4799 = vld [vmem:[#allocation10 + $0x768] sm:$0xff]
    %v4800 = vld [vmem:[#allocation10 + $0x770] sm:$0xff]
    %v4801 = vld [vmem:[#allocation10 + $0x778] sm:$0xff]
    %v4802 = vld [vmem:[#allocation10 + $0x780] sm:$0xff]
    %v4803 = vld [vmem:[#allocation10 + $0x788] sm:$0xff]
    %v4804 = vld [vmem:[#allocation10 + $0x790] sm:$0xff]
    %v4805 = vld [vmem:[#allocation10 + $0x798] sm:$0xff]
    %v4806 = vld [vmem:[#allocation10 + $0x7a0] sm:$0xff]
    %v4807 = vld [vmem:[#allocation10 + $0x7a8] sm:$0xff]
    %v4808 = vld [vmem:[#allocation10 + $0x7b0] sm:$0xff]
    %v4809 = vld [vmem:[#allocation10 + $0x7b8] sm:$0xff]
    %v4810 = vld [vmem:[#allocation10 + $0x7c0] sm:$0xff]
    %v4811 = vld [vmem:[#allocation10 + $0x7c8] sm:$0xff]
    %v4812 = vld [vmem:[#allocation10 + $0x7d0] sm:$0xff]
    %v4813 = vld [vmem:[#allocation10 + $0x7d8] sm:$0xff]
    %v4814 = vld [vmem:[#allocation10 + $0x7e0] sm:$0xff]
    %v4815 = vld [vmem:[#allocation10 + $0x7e8] sm:$0xff]
    %v4816 = vld [vmem:[#allocation10 + $0x7f0] sm:$0xff]
    %v4817 = vld [vmem:[#allocation10 + $0x7f8] sm:$0xff]
    %v4818 = vld [vmem:[%s6] sm:$0xff]
    %v4820 = vlaneseq
    %v4821 = vshrl.u32 %v4820, 7
    %v4822 = vsub.s32 0, %v4821
    %v4823 = vrot.slane %v4818, %v4822
    %v4824 = vlaneseq
    %v4825 = vshrl.u32 %v4824, 7
    %v4826 = vsub.s32 1, %v4825
    %v4827 = vrot.slane %v4818, %v4826
    %v4828 = vlaneseq
    %v4829 = vshrl.u32 %v4828, 7
    %v4830 = vsub.s32 2, %v4829
    %v4831 = vrot.slane %v4818, %v4830
    %v4832 = vlaneseq
    %v4833 = vshrl.u32 %v4832, 7
    %v4834 = vsub.s32 3, %v4833
    %v4835 = vrot.slane %v4818, %v4834
    %v4836 = vlaneseq
    %v4837 = vshrl.u32 %v4836, 7
    %v4838 = vsub.s32 4, %v4837
    %v4839 = vrot.slane %v4818, %v4838
    %v4840 = vlaneseq
    %v4841 = vshrl.u32 %v4840, 7
    %v4842 = vsub.s32 5, %v4841
    %v4843 = vrot.slane %v4818, %v4842
    %v4844 = vlaneseq
    %v4845 = vshrl.u32 %v4844, 7
    %v4846 = vsub.s32 6, %v4845
    %v4847 = vrot.slane %v4818, %v4846
    %v4848 = vlaneseq
    %v4849 = vshrl.u32 %v4848, 7
    %v4850 = vsub.s32 7, %v4849
    %v4851 = vrot.slane %v4818, %v4850
    %4860 = vmatprep.subr.mxu0 %v4563
    %4861 = vmatpush1.msra.mxu0 %v4562
    %4862 = vmatprep.subr.mxu0 %v4571
    %4863 = vmatpush1.msra.mxu0 %v4570
    %4864 = vmatprep.subr.mxu0 %v4579
    %4865 = vmatpush1.msra.mxu0 %v4578
    %4866 = vmatprep.subr.mxu0 %v4587
    %4867 = vmatpush1.msra.mxu0 %v4586
    %4868 = vmatprep.subr.mxu0 %v4595
    %4869 = vmatpush1.msra.mxu0 %v4594
    %4870 = vmatprep.subr.mxu0 %v4603
    %4871 = vmatpush1.msra.mxu0 %v4602
    %4872 = vmatprep.subr.mxu0 %v4611
    %4873 = vmatpush1.msra.mxu0 %v4610
    %4874 = vmatprep.subr.mxu0 %v4619
    %4875 = vmatpush1.msra.mxu0 %v4618
    %4876 = vmatprep.subr.mxu0 %v4627
    %4877 = vmatpush1.msra.mxu0 %v4626
    %4878 = vmatprep.subr.mxu0 %v4635
    %4879 = vmatpush1.msra.mxu0 %v4634
    %4880 = vmatprep.subr.mxu0 %v4643
    %4881 = vmatpush1.msra.mxu0 %v4642
    %4882 = vmatprep.subr.mxu0 %v4651
    %4883 = vmatpush1.msra.mxu0 %v4650
    %4884 = vmatprep.subr.mxu0 %v4659
    %4885 = vmatpush1.msra.mxu0 %v4658
    %4886 = vmatprep.subr.mxu0 %v4667
    %4887 = vmatpush1.msra.mxu0 %v4666
    %4888 = vmatprep.subr.mxu0 %v4675
    %4889 = vmatpush1.msra.mxu0 %v4674
    %4890 = vmatprep.subr.mxu0 %v4683
    %4891 = vmatpush1.msra.mxu0 %v4682
    %4892 = vmatprep.subr.mxu0 %v4691
    %4893 = vmatpush1.msra.mxu0 %v4690
    %4894 = vmatprep.subr.mxu0 %v4699
    %4895 = vmatpush1.msra.mxu0 %v4698
    %4896 = vmatprep.subr.mxu0 %v4707
    %4897 = vmatpush1.msra.mxu0 %v4706
    %4898 = vmatprep.subr.mxu0 %v4715
    %4899 = vmatpush1.msra.mxu0 %v4714
    %4900 = vmatprep.subr.mxu0 %v4723
    %4901 = vmatpush1.msra.mxu0 %v4722
    %4902 = vmatprep.subr.mxu0 %v4731
    %4903 = vmatpush1.msra.mxu0 %v4730
    %4904 = vmatprep.subr.mxu0 %v4739
    %4905 = vmatpush1.msra.mxu0 %v4738
    %4906 = vmatprep.subr.mxu0 %v4747
    %4907 = vmatpush1.msra.mxu0 %v4746
    %4908 = vmatprep.subr.mxu0 %v4755
    %4909 = vmatpush1.msra.mxu0 %v4754
    %4910 = vmatprep.subr.mxu0 %v4763
    %4911 = vmatpush1.msra.mxu0 %v4762
    %4912 = vmatprep.subr.mxu0 %v4771
    %4913 = vmatpush1.msra.mxu0 %v4770
    %4914 = vmatprep.subr.mxu0 %v4779
    %4915 = vmatpush1.msra.mxu0 %v4778
    %4916 = vmatprep.subr.mxu0 %v4787
    %4917 = vmatpush1.msra.mxu0 %v4786
    %4918 = vmatprep.subr.mxu0 %v4795
    %4919 = vmatpush1.msra.mxu0 %v4794
    %4920 = vmatprep.subr.mxu0 %v4803
    %4921 = vmatpush1.msra.mxu0 %v4802
    %4922 = vmatprep.subr.mxu0 %v4811
    %4923 = vmatpush1.msra.mxu0 %v4810
    %4924 = vmatprep.mubr.f32.mxu0 %v4559
    %4925 = vmatmul.mubr.f32.gmra.mrb[0].mxu0 %v4558
    %v4926 = vpop.f32.mrb[0].mxu0
    %v4927 = vadd.f32 %v4823, %v4926
    %v4928 = vpop.f32.mrb[0].mxu0
    %v4929 = vadd.f32 %v4827, %v4928
    %4930 = vmatprep.mubr.f32.mxu0 %v4561
    %4931 = vmatmul.mubr.f32.gmra.mrb[0].mxu0 %v4560
    %v4932 = vpop.f32.mrb[0].mxu0
    %v4933 = vadd.f32 %v4823, %v4932
    %v4934 = vpop.f32.mrb[0].mxu0
    %v4935 = vadd.f32 %v4827, %v4934
    %4936 = vdwg.mxu0
    %4937 = vmatprep.subr.mxu0 %v4565
    %4938 = vmatpush1.msra.mxu0 %v4564
    %4939 = vmatprep.subr.mxu0 %v4573
    %4940 = vmatpush1.msra.mxu0 %v4572
    %4941 = vmatprep.subr.mxu0 %v4581
    %4942 = vmatpush1.msra.mxu0 %v4580
    %4943 = vmatprep.subr.mxu0 %v4589
    %4944 = vmatpush1.msra.mxu0 %v4588
    %4945 = vmatprep.subr.mxu0 %v4597
    %4946 = vmatpush1.msra.mxu0 %v4596
    %4947 = vmatprep.subr.mxu0 %v4605
    %4948 = vmatpush1.msra.mxu0 %v4604
    %4949 = vmatprep.subr.mxu0 %v4613
    %4950 = vmatpush1.msra.mxu0 %v4612
    %4951 = vmatprep.subr.mxu0 %v4621
    %4952 = vmatpush1.msra.mxu0 %v4620
    %4953 = vmatprep.subr.mxu0 %v4629
    %4954 = vmatpush1.msra.mxu0 %v4628
    %4955 = vmatprep.subr.mxu0 %v4637
    %4956 = vmatpush1.msra.mxu0 %v4636
    %4957 = vmatprep.subr.mxu0 %v4645
    %4958 = vmatpush1.msra.mxu0 %v4644
    %4959 = vmatprep.subr.mxu0 %v4653
    %4960 = vmatpush1.msra.mxu0 %v4652
    %4961 = vmatprep.subr.mxu0 %v4661
    %4962 = vmatpush1.msra.mxu0 %v4660
    %4963 = vmatprep.subr.mxu0 %v4669
    %4964 = vmatpush1.msra.mxu0 %v4668
    %4965 = vmatprep.subr.mxu0 %v4677
    %4966 = vmatpush1.msra.mxu0 %v4676
    %4967 = vmatprep.subr.mxu0 %v4685
    %4968 = vmatpush1.msra.mxu0 %v4684
    %4969 = vmatprep.subr.mxu0 %v4693
    %4970 = vmatpush1.msra.mxu0 %v4692
    %4971 = vmatprep.subr.mxu0 %v4701
    %4972 = vmatpush1.msra.mxu0 %v4700
    %4973 = vmatprep.subr.mxu0 %v4709
    %4974 = vmatpush1.msra.mxu0 %v4708
    %4975 = vmatprep.subr.mxu0 %v4717
    %4976 = vmatpush1.msra.mxu0 %v4716
    %4977 = vmatprep.subr.mxu0 %v4725
    %4978 = vmatpush1.msra.mxu0 %v4724
    %4979 = vmatprep.subr.mxu0 %v4733
    %4980 = vmatpush1.msra.mxu0 %v4732
    %4981 = vmatprep.subr.mxu0 %v4741
    %4982 = vmatpush1.msra.mxu0 %v4740
    %4983 = vmatprep.subr.mxu0 %v4749
    %4984 = vmatpush1.msra.mxu0 %v4748
    %4985 = vmatprep.subr.mxu0 %v4757
    %4986 = vmatpush1.msra.mxu0 %v4756
    %4987 = vmatprep.subr.mxu0 %v4765
    %4988 = vmatpush1.msra.mxu0 %v4764
    %4989 = vmatprep.subr.mxu0 %v4773
    %4990 = vmatpush1.msra.mxu0 %v4772
    %4991 = vmatprep.subr.mxu0 %v4781
    %4992 = vmatpush1.msra.mxu0 %v4780
    %4993 = vmatprep.subr.mxu0 %v4789
    %4994 = vmatpush1.msra.mxu0 %v4788
    %4995 = vmatprep.subr.mxu0 %v4797
    %4996 = vmatpush1.msra.mxu0 %v4796
    %4997 = vmatprep.subr.mxu0 %v4805
    %4998 = vmatpush1.msra.mxu0 %v4804
    %4999 = vmatprep.subr.mxu0 %v4813
    %5000 = vmatpush1.msra.mxu0 %v4812
    %5001 = vmatprep.mubr.f32.mxu0 %v4559
    %5002 = vmatmul.mubr.f32.gmra.mrb[0].mxu0 %v4558
    %v5003 = vpop.f32.mrb[0].mxu0
    %v5004 = vadd.f32 %v4831, %v5003
    %v5005 = vpop.f32.mrb[0].mxu0
    %v5006 = vadd.f32 %v4835, %v5005
    %5007 = vmatprep.mubr.f32.mxu0 %v4561
    %5008 = vmatmul.mubr.f32.gmra.mrb[0].mxu0 %v4560
    %v5009 = vpop.f32.mrb[0].mxu0
    %v5010 = vadd.f32 %v4831, %v5009
    %v5011 = vpop.f32.mrb[0].mxu0
    %v5012 = vadd.f32 %v4835, %v5011
    %5013 = vdwg.mxu0
    %5014 = vmatprep.subr.mxu0 %v4567
    %5015 = vmatpush1.msra.mxu0 %v4566
    %5016 = vmatprep.subr.mxu0 %v4575
    %5017 = vmatpush1.msra.mxu0 %v4574
    %5018 = vmatprep.subr.mxu0 %v4583
    %5019 = vmatpush1.msra.mxu0 %v4582
    %5020 = vmatprep.subr.mxu0 %v4591
    %5021 = vmatpush1.msra.mxu0 %v4590
    %5022 = vmatprep.subr.mxu0 %v4599
    %5023 = vmatpush1.msra.mxu0 %v4598
    %5024 = vmatprep.subr.mxu0 %v4607
    %5025 = vmatpush1.msra.mxu0 %v4606
    %5026 = vmatprep.subr.mxu0 %v4615
    %5027 = vmatpush1.msra.mxu0 %v4614
    %5028 = vmatprep.subr.mxu0 %v4623
    %5029 = vmatpush1.msra.mxu0 %v4622
    %5030 = vmatprep.subr.mxu0 %v4631
    %5031 = vmatpush1.msra.mxu0 %v4630
    %5032 = vmatprep.subr.mxu0 %v4639
    %5033 = vmatpush1.msra.mxu0 %v4638
    %5034 = vmatprep.subr.mxu0 %v4647
    %5035 = vmatpush1.msra.mxu0 %v4646
    %5036 = vmatprep.subr.mxu0 %v4655
    %5037 = vmatpush1.msra.mxu0 %v4654
    %5038 = vmatprep.subr.mxu0 %v4663
    %5039 = vmatpush1.msra.mxu0 %v4662
    %5040 = vmatprep.subr.mxu0 %v4671
    %5041 = vmatpush1.msra.mxu0 %v4670
    %5042 = vmatprep.subr.mxu0 %v4679
    %5043 = vmatpush1.msra.mxu0 %v4678
    %5044 = vmatprep.subr.mxu0 %v4687
    %5045 = vmatpush1.msra.mxu0 %v4686
    %5046 = vmatprep.subr.mxu0 %v4695
    %5047 = vmatpush1.msra.mxu0 %v4694
    %5048 = vmatprep.subr.mxu0 %v4703
    %5049 = vmatpush1.msra.mxu0 %v4702
    %5050 = vmatprep.subr.mxu0 %v4711
    %5051 = vmatpush1.msra.mxu0 %v4710
    %5052 = vmatprep.subr.mxu0 %v4719
    %5053 = vmatpush1.msra.mxu0 %v4718
    %5054 = vmatprep.subr.mxu0 %v4727
    %5055 = vmatpush1.msra.mxu0 %v4726
    %5056 = vmatprep.subr.mxu0 %v4735
    %5057 = vmatpush1.msra.mxu0 %v4734
    %5058 = vmatprep.subr.mxu0 %v4743
    %5059 = vmatpush1.msra.mxu0 %v4742
    %5060 = vmatprep.subr.mxu0 %v4751
    %5061 = vmatpush1.msra.mxu0 %v4750
    %5062 = vmatprep.subr.mxu0 %v4759
    %5063 = vmatpush1.msra.mxu0 %v4758
    %5064 = vmatprep.subr.mxu0 %v4767
    %5065 = vmatpush1.msra.mxu0 %v4766
    %5066 = vmatprep.subr.mxu0 %v4775
    %5067 = vmatpush1.msra.mxu0 %v4774
    %5068 = vmatprep.subr.mxu0 %v4783
    %5069 = vmatpush1.msra.mxu0 %v4782
    %5070 = vmatprep.subr.mxu0 %v4791
    %5071 = vmatpush1.msra.mxu0 %v4790
    %5072 = vmatprep.subr.mxu0 %v4799
    %5073 = vmatpush1.msra.mxu0 %v4798
    %5074 = vmatprep.subr.mxu0 %v4807
    %5075 = vmatpush1.msra.mxu0 %v4806
    %5076 = vmatprep.subr.mxu0 %v4815
    %5077 = vmatpush1.msra.mxu0 %v4814
    %5078 = vmatprep.mubr.f32.mxu0 %v4559
    %5079 = vmatmul.mubr.f32.gmra.mrb[0].mxu0 %v4558
    %v5080 = vpop.f32.mrb[0].mxu0
    %v5081 = vadd.f32 %v4839, %v5080
    %v5082 = vpop.f32.mrb[0].mxu0
    %v5083 = vadd.f32 %v4843, %v5082
    %5084 = vmatprep.mubr.f32.mxu0 %v4561
    %5085 = vmatmul.mubr.f32.gmra.mrb[0].mxu0 %v4560
    %v5086 = vpop.f32.mrb[0].mxu0
    %v5087 = vadd.f32 %v4839, %v5086
    %v5088 = vpop.f32.mrb[0].mxu0
    %v5089 = vadd.f32 %v4843, %v5088
    %5090 = vdwg.mxu0
    %5091 = vmatprep.subr.mxu0 %v4569
    %5092 = vmatpush1.msra.mxu0 %v4568
    %5093 = vmatprep.subr.mxu0 %v4577
    %5094 = vmatpush1.msra.mxu0 %v4576
    %5095 = vmatprep.subr.mxu0 %v4585
    %5096 = vmatpush1.msra.mxu0 %v4584
    %5097 = vmatprep.subr.mxu0 %v4593
    %5098 = vmatpush1.msra.mxu0 %v4592
    %5099 = vmatprep.subr.mxu0 %v4601
    %5100 = vmatpush1.msra.mxu0 %v4600
    %5101 = vmatprep.subr.mxu0 %v4609
    %5102 = vmatpush1.msra.mxu0 %v4608
    %5103 = vmatprep.subr.mxu0 %v4617
    %5104 = vmatpush1.msra.mxu0 %v4616
    %5105 = vmatprep.subr.mxu0 %v4625
    %5106 = vmatpush1.msra.mxu0 %v4624
    %5107 = vmatprep.subr.mxu0 %v4633
    %5108 = vmatpush1.msra.mxu0 %v4632
    %5109 = vmatprep.subr.mxu0 %v4641
    %5110 = vmatpush1.msra.mxu0 %v4640
    %5111 = vmatprep.subr.mxu0 %v4649
    %5112 = vmatpush1.msra.mxu0 %v4648
    %5113 = vmatprep.subr.mxu0 %v4657
    %5114 = vmatpush1.msra.mxu0 %v4656
    %5115 = vmatprep.subr.mxu0 %v4665
    %5116 = vmatpush1.msra.mxu0 %v4664
    %5117 = vmatprep.subr.mxu0 %v4673
    %5118 = vmatpush1.msra.mxu0 %v4672
    %5119 = vmatprep.subr.mxu0 %v4681
    %5120 = vmatpush1.msra.mxu0 %v4680
    %5121 = vmatprep.subr.mxu0 %v4689
    %5122 = vmatpush1.msra.mxu0 %v4688
    %5123 = vmatprep.subr.mxu0 %v4697
    %5124 = vmatpush1.msra.mxu0 %v4696
    %5125 = vmatprep.subr.mxu0 %v4705
    %5126 = vmatpush1.msra.mxu0 %v4704
    %5127 = vmatprep.subr.mxu0 %v4713
    %5128 = vmatpush1.msra.mxu0 %v4712
    %5129 = vmatprep.subr.mxu0 %v4721
    %5130 = vmatpush1.msra.mxu0 %v4720
    %5131 = vmatprep.subr.mxu0 %v4729
    %5132 = vmatpush1.msra.mxu0 %v4728
    %5133 = vmatprep.subr.mxu0 %v4737
    %5134 = vmatpush1.msra.mxu0 %v4736
    %5135 = vmatprep.subr.mxu0 %v4745
    %5136 = vmatpush1.msra.mxu0 %v4744
    %5137 = vmatprep.subr.mxu0 %v4753
    %5138 = vmatpush1.msra.mxu0 %v4752
    %5139 = vmatprep.subr.mxu0 %v4761
    %5140 = vmatpush1.msra.mxu0 %v4760
    %5141 = vmatprep.subr.mxu0 %v4769
    %5142 = vmatpush1.msra.mxu0 %v4768
    %5143 = vmatprep.subr.mxu0 %v4777
    %5144 = vmatpush1.msra.mxu0 %v4776
    %5145 = vmatprep.subr.mxu0 %v4785
    %5146 = vmatpush1.msra.mxu0 %v4784
    %5147 = vmatprep.subr.mxu0 %v4793
    %5148 = vmatpush1.msra.mxu0 %v4792
    %5149 = vmatprep.subr.mxu0 %v4801
    %5150 = vmatpush1.msra.mxu0 %v4800
    %5151 = vmatprep.subr.mxu0 %v4809
    %5152 = vmatpush1.msra.mxu0 %v4808
    %5153 = vmatprep.subr.mxu0 %v4817
    %5154 = vmatpush1.msra.mxu0 %v4816
    %5155 = vmatprep.mubr.f32.mxu0 %v4559
    %5156 = vmatmul.mubr.f32.gmra.mrb[0].mxu0 %v4558
    %v5157 = vpop.f32.mrb[0].mxu0
    %v5158 = vadd.f32 %v4847, %v5157
    %v5159 = vpop.f32.mrb[0].mxu0
    %v5160 = vadd.f32 %v4851, %v5159
    %5161 = vmatprep.mubr.f32.mxu0 %v4561
    %5162 = vmatmul.mubr.f32.gmra.mrb[0].mxu0 %v4560
    %v5163 = vpop.f32.mrb[0].mxu0
    %v5164 = vadd.f32 %v4847, %v5163
    %v5165 = vpop.f32.mrb[0].mxu0
    %v5166 = vadd.f32 %v4851, %v5165
    %5167 = vdwg.mxu0
    %5168 = vst [vmem:[#allocation2] sm:$0xff] %v4927
    %5169 = vst [vmem:[#allocation2 + $0x8] sm:$0xff] %v4929
    %5170 = vst [vmem:[#allocation2 + $0x10] sm:$0xff] %v5004
    %5171 = vst [vmem:[#allocation2 + $0x18] sm:$0xff] %v5006
    %5172 = vst [vmem:[#allocation2 + $0x20] sm:$0xff] %v5081
    %5173 = vst [vmem:[#allocation2 + $0x28] sm:$0xff] %v5083
    %5174 = vst [vmem:[#allocation2 + $0x30] sm:$0xff] %v5158
    %5175 = vst [vmem:[#allocation2 + $0x38] sm:$0xff] %v5160
    %5176 = vst [vmem:[#allocation2 + $0x40] sm:$0xff] %v4933
    %5177 = vst [vmem:[#allocation2 + $0x48] sm:$0xff] %v4935
    %5178 = vst [vmem:[#allocation2 + $0x50] sm:$0xff] %v5010
    %5179 = vst [vmem:[#allocation2 + $0x58] sm:$0xff] %v5012
    %5180 = vst [vmem:[#allocation2 + $0x60] sm:$0xff] %v5087
    %5181 = vst [vmem:[#allocation2 + $0x68] sm:$0xff] %v5089
    %5182 = vst [vmem:[#allocation2 + $0x70] sm:$0xff] %v5164
    %5183 = vst [vmem:[#allocation2 + $0x78] sm:$0xff] %v5166
    %v5184 = vld [vmem:[#allocation12] sm:$0xff]
    %v5185 = vld [vmem:[#allocation12 + $0x8] sm:$0xff]
    %v5186 = vld [vmem:[#allocation12 + $0x10] sm:$0xff]
    %v5187 = vld [vmem:[#allocation12 + $0x18] sm:$0xff]
    %v5188 = vld [vmem:[#allocation12 + $0x20] sm:$0xff]
    %v5189 = vld [vmem:[#allocation12 + $0x28] sm:$0xff]
    %v5190 = vld [vmem:[#allocation12 + $0x30] sm:$0xff]
    %v5191 = vld [vmem:[#allocation12 + $0x38] sm:$0xff]
    %v5192 = vld [vmem:[#allocation12 + $0x40] sm:$0xff]
    %v5193 = vld [vmem:[#allocation12 + $0x48] sm:$0xff]
    %v5194 = vld [vmem:[#allocation12 + $0x50] sm:$0xff]
    %v5195 = vld [vmem:[#allocation12 + $0x58] sm:$0xff]
    %v5196 = vld [vmem:[#allocation12 + $0x60] sm:$0xff]
    %v5197 = vld [vmem:[#allocation12 + $0x68] sm:$0xff]
    %v5198 = vld [vmem:[#allocation12 + $0x70] sm:$0xff]
    %v5199 = vld [vmem:[#allocation12 + $0x78] sm:$0xff]
    %v5200 = vld [vmem:[#allocation12 + $0x80] sm:$0xff]
    %v5201 = vld [vmem:[#allocation12 + $0x88] sm:$0xff]
    %v5202 = vld [vmem:[#allocation12 + $0x90] sm:$0xff]
    %v5203 = vld [vmem:[#allocation12 + $0x98] sm:$0xff]
    %v5204 = vld [vmem:[#allocation12 + $0xa0] sm:$0xff]
    %v5205 = vld [vmem:[#allocation12 + $0xa8] sm:$0xff]
    %v5206 = vld [vmem:[#allocation12 + $0xb0] sm:$0xff]
    %v5207 = vld [vmem:[#allocation12 + $0xb8] sm:$0xff]
    %v5208 = vld [vmem:[#allocation12 + $0xc0] sm:$0xff]
    %v5209 = vld [vmem:[#allocation12 + $0xc8] sm:$0xff]
    %v5210 = vld [vmem:[#allocation12 + $0xd0] sm:$0xff]
    %v5211 = vld [vmem:[#allocation12 + $0xd8] sm:$0xff]
    %v5212 = vld [vmem:[#allocation12 + $0xe0] sm:$0xff]
    %v5213 = vld [vmem:[#allocation12 + $0xe8] sm:$0xff]
    %v5214 = vld [vmem:[#allocation12 + $0xf0] sm:$0xff]
    %v5215 = vld [vmem:[#allocation12 + $0xf8] sm:$0xff]
    %v5216 = vld [vmem:[#allocation12 + $0x100] sm:$0xff]
    %v5217 = vld [vmem:[#allocation12 + $0x108] sm:$0xff]
    %v5218 = vld [vmem:[#allocation12 + $0x110] sm:$0xff]
    %v5219 = vld [vmem:[#allocation12 + $0x118] sm:$0xff]
    %v5220 = vld [vmem:[#allocation12 + $0x120] sm:$0xff]
    %v5221 = vld [vmem:[#allocation12 + $0x128] sm:$0xff]
    %v5222 = vld [vmem:[#allocation12 + $0x130] sm:$0xff]
    %v5223 = vld [vmem:[#allocation12 + $0x138] sm:$0xff]
    %v5224 = vld [vmem:[#allocation12 + $0x140] sm:$0xff]
    %v5225 = vld [vmem:[#allocation12 + $0x148] sm:$0xff]
    %v5226 = vld [vmem:[#allocation12 + $0x150] sm:$0xff]
    %v5227 = vld [vmem:[#allocation12 + $0x158] sm:$0xff]
    %v5228 = vld [vmem:[#allocation12 + $0x160] sm:$0xff]
    %v5229 = vld [vmem:[#allocation12 + $0x168] sm:$0xff]
    %v5230 = vld [vmem:[#allocation12 + $0x170] sm:$0xff]
    %v5231 = vld [vmem:[#allocation12 + $0x178] sm:$0xff]
    %v5232 = vld [vmem:[#allocation12 + $0x180] sm:$0xff]
    %v5233 = vld [vmem:[#allocation12 + $0x188] sm:$0xff]
    %v5234 = vld [vmem:[#allocation12 + $0x190] sm:$0xff]
    %v5235 = vld [vmem:[#allocation12 + $0x198] sm:$0xff]
    %v5236 = vld [vmem:[#allocation12 + $0x1a0] sm:$0xff]
    %v5237 = vld [vmem:[#allocation12 + $0x1a8] sm:$0xff]
    %v5238 = vld [vmem:[#allocation12 + $0x1b0] sm:$0xff]
    %v5239 = vld [vmem:[#allocation12 + $0x1b8] sm:$0xff]
    %v5240 = vld [vmem:[#allocation12 + $0x1c0] sm:$0xff]
    %v5241 = vld [vmem:[#allocation12 + $0x1c8] sm:$0xff]
    %v5242 = vld [vmem:[#allocation12 + $0x1d0] sm:$0xff]
    %v5243 = vld [vmem:[#allocation12 + $0x1d8] sm:$0xff]
    %v5244 = vld [vmem:[#allocation12 + $0x1e0] sm:$0xff]
    %v5245 = vld [vmem:[#allocation12 + $0x1e8] sm:$0xff]
    %v5246 = vld [vmem:[#allocation12 + $0x1f0] sm:$0xff]
    %v5247 = vld [vmem:[#allocation12 + $0x1f8] sm:$0xff]
    %v5248 = vld [vmem:[#allocation12 + $0x200] sm:$0xff]
    %v5249 = vld [vmem:[#allocation12 + $0x208] sm:$0xff]
    %v5250 = vld [vmem:[#allocation12 + $0x210] sm:$0xff]
    %v5251 = vld [vmem:[#allocation12 + $0x218] sm:$0xff]
    %v5252 = vld [vmem:[#allocation12 + $0x220] sm:$0xff]
    %v5253 = vld [vmem:[#allocation12 + $0x228] sm:$0xff]
    %v5254 = vld [vmem:[#allocation12 + $0x230] sm:$0xff]
    %v5255 = vld [vmem:[#allocation12 + $0x238] sm:$0xff]
    %v5256 = vld [vmem:[#allocation12 + $0x240] sm:$0xff]
    %v5257 = vld [vmem:[#allocation12 + $0x248] sm:$0xff]
    %v5258 = vld [vmem:[#allocation12 + $0x250] sm:$0xff]
    %v5259 = vld [vmem:[#allocation12 + $0x258] sm:$0xff]
    %v5260 = vld [vmem:[#allocation12 + $0x260] sm:$0xff]
    %v5261 = vld [vmem:[#allocation12 + $0x268] sm:$0xff]
    %v5262 = vld [vmem:[#allocation12 + $0x270] sm:$0xff]
    %v5263 = vld [vmem:[#allocation12 + $0x278] sm:$0xff]
    %v5264 = vld [vmem:[#allocation12 + $0x280] sm:$0xff]
    %v5265 = vld [vmem:[#allocation12 + $0x288] sm:$0xff]
    %v5266 = vld [vmem:[#allocation12 + $0x290] sm:$0xff]
    %v5267 = vld [vmem:[#allocation12 + $0x298] sm:$0xff]
    %v5268 = vld [vmem:[#allocation12 + $0x2a0] sm:$0xff]
    %v5269 = vld [vmem:[#allocation12 + $0x2a8] sm:$0xff]
    %v5270 = vld [vmem:[#allocation12 + $0x2b0] sm:$0xff]
    %v5271 = vld [vmem:[#allocation12 + $0x2b8] sm:$0xff]
    %v5272 = vld [vmem:[#allocation12 + $0x2c0] sm:$0xff]
    %v5273 = vld [vmem:[#allocation12 + $0x2c8] sm:$0xff]
    %v5274 = vld [vmem:[#allocation12 + $0x2d0] sm:$0xff]
    %v5275 = vld [vmem:[#allocation12 + $0x2d8] sm:$0xff]
    %v5276 = vld [vmem:[#allocation12 + $0x2e0] sm:$0xff]
    %v5277 = vld [vmem:[#allocation12 + $0x2e8] sm:$0xff]
    %v5278 = vld [vmem:[#allocation12 + $0x2f0] sm:$0xff]
    %v5279 = vld [vmem:[#allocation12 + $0x2f8] sm:$0xff]
    %v5280 = vld [vmem:[#allocation12 + $0x300] sm:$0xff]
    %v5281 = vld [vmem:[#allocation12 + $0x308] sm:$0xff]
    %v5282 = vld [vmem:[#allocation12 + $0x310] sm:$0xff]
    %v5283 = vld [vmem:[#allocation12 + $0x318] sm:$0xff]
    %v5284 = vld [vmem:[#allocation12 + $0x320] sm:$0xff]
    %v5285 = vld [vmem:[#allocation12 + $0x328] sm:$0xff]
    %v5286 = vld [vmem:[#allocation12 + $0x330] sm:$0xff]
    %v5287 = vld [vmem:[#allocation12 + $0x338] sm:$0xff]
    %v5288 = vld [vmem:[#allocation12 + $0x340] sm:$0xff]
    %v5289 = vld [vmem:[#allocation12 + $0x348] sm:$0xff]
    %v5290 = vld [vmem:[#allocation12 + $0x350] sm:$0xff]
    %v5291 = vld [vmem:[#allocation12 + $0x358] sm:$0xff]
    %v5292 = vld [vmem:[#allocation12 + $0x360] sm:$0xff]
    %v5293 = vld [vmem:[#allocation12 + $0x368] sm:$0xff]
    %v5294 = vld [vmem:[#allocation12 + $0x370] sm:$0xff]
    %v5295 = vld [vmem:[#allocation12 + $0x378] sm:$0xff]
    %v5296 = vld [vmem:[#allocation12 + $0x380] sm:$0xff]
    %v5297 = vld [vmem:[#allocation12 + $0x388] sm:$0xff]
    %v5298 = vld [vmem:[#allocation12 + $0x390] sm:$0xff]
    %v5299 = vld [vmem:[#allocation12 + $0x398] sm:$0xff]
    %v5300 = vld [vmem:[#allocation12 + $0x3a0] sm:$0xff]
    %v5301 = vld [vmem:[#allocation12 + $0x3a8] sm:$0xff]
    %v5302 = vld [vmem:[#allocation12 + $0x3b0] sm:$0xff]
    %v5303 = vld [vmem:[#allocation12 + $0x3b8] sm:$0xff]
    %v5304 = vld [vmem:[#allocation12 + $0x3c0] sm:$0xff]
    %v5305 = vld [vmem:[#allocation12 + $0x3c8] sm:$0xff]
    %v5306 = vld [vmem:[#allocation12 + $0x3d0] sm:$0xff]
    %v5307 = vld [vmem:[#allocation12 + $0x3d8] sm:$0xff]
    %v5308 = vld [vmem:[#allocation12 + $0x3e0] sm:$0xff]
    %v5309 = vld [vmem:[#allocation12 + $0x3e8] sm:$0xff]
    %v5310 = vld [vmem:[#allocation12 + $0x3f0] sm:$0xff]
    %v5311 = vld [vmem:[#allocation12 + $0x3f8] sm:$0xff]
    %v5312 = vld [vmem:[#allocation12 + $0x400] sm:$0xff]
    %v5313 = vld [vmem:[#allocation12 + $0x408] sm:$0xff]
    %v5314 = vld [vmem:[#allocation12 + $0x410] sm:$0xff]
    %v5315 = vld [vmem:[#allocation12 + $0x418] sm:$0xff]
    %v5316 = vld [vmem:[#allocation12 + $0x420] sm:$0xff]
    %v5317 = vld [vmem:[#allocation12 + $0x428] sm:$0xff]
    %v5318 = vld [vmem:[#allocation12 + $0x430] sm:$0xff]
    %v5319 = vld [vmem:[#allocation12 + $0x438] sm:$0xff]
    %v5320 = vld [vmem:[#allocation12 + $0x440] sm:$0xff]
    %v5321 = vld [vmem:[#allocation12 + $0x448] sm:$0xff]
    %v5322 = vld [vmem:[#allocation12 + $0x450] sm:$0xff]
    %v5323 = vld [vmem:[#allocation12 + $0x458] sm:$0xff]
    %v5324 = vld [vmem:[#allocation12 + $0x460] sm:$0xff]
    %v5325 = vld [vmem:[#allocation12 + $0x468] sm:$0xff]
    %v5326 = vld [vmem:[#allocation12 + $0x470] sm:$0xff]
    %v5327 = vld [vmem:[#allocation12 + $0x478] sm:$0xff]
    %v5328 = vld [vmem:[#allocation12 + $0x480] sm:$0xff]
    %v5329 = vld [vmem:[#allocation12 + $0x488] sm:$0xff]
    %v5330 = vld [vmem:[#allocation12 + $0x490] sm:$0xff]
    %v5331 = vld [vmem:[#allocation12 + $0x498] sm:$0xff]
    %v5332 = vld [vmem:[#allocation12 + $0x4a0] sm:$0xff]
    %v5333 = vld [vmem:[#allocation12 + $0x4a8] sm:$0xff]
    %v5334 = vld [vmem:[#allocation12 + $0x4b0] sm:$0xff]
    %v5335 = vld [vmem:[#allocation12 + $0x4b8] sm:$0xff]
    %v5336 = vld [vmem:[#allocation12 + $0x4c0] sm:$0xff]
    %v5337 = vld [vmem:[#allocation12 + $0x4c8] sm:$0xff]
    %v5338 = vld [vmem:[#allocation12 + $0x4d0] sm:$0xff]
    %v5339 = vld [vmem:[#allocation12 + $0x4d8] sm:$0xff]
    %v5340 = vld [vmem:[#allocation12 + $0x4e0] sm:$0xff]
    %v5341 = vld [vmem:[#allocation12 + $0x4e8] sm:$0xff]
    %v5342 = vld [vmem:[#allocation12 + $0x4f0] sm:$0xff]
    %v5343 = vld [vmem:[#allocation12 + $0x4f8] sm:$0xff]
    %v5344 = vld [vmem:[#allocation12 + $0x500] sm:$0xff]
    %v5345 = vld [vmem:[#allocation12 + $0x508] sm:$0xff]
    %v5346 = vld [vmem:[#allocation12 + $0x510] sm:$0xff]
    %v5347 = vld [vmem:[#allocation12 + $0x518] sm:$0xff]
    %v5348 = vld [vmem:[#allocation12 + $0x520] sm:$0xff]
    %v5349 = vld [vmem:[#allocation12 + $0x528] sm:$0xff]
    %v5350 = vld [vmem:[#allocation12 + $0x530] sm:$0xff]
    %v5351 = vld [vmem:[#allocation12 + $0x538] sm:$0xff]
    %v5352 = vld [vmem:[#allocation12 + $0x540] sm:$0xff]
    %v5353 = vld [vmem:[#allocation12 + $0x548] sm:$0xff]
    %v5354 = vld [vmem:[#allocation12 + $0x550] sm:$0xff]
    %v5355 = vld [vmem:[#allocation12 + $0x558] sm:$0xff]
    %v5356 = vld [vmem:[#allocation12 + $0x560] sm:$0xff]
    %v5357 = vld [vmem:[#allocation12 + $0x568] sm:$0xff]
    %v5358 = vld [vmem:[#allocation12 + $0x570] sm:$0xff]
    %v5359 = vld [vmem:[#allocation12 + $0x578] sm:$0xff]
    %v5360 = vld [vmem:[#allocation12 + $0x580] sm:$0xff]
    %v5361 = vld [vmem:[#allocation12 + $0x588] sm:$0xff]
    %v5362 = vld [vmem:[#allocation12 + $0x590] sm:$0xff]
    %v5363 = vld [vmem:[#allocation12 + $0x598] sm:$0xff]
    %v5364 = vld [vmem:[#allocation12 + $0x5a0] sm:$0xff]
    %v5365 = vld [vmem:[#allocation12 + $0x5a8] sm:$0xff]
    %v5366 = vld [vmem:[#allocation12 + $0x5b0] sm:$0xff]
    %v5367 = vld [vmem:[#allocation12 + $0x5b8] sm:$0xff]
    %v5368 = vld [vmem:[#allocation12 + $0x5c0] sm:$0xff]
    %v5369 = vld [vmem:[#allocation12 + $0x5c8] sm:$0xff]
    %v5370 = vld [vmem:[#allocation12 + $0x5d0] sm:$0xff]
    %v5371 = vld [vmem:[#allocation12 + $0x5d8] sm:$0xff]
    %v5372 = vld [vmem:[#allocation12 + $0x5e0] sm:$0xff]
    %v5373 = vld [vmem:[#allocation12 + $0x5e8] sm:$0xff]
    %v5374 = vld [vmem:[#allocation12 + $0x5f0] sm:$0xff]
    %v5375 = vld [vmem:[#allocation12 + $0x5f8] sm:$0xff]
    %v5376 = vld [vmem:[#allocation12 + $0x600] sm:$0xff]
    %v5377 = vld [vmem:[#allocation12 + $0x608] sm:$0xff]
    %v5378 = vld [vmem:[#allocation12 + $0x610] sm:$0xff]
    %v5379 = vld [vmem:[#allocation12 + $0x618] sm:$0xff]
    %v5380 = vld [vmem:[#allocation12 + $0x620] sm:$0xff]
    %v5381 = vld [vmem:[#allocation12 + $0x628] sm:$0xff]
    %v5382 = vld [vmem:[#allocation12 + $0x630] sm:$0xff]
    %v5383 = vld [vmem:[#allocation12 + $0x638] sm:$0xff]
    %v5384 = vld [vmem:[#allocation12 + $0x640] sm:$0xff]
    %v5385 = vld [vmem:[#allocation12 + $0x648] sm:$0xff]
    %v5386 = vld [vmem:[#allocation12 + $0x650] sm:$0xff]
    %v5387 = vld [vmem:[#allocation12 + $0x658] sm:$0xff]
    %v5388 = vld [vmem:[#allocation12 + $0x660] sm:$0xff]
    %v5389 = vld [vmem:[#allocation12 + $0x668] sm:$0xff]
    %v5390 = vld [vmem:[#allocation12 + $0x670] sm:$0xff]
    %v5391 = vld [vmem:[#allocation12 + $0x678] sm:$0xff]
    %v5392 = vld [vmem:[#allocation12 + $0x680] sm:$0xff]
    %v5393 = vld [vmem:[#allocation12 + $0x688] sm:$0xff]
    %v5394 = vld [vmem:[#allocation12 + $0x690] sm:$0xff]
    %v5395 = vld [vmem:[#allocation12 + $0x698] sm:$0xff]
    %v5396 = vld [vmem:[#allocation12 + $0x6a0] sm:$0xff]
    %v5397 = vld [vmem:[#allocation12 + $0x6a8] sm:$0xff]
    %v5398 = vld [vmem:[#allocation12 + $0x6b0] sm:$0xff]
    %v5399 = vld [vmem:[#allocation12 + $0x6b8] sm:$0xff]
    %v5400 = vld [vmem:[#allocation12 + $0x6c0] sm:$0xff]
    %v5401 = vld [vmem:[#allocation12 + $0x6c8] sm:$0xff]
    %v5402 = vld [vmem:[#allocation12 + $0x6d0] sm:$0xff]
    %v5403 = vld [vmem:[#allocation12 + $0x6d8] sm:$0xff]
    %v5404 = vld [vmem:[#allocation12 + $0x6e0] sm:$0xff]
    %v5405 = vld [vmem:[#allocation12 + $0x6e8] sm:$0xff]
    %v5406 = vld [vmem:[#allocation12 + $0x6f0] sm:$0xff]
    %v5407 = vld [vmem:[#allocation12 + $0x6f8] sm:$0xff]
    %v5408 = vld [vmem:[#allocation12 + $0x700] sm:$0xff]
    %v5409 = vld [vmem:[#allocation12 + $0x708] sm:$0xff]
    %v5410 = vld [vmem:[#allocation12 + $0x710] sm:$0xff]
    %v5411 = vld [vmem:[#allocation12 + $0x718] sm:$0xff]
    %v5412 = vld [vmem:[#allocation12 + $0x720] sm:$0xff]
    %v5413 = vld [vmem:[#allocation12 + $0x728] sm:$0xff]
    %v5414 = vld [vmem:[#allocation12 + $0x730] sm:$0xff]
    %v5415 = vld [vmem:[#allocation12 + $0x738] sm:$0xff]
    %v5416 = vld [vmem:[#allocation12 + $0x740] sm:$0xff]
    %v5417 = vld [vmem:[#allocation12 + $0x748] sm:$0xff]
    %v5418 = vld [vmem:[#allocation12 + $0x750] sm:$0xff]
    %v5419 = vld [vmem:[#allocation12 + $0x758] sm:$0xff]
    %v5420 = vld [vmem:[#allocation12 + $0x760] sm:$0xff]
    %v5421 = vld [vmem:[#allocation12 + $0x768] sm:$0xff]
    %v5422 = vld [vmem:[#allocation12 + $0x770] sm:$0xff]
    %v5423 = vld [vmem:[#allocation12 + $0x778] sm:$0xff]
    %v5424 = vld [vmem:[#allocation12 + $0x780] sm:$0xff]
    %v5425 = vld [vmem:[#allocation12 + $0x788] sm:$0xff]
    %v5426 = vld [vmem:[#allocation12 + $0x790] sm:$0xff]
    %v5427 = vld [vmem:[#allocation12 + $0x798] sm:$0xff]
    %v5428 = vld [vmem:[#allocation12 + $0x7a0] sm:$0xff]
    %v5429 = vld [vmem:[#allocation12 + $0x7a8] sm:$0xff]
    %v5430 = vld [vmem:[#allocation12 + $0x7b0] sm:$0xff]
    %v5431 = vld [vmem:[#allocation12 + $0x7b8] sm:$0xff]
    %v5432 = vld [vmem:[#allocation12 + $0x7c0] sm:$0xff]
    %v5433 = vld [vmem:[#allocation12 + $0x7c8] sm:$0xff]
    %v5434 = vld [vmem:[#allocation12 + $0x7d0] sm:$0xff]
    %v5435 = vld [vmem:[#allocation12 + $0x7d8] sm:$0xff]
    %v5436 = vld [vmem:[#allocation12 + $0x7e0] sm:$0xff]
    %v5437 = vld [vmem:[#allocation12 + $0x7e8] sm:$0xff]
    %v5438 = vld [vmem:[#allocation12 + $0x7f0] sm:$0xff]
    %v5439 = vld [vmem:[#allocation12 + $0x7f8] sm:$0xff]
    %v5440 = vld [vmem:[#allocation2] ss:$8 sm:$0xf]
    %v5441 = vld [vmem:[%s848] ss:$8 sm:$0xf]
    %v5442 = vld [vmem:[%s850] ss:$8 sm:$0xf]
    %v5443 = vld [vmem:[%s852] ss:$8 sm:$0xf]
    %v5446 = vcombine.low %v5440, %v5441
    %v5448 = vunpack.c.l.s4 1966171168
    %v5449 = vunpack.c.0.s8 %v5448
    %v5450 = vlaneseq
    %v5451 = vshrl.u32 %v5450, 7
    %v5452 = vsub.s32 %v5449, %v5451
    %v5453 = vrot.slane %v5446, %v5452
    %v5454 = vcombine.high %v5453, %v5453
    %v5456 = vunpack.c.l.s4 1966171168
    %v5457 = vunpack.c.0.s8 %v5456
    %v5458 = vlaneseq
    %v5459 = vshrl.u32 %v5458, 7
    %v5460 = vsub.s32 %v5457, %v5459
    %v5461 = vrot.slane %v5453, %v5460
    %v5463 = vunpack.c.l.s4 1966171168
    %v5464 = vunpack.c.0.s8 %v5463
    %v5465 = vlaneseq
    %v5466 = vshrl.u32 %v5465, 7
    %v5467 = vsub.s32 %v5464, %v5466
    %v5468 = vrot.slane %v5454, %v5467
    %v5469 = vcombine.high %v5461, %v5461
    %v5470 = vcombine.high %v5468, %v5468
    %v5477 = vcombine.low %v5442, %v5443
    %v5479 = vunpack.c.l.s4 1966171168
    %v5480 = vunpack.c.0.s8 %v5479
    %v5481 = vlaneseq
    %v5482 = vshrl.u32 %v5481, 7
    %v5483 = vsub.s32 %v5480, %v5482
    %v5484 = vrot.slane %v5477, %v5483
    %v5485 = vcombine.high %v5484, %v5484
    %v5487 = vunpack.c.l.s4 1966171168
    %v5488 = vunpack.c.0.s8 %v5487
    %v5489 = vlaneseq
    %v5490 = vshrl.u32 %v5489, 7
    %v5491 = vsub.s32 %v5488, %v5490
    %v5492 = vrot.slane %v5484, %v5491
    %v5494 = vunpack.c.l.s4 1966171168
    %v5495 = vunpack.c.0.s8 %v5494
    %v5496 = vlaneseq
    %v5497 = vshrl.u32 %v5496, 7
    %v5498 = vsub.s32 %v5495, %v5497
    %v5499 = vrot.slane %v5485, %v5498
    %v5500 = vcombine.high %v5492, %v5492
    %v5501 = vcombine.high %v5499, %v5499
    %5506 = vmatprep.subr.mxu0 %v5185
    %5507 = vmatpush1.msra.mxu0 %v5184
    %5508 = vmatprep.subr.mxu0 %v5193
    %5509 = vmatpush1.msra.mxu0 %v5192
    %5510 = vmatprep.subr.mxu0 %v5201
    %5511 = vmatpush1.msra.mxu0 %v5200
    %5512 = vmatprep.subr.mxu0 %v5209
    %5513 = vmatpush1.msra.mxu0 %v5208
    %5514 = vmatprep.subr.mxu0 %v5217
    %5515 = vmatpush1.msra.mxu0 %v5216
    %5516 = vmatprep.subr.mxu0 %v5225
    %5517 = vmatpush1.msra.mxu0 %v5224
    %5518 = vmatprep.subr.mxu0 %v5233
    %5519 = vmatpush1.msra.mxu0 %v5232
    %5520 = vmatprep.subr.mxu0 %v5241
    %5521 = vmatpush1.msra.mxu0 %v5240
    %5522 = vmatprep.subr.mxu0 %v5249
    %5523 = vmatpush1.msra.mxu0 %v5248
    %5524 = vmatprep.subr.mxu0 %v5257
    %5525 = vmatpush1.msra.mxu0 %v5256
    %5526 = vmatprep.subr.mxu0 %v5265
    %5527 = vmatpush1.msra.mxu0 %v5264
    %5528 = vmatprep.subr.mxu0 %v5273
    %5529 = vmatpush1.msra.mxu0 %v5272
    %5530 = vmatprep.subr.mxu0 %v5281
    %5531 = vmatpush1.msra.mxu0 %v5280
    %5532 = vmatprep.subr.mxu0 %v5289
    %5533 = vmatpush1.msra.mxu0 %v5288
    %5534 = vmatprep.subr.mxu0 %v5297
    %5535 = vmatpush1.msra.mxu0 %v5296
    %5536 = vmatprep.subr.mxu0 %v5305
    %5537 = vmatpush1.msra.mxu0 %v5304
    %5538 = vmatprep.subr.mxu0 %v5313
    %5539 = vmatpush1.msra.mxu0 %v5312
    %5540 = vmatprep.subr.mxu0 %v5321
    %5541 = vmatpush1.msra.mxu0 %v5320
    %5542 = vmatprep.subr.mxu0 %v5329
    %5543 = vmatpush1.msra.mxu0 %v5328
    %5544 = vmatprep.subr.mxu0 %v5337
    %5545 = vmatpush1.msra.mxu0 %v5336
    %5546 = vmatprep.subr.mxu0 %v5345
    %5547 = vmatpush1.msra.mxu0 %v5344
    %5548 = vmatprep.subr.mxu0 %v5353
    %5549 = vmatpush1.msra.mxu0 %v5352
    %5550 = vmatprep.subr.mxu0 %v5361
    %5551 = vmatpush1.msra.mxu0 %v5360
    %5552 = vmatprep.subr.mxu0 %v5369
    %5553 = vmatpush1.msra.mxu0 %v5368
    %5554 = vmatprep.subr.mxu0 %v5377
    %5555 = vmatpush1.msra.mxu0 %v5376
    %5556 = vmatprep.subr.mxu0 %v5385
    %5557 = vmatpush1.msra.mxu0 %v5384
    %5558 = vmatprep.subr.mxu0 %v5393
    %5559 = vmatpush1.msra.mxu0 %v5392
    %5560 = vmatprep.subr.mxu0 %v5401
    %5561 = vmatpush1.msra.mxu0 %v5400
    %5562 = vmatprep.subr.mxu0 %v5409
    %5563 = vmatpush1.msra.mxu0 %v5408
    %5564 = vmatprep.subr.mxu0 %v5417
    %5565 = vmatpush1.msra.mxu0 %v5416
    %5566 = vmatprep.subr.mxu0 %v5425
    %5567 = vmatpush1.msra.mxu0 %v5424
    %5568 = vmatprep.subr.mxu0 %v5433
    %5569 = vmatpush1.msra.mxu0 %v5432
    %5570 = vmatprep.mubr.f32.mxu0 0.0
    %5571 = vmatmul.mubr.f32.gmra.mrb[0].mxu0 0.0
    %v5572 = vpop.f32.mrb[0].mxu0
    %v5573 = vadd.f32 0.0, %v5572
    %v5574 = vpop.f32.mrb[0].mxu0
    %v5575 = vadd.f32 0.0, %v5574
    %5576 = vdwg.mxu0
    %5577 = vmatprep.subr.mxu0 %v5187
    %5578 = vmatpush1.msra.mxu0 %v5186
    %5579 = vmatprep.subr.mxu0 %v5195
    %5580 = vmatpush1.msra.mxu0 %v5194
    %5581 = vmatprep.subr.mxu0 %v5203
    %5582 = vmatpush1.msra.mxu0 %v5202
    %5583 = vmatprep.subr.mxu0 %v5211
    %5584 = vmatpush1.msra.mxu0 %v5210
    %5585 = vmatprep.subr.mxu0 %v5219
    %5586 = vmatpush1.msra.mxu0 %v5218
    %5587 = vmatprep.subr.mxu0 %v5227
    %5588 = vmatpush1.msra.mxu0 %v5226
    %5589 = vmatprep.subr.mxu0 %v5235
    %5590 = vmatpush1.msra.mxu0 %v5234
    %5591 = vmatprep.subr.mxu0 %v5243
    %5592 = vmatpush1.msra.mxu0 %v5242
    %5593 = vmatprep.subr.mxu0 %v5251
    %5594 = vmatpush1.msra.mxu0 %v5250
    %5595 = vmatprep.subr.mxu0 %v5259
    %5596 = vmatpush1.msra.mxu0 %v5258
    %5597 = vmatprep.subr.mxu0 %v5267
    %5598 = vmatpush1.msra.mxu0 %v5266
    %5599 = vmatprep.subr.mxu0 %v5275
    %5600 = vmatpush1.msra.mxu0 %v5274
    %5601 = vmatprep.subr.mxu0 %v5283
    %5602 = vmatpush1.msra.mxu0 %v5282
    %5603 = vmatprep.subr.mxu0 %v5291
    %5604 = vmatpush1.msra.mxu0 %v5290
    %5605 = vmatprep.subr.mxu0 %v5299
    %5606 = vmatpush1.msra.mxu0 %v5298
    %5607 = vmatprep.subr.mxu0 %v5307
    %5608 = vmatpush1.msra.mxu0 %v5306
    %5609 = vmatprep.subr.mxu0 %v5315
    %5610 = vmatpush1.msra.mxu0 %v5314
    %5611 = vmatprep.subr.mxu0 %v5323
    %5612 = vmatpush1.msra.mxu0 %v5322
    %5613 = vmatprep.subr.mxu0 %v5331
    %5614 = vmatpush1.msra.mxu0 %v5330
    %5615 = vmatprep.subr.mxu0 %v5339
    %5616 = vmatpush1.msra.mxu0 %v5338
    %5617 = vmatprep.subr.mxu0 %v5347
    %5618 = vmatpush1.msra.mxu0 %v5346
    %5619 = vmatprep.subr.mxu0 %v5355
    %5620 = vmatpush1.msra.mxu0 %v5354
    %5621 = vmatprep.subr.mxu0 %v5363
    %5622 = vmatpush1.msra.mxu0 %v5362
    %5623 = vmatprep.subr.mxu0 %v5371
    %5624 = vmatpush1.msra.mxu0 %v5370
    %5625 = vmatprep.subr.mxu0 %v5379
    %5626 = vmatpush1.msra.mxu0 %v5378
    %5627 = vmatprep.subr.mxu0 %v5387
    %5628 = vmatpush1.msra.mxu0 %v5386
    %5629 = vmatprep.subr.mxu0 %v5395
    %5630 = vmatpush1.msra.mxu0 %v5394
    %5631 = vmatprep.subr.mxu0 %v5403
    %5632 = vmatpush1.msra.mxu0 %v5402
    %5633 = vmatprep.subr.mxu0 %v5411
    %5634 = vmatpush1.msra.mxu0 %v5410
    %5635 = vmatprep.subr.mxu0 %v5419
    %5636 = vmatpush1.msra.mxu0 %v5418
    %5637 = vmatprep.subr.mxu0 %v5427
    %5638 = vmatpush1.msra.mxu0 %v5426
    %5639 = vmatprep.subr.mxu0 %v5435
    %5640 = vmatpush1.msra.mxu0 %v5434
    %5641 = vmatprep.mubr.f32.mxu0 0.0
    %5642 = vmatmul.mubr.f32.gmra.mrb[0].mxu0 0.0
    %v5643 = vpop.f32.mrb[0].mxu0
    %v5644 = vadd.f32 0.0, %v5643
    %v5645 = vpop.f32.mrb[0].mxu0
    %v5646 = vadd.f32 0.0, %v5645
    %5647 = vdwg.mxu0
    %5648 = vmatprep.subr.mxu0 %v5189
    %5649 = vmatpush1.msra.mxu0 %v5188
    %5650 = vmatprep.subr.mxu0 %v5197
    %5651 = vmatpush1.msra.mxu0 %v5196
    %5652 = vmatprep.subr.mxu0 %v5205
    %5653 = vmatpush1.msra.mxu0 %v5204
    %5654 = vmatprep.subr.mxu0 %v5213
    %5655 = vmatpush1.msra.mxu0 %v5212
    %5656 = vmatprep.subr.mxu0 %v5221
    %5657 = vmatpush1.msra.mxu0 %v5220
    %5658 = vmatprep.subr.mxu0 %v5229
    %5659 = vmatpush1.msra.mxu0 %v5228
    %5660 = vmatprep.subr.mxu0 %v5237
    %5661 = vmatpush1.msra.mxu0 %v5236
    %5662 = vmatprep.subr.mxu0 %v5245
    %5663 = vmatpush1.msra.mxu0 %v5244
    %5664 = vmatprep.subr.mxu0 %v5253
    %5665 = vmatpush1.msra.mxu0 %v5252
    %5666 = vmatprep.subr.mxu0 %v5261
    %5667 = vmatpush1.msra.mxu0 %v5260
    %5668 = vmatprep.subr.mxu0 %v5269
    %5669 = vmatpush1.msra.mxu0 %v5268
    %5670 = vmatprep.subr.mxu0 %v5277
    %5671 = vmatpush1.msra.mxu0 %v5276
    %5672 = vmatprep.subr.mxu0 %v5285
    %5673 = vmatpush1.msra.mxu0 %v5284
    %5674 = vmatprep.subr.mxu0 %v5293
    %5675 = vmatpush1.msra.mxu0 %v5292
    %5676 = vmatprep.subr.mxu0 %v5301
    %5677 = vmatpush1.msra.mxu0 %v5300
    %5678 = vmatprep.subr.mxu0 %v5309
    %5679 = vmatpush1.msra.mxu0 %v5308
    %5680 = vmatprep.subr.mxu0 %v5317
    %5681 = vmatpush1.msra.mxu0 %v5316
    %5682 = vmatprep.subr.mxu0 %v5325
    %5683 = vmatpush1.msra.mxu0 %v5324
    %5684 = vmatprep.subr.mxu0 %v5333
    %5685 = vmatpush1.msra.mxu0 %v5332
    %5686 = vmatprep.subr.mxu0 %v5341
    %5687 = vmatpush1.msra.mxu0 %v5340
    %5688 = vmatprep.subr.mxu0 %v5349
    %5689 = vmatpush1.msra.mxu0 %v5348
    %5690 = vmatprep.subr.mxu0 %v5357
    %5691 = vmatpush1.msra.mxu0 %v5356
    %5692 = vmatprep.subr.mxu0 %v5365
    %5693 = vmatpush1.msra.mxu0 %v5364
    %5694 = vmatprep.subr.mxu0 %v5373
    %5695 = vmatpush1.msra.mxu0 %v5372
    %5696 = vmatprep.subr.mxu0 %v5381
    %5697 = vmatpush1.msra.mxu0 %v5380
    %5698 = vmatprep.subr.mxu0 %v5389
    %5699 = vmatpush1.msra.mxu0 %v5388
    %5700 = vmatprep.subr.mxu0 %v5397
    %5701 = vmatpush1.msra.mxu0 %v5396
    %5702 = vmatprep.subr.mxu0 %v5405
    %5703 = vmatpush1.msra.mxu0 %v5404
    %5704 = vmatprep.subr.mxu0 %v5413
    %5705 = vmatpush1.msra.mxu0 %v5412
    %5706 = vmatprep.subr.mxu0 %v5421
    %5707 = vmatpush1.msra.mxu0 %v5420
    %5708 = vmatprep.subr.mxu0 %v5429
    %5709 = vmatpush1.msra.mxu0 %v5428
    %5710 = vmatprep.subr.mxu0 %v5437
    %5711 = vmatpush1.msra.mxu0 %v5436
    %5712 = vmatprep.mubr.f32.mxu0 0.0
    %5713 = vmatmul.mubr.f32.gmra.mrb[0].mxu0 0.0
    %v5714 = vpop.f32.mrb[0].mxu0
    %v5715 = vadd.f32 0.0, %v5714
    %v5716 = vpop.f32.mrb[0].mxu0
    %v5717 = vadd.f32 0.0, %v5716
    %5718 = vdwg.mxu0
    %5719 = vmatprep.subr.mxu0 %v5191
    %5720 = vmatpush1.msra.mxu0 %v5190
    %5721 = vmatprep.subr.mxu0 %v5199
    %5722 = vmatpush1.msra.mxu0 %v5198
    %5723 = vmatprep.subr.mxu0 %v5207
    %5724 = vmatpush1.msra.mxu0 %v5206
    %5725 = vmatprep.subr.mxu0 %v5215
    %5726 = vmatpush1.msra.mxu0 %v5214
    %5727 = vmatprep.subr.mxu0 %v5223
    %5728 = vmatpush1.msra.mxu0 %v5222
    %5729 = vmatprep.subr.mxu0 %v5231
    %5730 = vmatpush1.msra.mxu0 %v5230
    %5731 = vmatprep.subr.mxu0 %v5239
    %5732 = vmatpush1.msra.mxu0 %v5238
    %5733 = vmatprep.subr.mxu0 %v5247
    %5734 = vmatpush1.msra.mxu0 %v5246
    %5735 = vmatprep.subr.mxu0 %v5255
    %5736 = vmatpush1.msra.mxu0 %v5254
    %5737 = vmatprep.subr.mxu0 %v5263
    %5738 = vmatpush1.msra.mxu0 %v5262
    %5739 = vmatprep.subr.mxu0 %v5271
    %5740 = vmatpush1.msra.mxu0 %v5270
    %5741 = vmatprep.subr.mxu0 %v5279
    %5742 = vmatpush1.msra.mxu0 %v5278
    %5743 = vmatprep.subr.mxu0 %v5287
    %5744 = vmatpush1.msra.mxu0 %v5286
    %5745 = vmatprep.subr.mxu0 %v5295
    %5746 = vmatpush1.msra.mxu0 %v5294
    %5747 = vmatprep.subr.mxu0 %v5303
    %5748 = vmatpush1.msra.mxu0 %v5302
    %5749 = vmatprep.subr.mxu0 %v5311
    %5750 = vmatpush1.msra.mxu0 %v5310
    %5751 = vmatprep.subr.mxu0 %v5319
    %5752 = vmatpush1.msra.mxu0 %v5318
    %5753 = vmatprep.subr.mxu0 %v5327
    %5754 = vmatpush1.msra.mxu0 %v5326
    %5755 = vmatprep.subr.mxu0 %v5335
    %5756 = vmatpush1.msra.mxu0 %v5334
    %5757 = vmatprep.subr.mxu0 %v5343
    %5758 = vmatpush1.msra.mxu0 %v5342
    %5759 = vmatprep.subr.mxu0 %v5351
    %5760 = vmatpush1.msra.mxu0 %v5350
    %5761 = vmatprep.subr.mxu0 %v5359
    %5762 = vmatpush1.msra.mxu0 %v5358
    %5763 = vmatprep.subr.mxu0 %v5367
    %5764 = vmatpush1.msra.mxu0 %v5366
    %5765 = vmatprep.subr.mxu0 %v5375
    %5766 = vmatpush1.msra.mxu0 %v5374
    %5767 = vmatprep.subr.mxu0 %v5383
    %5768 = vmatpush1.msra.mxu0 %v5382
    %5769 = vmatprep.subr.mxu0 %v5391
    %5770 = vmatpush1.msra.mxu0 %v5390
    %5771 = vmatprep.subr.mxu0 %v5399
    %5772 = vmatpush1.msra.mxu0 %v5398
    %5773 = vmatprep.subr.mxu0 %v5407
    %5774 = vmatpush1.msra.mxu0 %v5406
    %5775 = vmatprep.subr.mxu0 %v5415
    %5776 = vmatpush1.msra.mxu0 %v5414
    %5777 = vmatprep.subr.mxu0 %v5423
    %5778 = vmatpush1.msra.mxu0 %v5422
    %5779 = vmatprep.subr.mxu0 %v5431
    %5780 = vmatpush1.msra.mxu0 %v5430
    %5781 = vmatprep.subr.mxu0 %v5439
    %5782 = vmatpush1.msra.mxu0 %v5438
    %5783 = vmatprep.mubr.f32.mxu0 0.0
    %5784 = vmatmul.mubr.f32.gmra.mrb[0].mxu0 0.0
    %v5785 = vpop.f32.mrb[0].mxu0
    %v5786 = vadd.f32 0.0, %v5785
    %v5787 = vpop.f32.mrb[0].mxu0
    %v5788 = vadd.f32 0.0, %v5787
    %5789 = vdwg.mxu0
    %v5790 = vadd.f32 %v5461, %v5573
    %v5791 = vadd.f32 %v5468, %v5575
    %v5792 = vadd.f32 %v5469, %v5644
    %v5793 = vadd.f32 %v5470, %v5646
    %v5794 = vadd.f32 %v5492, %v5715
    %v5795 = vadd.f32 %v5499, %v5717
    %v5796 = vadd.f32 %v5500, %v5786
    %v5797 = vadd.f32 %v5501, %v5788
    %v5798 = vxor.u32 %v5790, 2147483648
    %v5799 = vxor.u32 %v5791, 2147483648
    %v5800 = vxor.u32 %v5792, 2147483648
    %v5801 = vmul.f32 %v5798, 1.442695
    %v5802 = vpow.pop %v5801
    %v5803 = vmul.f32 %v5799, 1.442695
    %v5804 = vpow.pop %v5803
    %v5805 = vmul.f32 %v5800, 1.442695
    %v5806 = vpow.pop %v5805
    %v5807 = vadd.f32 %v5802, 1.0
    %v5808 = vadd.f32 %v5804, 1.0
    %v5809 = vadd.f32 %v5806, 1.0
    %v5810 = vrcp.pop %v5807
    %v5811 = vmul.f32 1.0, %v5810
    %v5812 = vrcp.pop %v5808
    %v5813 = vmul.f32 1.0, %v5812
    %v5814 = vrcp.pop %v5809
    %v5815 = vmul.f32 1.0, %v5814
    %v5816 = vtanh.pop %v5793
    %v5817 = vmul.f32 %v5813, 0.0
    %v5818 = vmul.f32 %v5811, %v5816
    %v5819 = vadd.f32 %v5817, %v5818
    %v5820 = vtanh.pop %v5819
    %v5821 = vmul.f32 %v5815, %v5820
    %v5822 = vxor.u32 %v5794, 2147483648
    %v5823 = vxor.u32 %v5795, 2147483648
    %v5824 = vxor.u32 %v5796, 2147483648
    %v5825 = vmul.f32 %v5822, 1.442695
    %v5826 = vpow.pop %v5825
    %v5827 = vmul.f32 %v5823, 1.442695
    %v5828 = vpow.pop %v5827
    %v5829 = vmul.f32 %v5824, 1.442695
    %v5830 = vpow.pop %v5829
    %v5831 = vadd.f32 %v5826, 1.0
    %v5832 = vadd.f32 %v5828, 1.0
    %v5833 = vadd.f32 %v5830, 1.0
    %v5834 = vrcp.pop %v5831
    %v5835 = vmul.f32 1.0, %v5834
    %v5836 = vrcp.pop %v5832
    %v5837 = vmul.f32 1.0, %v5836
    %v5838 = vrcp.pop %v5833
    %v5839 = vmul.f32 1.0, %v5838
    %v5840 = vtanh.pop %v5797
    %v5841 = vmul.f32 %v5837, 0.0
    %v5842 = vmul.f32 %v5835, %v5840
    %v5843 = vadd.f32 %v5841, %v5842
    %v5844 = vtanh.pop %v5843
    %v5845 = vmul.f32 %v5839, %v5844
    %v5848 = vunpack.c.l.s4 1966171168
    %v5849 = vunpack.c.0.s8 %v5848
    %v5850 = vlaneseq
    %v5851 = vshrl.u32 %v5850, 7
    %v5852 = vsub.s32 %v5849, %v5851
    %v5853 = vrot.slane %v5821, %v5852
    %v5854 = vcombine.high %v5853, %v5853
    %v5856 = vunpack.c.l.s4 1966171168
    %v5857 = vunpack.c.0.s8 %v5856
    %v5858 = vlaneseq
    %v5859 = vshrl.u32 %v5858, 7
    %v5860 = vsub.s32 %v5857, %v5859
    %v5861 = vrot.slane %v5853, %v5860
    %v5863 = vunpack.c.l.s4 1966171168
    %v5864 = vunpack.c.0.s8 %v5863
    %v5865 = vlaneseq
    %v5866 = vshrl.u32 %v5865, 7
    %v5867 = vsub.s32 %v5864, %v5866
    %v5868 = vrot.slane %v5854, %v5867
    %5871 = vst [vmem:[#allocation3] sm:$0x1] %v5861
    %5872 = vst [vmem:[#allocation3 + $0x10] sm:$0x1] %v5868
    %v5875 = vunpack.c.l.s4 1966171168
    %v5876 = vunpack.c.0.s8 %v5875
    %v5877 = vlaneseq
    %v5878 = vshrl.u32 %v5877, 7
    %v5879 = vsub.s32 %v5876, %v5878
    %v5880 = vrot.slane %v5845, %v5879
    %v5881 = vcombine.high %v5880, %v5880
    %v5883 = vunpack.c.l.s4 1966171168
    %v5884 = vunpack.c.0.s8 %v5883
    %v5885 = vlaneseq
    %v5886 = vshrl.u32 %v5885, 7
    %v5887 = vsub.s32 %v5884, %v5886
    %v5888 = vrot.slane %v5880, %v5887
    %v5890 = vunpack.c.l.s4 1966171168
    %v5891 = vunpack.c.0.s8 %v5890
    %v5892 = vlaneseq
    %v5893 = vshrl.u32 %v5892, 7
    %v5894 = vsub.s32 %v5891, %v5893
    %v5895 = vrot.slane %v5881, %v5894
    %5898 = vst [vmem:[#allocation3 + $0xf] sm:$0x1] %v5888
    %5899 = vst [vmem:[#allocation3 + $0x1f] sm:$0x1] %v5895
    %v5900 = vld [vmem:[%s1310] ss:$8 sm:$0xf]
    %v5901 = vld [vmem:[%s1312] ss:$8 sm:$0xf]
    %v5902 = vld [vmem:[%s1314] ss:$8 sm:$0xf]
    %v5903 = vld [vmem:[%s1316] ss:$8 sm:$0xf]
    %v5906 = vcombine.low %v5900, %v5901
    %v5908 = vunpack.c.l.s4 1966171168
    %v5909 = vunpack.c.0.s8 %v5908
    %v5910 = vlaneseq
    %v5911 = vshrl.u32 %v5910, 7
    %v5912 = vsub.s32 %v5909, %v5911
    %v5913 = vrot.slane %v5906, %v5912
    %v5914 = vcombine.high %v5913, %v5913
    %v5916 = vunpack.c.l.s4 1966171168
    %v5917 = vunpack.c.0.s8 %v5916
    %v5918 = vlaneseq
    %v5919 = vshrl.u32 %v5918, 7
    %v5920 = vsub.s32 %v5917, %v5919
    %v5921 = vrot.slane %v5913, %v5920
    %v5923 = vunpack.c.l.s4 1966171168
    %v5924 = vunpack.c.0.s8 %v5923
    %v5925 = vlaneseq
    %v5926 = vshrl.u32 %v5925, 7
    %v5927 = vsub.s32 %v5924, %v5926
    %v5928 = vrot.slane %v5914, %v5927
    %v5929 = vcombine.high %v5921, %v5921
    %v5930 = vcombine.high %v5928, %v5928
    %v5937 = vcombine.low %v5902, %v5903
    %v5939 = vunpack.c.l.s4 1966171168
    %v5940 = vunpack.c.0.s8 %v5939
    %v5941 = vlaneseq
    %v5942 = vshrl.u32 %v5941, 7
    %v5943 = vsub.s32 %v5940, %v5942
    %v5944 = vrot.slane %v5937, %v5943
    %v5945 = vcombine.high %v5944, %v5944
    %v5947 = vunpack.c.l.s4 1966171168
    %v5948 = vunpack.c.0.s8 %v5947
    %v5949 = vlaneseq
    %v5950 = vshrl.u32 %v5949, 7
    %v5951 = vsub.s32 %v5948, %v5950
    %v5952 = vrot.slane %v5944, %v5951
    %v5954 = vunpack.c.l.s4 1966171168
    %v5955 = vunpack.c.0.s8 %v5954
    %v5956 = vlaneseq
    %v5957 = vshrl.u32 %v5956, 7
    %v5958 = vsub.s32 %v5955, %v5957
    %v5959 = vrot.slane %v5945, %v5958
    %v5960 = vcombine.high %v5952, %v5952
    %v5961 = vcombine.high %v5959, %v5959
    %5966 = vmatprep.subr.mxu0 %v5185
    %5967 = vmatpush1.msra.mxu0 %v5184
    %5968 = vmatprep.subr.mxu0 %v5193
    %5969 = vmatpush1.msra.mxu0 %v5192
    %5970 = vmatprep.subr.mxu0 %v5201
    %5971 = vmatpush1.msra.mxu0 %v5200
    %5972 = vmatprep.subr.mxu0 %v5209
    %5973 = vmatpush1.msra.mxu0 %v5208
    %5974 = vmatprep.subr.mxu0 %v5217
    %5975 = vmatpush1.msra.mxu0 %v5216
    %5976 = vmatprep.subr.mxu0 %v5225
    %5977 = vmatpush1.msra.mxu0 %v5224
    %5978 = vmatprep.subr.mxu0 %v5233
    %5979 = vmatpush1.msra.mxu0 %v5232
    %5980 = vmatprep.subr.mxu0 %v5241
    %5981 = vmatpush1.msra.mxu0 %v5240
    %5982 = vmatprep.subr.mxu0 %v5249
    %5983 = vmatpush1.msra.mxu0 %v5248
    %5984 = vmatprep.subr.mxu0 %v5257
    %5985 = vmatpush1.msra.mxu0 %v5256
    %5986 = vmatprep.subr.mxu0 %v5265
    %5987 = vmatpush1.msra.mxu0 %v5264
    %5988 = vmatprep.subr.mxu0 %v5273
    %5989 = vmatpush1.msra.mxu0 %v5272
    %5990 = vmatprep.subr.mxu0 %v5281
    %5991 = vmatpush1.msra.mxu0 %v5280
    %5992 = vmatprep.subr.mxu0 %v5289
    %5993 = vmatpush1.msra.mxu0 %v5288
    %5994 = vmatprep.subr.mxu0 %v5297
    %5995 = vmatpush1.msra.mxu0 %v5296
    %5996 = vmatprep.subr.mxu0 %v5305
    %5997 = vmatpush1.msra.mxu0 %v5304
    %5998 = vmatprep.subr.mxu0 %v5313
    %5999 = vmatpush1.msra.mxu0 %v5312
    %6000 = vmatprep.subr.mxu0 %v5321
    %6001 = vmatpush1.msra.mxu0 %v5320
    %6002 = vmatprep.subr.mxu0 %v5329
    %6003 = vmatpush1.msra.mxu0 %v5328
    %6004 = vmatprep.subr.mxu0 %v5337
    %6005 = vmatpush1.msra.mxu0 %v5336
    %6006 = vmatprep.subr.mxu0 %v5345
    %6007 = vmatpush1.msra.mxu0 %v5344
    %6008 = vmatprep.subr.mxu0 %v5353
    %6009 = vmatpush1.msra.mxu0 %v5352
    %6010 = vmatprep.subr.mxu0 %v5361
    %6011 = vmatpush1.msra.mxu0 %v5360
    %6012 = vmatprep.subr.mxu0 %v5369
    %6013 = vmatpush1.msra.mxu0 %v5368
    %6014 = vmatprep.subr.mxu0 %v5377
    %6015 = vmatpush1.msra.mxu0 %v5376
    %6016 = vmatprep.subr.mxu0 %v5385
    %6017 = vmatpush1.msra.mxu0 %v5384
    %6018 = vmatprep.subr.mxu0 %v5393
    %6019 = vmatpush1.msra.mxu0 %v5392
    %6020 = vmatprep.subr.mxu0 %v5401
    %6021 = vmatpush1.msra.mxu0 %v5400
    %6022 = vmatprep.subr.mxu0 %v5409
    %6023 = vmatpush1.msra.mxu0 %v5408
    %6024 = vmatprep.subr.mxu0 %v5417
    %6025 = vmatpush1.msra.mxu0 %v5416
    %6026 = vmatprep.subr.mxu0 %v5425
    %6027 = vmatpush1.msra.mxu0 %v5424
    %6028 = vmatprep.subr.mxu0 %v5433
    %6029 = vmatpush1.msra.mxu0 %v5432
    %6030 = vmatprep.mubr.f32.mxu0 %v5845
    %6031 = vmatmul.mubr.f32.gmra.mrb[0].mxu0 %v5821
    %v6032 = vpop.f32.mrb[0].mxu0
    %v6033 = vadd.f32 0.0, %v6032
    %v6034 = vpop.f32.mrb[0].mxu0
    %v6035 = vadd.f32 0.0, %v6034
    %6036 = vdwg.mxu0
    %6037 = vmatprep.subr.mxu0 %v5187
    %6038 = vmatpush1.msra.mxu0 %v5186
    %6039 = vmatprep.subr.mxu0 %v5195
    %6040 = vmatpush1.msra.mxu0 %v5194
    %6041 = vmatprep.subr.mxu0 %v5203
    %6042 = vmatpush1.msra.mxu0 %v5202
    %6043 = vmatprep.subr.mxu0 %v5211
    %6044 = vmatpush1.msra.mxu0 %v5210
    %6045 = vmatprep.subr.mxu0 %v5219
    %6046 = vmatpush1.msra.mxu0 %v5218
    %6047 = vmatprep.subr.mxu0 %v5227
    %6048 = vmatpush1.msra.mxu0 %v5226
    %6049 = vmatprep.subr.mxu0 %v5235
    %6050 = vmatpush1.msra.mxu0 %v5234
    %6051 = vmatprep.subr.mxu0 %v5243
    %6052 = vmatpush1.msra.mxu0 %v5242
    %6053 = vmatprep.subr.mxu0 %v5251
    %6054 = vmatpush1.msra.mxu0 %v5250
    %6055 = vmatprep.subr.mxu0 %v5259
    %6056 = vmatpush1.msra.mxu0 %v5258
    %6057 = vmatprep.subr.mxu0 %v5267
    %6058 = vmatpush1.msra.mxu0 %v5266
    %6059 = vmatprep.subr.mxu0 %v5275
    %6060 = vmatpush1.msra.mxu0 %v5274
    %6061 = vmatprep.subr.mxu0 %v5283
    %6062 = vmatpush1.msra.mxu0 %v5282
    %6063 = vmatprep.subr.mxu0 %v5291
    %6064 = vmatpush1.msra.mxu0 %v5290
    %6065 = vmatprep.subr.mxu0 %v5299
    %6066 = vmatpush1.msra.mxu0 %v5298
    %6067 = vmatprep.subr.mxu0 %v5307
    %6068 = vmatpush1.msra.mxu0 %v5306
    %6069 = vmatprep.subr.mxu0 %v5315
    %6070 = vmatpush1.msra.mxu0 %v5314
    %6071 = vmatprep.subr.mxu0 %v5323
    %6072 = vmatpush1.msra.mxu0 %v5322
    %6073 = vmatprep.subr.mxu0 %v5331
    %6074 = vmatpush1.msra.mxu0 %v5330
    %6075 = vmatprep.subr.mxu0 %v5339
    %6076 = vmatpush1.msra.mxu0 %v5338
    %6077 = vmatprep.subr.mxu0 %v5347
    %6078 = vmatpush1.msra.mxu0 %v5346
    %6079 = vmatprep.subr.mxu0 %v5355
    %6080 = vmatpush1.msra.mxu0 %v5354
    %6081 = vmatprep.subr.mxu0 %v5363
    %6082 = vmatpush1.msra.mxu0 %v5362
    %6083 = vmatprep.subr.mxu0 %v5371
    %6084 = vmatpush1.msra.mxu0 %v5370
    %6085 = vmatprep.subr.mxu0 %v5379
    %6086 = vmatpush1.msra.mxu0 %v5378
    %6087 = vmatprep.subr.mxu0 %v5387
    %6088 = vmatpush1.msra.mxu0 %v5386
    %6089 = vmatprep.subr.mxu0 %v5395
    %6090 = vmatpush1.msra.mxu0 %v5394
    %6091 = vmatprep.subr.mxu0 %v5403
    %6092 = vmatpush1.msra.mxu0 %v5402
    %6093 = vmatprep.subr.mxu0 %v5411
    %6094 = vmatpush1.msra.mxu0 %v5410
    %6095 = vmatprep.subr.mxu0 %v5419
    %6096 = vmatpush1.msra.mxu0 %v5418
    %6097 = vmatprep.subr.mxu0 %v5427
    %6098 = vmatpush1.msra.mxu0 %v5426
    %6099 = vmatprep.subr.mxu0 %v5435
    %6100 = vmatpush1.msra.mxu0 %v5434
    %6101 = vmatprep.mubr.f32.mxu0 %v5845
    %6102 = vmatmul.mubr.f32.gmra.mrb[0].mxu0 %v5821
    %v6103 = vpop.f32.mrb[0].mxu0
    %v6104 = vadd.f32 0.0, %v6103
    %v6105 = vpop.f32.mrb[0].mxu0
    %v6106 = vadd.f32 0.0, %v6105
    %6107 = vdwg.mxu0
    %6108 = vmatprep.subr.mxu0 %v5189
    %6109 = vmatpush1.msra.mxu0 %v5188
    %6110 = vmatprep.subr.mxu0 %v5197
    %6111 = vmatpush1.msra.mxu0 %v5196
    %6112 = vmatprep.subr.mxu0 %v5205
    %6113 = vmatpush1.msra.mxu0 %v5204
    %6114 = vmatprep.subr.mxu0 %v5213
    %6115 = vmatpush1.msra.mxu0 %v5212
    %6116 = vmatprep.subr.mxu0 %v5221
    %6117 = vmatpush1.msra.mxu0 %v5220
    %6118 = vmatprep.subr.mxu0 %v5229
    %6119 = vmatpush1.msra.mxu0 %v5228
    %6120 = vmatprep.subr.mxu0 %v5237
    %6121 = vmatpush1.msra.mxu0 %v5236
    %6122 = vmatprep.subr.mxu0 %v5245
    %6123 = vmatpush1.msra.mxu0 %v5244
    %6124 = vmatprep.subr.mxu0 %v5253
    %6125 = vmatpush1.msra.mxu0 %v5252
    %6126 = vmatprep.subr.mxu0 %v5261
    %6127 = vmatpush1.msra.mxu0 %v5260
    %6128 = vmatprep.subr.mxu0 %v5269
    %6129 = vmatpush1.msra.mxu0 %v5268
    %6130 = vmatprep.subr.mxu0 %v5277
    %6131 = vmatpush1.msra.mxu0 %v5276
    %6132 = vmatprep.subr.mxu0 %v5285
    %6133 = vmatpush1.msra.mxu0 %v5284
    %6134 = vmatprep.subr.mxu0 %v5293
    %6135 = vmatpush1.msra.mxu0 %v5292
    %6136 = vmatprep.subr.mxu0 %v5301
    %6137 = vmatpush1.msra.mxu0 %v5300
    %6138 = vmatprep.subr.mxu0 %v5309
    %6139 = vmatpush1.msra.mxu0 %v5308
    %6140 = vmatprep.subr.mxu0 %v5317
    %6141 = vmatpush1.msra.mxu0 %v5316
    %6142 = vmatprep.subr.mxu0 %v5325
    %6143 = vmatpush1.msra.mxu0 %v5324
    %6144 = vmatprep.subr.mxu0 %v5333
    %6145 = vmatpush1.msra.mxu0 %v5332
    %6146 = vmatprep.subr.mxu0 %v5341
    %6147 = vmatpush1.msra.mxu0 %v5340
    %6148 = vmatprep.subr.mxu0 %v5349
    %6149 = vmatpush1.msra.mxu0 %v5348
    %6150 = vmatprep.subr.mxu0 %v5357
    %6151 = vmatpush1.msra.mxu0 %v5356
    %6152 = vmatprep.subr.mxu0 %v5365
    %6153 = vmatpush1.msra.mxu0 %v5364
    %6154 = vmatprep.subr.mxu0 %v5373
    %6155 = vmatpush1.msra.mxu0 %v5372
    %6156 = vmatprep.subr.mxu0 %v5381
    %6157 = vmatpush1.msra.mxu0 %v5380
    %6158 = vmatprep.subr.mxu0 %v5389
    %6159 = vmatpush1.msra.mxu0 %v5388
    %6160 = vmatprep.subr.mxu0 %v5397
    %6161 = vmatpush1.msra.mxu0 %v5396
    %6162 = vmatprep.subr.mxu0 %v5405
    %6163 = vmatpush1.msra.mxu0 %v5404
    %6164 = vmatprep.subr.mxu0 %v5413
    %6165 = vmatpush1.msra.mxu0 %v5412
    %6166 = vmatprep.subr.mxu0 %v5421
    %6167 = vmatpush1.msra.mxu0 %v5420
    %6168 = vmatprep.subr.mxu0 %v5429
    %6169 = vmatpush1.msra.mxu0 %v5428
    %6170 = vmatprep.subr.mxu0 %v5437
    %6171 = vmatpush1.msra.mxu0 %v5436
    %6172 = vmatprep.mubr.f32.mxu0 %v5845
    %6173 = vmatmul.mubr.f32.gmra.mrb[0].mxu0 %v5821
    %v6174 = vpop.f32.mrb[0].mxu0
    %v6175 = vadd.f32 0.0, %v6174
    %v6176 = vpop.f32.mrb[0].mxu0
    %v6177 = vadd.f32 0.0, %v6176
    %6178 = vdwg.mxu0
    %6179 = vmatprep.subr.mxu0 %v5191
    %6180 = vmatpush1.msra.mxu0 %v5190
    %6181 = vmatprep.subr.mxu0 %v5199
    %6182 = vmatpush1.msra.mxu0 %v5198
    %6183 = vmatprep.subr.mxu0 %v5207
    %6184 = vmatpush1.msra.mxu0 %v5206
    %6185 = vmatprep.subr.mxu0 %v5215
    %6186 = vmatpush1.msra.mxu0 %v5214
    %6187 = vmatprep.subr.mxu0 %v5223
    %6188 = vmatpush1.msra.mxu0 %v5222
    %6189 = vmatprep.subr.mxu0 %v5231
    %6190 = vmatpush1.msra.mxu0 %v5230
    %6191 = vmatprep.subr.mxu0 %v5239
    %6192 = vmatpush1.msra.mxu0 %v5238
    %6193 = vmatprep.subr.mxu0 %v5247
    %6194 = vmatpush1.msra.mxu0 %v5246
    %6195 = vmatprep.subr.mxu0 %v5255
    %6196 = vmatpush1.msra.mxu0 %v5254
    %6197 = vmatprep.subr.mxu0 %v5263
    %6198 = vmatpush1.msra.mxu0 %v5262
    %6199 = vmatprep.subr.mxu0 %v5271
    %6200 = vmatpush1.msra.mxu0 %v5270
    %6201 = vmatprep.subr.mxu0 %v5279
    %6202 = vmatpush1.msra.mxu0 %v5278
    %6203 = vmatprep.subr.mxu0 %v5287
    %6204 = vmatpush1.msra.mxu0 %v5286
    %6205 = vmatprep.subr.mxu0 %v5295
    %6206 = vmatpush1.msra.mxu0 %v5294
    %6207 = vmatprep.subr.mxu0 %v5303
    %6208 = vmatpush1.msra.mxu0 %v5302
    %6209 = vmatprep.subr.mxu0 %v5311
    %6210 = vmatpush1.msra.mxu0 %v5310
    %6211 = vmatprep.subr.mxu0 %v5319
    %6212 = vmatpush1.msra.mxu0 %v5318
    %6213 = vmatprep.subr.mxu0 %v5327
    %6214 = vmatpush1.msra.mxu0 %v5326
    %6215 = vmatprep.subr.mxu0 %v5335
    %6216 = vmatpush1.msra.mxu0 %v5334
    %6217 = vmatprep.subr.mxu0 %v5343
    %6218 = vmatpush1.msra.mxu0 %v5342
    %6219 = vmatprep.subr.mxu0 %v5351
    %6220 = vmatpush1.msra.mxu0 %v5350
    %6221 = vmatprep.subr.mxu0 %v5359
    %6222 = vmatpush1.msra.mxu0 %v5358
    %6223 = vmatprep.subr.mxu0 %v5367
    %6224 = vmatpush1.msra.mxu0 %v5366
    %6225 = vmatprep.subr.mxu0 %v5375
    %6226 = vmatpush1.msra.mxu0 %v5374
    %6227 = vmatprep.subr.mxu0 %v5383
    %6228 = vmatpush1.msra.mxu0 %v5382
    %6229 = vmatprep.subr.mxu0 %v5391
    %6230 = vmatpush1.msra.mxu0 %v5390
    %6231 = vmatprep.subr.mxu0 %v5399
    %6232 = vmatpush1.msra.mxu0 %v5398
    %6233 = vmatprep.subr.mxu0 %v5407
    %6234 = vmatpush1.msra.mxu0 %v5406
    %6235 = vmatprep.subr.mxu0 %v5415
    %6236 = vmatpush1.msra.mxu0 %v5414
    %6237 = vmatprep.subr.mxu0 %v5423
    %6238 = vmatpush1.msra.mxu0 %v5422
    %6239 = vmatprep.subr.mxu0 %v5431
    %6240 = vmatpush1.msra.mxu0 %v5430
    %6241 = vmatprep.subr.mxu0 %v5439
    %6242 = vmatpush1.msra.mxu0 %v5438
    %6243 = vmatprep.mubr.f32.mxu0 %v5845
    %6244 = vmatmul.mubr.f32.gmra.mrb[0].mxu0 %v5821
    %v6245 = vpop.f32.mrb[0].mxu0
    %v6246 = vadd.f32 0.0, %v6245
    %v6247 = vpop.f32.mrb[0].mxu0
    %v6248 = vadd.f32 0.0, %v6247
    %6249 = vdwg.mxu0
    %v6250 = vadd.f32 %v5921, %v6033
    %v6251 = vadd.f32 %v5928, %v6035
    %v6252 = vadd.f32 %v5929, %v6104
    %v6253 = vadd.f32 %v5930, %v6106
    %v6254 = vadd.f32 %v5952, %v6175
    %v6255 = vadd.f32 %v5959, %v6177
    %v6256 = vadd.f32 %v5960, %v6246
    %v6257 = vadd.f32 %v5961, %v6248
    %v6258 = vxor.u32 %v6250, 2147483648
    %v6259 = vxor.u32 %v6251, 2147483648
    %v6260 = vxor.u32 %v6252, 2147483648
    %v6261 = vmul.f32 %v6258, 1.442695
    %v6262 = vpow.pop %v6261
    %v6263 = vmul.f32 %v6259, 1.442695
    %v6264 = vpow.pop %v6263
    %v6265 = vmul.f32 %v6260, 1.442695
    %v6266 = vpow.pop %v6265
    %v6267 = vadd.f32 %v6262, 1.0
    %v6268 = vadd.f32 %v6264, 1.0
    %v6269 = vadd.f32 %v6266, 1.0
    %v6270 = vrcp.pop %v6267
    %v6271 = vmul.f32 1.0, %v6270
    %v6272 = vrcp.pop %v6268
    %v6273 = vmul.f32 1.0, %v6272
    %v6274 = vrcp.pop %v6269
    %v6275 = vmul.f32 1.0, %v6274
    %v6276 = vtanh.pop %v6253
    %v6277 = vmul.f32 %v6273, %v5819
    %v6278 = vmul.f32 %v6271, %v6276
    %v6279 = vadd.f32 %v6277, %v6278
    %v6280 = vtanh.pop %v6279
    %v6281 = vmul.f32 %v6275, %v6280
    %v6282 = vxor.u32 %v6254, 2147483648
    %v6283 = vxor.u32 %v6255, 2147483648
    %v6284 = vxor.u32 %v6256, 2147483648
    %v6285 = vmul.f32 %v6282, 1.442695
    %v6286 = vpow.pop %v6285
    %v6287 = vmul.f32 %v6283, 1.442695
    %v6288 = vpow.pop %v6287
    %v6289 = vmul.f32 %v6284, 1.442695
    %v6290 = vpow.pop %v6289
    %v6291 = vadd.f32 %v6286, 1.0
    %v6292 = vadd.f32 %v6288, 1.0
    %v6293 = vadd.f32 %v6290, 1.0
    %v6294 = vrcp.pop %v6291
    %v6295 = vmul.f32 1.0, %v6294
    %v6296 = vrcp.pop %v6292
    %v6297 = vmul.f32 1.0, %v6296
    %v6298 = vrcp.pop %v6293
    %v6299 = vmul.f32 1.0, %v6298
    %v6300 = vtanh.pop %v6257
    %v6301 = vmul.f32 %v6297, %v5843
    %v6302 = vmul.f32 %v6295, %v6300
    %v6303 = vadd.f32 %v6301, %v6302
    %v6304 = vtanh.pop %v6303
    %v6305 = vmul.f32 %v6299, %v6304
    %v6308 = vunpack.c.l.s4 1966171168
    %v6309 = vunpack.c.0.s8 %v6308
    %v6310 = vlaneseq
    %v6311 = vshrl.u32 %v6310, 7
    %v6312 = vsub.s32 %v6309, %v6311
    %v6313 = vrot.slane %v6281, %v6312
    %v6314 = vcombine.high %v6313, %v6313
    %v6316 = vunpack.c.l.s4 1966171168
    %v6317 = vunpack.c.0.s8 %v6316
    %v6318 = vlaneseq
    %v6319 = vshrl.u32 %v6318, 7
    %v6320 = vsub.s32 %v6317, %v6319
    %v6321 = vrot.slane %v6313, %v6320
    %v6323 = vunpack.c.l.s4 1966171168
    %v6324 = vunpack.c.0.s8 %v6323
    %v6325 = vlaneseq
    %v6326 = vshrl.u32 %v6325, 7
    %v6327 = vsub.s32 %v6324, %v6326
    %v6328 = vrot.slane %v6314, %v6327
    %6331 = vst [vmem:[#allocation3 + $0x1] sm:$0x1] %v6321
    %6332 = vst [vmem:[#allocation3 + $0x11] sm:$0x1] %v6328
    %v6335 = vunpack.c.l.s4 1966171168
    %v6336 = vunpack.c.0.s8 %v6335
    %v6337 = vlaneseq
    %v6338 = vshrl.u32 %v6337, 7
    %v6339 = vsub.s32 %v6336, %v6338
    %v6340 = vrot.slane %v6305, %v6339
    %v6341 = vcombine.high %v6340, %v6340
    %v6343 = vunpack.c.l.s4 1966171168
    %v6344 = vunpack.c.0.s8 %v6343
    %v6345 = vlaneseq
    %v6346 = vshrl.u32 %v6345, 7
    %v6347 = vsub.s32 %v6344, %v6346
    %v6348 = vrot.slane %v6340, %v6347
    %v6350 = vunpack.c.l.s4 1966171168
    %v6351 = vunpack.c.0.s8 %v6350
    %v6352 = vlaneseq
    %v6353 = vshrl.u32 %v6352, 7
    %v6354 = vsub.s32 %v6351, %v6353
    %v6355 = vrot.slane %v6341, %v6354
    %6358 = vst [vmem:[#allocation3 + $0xe] sm:$0x1] %v6348
    %6359 = vst [vmem:[#allocation3 + $0x1e] sm:$0x1] %v6355
    %v6360 = vld [vmem:[%s1774] ss:$8 sm:$0xf]
    %v6361 = vld [vmem:[%s1776] ss:$8 sm:$0xf]
    %v6362 = vld [vmem:[%s1778] ss:$8 sm:$0xf]
    %v6363 = vld [vmem:[%s1780] ss:$8 sm:$0xf]
    %v6366 = vcombine.low %v6360, %v6361
    %v6368 = vunpack.c.l.s4 1966171168
    %v6369 = vunpack.c.0.s8 %v6368
    %v6370 = vlaneseq
    %v6371 = vshrl.u32 %v6370, 7
    %v6372 = vsub.s32 %v6369, %v6371
    %v6373 = vrot.slane %v6366, %v6372
    %v6374 = vcombine.high %v6373, %v6373
    %v6376 = vunpack.c.l.s4 1966171168
    %v6377 = vunpack.c.0.s8 %v6376
    %v6378 = vlaneseq
    %v6379 = vshrl.u32 %v6378, 7
    %v6380 = vsub.s32 %v6377, %v6379
    %v6381 = vrot.slane %v6373, %v6380
    %v6383 = vunpack.c.l.s4 1966171168
    %v6384 = vunpack.c.0.s8 %v6383
    %v6385 = vlaneseq
    %v6386 = vshrl.u32 %v6385, 7
    %v6387 = vsub.s32 %v6384, %v6386
    %v6388 = vrot.slane %v6374, %v6387
    %v6389 = vcombine.high %v6381, %v6381
    %v6390 = vcombine.high %v6388, %v6388
    %v6397 = vcombine.low %v6362, %v6363
    %v6399 = vunpack.c.l.s4 1966171168
    %v6400 = vunpack.c.0.s8 %v6399
    %v6401 = vlaneseq
    %v6402 = vshrl.u32 %v6401, 7
    %v6403 = vsub.s32 %v6400, %v6402
    %v6404 = vrot.slane %v6397, %v6403
    %v6405 = vcombine.high %v6404, %v6404
    %v6407 = vunpack.c.l.s4 1966171168
    %v6408 = vunpack.c.0.s8 %v6407
    %v6409 = vlaneseq
    %v6410 = vshrl.u32 %v6409, 7
    %v6411 = vsub.s32 %v6408, %v6410
    %v6412 = vrot.slane %v6404, %v6411
    %v6414 = vunpack.c.l.s4 1966171168
    %v6415 = vunpack.c.0.s8 %v6414
    %v6416 = vlaneseq
    %v6417 = vshrl.u32 %v6416, 7
    %v6418 = vsub.s32 %v6415, %v6417
    %v6419 = vrot.slane %v6405, %v6418
    %v6420 = vcombine.high %v6412, %v6412
    %v6421 = vcombine.high %v6419, %v6419
    %6426 = vmatprep.subr.mxu0 %v5185
    %6427 = vmatpush1.msra.mxu0 %v5184
    %6428 = vmatprep.subr.mxu0 %v5193
    %6429 = vmatpush1.msra.mxu0 %v5192
    %6430 = vmatprep.subr.mxu0 %v5201
    %6431 = vmatpush1.msra.mxu0 %v5200
    %6432 = vmatprep.subr.mxu0 %v5209
    %6433 = vmatpush1.msra.mxu0 %v5208
    %6434 = vmatprep.subr.mxu0 %v5217
    %6435 = vmatpush1.msra.mxu0 %v5216
    %6436 = vmatprep.subr.mxu0 %v5225
    %6437 = vmatpush1.msra.mxu0 %v5224
    %6438 = vmatprep.subr.mxu0 %v5233
    %6439 = vmatpush1.msra.mxu0 %v5232
    %6440 = vmatprep.subr.mxu0 %v5241
    %6441 = vmatpush1.msra.mxu0 %v5240
    %6442 = vmatprep.subr.mxu0 %v5249
    %6443 = vmatpush1.msra.mxu0 %v5248
    %6444 = vmatprep.subr.mxu0 %v5257
    %6445 = vmatpush1.msra.mxu0 %v5256
    %6446 = vmatprep.subr.mxu0 %v5265
    %6447 = vmatpush1.msra.mxu0 %v5264
    %6448 = vmatprep.subr.mxu0 %v5273
    %6449 = vmatpush1.msra.mxu0 %v5272
    %6450 = vmatprep.subr.mxu0 %v5281
    %6451 = vmatpush1.msra.mxu0 %v5280
    %6452 = vmatprep.subr.mxu0 %v5289
    %6453 = vmatpush1.msra.mxu0 %v5288
    %6454 = vmatprep.subr.mxu0 %v5297
    %6455 = vmatpush1.msra.mxu0 %v5296
    %6456 = vmatprep.subr.mxu0 %v5305
    %6457 = vmatpush1.msra.mxu0 %v5304
    %6458 = vmatprep.subr.mxu0 %v5313
    %6459 = vmatpush1.msra.mxu0 %v5312
    %6460 = vmatprep.subr.mxu0 %v5321
    %6461 = vmatpush1.msra.mxu0 %v5320
    %6462 = vmatprep.subr.mxu0 %v5329
    %6463 = vmatpush1.msra.mxu0 %v5328
    %6464 = vmatprep.subr.mxu0 %v5337
    %6465 = vmatpush1.msra.mxu0 %v5336
    %6466 = vmatprep.subr.mxu0 %v5345
    %6467 = vmatpush1.msra.mxu0 %v5344
    %6468 = vmatprep.subr.mxu0 %v5353
    %6469 = vmatpush1.msra.mxu0 %v5352
    %6470 = vmatprep.subr.mxu0 %v5361
    %6471 = vmatpush1.msra.mxu0 %v5360
    %6472 = vmatprep.subr.mxu0 %v5369
    %6473 = vmatpush1.msra.mxu0 %v5368
    %6474 = vmatprep.subr.mxu0 %v5377
    %6475 = vmatpush1.msra.mxu0 %v5376
    %6476 = vmatprep.subr.mxu0 %v5385
    %6477 = vmatpush1.msra.mxu0 %v5384
    %6478 = vmatprep.subr.mxu0 %v5393
    %6479 = vmatpush1.msra.mxu0 %v5392
    %6480 = vmatprep.subr.mxu0 %v5401
    %6481 = vmatpush1.msra.mxu0 %v5400
    %6482 = vmatprep.subr.mxu0 %v5409
    %6483 = vmatpush1.msra.mxu0 %v5408
    %6484 = vmatprep.subr.mxu0 %v5417
    %6485 = vmatpush1.msra.mxu0 %v5416
    %6486 = vmatprep.subr.mxu0 %v5425
    %6487 = vmatpush1.msra.mxu0 %v5424
    %6488 = vmatprep.subr.mxu0 %v5433
    %6489 = vmatpush1.msra.mxu0 %v5432
    %6490 = vmatprep.mubr.f32.mxu0 %v6305
    %6491 = vmatmul.mubr.f32.gmra.mrb[0].mxu0 %v6281
    %v6492 = vpop.f32.mrb[0].mxu0
    %v6493 = vadd.f32 0.0, %v6492
    %v6494 = vpop.f32.mrb[0].mxu0
    %v6495 = vadd.f32 0.0, %v6494
    %6496 = vdwg.mxu0
    %6497 = vmatprep.subr.mxu0 %v5187
    %6498 = vmatpush1.msra.mxu0 %v5186
    %6499 = vmatprep.subr.mxu0 %v5195
    %6500 = vmatpush1.msra.mxu0 %v5194
    %6501 = vmatprep.subr.mxu0 %v5203
    %6502 = vmatpush1.msra.mxu0 %v5202
    %6503 = vmatprep.subr.mxu0 %v5211
    %6504 = vmatpush1.msra.mxu0 %v5210
    %6505 = vmatprep.subr.mxu0 %v5219
    %6506 = vmatpush1.msra.mxu0 %v5218
    %6507 = vmatprep.subr.mxu0 %v5227
    %6508 = vmatpush1.msra.mxu0 %v5226
    %6509 = vmatprep.subr.mxu0 %v5235
    %6510 = vmatpush1.msra.mxu0 %v5234
    %6511 = vmatprep.subr.mxu0 %v5243
    %6512 = vmatpush1.msra.mxu0 %v5242
    %6513 = vmatprep.subr.mxu0 %v5251
    %6514 = vmatpush1.msra.mxu0 %v5250
    %6515 = vmatprep.subr.mxu0 %v5259
    %6516 = vmatpush1.msra.mxu0 %v5258
    %6517 = vmatprep.subr.mxu0 %v5267
    %6518 = vmatpush1.msra.mxu0 %v5266
    %6519 = vmatprep.subr.mxu0 %v5275
    %6520 = vmatpush1.msra.mxu0 %v5274
    %6521 = vmatprep.subr.mxu0 %v5283
    %6522 = vmatpush1.msra.mxu0 %v5282
    %6523 = vmatprep.subr.mxu0 %v5291
    %6524 = vmatpush1.msra.mxu0 %v5290
    %6525 = vmatprep.subr.mxu0 %v5299
    %6526 = vmatpush1.msra.mxu0 %v5298
    %6527 = vmatprep.subr.mxu0 %v5307
    %6528 = vmatpush1.msra.mxu0 %v5306
    %6529 = vmatprep.subr.mxu0 %v5315
    %6530 = vmatpush1.msra.mxu0 %v5314
    %6531 = vmatprep.subr.mxu0 %v5323
    %6532 = vmatpush1.msra.mxu0 %v5322
    %6533 = vmatprep.subr.mxu0 %v5331
    %6534 = vmatpush1.msra.mxu0 %v5330
    %6535 = vmatprep.subr.mxu0 %v5339
    %6536 = vmatpush1.msra.mxu0 %v5338
    %6537 = vmatprep.subr.mxu0 %v5347
    %6538 = vmatpush1.msra.mxu0 %v5346
    %6539 = vmatprep.subr.mxu0 %v5355
    %6540 = vmatpush1.msra.mxu0 %v5354
    %6541 = vmatprep.subr.mxu0 %v5363
    %6542 = vmatpush1.msra.mxu0 %v5362
    %6543 = vmatprep.subr.mxu0 %v5371
    %6544 = vmatpush1.msra.mxu0 %v5370
    %6545 = vmatprep.subr.mxu0 %v5379
    %6546 = vmatpush1.msra.mxu0 %v5378
    %6547 = vmatprep.subr.mxu0 %v5387
    %6548 = vmatpush1.msra.mxu0 %v5386
    %6549 = vmatprep.subr.mxu0 %v5395
    %6550 = vmatpush1.msra.mxu0 %v5394
    %6551 = vmatprep.subr.mxu0 %v5403
    %6552 = vmatpush1.msra.mxu0 %v5402
    %6553 = vmatprep.subr.mxu0 %v5411
    %6554 = vmatpush1.msra.mxu0 %v5410
    %6555 = vmatprep.subr.mxu0 %v5419
    %6556 = vmatpush1.msra.mxu0 %v5418
    %6557 = vmatprep.subr.mxu0 %v5427
    %6558 = vmatpush1.msra.mxu0 %v5426
    %6559 = vmatprep.subr.mxu0 %v5435
    %6560 = vmatpush1.msra.mxu0 %v5434
    %6561 = vmatprep.mubr.f32.mxu0 %v6305
    %6562 = vmatmul.mubr.f32.gmra.mrb[0].mxu0 %v6281
    %v6563 = vpop.f32.mrb[0].mxu0
    %v6564 = vadd.f32 0.0, %v6563
    %v6565 = vpop.f32.mrb[0].mxu0
    %v6566 = vadd.f32 0.0, %v6565
    %6567 = vdwg.mxu0
    %6568 = vmatprep.subr.mxu0 %v5189
    %6569 = vmatpush1.msra.mxu0 %v5188
    %6570 = vmatprep.subr.mxu0 %v5197
    %6571 = vmatpush1.msra.mxu0 %v5196
    %6572 = vmatprep.subr.mxu0 %v5205
    %6573 = vmatpush1.msra.mxu0 %v5204
    %6574 = vmatprep.subr.mxu0 %v5213
    %6575 = vmatpush1.msra.mxu0 %v5212
    %6576 = vmatprep.subr.mxu0 %v5221
    %6577 = vmatpush1.msra.mxu0 %v5220
    %6578 = vmatprep.subr.mxu0 %v5229
    %6579 = vmatpush1.msra.mxu0 %v5228
    %6580 = vmatprep.subr.mxu0 %v5237
    %6581 = vmatpush1.msra.mxu0 %v5236
    %6582 = vmatprep.subr.mxu0 %v5245
    %6583 = vmatpush1.msra.mxu0 %v5244
    %6584 = vmatprep.subr.mxu0 %v5253
    %6585 = vmatpush1.msra.mxu0 %v5252
    %6586 = vmatprep.subr.mxu0 %v5261
    %6587 = vmatpush1.msra.mxu0 %v5260
    %6588 = vmatprep.subr.mxu0 %v5269
    %6589 = vmatpush1.msra.mxu0 %v5268
    %6590 = vmatprep.subr.mxu0 %v5277
    %6591 = vmatpush1.msra.mxu0 %v5276
    %6592 = vmatprep.subr.mxu0 %v5285
    %6593 = vmatpush1.msra.mxu0 %v5284
    %6594 = vmatprep.subr.mxu0 %v5293
    %6595 = vmatpush1.msra.mxu0 %v5292
    %6596 = vmatprep.subr.mxu0 %v5301
    %6597 = vmatpush1.msra.mxu0 %v5300
    %6598 = vmatprep.subr.mxu0 %v5309
    %6599 = vmatpush1.msra.mxu0 %v5308
    %6600 = vmatprep.subr.mxu0 %v5317
    %6601 = vmatpush1.msra.mxu0 %v5316
    %6602 = vmatprep.subr.mxu0 %v5325
    %6603 = vmatpush1.msra.mxu0 %v5324
    %6604 = vmatprep.subr.mxu0 %v5333
    %6605 = vmatpush1.msra.mxu0 %v5332
    %6606 = vmatprep.subr.mxu0 %v5341
    %6607 = vmatpush1.msra.mxu0 %v5340
    %6608 = vmatprep.subr.mxu0 %v5349
    %6609 = vmatpush1.msra.mxu0 %v5348
    %6610 = vmatprep.subr.mxu0 %v5357
    %6611 = vmatpush1.msra.mxu0 %v5356
    %6612 = vmatprep.subr.mxu0 %v5365
    %6613 = vmatpush1.msra.mxu0 %v5364
    %6614 = vmatprep.subr.mxu0 %v5373
    %6615 = vmatpush1.msra.mxu0 %v5372
    %6616 = vmatprep.subr.mxu0 %v5381
    %6617 = vmatpush1.msra.mxu0 %v5380
    %6618 = vmatprep.subr.mxu0 %v5389
    %6619 = vmatpush1.msra.mxu0 %v5388
    %6620 = vmatprep.subr.mxu0 %v5397
    %6621 = vmatpush1.msra.mxu0 %v5396
    %6622 = vmatprep.subr.mxu0 %v5405
    %6623 = vmatpush1.msra.mxu0 %v5404
    %6624 = vmatprep.subr.mxu0 %v5413
    %6625 = vmatpush1.msra.mxu0 %v5412
    %6626 = vmatprep.subr.mxu0 %v5421
    %6627 = vmatpush1.msra.mxu0 %v5420
    %6628 = vmatprep.subr.mxu0 %v5429
    %6629 = vmatpush1.msra.mxu0 %v5428
    %6630 = vmatprep.subr.mxu0 %v5437
    %6631 = vmatpush1.msra.mxu0 %v5436
    %6632 = vmatprep.mubr.f32.mxu0 %v6305
    %6633 = vmatmul.mubr.f32.gmra.mrb[0].mxu0 %v6281
    %v6634 = vpop.f32.mrb[0].mxu0
    %v6635 = vadd.f32 0.0, %v6634
    %v6636 = vpop.f32.mrb[0].mxu0
    %v6637 = vadd.f32 0.0, %v6636
    %6638 = vdwg.mxu0
    %6639 = vmatprep.subr.mxu0 %v5191
    %6640 = vmatpush1.msra.mxu0 %v5190
    %6641 = vmatprep.subr.mxu0 %v5199
    %6642 = vmatpush1.msra.mxu0 %v5198
    %6643 = vmatprep.subr.mxu0 %v5207
    %6644 = vmatpush1.msra.mxu0 %v5206
    %6645 = vmatprep.subr.mxu0 %v5215
    %6646 = vmatpush1.msra.mxu0 %v5214
    %6647 = vmatprep.subr.mxu0 %v5223
    %6648 = vmatpush1.msra.mxu0 %v5222
    %6649 = vmatprep.subr.mxu0 %v5231
    %6650 = vmatpush1.msra.mxu0 %v5230
    %6651 = vmatprep.subr.mxu0 %v5239
    %6652 = vmatpush1.msra.mxu0 %v5238
    %6653 = vmatprep.subr.mxu0 %v5247
    %6654 = vmatpush1.msra.mxu0 %v5246
    %6655 = vmatprep.subr.mxu0 %v5255
    %6656 = vmatpush1.msra.mxu0 %v5254
    %6657 = vmatprep.subr.mxu0 %v5263
    %6658 = vmatpush1.msra.mxu0 %v5262
    %6659 = vmatprep.subr.mxu0 %v5271
    %6660 = vmatpush1.msra.mxu0 %v5270
    %6661 = vmatprep.subr.mxu0 %v5279
    %6662 = vmatpush1.msra.mxu0 %v5278
    %6663 = vmatprep.subr.mxu0 %v5287
    %6664 = vmatpush1.msra.mxu0 %v5286
    %6665 = vmatprep.subr.mxu0 %v5295
    %6666 = vmatpush1.msra.mxu0 %v5294
    %6667 = vmatprep.subr.mxu0 %v5303
    %6668 = vmatpush1.msra.mxu0 %v5302
    %6669 = vmatprep.subr.mxu0 %v5311
    %6670 = vmatpush1.msra.mxu0 %v5310
    %6671 = vmatprep.subr.mxu0 %v5319
    %6672 = vmatpush1.msra.mxu0 %v5318
    %6673 = vmatprep.subr.mxu0 %v5327
    %6674 = vmatpush1.msra.mxu0 %v5326
    %6675 = vmatprep.subr.mxu0 %v5335
    %6676 = vmatpush1.msra.mxu0 %v5334
    %6677 = vmatprep.subr.mxu0 %v5343
    %6678 = vmatpush1.msra.mxu0 %v5342
    %6679 = vmatprep.subr.mxu0 %v5351
    %6680 = vmatpush1.msra.mxu0 %v5350
    %6681 = vmatprep.subr.mxu0 %v5359
    %6682 = vmatpush1.msra.mxu0 %v5358
    %6683 = vmatprep.subr.mxu0 %v5367
    %6684 = vmatpush1.msra.mxu0 %v5366
    %6685 = vmatprep.subr.mxu0 %v5375
    %6686 = vmatpush1.msra.mxu0 %v5374
    %6687 = vmatprep.subr.mxu0 %v5383
    %6688 = vmatpush1.msra.mxu0 %v5382
    %6689 = vmatprep.subr.mxu0 %v5391
    %6690 = vmatpush1.msra.mxu0 %v5390
    %6691 = vmatprep.subr.mxu0 %v5399
    %6692 = vmatpush1.msra.mxu0 %v5398
    %6693 = vmatprep.subr.mxu0 %v5407
    %6694 = vmatpush1.msra.mxu0 %v5406
    %6695 = vmatprep.subr.mxu0 %v5415
    %6696 = vmatpush1.msra.mxu0 %v5414
    %6697 = vmatprep.subr.mxu0 %v5423
    %6698 = vmatpush1.msra.mxu0 %v5422
    %6699 = vmatprep.subr.mxu0 %v5431
    %6700 = vmatpush1.msra.mxu0 %v5430
    %6701 = vmatprep.subr.mxu0 %v5439
    %6702 = vmatpush1.msra.mxu0 %v5438
    %6703 = vmatprep.mubr.f32.mxu0 %v6305
    %6704 = vmatmul.mubr.f32.gmra.mrb[0].mxu0 %v6281
    %v6705 = vpop.f32.mrb[0].mxu0
    %v6706 = vadd.f32 0.0, %v6705
    %v6707 = vpop.f32.mrb[0].mxu0
    %v6708 = vadd.f32 0.0, %v6707
    %6709 = vdwg.mxu0
    %v6710 = vadd.f32 %v6381, %v6493
    %v6711 = vadd.f32 %v6388, %v6495
    %v6712 = vadd.f32 %v6389, %v6564
    %v6713 = vadd.f32 %v6390, %v6566
    %v6714 = vadd.f32 %v6412, %v6635
    %v6715 = vadd.f32 %v6419, %v6637
    %v6716 = vadd.f32 %v6420, %v6706
    %v6717 = vadd.f32 %v6421, %v6708
    %v6718 = vxor.u32 %v6710, 2147483648
    %v6719 = vxor.u32 %v6711, 2147483648
    %v6720 = vxor.u32 %v6712, 2147483648
    %v6721 = vmul.f32 %v6718, 1.442695
    %v6722 = vpow.pop %v6721
    %v6723 = vmul.f32 %v6719, 1.442695
    %v6724 = vpow.pop %v6723
    %v6725 = vmul.f32 %v6720, 1.442695
    %v6726 = vpow.pop %v6725
    %v6727 = vadd.f32 %v6722, 1.0
    %v6728 = vadd.f32 %v6724, 1.0
    %v6729 = vadd.f32 %v6726, 1.0
    %v6730 = vrcp.pop %v6727
    %v6731 = vmul.f32 1.0, %v6730
    %v6732 = vrcp.pop %v6728
    %v6733 = vmul.f32 1.0, %v6732
    %v6734 = vrcp.pop %v6729
    %v6735 = vmul.f32 1.0, %v6734
    %v6736 = vtanh.pop %v6713
    %v6737 = vmul.f32 %v6733, %v6279
    %v6738 = vmul.f32 %v6731, %v6736
    %v6739 = vadd.f32 %v6737, %v6738
    %v6740 = vtanh.pop %v6739
    %v6741 = vmul.f32 %v6735, %v6740
    %v6742 = vxor.u32 %v6714, 2147483648
    %v6743 = vxor.u32 %v6715, 2147483648
    %v6744 = vxor.u32 %v6716, 2147483648
    %v6745 = vmul.f32 %v6742, 1.442695
    %v6746 = vpow.pop %v6745
    %v6747 = vmul.f32 %v6743, 1.442695
    %v6748 = vpow.pop %v6747
    %v6749 = vmul.f32 %v6744, 1.442695
    %v6750 = vpow.pop %v6749
    %v6751 = vadd.f32 %v6746, 1.0
    %v6752 = vadd.f32 %v6748, 1.0
    %v6753 = vadd.f32 %v6750, 1.0
    %v6754 = vrcp.pop %v6751
    %v6755 = vmul.f32 1.0, %v6754
    %v6756 = vrcp.pop %v6752
    %v6757 = vmul.f32 1.0, %v6756
    %v6758 = vrcp.pop %v6753
    %v6759 = vmul.f32 1.0, %v6758
    %v6760 = vtanh.pop %v6717
    %v6761 = vmul.f32 %v6757, %v6303
    %v6762 = vmul.f32 %v6755, %v6760
    %v6763 = vadd.f32 %v6761, %v6762
    %v6764 = vtanh.pop %v6763
    %v6765 = vmul.f32 %v6759, %v6764
    %v6768 = vunpack.c.l.s4 1966171168
    %v6769 = vunpack.c.0.s8 %v6768
    %v6770 = vlaneseq
    %v6771 = vshrl.u32 %v6770, 7
    %v6772 = vsub.s32 %v6769, %v6771
    %v6773 = vrot.slane %v6741, %v6772
    %v6774 = vcombine.high %v6773, %v6773
    %v6776 = vunpack.c.l.s4 1966171168
    %v6777 = vunpack.c.0.s8 %v6776
    %v6778 = vlaneseq
    %v6779 = vshrl.u32 %v6778, 7
    %v6780 = vsub.s32 %v6777, %v6779
    %v6781 = vrot.slane %v6773, %v6780
    %v6783 = vunpack.c.l.s4 1966171168
    %v6784 = vunpack.c.0.s8 %v6783
    %v6785 = vlaneseq
    %v6786 = vshrl.u32 %v6785, 7
    %v6787 = vsub.s32 %v6784, %v6786
    %v6788 = vrot.slane %v6774, %v6787
    %6791 = vst [vmem:[#allocation3 + $0x2] sm:$0x1] %v6781
    %6792 = vst [vmem:[#allocation3 + $0x12] sm:$0x1] %v6788
    %v6795 = vunpack.c.l.s4 1966171168
    %v6796 = vunpack.c.0.s8 %v6795
    %v6797 = vlaneseq
    %v6798 = vshrl.u32 %v6797, 7
    %v6799 = vsub.s32 %v6796, %v6798
    %v6800 = vrot.slane %v6765, %v6799
    %v6801 = vcombine.high %v6800, %v6800
    %v6803 = vunpack.c.l.s4 1966171168
    %v6804 = vunpack.c.0.s8 %v6803
    %v6805 = vlaneseq
    %v6806 = vshrl.u32 %v6805, 7
    %v6807 = vsub.s32 %v6804, %v6806
    %v6808 = vrot.slane %v6800, %v6807
    %v6810 = vunpack.c.l.s4 1966171168
    %v6811 = vunpack.c.0.s8 %v6810
    %v6812 = vlaneseq
    %v6813 = vshrl.u32 %v6812, 7
    %v6814 = vsub.s32 %v6811, %v6813
    %v6815 = vrot.slane %v6801, %v6814
    %6818 = vst [vmem:[#allocation3 + $0xd] sm:$0x1] %v6808
    %6819 = vst [vmem:[#allocation3 + $0x1d] sm:$0x1] %v6815
    %v6820 = vld [vmem:[%s2238] ss:$8 sm:$0xf]
    %v6821 = vld [vmem:[%s2240] ss:$8 sm:$0xf]
    %v6822 = vld [vmem:[%s2242] ss:$8 sm:$0xf]
    %v6823 = vld [vmem:[%s2244] ss:$8 sm:$0xf]
    %v6826 = vcombine.low %v6820, %v6821
    %v6828 = vunpack.c.l.s4 1966171168
    %v6829 = vunpack.c.0.s8 %v6828
    %v6830 = vlaneseq
    %v6831 = vshrl.u32 %v6830, 7
    %v6832 = vsub.s32 %v6829, %v6831
    %v6833 = vrot.slane %v6826, %v6832
    %v6834 = vcombine.high %v6833, %v6833
    %v6836 = vunpack.c.l.s4 1966171168
    %v6837 = vunpack.c.0.s8 %v6836
    %v6838 = vlaneseq
    %v6839 = vshrl.u32 %v6838, 7
    %v6840 = vsub.s32 %v6837, %v6839
    %v6841 = vrot.slane %v6833, %v6840
    %v6843 = vunpack.c.l.s4 1966171168
    %v6844 = vunpack.c.0.s8 %v6843
    %v6845 = vlaneseq
    %v6846 = vshrl.u32 %v6845, 7
    %v6847 = vsub.s32 %v6844, %v6846
    %v6848 = vrot.slane %v6834, %v6847
    %v6849 = vcombine.high %v6841, %v6841
    %v6850 = vcombine.high %v6848, %v6848
    %v6857 = vcombine.low %v6822, %v6823
    %v6859 = vunpack.c.l.s4 1966171168
    %v6860 = vunpack.c.0.s8 %v6859
    %v6861 = vlaneseq
    %v6862 = vshrl.u32 %v6861, 7
    %v6863 = vsub.s32 %v6860, %v6862
    %v6864 = vrot.slane %v6857, %v6863
    %v6865 = vcombine.high %v6864, %v6864
    %v6867 = vunpack.c.l.s4 1966171168
    %v6868 = vunpack.c.0.s8 %v6867
    %v6869 = vlaneseq
    %v6870 = vshrl.u32 %v6869, 7
    %v6871 = vsub.s32 %v6868, %v6870
    %v6872 = vrot.slane %v6864, %v6871
    %v6874 = vunpack.c.l.s4 1966171168
    %v6875 = vunpack.c.0.s8 %v6874
    %v6876 = vlaneseq
    %v6877 = vshrl.u32 %v6876, 7
    %v6878 = vsub.s32 %v6875, %v6877
    %v6879 = vrot.slane %v6865, %v6878
    %v6880 = vcombine.high %v6872, %v6872
    %v6881 = vcombine.high %v6879, %v6879
    %6886 = vmatprep.subr.mxu0 %v5185
    %6887 = vmatpush1.msra.mxu0 %v5184
    %6888 = vmatprep.subr.mxu0 %v5193
    %6889 = vmatpush1.msra.mxu0 %v5192
    %6890 = vmatprep.subr.mxu0 %v5201
    %6891 = vmatpush1.msra.mxu0 %v5200
    %6892 = vmatprep.subr.mxu0 %v5209
    %6893 = vmatpush1.msra.mxu0 %v5208
    %6894 = vmatprep.subr.mxu0 %v5217
    %6895 = vmatpush1.msra.mxu0 %v5216
    %6896 = vmatprep.subr.mxu0 %v5225
    %6897 = vmatpush1.msra.mxu0 %v5224
    %6898 = vmatprep.subr.mxu0 %v5233
    %6899 = vmatpush1.msra.mxu0 %v5232
    %6900 = vmatprep.subr.mxu0 %v5241
    %6901 = vmatpush1.msra.mxu0 %v5240
    %6902 = vmatprep.subr.mxu0 %v5249
    %6903 = vmatpush1.msra.mxu0 %v5248
    %6904 = vmatprep.subr.mxu0 %v5257
    %6905 = vmatpush1.msra.mxu0 %v5256
    %6906 = vmatprep.subr.mxu0 %v5265
    %6907 = vmatpush1.msra.mxu0 %v5264
    %6908 = vmatprep.subr.mxu0 %v5273
    %6909 = vmatpush1.msra.mxu0 %v5272
    %6910 = vmatprep.subr.mxu0 %v5281
    %6911 = vmatpush1.msra.mxu0 %v5280
    %6912 = vmatprep.subr.mxu0 %v5289
    %6913 = vmatpush1.msra.mxu0 %v5288
    %6914 = vmatprep.subr.mxu0 %v5297
    %6915 = vmatpush1.msra.mxu0 %v5296
    %6916 = vmatprep.subr.mxu0 %v5305
    %6917 = vmatpush1.msra.mxu0 %v5304
    %6918 = vmatprep.subr.mxu0 %v5313
    %6919 = vmatpush1.msra.mxu0 %v5312
    %6920 = vmatprep.subr.mxu0 %v5321
    %6921 = vmatpush1.msra.mxu0 %v5320
    %6922 = vmatprep.subr.mxu0 %v5329
    %6923 = vmatpush1.msra.mxu0 %v5328
    %6924 = vmatprep.subr.mxu0 %v5337
    %6925 = vmatpush1.msra.mxu0 %v5336
    %6926 = vmatprep.subr.mxu0 %v5345
    %6927 = vmatpush1.msra.mxu0 %v5344
    %6928 = vmatprep.subr.mxu0 %v5353
    %6929 = vmatpush1.msra.mxu0 %v5352
    %6930 = vmatprep.subr.mxu0 %v5361
    %6931 = vmatpush1.msra.mxu0 %v5360
    %6932 = vmatprep.subr.mxu0 %v5369
    %6933 = vmatpush1.msra.mxu0 %v5368
    %6934 = vmatprep.subr.mxu0 %v5377
    %6935 = vmatpush1.msra.mxu0 %v5376
    %6936 = vmatprep.subr.mxu0 %v5385
    %6937 = vmatpush1.msra.mxu0 %v5384
    %6938 = vmatprep.subr.mxu0 %v5393
    %6939 = vmatpush1.msra.mxu0 %v5392
    %6940 = vmatprep.subr.mxu0 %v5401
    %6941 = vmatpush1.msra.mxu0 %v5400
    %6942 = vmatprep.subr.mxu0 %v5409
    %6943 = vmatpush1.msra.mxu0 %v5408
    %6944 = vmatprep.subr.mxu0 %v5417
    %6945 = vmatpush1.msra.mxu0 %v5416
    %6946 = vmatprep.subr.mxu0 %v5425
    %6947 = vmatpush1.msra.mxu0 %v5424
    %6948 = vmatprep.subr.mxu0 %v5433
    %6949 = vmatpush1.msra.mxu0 %v5432
    %6950 = vmatprep.mubr.f32.mxu0 %v6765
    %6951 = vmatmul.mubr.f32.gmra.mrb[0].mxu0 %v6741
    %v6952 = vpop.f32.mrb[0].mxu0
    %v6953 = vadd.f32 0.0, %v6952
    %v6954 = vpop.f32.mrb[0].mxu0
    %v6955 = vadd.f32 0.0, %v6954
    %6956 = vdwg.mxu0
    %6957 = vmatprep.subr.mxu0 %v5187
    %6958 = vmatpush1.msra.mxu0 %v5186
    %6959 = vmatprep.subr.mxu0 %v5195
    %6960 = vmatpush1.msra.mxu0 %v5194
    %6961 = vmatprep.subr.mxu0 %v5203
    %6962 = vmatpush1.msra.mxu0 %v5202
    %6963 = vmatprep.subr.mxu0 %v5211
    %6964 = vmatpush1.msra.mxu0 %v5210
    %6965 = vmatprep.subr.mxu0 %v5219
    %6966 = vmatpush1.msra.mxu0 %v5218
    %6967 = vmatprep.subr.mxu0 %v5227
    %6968 = vmatpush1.msra.mxu0 %v5226
    %6969 = vmatprep.subr.mxu0 %v5235
    %6970 = vmatpush1.msra.mxu0 %v5234
    %6971 = vmatprep.subr.mxu0 %v5243
    %6972 = vmatpush1.msra.mxu0 %v5242
    %6973 = vmatprep.subr.mxu0 %v5251
    %6974 = vmatpush1.msra.mxu0 %v5250
    %6975 = vmatprep.subr.mxu0 %v5259
    %6976 = vmatpush1.msra.mxu0 %v5258
    %6977 = vmatprep.subr.mxu0 %v5267
    %6978 = vmatpush1.msra.mxu0 %v5266
    %6979 = vmatprep.subr.mxu0 %v5275
    %6980 = vmatpush1.msra.mxu0 %v5274
    %6981 = vmatprep.subr.mxu0 %v5283
    %6982 = vmatpush1.msra.mxu0 %v5282
    %6983 = vmatprep.subr.mxu0 %v5291
    %6984 = vmatpush1.msra.mxu0 %v5290
    %6985 = vmatprep.subr.mxu0 %v5299
    %6986 = vmatpush1.msra.mxu0 %v5298
    %6987 = vmatprep.subr.mxu0 %v5307
    %6988 = vmatpush1.msra.mxu0 %v5306
    %6989 = vmatprep.subr.mxu0 %v5315
    %6990 = vmatpush1.msra.mxu0 %v5314
    %6991 = vmatprep.subr.mxu0 %v5323
    %6992 = vmatpush1.msra.mxu0 %v5322
    %6993 = vmatprep.subr.mxu0 %v5331
    %6994 = vmatpush1.msra.mxu0 %v5330
    %6995 = vmatprep.subr.mxu0 %v5339
    %6996 = vmatpush1.msra.mxu0 %v5338
    %6997 = vmatprep.subr.mxu0 %v5347
    %6998 = vmatpush1.msra.mxu0 %v5346
    %6999 = vmatprep.subr.mxu0 %v5355
    %7000 = vmatpush1.msra.mxu0 %v5354
    %7001 = vmatprep.subr.mxu0 %v5363
    %7002 = vmatpush1.msra.mxu0 %v5362
    %7003 = vmatprep.subr.mxu0 %v5371
    %7004 = vmatpush1.msra.mxu0 %v5370
    %7005 = vmatprep.subr.mxu0 %v5379
    %7006 = vmatpush1.msra.mxu0 %v5378
    %7007 = vmatprep.subr.mxu0 %v5387
    %7008 = vmatpush1.msra.mxu0 %v5386
    %7009 = vmatprep.subr.mxu0 %v5395
    %7010 = vmatpush1.msra.mxu0 %v5394
    %7011 = vmatprep.subr.mxu0 %v5403
    %7012 = vmatpush1.msra.mxu0 %v5402
    %7013 = vmatprep.subr.mxu0 %v5411
    %7014 = vmatpush1.msra.mxu0 %v5410
    %7015 = vmatprep.subr.mxu0 %v5419
    %7016 = vmatpush1.msra.mxu0 %v5418
    %7017 = vmatprep.subr.mxu0 %v5427
    %7018 = vmatpush1.msra.mxu0 %v5426
    %7019 = vmatprep.subr.mxu0 %v5435
    %7020 = vmatpush1.msra.mxu0 %v5434
    %7021 = vmatprep.mubr.f32.mxu0 %v6765
    %7022 = vmatmul.mubr.f32.gmra.mrb[0].mxu0 %v6741
    %v7023 = vpop.f32.mrb[0].mxu0
    %v7024 = vadd.f32 0.0, %v7023
    %v7025 = vpop.f32.mrb[0].mxu0
    %v7026 = vadd.f32 0.0, %v7025
    %7027 = vdwg.mxu0
    %7028 = vmatprep.subr.mxu0 %v5189
    %7029 = vmatpush1.msra.mxu0 %v5188
    %7030 = vmatprep.subr.mxu0 %v5197
    %7031 = vmatpush1.msra.mxu0 %v5196
    %7032 = vmatprep.subr.mxu0 %v5205
    %7033 = vmatpush1.msra.mxu0 %v5204
    %7034 = vmatprep.subr.mxu0 %v5213
    %7035 = vmatpush1.msra.mxu0 %v5212
    %7036 = vmatprep.subr.mxu0 %v5221
    %7037 = vmatpush1.msra.mxu0 %v5220
    %7038 = vmatprep.subr.mxu0 %v5229
    %7039 = vmatpush1.msra.mxu0 %v5228
    %7040 = vmatprep.subr.mxu0 %v5237
    %7041 = vmatpush1.msra.mxu0 %v5236
    %7042 = vmatprep.subr.mxu0 %v5245
    %7043 = vmatpush1.msra.mxu0 %v5244
    %7044 = vmatprep.subr.mxu0 %v5253
    %7045 = vmatpush1.msra.mxu0 %v5252
    %7046 = vmatprep.subr.mxu0 %v5261
    %7047 = vmatpush1.msra.mxu0 %v5260
    %7048 = vmatprep.subr.mxu0 %v5269
    %7049 = vmatpush1.msra.mxu0 %v5268
    %7050 = vmatprep.subr.mxu0 %v5277
    %7051 = vmatpush1.msra.mxu0 %v5276
    %7052 = vmatprep.subr.mxu0 %v5285
    %7053 = vmatpush1.msra.mxu0 %v5284
    %7054 = vmatprep.subr.mxu0 %v5293
    %7055 = vmatpush1.msra.mxu0 %v5292
    %7056 = vmatprep.subr.mxu0 %v5301
    %7057 = vmatpush1.msra.mxu0 %v5300
    %7058 = vmatprep.subr.mxu0 %v5309
    %7059 = vmatpush1.msra.mxu0 %v5308
    %7060 = vmatprep.subr.mxu0 %v5317
    %7061 = vmatpush1.msra.mxu0 %v5316
    %7062 = vmatprep.subr.mxu0 %v5325
    %7063 = vmatpush1.msra.mxu0 %v5324
    %7064 = vmatprep.subr.mxu0 %v5333
    %7065 = vmatpush1.msra.mxu0 %v5332
    %7066 = vmatprep.subr.mxu0 %v5341
    %7067 = vmatpush1.msra.mxu0 %v5340
    %7068 = vmatprep.subr.mxu0 %v5349
    %7069 = vmatpush1.msra.mxu0 %v5348
    %7070 = vmatprep.subr.mxu0 %v5357
    %7071 = vmatpush1.msra.mxu0 %v5356
    %7072 = vmatprep.subr.mxu0 %v5365
    %7073 = vmatpush1.msra.mxu0 %v5364
    %7074 = vmatprep.subr.mxu0 %v5373
    %7075 = vmatpush1.msra.mxu0 %v5372
    %7076 = vmatprep.subr.mxu0 %v5381
    %7077 = vmatpush1.msra.mxu0 %v5380
    %7078 = vmatprep.subr.mxu0 %v5389
    %7079 = vmatpush1.msra.mxu0 %v5388
    %7080 = vmatprep.subr.mxu0 %v5397
    %7081 = vmatpush1.msra.mxu0 %v5396
    %7082 = vmatprep.subr.mxu0 %v5405
    %7083 = vmatpush1.msra.mxu0 %v5404
    %7084 = vmatprep.subr.mxu0 %v5413
    %7085 = vmatpush1.msra.mxu0 %v5412
    %7086 = vmatprep.subr.mxu0 %v5421
    %7087 = vmatpush1.msra.mxu0 %v5420
    %7088 = vmatprep.subr.mxu0 %v5429
    %7089 = vmatpush1.msra.mxu0 %v5428
    %7090 = vmatprep.subr.mxu0 %v5437
    %7091 = vmatpush1.msra.mxu0 %v5436
    %7092 = vmatprep.mubr.f32.mxu0 %v6765
    %7093 = vmatmul.mubr.f32.gmra.mrb[0].mxu0 %v6741
    %v7094 = vpop.f32.mrb[0].mxu0
    %v7095 = vadd.f32 0.0, %v7094
    %v7096 = vpop.f32.mrb[0].mxu0
    %v7097 = vadd.f32 0.0, %v7096
    %7098 = vdwg.mxu0
    %7099 = vmatprep.subr.mxu0 %v5191
    %7100 = vmatpush1.msra.mxu0 %v5190
    %7101 = vmatprep.subr.mxu0 %v5199
    %7102 = vmatpush1.msra.mxu0 %v5198
    %7103 = vmatprep.subr.mxu0 %v5207
    %7104 = vmatpush1.msra.mxu0 %v5206
    %7105 = vmatprep.subr.mxu0 %v5215
    %7106 = vmatpush1.msra.mxu0 %v5214
    %7107 = vmatprep.subr.mxu0 %v5223
    %7108 = vmatpush1.msra.mxu0 %v5222
    %7109 = vmatprep.subr.mxu0 %v5231
    %7110 = vmatpush1.msra.mxu0 %v5230
    %7111 = vmatprep.subr.mxu0 %v5239
    %7112 = vmatpush1.msra.mxu0 %v5238
    %7113 = vmatprep.subr.mxu0 %v5247
    %7114 = vmatpush1.msra.mxu0 %v5246
    %7115 = vmatprep.subr.mxu0 %v5255
    %7116 = vmatpush1.msra.mxu0 %v5254
    %7117 = vmatprep.subr.mxu0 %v5263
    %7118 = vmatpush1.msra.mxu0 %v5262
    %7119 = vmatprep.subr.mxu0 %v5271
    %7120 = vmatpush1.msra.mxu0 %v5270
    %7121 = vmatprep.subr.mxu0 %v5279
    %7122 = vmatpush1.msra.mxu0 %v5278
    %7123 = vmatprep.subr.mxu0 %v5287
    %7124 = vmatpush1.msra.mxu0 %v5286
    %7125 = vmatprep.subr.mxu0 %v5295
    %7126 = vmatpush1.msra.mxu0 %v5294
    %7127 = vmatprep.subr.mxu0 %v5303
    %7128 = vmatpush1.msra.mxu0 %v5302
    %7129 = vmatprep.subr.mxu0 %v5311
    %7130 = vmatpush1.msra.mxu0 %v5310
    %7131 = vmatprep.subr.mxu0 %v5319
    %7132 = vmatpush1.msra.mxu0 %v5318
    %7133 = vmatprep.subr.mxu0 %v5327
    %7134 = vmatpush1.msra.mxu0 %v5326
    %7135 = vmatprep.subr.mxu0 %v5335
    %7136 = vmatpush1.msra.mxu0 %v5334
    %7137 = vmatprep.subr.mxu0 %v5343
    %7138 = vmatpush1.msra.mxu0 %v5342
    %7139 = vmatprep.subr.mxu0 %v5351
    %7140 = vmatpush1.msra.mxu0 %v5350
    %7141 = vmatprep.subr.mxu0 %v5359
    %7142 = vmatpush1.msra.mxu0 %v5358
    %7143 = vmatprep.subr.mxu0 %v5367
    %7144 = vmatpush1.msra.mxu0 %v5366
    %7145 = vmatprep.subr.mxu0 %v5375
    %7146 = vmatpush1.msra.mxu0 %v5374
    %7147 = vmatprep.subr.mxu0 %v5383
    %7148 = vmatpush1.msra.mxu0 %v5382
    %7149 = vmatprep.subr.mxu0 %v5391
    %7150 = vmatpush1.msra.mxu0 %v5390
    %7151 = vmatprep.subr.mxu0 %v5399
    %7152 = vmatpush1.msra.mxu0 %v5398
    %7153 = vmatprep.subr.mxu0 %v5407
    %7154 = vmatpush1.msra.mxu0 %v5406
    %7155 = vmatprep.subr.mxu0 %v5415
    %7156 = vmatpush1.msra.mxu0 %v5414
    %7157 = vmatprep.subr.mxu0 %v5423
    %7158 = vmatpush1.msra.mxu0 %v5422
    %7159 = vmatprep.subr.mxu0 %v5431
    %7160 = vmatpush1.msra.mxu0 %v5430
    %7161 = vmatprep.subr.mxu0 %v5439
    %7162 = vmatpush1.msra.mxu0 %v5438
    %7163 = vmatprep.mubr.f32.mxu0 %v6765
    %7164 = vmatmul.mubr.f32.gmra.mrb[0].mxu0 %v6741
    %v7165 = vpop.f32.mrb[0].mxu0
    %v7166 = vadd.f32 0.0, %v7165
    %v7167 = vpop.f32.mrb[0].mxu0
    %v7168 = vadd.f32 0.0, %v7167
    %7169 = vdwg.mxu0
    %v7170 = vadd.f32 %v6841, %v6953
    %v7171 = vadd.f32 %v6848, %v6955
    %v7172 = vadd.f32 %v6849, %v7024
    %v7173 = vadd.f32 %v6850, %v7026
    %v7174 = vadd.f32 %v6872, %v7095
    %v7175 = vadd.f32 %v6879, %v7097
    %v7176 = vadd.f32 %v6880, %v7166
    %v7177 = vadd.f32 %v6881, %v7168
    %v7178 = vxor.u32 %v7170, 2147483648
    %v7179 = vxor.u32 %v7171, 2147483648
    %v7180 = vxor.u32 %v7172, 2147483648
    %v7181 = vmul.f32 %v7178, 1.442695
    %v7182 = vpow.pop %v7181
    %v7183 = vmul.f32 %v7179, 1.442695
    %v7184 = vpow.pop %v7183
    %v7185 = vmul.f32 %v7180, 1.442695
    %v7186 = vpow.pop %v7185
    %v7187 = vadd.f32 %v7182, 1.0
    %v7188 = vadd.f32 %v7184, 1.0
    %v7189 = vadd.f32 %v7186, 1.0
    %v7190 = vrcp.pop %v7187
    %v7191 = vmul.f32 1.0, %v7190
    %v7192 = vrcp.pop %v7188
    %v7193 = vmul.f32 1.0, %v7192
    %v7194 = vrcp.pop %v7189
    %v7195 = vmul.f32 1.0, %v7194
    %v7196 = vtanh.pop %v7173
    %v7197 = vmul.f32 %v7193, %v6739
    %v7198 = vmul.f32 %v7191, %v7196
    %v7199 = vadd.f32 %v7197, %v7198
    %v7200 = vtanh.pop %v7199
    %v7201 = vmul.f32 %v7195, %v7200
    %v7202 = vxor.u32 %v7174, 2147483648
    %v7203 = vxor.u32 %v7175, 2147483648
    %v7204 = vxor.u32 %v7176, 2147483648
    %v7205 = vmul.f32 %v7202, 1.442695
    %v7206 = vpow.pop %v7205
    %v7207 = vmul.f32 %v7203, 1.442695
    %v7208 = vpow.pop %v7207
    %v7209 = vmul.f32 %v7204, 1.442695
    %v7210 = vpow.pop %v7209
    %v7211 = vadd.f32 %v7206, 1.0
    %v7212 = vadd.f32 %v7208, 1.0
    %v7213 = vadd.f32 %v7210, 1.0
    %v7214 = vrcp.pop %v7211
    %v7215 = vmul.f32 1.0, %v7214
    %v7216 = vrcp.pop %v7212
    %v7217 = vmul.f32 1.0, %v7216
    %v7218 = vrcp.pop %v7213
    %v7219 = vmul.f32 1.0, %v7218
    %v7220 = vtanh.pop %v7177
    %v7221 = vmul.f32 %v7217, %v6763
    %v7222 = vmul.f32 %v7215, %v7220
    %v7223 = vadd.f32 %v7221, %v7222
    %v7224 = vtanh.pop %v7223
    %v7225 = vmul.f32 %v7219, %v7224
    %v7228 = vunpack.c.l.s4 1966171168
    %v7229 = vunpack.c.0.s8 %v7228
    %v7230 = vlaneseq
    %v7231 = vshrl.u32 %v7230, 7
    %v7232 = vsub.s32 %v7229, %v7231
    %v7233 = vrot.slane %v7201, %v7232
    %v7234 = vcombine.high %v7233, %v7233
    %v7236 = vunpack.c.l.s4 1966171168
    %v7237 = vunpack.c.0.s8 %v7236
    %v7238 = vlaneseq
    %v7239 = vshrl.u32 %v7238, 7
    %v7240 = vsub.s32 %v7237, %v7239
    %v7241 = vrot.slane %v7233, %v7240
    %v7243 = vunpack.c.l.s4 1966171168
    %v7244 = vunpack.c.0.s8 %v7243
    %v7245 = vlaneseq
    %v7246 = vshrl.u32 %v7245, 7
    %v7247 = vsub.s32 %v7244, %v7246
    %v7248 = vrot.slane %v7234, %v7247
    %7251 = vst [vmem:[#allocation3 + $0x3] sm:$0x1] %v7241
    %7252 = vst [vmem:[#allocation3 + $0x13] sm:$0x1] %v7248
    %v7255 = vunpack.c.l.s4 1966171168
    %v7256 = vunpack.c.0.s8 %v7255
    %v7257 = vlaneseq
    %v7258 = vshrl.u32 %v7257, 7
    %v7259 = vsub.s32 %v7256, %v7258
    %v7260 = vrot.slane %v7225, %v7259
    %v7261 = vcombine.high %v7260, %v7260
    %v7263 = vunpack.c.l.s4 1966171168
    %v7264 = vunpack.c.0.s8 %v7263
    %v7265 = vlaneseq
    %v7266 = vshrl.u32 %v7265, 7
    %v7267 = vsub.s32 %v7264, %v7266
    %v7268 = vrot.slane %v7260, %v7267
    %v7270 = vunpack.c.l.s4 1966171168
    %v7271 = vunpack.c.0.s8 %v7270
    %v7272 = vlaneseq
    %v7273 = vshrl.u32 %v7272, 7
    %v7274 = vsub.s32 %v7271, %v7273
    %v7275 = vrot.slane %v7261, %v7274
    %7278 = vst [vmem:[#allocation3 + $0xc] sm:$0x1] %v7268
    %7279 = vst [vmem:[#allocation3 + $0x1c] sm:$0x1] %v7275
    %v7280 = vld [vmem:[%s2702] ss:$8 sm:$0xf]
    %v7281 = vld [vmem:[%s2704] ss:$8 sm:$0xf]
    %v7282 = vld [vmem:[%s2706] ss:$8 sm:$0xf]
    %v7283 = vld [vmem:[%s2708] ss:$8 sm:$0xf]
    %v7286 = vcombine.low %v7280, %v7281
    %v7288 = vunpack.c.l.s4 1966171168
    %v7289 = vunpack.c.0.s8 %v7288
    %v7290 = vlaneseq
    %v7291 = vshrl.u32 %v7290, 7
    %v7292 = vsub.s32 %v7289, %v7291
    %v7293 = vrot.slane %v7286, %v7292
    %v7294 = vcombine.high %v7293, %v7293
    %v7296 = vunpack.c.l.s4 1966171168
    %v7297 = vunpack.c.0.s8 %v7296
    %v7298 = vlaneseq
    %v7299 = vshrl.u32 %v7298, 7
    %v7300 = vsub.s32 %v7297, %v7299
    %v7301 = vrot.slane %v7293, %v7300
    %v7303 = vunpack.c.l.s4 1966171168
    %v7304 = vunpack.c.0.s8 %v7303
    %v7305 = vlaneseq
    %v7306 = vshrl.u32 %v7305, 7
    %v7307 = vsub.s32 %v7304, %v7306
    %v7308 = vrot.slane %v7294, %v7307
    %v7309 = vcombine.high %v7301, %v7301
    %v7310 = vcombine.high %v7308, %v7308
    %v7317 = vcombine.low %v7282, %v7283
    %v7319 = vunpack.c.l.s4 1966171168
    %v7320 = vunpack.c.0.s8 %v7319
    %v7321 = vlaneseq
    %v7322 = vshrl.u32 %v7321, 7
    %v7323 = vsub.s32 %v7320, %v7322
    %v7324 = vrot.slane %v7317, %v7323
    %v7325 = vcombine.high %v7324, %v7324
    %v7327 = vunpack.c.l.s4 1966171168
    %v7328 = vunpack.c.0.s8 %v7327
    %v7329 = vlaneseq
    %v7330 = vshrl.u32 %v7329, 7
    %v7331 = vsub.s32 %v7328, %v7330
    %v7332 = vrot.slane %v7324, %v7331
    %v7334 = vunpack.c.l.s4 1966171168
    %v7335 = vunpack.c.0.s8 %v7334
    %v7336 = vlaneseq
    %v7337 = vshrl.u32 %v7336, 7
    %v7338 = vsub.s32 %v7335, %v7337
    %v7339 = vrot.slane %v7325, %v7338
    %v7340 = vcombine.high %v7332, %v7332
    %v7341 = vcombine.high %v7339, %v7339
    %7346 = vmatprep.subr.mxu0 %v5185
    %7347 = vmatpush1.msra.mxu0 %v5184
    %7348 = vmatprep.subr.mxu0 %v5193
    %7349 = vmatpush1.msra.mxu0 %v5192
    %7350 = vmatprep.subr.mxu0 %v5201
    %7351 = vmatpush1.msra.mxu0 %v5200
    %7352 = vmatprep.subr.mxu0 %v5209
    %7353 = vmatpush1.msra.mxu0 %v5208
    %7354 = vmatprep.subr.mxu0 %v5217
    %7355 = vmatpush1.msra.mxu0 %v5216
    %7356 = vmatprep.subr.mxu0 %v5225
    %7357 = vmatpush1.msra.mxu0 %v5224
    %7358 = vmatprep.subr.mxu0 %v5233
    %7359 = vmatpush1.msra.mxu0 %v5232
    %7360 = vmatprep.subr.mxu0 %v5241
    %7361 = vmatpush1.msra.mxu0 %v5240
    %7362 = vmatprep.subr.mxu0 %v5249
    %7363 = vmatpush1.msra.mxu0 %v5248
    %7364 = vmatprep.subr.mxu0 %v5257
    %7365 = vmatpush1.msra.mxu0 %v5256
    %7366 = vmatprep.subr.mxu0 %v5265
    %7367 = vmatpush1.msra.mxu0 %v5264
    %7368 = vmatprep.subr.mxu0 %v5273
    %7369 = vmatpush1.msra.mxu0 %v5272
    %7370 = vmatprep.subr.mxu0 %v5281
    %7371 = vmatpush1.msra.mxu0 %v5280
    %7372 = vmatprep.subr.mxu0 %v5289
    %7373 = vmatpush1.msra.mxu0 %v5288
    %7374 = vmatprep.subr.mxu0 %v5297
    %7375 = vmatpush1.msra.mxu0 %v5296
    %7376 = vmatprep.subr.mxu0 %v5305
    %7377 = vmatpush1.msra.mxu0 %v5304
    %7378 = vmatprep.subr.mxu0 %v5313
    %7379 = vmatpush1.msra.mxu0 %v5312
    %7380 = vmatprep.subr.mxu0 %v5321
    %7381 = vmatpush1.msra.mxu0 %v5320
    %7382 = vmatprep.subr.mxu0 %v5329
    %7383 = vmatpush1.msra.mxu0 %v5328
    %7384 = vmatprep.subr.mxu0 %v5337
    %7385 = vmatpush1.msra.mxu0 %v5336
    %7386 = vmatprep.subr.mxu0 %v5345
    %7387 = vmatpush1.msra.mxu0 %v5344
    %7388 = vmatprep.subr.mxu0 %v5353
    %7389 = vmatpush1.msra.mxu0 %v5352
    %7390 = vmatprep.subr.mxu0 %v5361
    %7391 = vmatpush1.msra.mxu0 %v5360
    %7392 = vmatprep.subr.mxu0 %v5369
    %7393 = vmatpush1.msra.mxu0 %v5368
    %7394 = vmatprep.subr.mxu0 %v5377
    %7395 = vmatpush1.msra.mxu0 %v5376
    %7396 = vmatprep.subr.mxu0 %v5385
    %7397 = vmatpush1.msra.mxu0 %v5384
    %7398 = vmatprep.subr.mxu0 %v5393
    %7399 = vmatpush1.msra.mxu0 %v5392
    %7400 = vmatprep.subr.mxu0 %v5401
    %7401 = vmatpush1.msra.mxu0 %v5400
    %7402 = vmatprep.subr.mxu0 %v5409
    %7403 = vmatpush1.msra.mxu0 %v5408
    %7404 = vmatprep.subr.mxu0 %v5417
    %7405 = vmatpush1.msra.mxu0 %v5416
    %7406 = vmatprep.subr.mxu0 %v5425
    %7407 = vmatpush1.msra.mxu0 %v5424
    %7408 = vmatprep.subr.mxu0 %v5433
    %7409 = vmatpush1.msra.mxu0 %v5432
    %7410 = vmatprep.mubr.f32.mxu0 %v7225
    %7411 = vmatmul.mubr.f32.gmra.mrb[0].mxu0 %v7201
    %v7412 = vpop.f32.mrb[0].mxu0
    %v7413 = vadd.f32 0.0, %v7412
    %v7414 = vpop.f32.mrb[0].mxu0
    %v7415 = vadd.f32 0.0, %v7414
    %7416 = vdwg.mxu0
    %7417 = vmatprep.subr.mxu0 %v5187
    %7418 = vmatpush1.msra.mxu0 %v5186
    %7419 = vmatprep.subr.mxu0 %v5195
    %7420 = vmatpush1.msra.mxu0 %v5194
    %7421 = vmatprep.subr.mxu0 %v5203
    %7422 = vmatpush1.msra.mxu0 %v5202
    %7423 = vmatprep.subr.mxu0 %v5211
    %7424 = vmatpush1.msra.mxu0 %v5210
    %7425 = vmatprep.subr.mxu0 %v5219
    %7426 = vmatpush1.msra.mxu0 %v5218
    %7427 = vmatprep.subr.mxu0 %v5227
    %7428 = vmatpush1.msra.mxu0 %v5226
    %7429 = vmatprep.subr.mxu0 %v5235
    %7430 = vmatpush1.msra.mxu0 %v5234
    %7431 = vmatprep.subr.mxu0 %v5243
    %7432 = vmatpush1.msra.mxu0 %v5242
    %7433 = vmatprep.subr.mxu0 %v5251
    %7434 = vmatpush1.msra.mxu0 %v5250
    %7435 = vmatprep.subr.mxu0 %v5259
    %7436 = vmatpush1.msra.mxu0 %v5258
    %7437 = vmatprep.subr.mxu0 %v5267
    %7438 = vmatpush1.msra.mxu0 %v5266
    %7439 = vmatprep.subr.mxu0 %v5275
    %7440 = vmatpush1.msra.mxu0 %v5274
    %7441 = vmatprep.subr.mxu0 %v5283
    %7442 = vmatpush1.msra.mxu0 %v5282
    %7443 = vmatprep.subr.mxu0 %v5291
    %7444 = vmatpush1.msra.mxu0 %v5290
    %7445 = vmatprep.subr.mxu0 %v5299
    %7446 = vmatpush1.msra.mxu0 %v5298
    %7447 = vmatprep.subr.mxu0 %v5307
    %7448 = vmatpush1.msra.mxu0 %v5306
    %7449 = vmatprep.subr.mxu0 %v5315
    %7450 = vmatpush1.msra.mxu0 %v5314
    %7451 = vmatprep.subr.mxu0 %v5323
    %7452 = vmatpush1.msra.mxu0 %v5322
    %7453 = vmatprep.subr.mxu0 %v5331
    %7454 = vmatpush1.msra.mxu0 %v5330
    %7455 = vmatprep.subr.mxu0 %v5339
    %7456 = vmatpush1.msra.mxu0 %v5338
    %7457 = vmatprep.subr.mxu0 %v5347
    %7458 = vmatpush1.msra.mxu0 %v5346
    %7459 = vmatprep.subr.mxu0 %v5355
    %7460 = vmatpush1.msra.mxu0 %v5354
    %7461 = vmatprep.subr.mxu0 %v5363
    %7462 = vmatpush1.msra.mxu0 %v5362
    %7463 = vmatprep.subr.mxu0 %v5371
    %7464 = vmatpush1.msra.mxu0 %v5370
    %7465 = vmatprep.subr.mxu0 %v5379
    %7466 = vmatpush1.msra.mxu0 %v5378
    %7467 = vmatprep.subr.mxu0 %v5387
    %7468 = vmatpush1.msra.mxu0 %v5386
    %7469 = vmatprep.subr.mxu0 %v5395
    %7470 = vmatpush1.msra.mxu0 %v5394
    %7471 = vmatprep.subr.mxu0 %v5403
    %7472 = vmatpush1.msra.mxu0 %v5402
    %7473 = vmatprep.subr.mxu0 %v5411
    %7474 = vmatpush1.msra.mxu0 %v5410
    %7475 = vmatprep.subr.mxu0 %v5419
    %7476 = vmatpush1.msra.mxu0 %v5418
    %7477 = vmatprep.subr.mxu0 %v5427
    %7478 = vmatpush1.msra.mxu0 %v5426
    %7479 = vmatprep.subr.mxu0 %v5435
    %7480 = vmatpush1.msra.mxu0 %v5434
    %7481 = vmatprep.mubr.f32.mxu0 %v7225
    %7482 = vmatmul.mubr.f32.gmra.mrb[0].mxu0 %v7201
    %v7483 = vpop.f32.mrb[0].mxu0
    %v7484 = vadd.f32 0.0, %v7483
    %v7485 = vpop.f32.mrb[0].mxu0
    %v7486 = vadd.f32 0.0, %v7485
    %7487 = vdwg.mxu0
    %7488 = vmatprep.subr.mxu0 %v5189
    %7489 = vmatpush1.msra.mxu0 %v5188
    %7490 = vmatprep.subr.mxu0 %v5197
    %7491 = vmatpush1.msra.mxu0 %v5196
    %7492 = vmatprep.subr.mxu0 %v5205
    %7493 = vmatpush1.msra.mxu0 %v5204
    %7494 = vmatprep.subr.mxu0 %v5213
    %7495 = vmatpush1.msra.mxu0 %v5212
    %7496 = vmatprep.subr.mxu0 %v5221
    %7497 = vmatpush1.msra.mxu0 %v5220
    %7498 = vmatprep.subr.mxu0 %v5229
    %7499 = vmatpush1.msra.mxu0 %v5228
    %7500 = vmatprep.subr.mxu0 %v5237
    %7501 = vmatpush1.msra.mxu0 %v5236
    %7502 = vmatprep.subr.mxu0 %v5245
    %7503 = vmatpush1.msra.mxu0 %v5244
    %7504 = vmatprep.subr.mxu0 %v5253
    %7505 = vmatpush1.msra.mxu0 %v5252
    %7506 = vmatprep.subr.mxu0 %v5261
    %7507 = vmatpush1.msra.mxu0 %v5260
    %7508 = vmatprep.subr.mxu0 %v5269
    %7509 = vmatpush1.msra.mxu0 %v5268
    %7510 = vmatprep.subr.mxu0 %v5277
    %7511 = vmatpush1.msra.mxu0 %v5276
    %7512 = vmatprep.subr.mxu0 %v5285
    %7513 = vmatpush1.msra.mxu0 %v5284
    %7514 = vmatprep.subr.mxu0 %v5293
    %7515 = vmatpush1.msra.mxu0 %v5292
    %7516 = vmatprep.subr.mxu0 %v5301
    %7517 = vmatpush1.msra.mxu0 %v5300
    %7518 = vmatprep.subr.mxu0 %v5309
    %7519 = vmatpush1.msra.mxu0 %v5308
    %7520 = vmatprep.subr.mxu0 %v5317
    %7521 = vmatpush1.msra.mxu0 %v5316
    %7522 = vmatprep.subr.mxu0 %v5325
    %7523 = vmatpush1.msra.mxu0 %v5324
    %7524 = vmatprep.subr.mxu0 %v5333
    %7525 = vmatpush1.msra.mxu0 %v5332
    %7526 = vmatprep.subr.mxu0 %v5341
    %7527 = vmatpush1.msra.mxu0 %v5340
    %7528 = vmatprep.subr.mxu0 %v5349
    %7529 = vmatpush1.msra.mxu0 %v5348
    %7530 = vmatprep.subr.mxu0 %v5357
    %7531 = vmatpush1.msra.mxu0 %v5356
    %7532 = vmatprep.subr.mxu0 %v5365
    %7533 = vmatpush1.msra.mxu0 %v5364
    %7534 = vmatprep.subr.mxu0 %v5373
    %7535 = vmatpush1.msra.mxu0 %v5372
    %7536 = vmatprep.subr.mxu0 %v5381
    %7537 = vmatpush1.msra.mxu0 %v5380
    %7538 = vmatprep.subr.mxu0 %v5389
    %7539 = vmatpush1.msra.mxu0 %v5388
    %7540 = vmatprep.subr.mxu0 %v5397
    %7541 = vmatpush1.msra.mxu0 %v5396
    %7542 = vmatprep.subr.mxu0 %v5405
    %7543 = vmatpush1.msra.mxu0 %v5404
    %7544 = vmatprep.subr.mxu0 %v5413
    %7545 = vmatpush1.msra.mxu0 %v5412
    %7546 = vmatprep.subr.mxu0 %v5421
    %7547 = vmatpush1.msra.mxu0 %v5420
    %7548 = vmatprep.subr.mxu0 %v5429
    %7549 = vmatpush1.msra.mxu0 %v5428
    %7550 = vmatprep.subr.mxu0 %v5437
    %7551 = vmatpush1.msra.mxu0 %v5436
    %7552 = vmatprep.mubr.f32.mxu0 %v7225
    %7553 = vmatmul.mubr.f32.gmra.mrb[0].mxu0 %v7201
    %v7554 = vpop.f32.mrb[0].mxu0
    %v7555 = vadd.f32 0.0, %v7554
    %v7556 = vpop.f32.mrb[0].mxu0
    %v7557 = vadd.f32 0.0, %v7556
    %7558 = vdwg.mxu0
    %7559 = vmatprep.subr.mxu0 %v5191
    %7560 = vmatpush1.msra.mxu0 %v5190
    %7561 = vmatprep.subr.mxu0 %v5199
    %7562 = vmatpush1.msra.mxu0 %v5198
    %7563 = vmatprep.subr.mxu0 %v5207
    %7564 = vmatpush1.msra.mxu0 %v5206
    %7565 = vmatprep.subr.mxu0 %v5215
    %7566 = vmatpush1.msra.mxu0 %v5214
    %7567 = vmatprep.subr.mxu0 %v5223
    %7568 = vmatpush1.msra.mxu0 %v5222
    %7569 = vmatprep.subr.mxu0 %v5231
    %7570 = vmatpush1.msra.mxu0 %v5230
    %7571 = vmatprep.subr.mxu0 %v5239
    %7572 = vmatpush1.msra.mxu0 %v5238
    %7573 = vmatprep.subr.mxu0 %v5247
    %7574 = vmatpush1.msra.mxu0 %v5246
    %7575 = vmatprep.subr.mxu0 %v5255
    %7576 = vmatpush1.msra.mxu0 %v5254
    %7577 = vmatprep.subr.mxu0 %v5263
    %7578 = vmatpush1.msra.mxu0 %v5262
    %7579 = vmatprep.subr.mxu0 %v5271
    %7580 = vmatpush1.msra.mxu0 %v5270
    %7581 = vmatprep.subr.mxu0 %v5279
    %7582 = vmatpush1.msra.mxu0 %v5278
    %7583 = vmatprep.subr.mxu0 %v5287
    %7584 = vmatpush1.msra.mxu0 %v5286
    %7585 = vmatprep.subr.mxu0 %v5295
    %7586 = vmatpush1.msra.mxu0 %v5294
    %7587 = vmatprep.subr.mxu0 %v5303
    %7588 = vmatpush1.msra.mxu0 %v5302
    %7589 = vmatprep.subr.mxu0 %v5311
    %7590 = vmatpush1.msra.mxu0 %v5310
    %7591 = vmatprep.subr.mxu0 %v5319
    %7592 = vmatpush1.msra.mxu0 %v5318
    %7593 = vmatprep.subr.mxu0 %v5327
    %7594 = vmatpush1.msra.mxu0 %v5326
    %7595 = vmatprep.subr.mxu0 %v5335
    %7596 = vmatpush1.msra.mxu0 %v5334
    %7597 = vmatprep.subr.mxu0 %v5343
    %7598 = vmatpush1.msra.mxu0 %v5342
    %7599 = vmatprep.subr.mxu0 %v5351
    %7600 = vmatpush1.msra.mxu0 %v5350
    %7601 = vmatprep.subr.mxu0 %v5359
    %7602 = vmatpush1.msra.mxu0 %v5358
    %7603 = vmatprep.subr.mxu0 %v5367
    %7604 = vmatpush1.msra.mxu0 %v5366
    %7605 = vmatprep.subr.mxu0 %v5375
    %7606 = vmatpush1.msra.mxu0 %v5374
    %7607 = vmatprep.subr.mxu0 %v5383
    %7608 = vmatpush1.msra.mxu0 %v5382
    %7609 = vmatprep.subr.mxu0 %v5391
    %7610 = vmatpush1.msra.mxu0 %v5390
    %7611 = vmatprep.subr.mxu0 %v5399
    %7612 = vmatpush1.msra.mxu0 %v5398
    %7613 = vmatprep.subr.mxu0 %v5407
    %7614 = vmatpush1.msra.mxu0 %v5406
    %7615 = vmatprep.subr.mxu0 %v5415
    %7616 = vmatpush1.msra.mxu0 %v5414
    %7617 = vmatprep.subr.mxu0 %v5423
    %7618 = vmatpush1.msra.mxu0 %v5422
    %7619 = vmatprep.subr.mxu0 %v5431
    %7620 = vmatpush1.msra.mxu0 %v5430
    %7621 = vmatprep.subr.mxu0 %v5439
    %7622 = vmatpush1.msra.mxu0 %v5438
    %7623 = vmatprep.mubr.f32.mxu0 %v7225
    %7624 = vmatmul.mubr.f32.gmra.mrb[0].mxu0 %v7201
    %v7625 = vpop.f32.mrb[0].mxu0
    %v7626 = vadd.f32 0.0, %v7625
    %v7627 = vpop.f32.mrb[0].mxu0
    %v7628 = vadd.f32 0.0, %v7627
    %7629 = vdwg.mxu0
    %v7630 = vadd.f32 %v7301, %v7413
    %v7631 = vadd.f32 %v7308, %v7415
    %v7632 = vadd.f32 %v7309, %v7484
    %v7633 = vadd.f32 %v7310, %v7486
    %v7634 = vadd.f32 %v7332, %v7555
    %v7635 = vadd.f32 %v7339, %v7557
    %v7636 = vadd.f32 %v7340, %v7626
    %v7637 = vadd.f32 %v7341, %v7628
    %v7638 = vxor.u32 %v7630, 2147483648
    %v7639 = vxor.u32 %v7631, 2147483648
    %v7640 = vxor.u32 %v7632, 2147483648
    %v7641 = vmul.f32 %v7638, 1.442695
    %v7642 = vpow.pop %v7641
    %v7643 = vmul.f32 %v7639, 1.442695
    %v7644 = vpow.pop %v7643
    %v7645 = vmul.f32 %v7640, 1.442695
    %v7646 = vpow.pop %v7645
    %v7647 = vadd.f32 %v7642, 1.0
    %v7648 = vadd.f32 %v7644, 1.0
    %v7649 = vadd.f32 %v7646, 1.0
    %v7650 = vrcp.pop %v7647
    %v7651 = vmul.f32 1.0, %v7650
    %v7652 = vrcp.pop %v7648
    %v7653 = vmul.f32 1.0, %v7652
    %v7654 = vrcp.pop %v7649
    %v7655 = vmul.f32 1.0, %v7654
    %v7656 = vtanh.pop %v7633
    %v7657 = vmul.f32 %v7653, %v7199
    %v7658 = vmul.f32 %v7651, %v7656
    %v7659 = vadd.f32 %v7657, %v7658
    %v7660 = vtanh.pop %v7659
    %v7661 = vmul.f32 %v7655, %v7660
    %v7662 = vxor.u32 %v7634, 2147483648
    %v7663 = vxor.u32 %v7635, 2147483648
    %v7664 = vxor.u32 %v7636, 2147483648
    %v7665 = vmul.f32 %v7662, 1.442695
    %v7666 = vpow.pop %v7665
    %v7667 = vmul.f32 %v7663, 1.442695
    %v7668 = vpow.pop %v7667
    %v7669 = vmul.f32 %v7664, 1.442695
    %v7670 = vpow.pop %v7669
    %v7671 = vadd.f32 %v7666, 1.0
    %v7672 = vadd.f32 %v7668, 1.0
    %v7673 = vadd.f32 %v7670, 1.0
    %v7674 = vrcp.pop %v7671
    %v7675 = vmul.f32 1.0, %v7674
    %v7676 = vrcp.pop %v7672
    %v7677 = vmul.f32 1.0, %v7676
    %v7678 = vrcp.pop %v7673
    %v7679 = vmul.f32 1.0, %v7678
    %v7680 = vtanh.pop %v7637
    %v7681 = vmul.f32 %v7677, %v7223
    %v7682 = vmul.f32 %v7675, %v7680
    %v7683 = vadd.f32 %v7681, %v7682
    %v7684 = vtanh.pop %v7683
    %v7685 = vmul.f32 %v7679, %v7684
    %v7688 = vunpack.c.l.s4 1966171168
    %v7689 = vunpack.c.0.s8 %v7688
    %v7690 = vlaneseq
    %v7691 = vshrl.u32 %v7690, 7
    %v7692 = vsub.s32 %v7689, %v7691
    %v7693 = vrot.slane %v7661, %v7692
    %v7694 = vcombine.high %v7693, %v7693
    %v7696 = vunpack.c.l.s4 1966171168
    %v7697 = vunpack.c.0.s8 %v7696
    %v7698 = vlaneseq
    %v7699 = vshrl.u32 %v7698, 7
    %v7700 = vsub.s32 %v7697, %v7699
    %v7701 = vrot.slane %v7693, %v7700
    %v7703 = vunpack.c.l.s4 1966171168
    %v7704 = vunpack.c.0.s8 %v7703
    %v7705 = vlaneseq
    %v7706 = vshrl.u32 %v7705, 7
    %v7707 = vsub.s32 %v7704, %v7706
    %v7708 = vrot.slane %v7694, %v7707
    %7711 = vst [vmem:[#allocation3 + $0x4] sm:$0x1] %v7701
    %7712 = vst [vmem:[#allocation3 + $0x14] sm:$0x1] %v7708
    %v7715 = vunpack.c.l.s4 1966171168
    %v7716 = vunpack.c.0.s8 %v7715
    %v7717 = vlaneseq
    %v7718 = vshrl.u32 %v7717, 7
    %v7719 = vsub.s32 %v7716, %v7718
    %v7720 = vrot.slane %v7685, %v7719
    %v7721 = vcombine.high %v7720, %v7720
    %v7723 = vunpack.c.l.s4 1966171168
    %v7724 = vunpack.c.0.s8 %v7723
    %v7725 = vlaneseq
    %v7726 = vshrl.u32 %v7725, 7
    %v7727 = vsub.s32 %v7724, %v7726
    %v7728 = vrot.slane %v7720, %v7727
    %v7730 = vunpack.c.l.s4 1966171168
    %v7731 = vunpack.c.0.s8 %v7730
    %v7732 = vlaneseq
    %v7733 = vshrl.u32 %v7732, 7
    %v7734 = vsub.s32 %v7731, %v7733
    %v7735 = vrot.slane %v7721, %v7734
    %7738 = vst [vmem:[#allocation3 + $0xb] sm:$0x1] %v7728
    %7739 = vst [vmem:[#allocation3 + $0x1b] sm:$0x1] %v7735
    %v7740 = vld [vmem:[%s3166] ss:$8 sm:$0xf]
    %v7741 = vld [vmem:[%s3168] ss:$8 sm:$0xf]
    %v7742 = vld [vmem:[%s3170] ss:$8 sm:$0xf]
    %v7743 = vld [vmem:[%s3172] ss:$8 sm:$0xf]
    %v7746 = vcombine.low %v7740, %v7741
    %v7748 = vunpack.c.l.s4 1966171168
    %v7749 = vunpack.c.0.s8 %v7748
    %v7750 = vlaneseq
    %v7751 = vshrl.u32 %v7750, 7
    %v7752 = vsub.s32 %v7749, %v7751
    %v7753 = vrot.slane %v7746, %v7752
    %v7754 = vcombine.high %v7753, %v7753
    %v7756 = vunpack.c.l.s4 1966171168
    %v7757 = vunpack.c.0.s8 %v7756
    %v7758 = vlaneseq
    %v7759 = vshrl.u32 %v7758, 7
    %v7760 = vsub.s32 %v7757, %v7759
    %v7761 = vrot.slane %v7753, %v7760
    %v7763 = vunpack.c.l.s4 1966171168
    %v7764 = vunpack.c.0.s8 %v7763
    %v7765 = vlaneseq
    %v7766 = vshrl.u32 %v7765, 7
    %v7767 = vsub.s32 %v7764, %v7766
    %v7768 = vrot.slane %v7754, %v7767
    %v7769 = vcombine.high %v7761, %v7761
    %v7770 = vcombine.high %v7768, %v7768
    %v7777 = vcombine.low %v7742, %v7743
    %v7779 = vunpack.c.l.s4 1966171168
    %v7780 = vunpack.c.0.s8 %v7779
    %v7781 = vlaneseq
    %v7782 = vshrl.u32 %v7781, 7
    %v7783 = vsub.s32 %v7780, %v7782
    %v7784 = vrot.slane %v7777, %v7783
    %v7785 = vcombine.high %v7784, %v7784
    %v7787 = vunpack.c.l.s4 1966171168
    %v7788 = vunpack.c.0.s8 %v7787
    %v7789 = vlaneseq
    %v7790 = vshrl.u32 %v7789, 7
    %v7791 = vsub.s32 %v7788, %v7790
    %v7792 = vrot.slane %v7784, %v7791
    %v7794 = vunpack.c.l.s4 1966171168
    %v7795 = vunpack.c.0.s8 %v7794
    %v7796 = vlaneseq
    %v7797 = vshrl.u32 %v7796, 7
    %v7798 = vsub.s32 %v7795, %v7797
    %v7799 = vrot.slane %v7785, %v7798
    %v7800 = vcombine.high %v7792, %v7792
    %v7801 = vcombine.high %v7799, %v7799
    %7806 = vmatprep.subr.mxu0 %v5185
    %7807 = vmatpush1.msra.mxu0 %v5184
    %7808 = vmatprep.subr.mxu0 %v5193
    %7809 = vmatpush1.msra.mxu0 %v5192
    %7810 = vmatprep.subr.mxu0 %v5201
    %7811 = vmatpush1.msra.mxu0 %v5200
    %7812 = vmatprep.subr.mxu0 %v5209
    %7813 = vmatpush1.msra.mxu0 %v5208
    %7814 = vmatprep.subr.mxu0 %v5217
    %7815 = vmatpush1.msra.mxu0 %v5216
    %7816 = vmatprep.subr.mxu0 %v5225
    %7817 = vmatpush1.msra.mxu0 %v5224
    %7818 = vmatprep.subr.mxu0 %v5233
    %7819 = vmatpush1.msra.mxu0 %v5232
    %7820 = vmatprep.subr.mxu0 %v5241
    %7821 = vmatpush1.msra.mxu0 %v5240
    %7822 = vmatprep.subr.mxu0 %v5249
    %7823 = vmatpush1.msra.mxu0 %v5248
    %7824 = vmatprep.subr.mxu0 %v5257
    %7825 = vmatpush1.msra.mxu0 %v5256
    %7826 = vmatprep.subr.mxu0 %v5265
    %7827 = vmatpush1.msra.mxu0 %v5264
    %7828 = vmatprep.subr.mxu0 %v5273
    %7829 = vmatpush1.msra.mxu0 %v5272
    %7830 = vmatprep.subr.mxu0 %v5281
    %7831 = vmatpush1.msra.mxu0 %v5280
    %7832 = vmatprep.subr.mxu0 %v5289
    %7833 = vmatpush1.msra.mxu0 %v5288
    %7834 = vmatprep.subr.mxu0 %v5297
    %7835 = vmatpush1.msra.mxu0 %v5296
    %7836 = vmatprep.subr.mxu0 %v5305
    %7837 = vmatpush1.msra.mxu0 %v5304
    %7838 = vmatprep.subr.mxu0 %v5313
    %7839 = vmatpush1.msra.mxu0 %v5312
    %7840 = vmatprep.subr.mxu0 %v5321
    %7841 = vmatpush1.msra.mxu0 %v5320
    %7842 = vmatprep.subr.mxu0 %v5329
    %7843 = vmatpush1.msra.mxu0 %v5328
    %7844 = vmatprep.subr.mxu0 %v5337
    %7845 = vmatpush1.msra.mxu0 %v5336
    %7846 = vmatprep.subr.mxu0 %v5345
    %7847 = vmatpush1.msra.mxu0 %v5344
    %7848 = vmatprep.subr.mxu0 %v5353
    %7849 = vmatpush1.msra.mxu0 %v5352
    %7850 = vmatprep.subr.mxu0 %v5361
    %7851 = vmatpush1.msra.mxu0 %v5360
    %7852 = vmatprep.subr.mxu0 %v5369
    %7853 = vmatpush1.msra.mxu0 %v5368
    %7854 = vmatprep.subr.mxu0 %v5377
    %7855 = vmatpush1.msra.mxu0 %v5376
    %7856 = vmatprep.subr.mxu0 %v5385
    %7857 = vmatpush1.msra.mxu0 %v5384
    %7858 = vmatprep.subr.mxu0 %v5393
    %7859 = vmatpush1.msra.mxu0 %v5392
    %7860 = vmatprep.subr.mxu0 %v5401
    %7861 = vmatpush1.msra.mxu0 %v5400
    %7862 = vmatprep.subr.mxu0 %v5409
    %7863 = vmatpush1.msra.mxu0 %v5408
    %7864 = vmatprep.subr.mxu0 %v5417
    %7865 = vmatpush1.msra.mxu0 %v5416
    %7866 = vmatprep.subr.mxu0 %v5425
    %7867 = vmatpush1.msra.mxu0 %v5424
    %7868 = vmatprep.subr.mxu0 %v5433
    %7869 = vmatpush1.msra.mxu0 %v5432
    %7870 = vmatprep.mubr.f32.mxu0 %v7685
    %7871 = vmatmul.mubr.f32.gmra.mrb[0].mxu0 %v7661
    %v7872 = vpop.f32.mrb[0].mxu0
    %v7873 = vadd.f32 0.0, %v7872
    %v7874 = vpop.f32.mrb[0].mxu0
    %v7875 = vadd.f32 0.0, %v7874
    %7876 = vdwg.mxu0
    %7877 = vmatprep.subr.mxu0 %v5187
    %7878 = vmatpush1.msra.mxu0 %v5186
    %7879 = vmatprep.subr.mxu0 %v5195
    %7880 = vmatpush1.msra.mxu0 %v5194
    %7881 = vmatprep.subr.mxu0 %v5203
    %7882 = vmatpush1.msra.mxu0 %v5202
    %7883 = vmatprep.subr.mxu0 %v5211
    %7884 = vmatpush1.msra.mxu0 %v5210
    %7885 = vmatprep.subr.mxu0 %v5219
    %7886 = vmatpush1.msra.mxu0 %v5218
    %7887 = vmatprep.subr.mxu0 %v5227
    %7888 = vmatpush1.msra.mxu0 %v5226
    %7889 = vmatprep.subr.mxu0 %v5235
    %7890 = vmatpush1.msra.mxu0 %v5234
    %7891 = vmatprep.subr.mxu0 %v5243
    %7892 = vmatpush1.msra.mxu0 %v5242
    %7893 = vmatprep.subr.mxu0 %v5251
    %7894 = vmatpush1.msra.mxu0 %v5250
    %7895 = vmatprep.subr.mxu0 %v5259
    %7896 = vmatpush1.msra.mxu0 %v5258
    %7897 = vmatprep.subr.mxu0 %v5267
    %7898 = vmatpush1.msra.mxu0 %v5266
    %7899 = vmatprep.subr.mxu0 %v5275
    %7900 = vmatpush1.msra.mxu0 %v5274
    %7901 = vmatprep.subr.mxu0 %v5283
    %7902 = vmatpush1.msra.mxu0 %v5282
    %7903 = vmatprep.subr.mxu0 %v5291
    %7904 = vmatpush1.msra.mxu0 %v5290
    %7905 = vmatprep.subr.mxu0 %v5299
    %7906 = vmatpush1.msra.mxu0 %v5298
    %7907 = vmatprep.subr.mxu0 %v5307
    %7908 = vmatpush1.msra.mxu0 %v5306
    %7909 = vmatprep.subr.mxu0 %v5315
    %7910 = vmatpush1.msra.mxu0 %v5314
    %7911 = vmatprep.subr.mxu0 %v5323
    %7912 = vmatpush1.msra.mxu0 %v5322
    %7913 = vmatprep.subr.mxu0 %v5331
    %7914 = vmatpush1.msra.mxu0 %v5330
    %7915 = vmatprep.subr.mxu0 %v5339
    %7916 = vmatpush1.msra.mxu0 %v5338
    %7917 = vmatprep.subr.mxu0 %v5347
    %7918 = vmatpush1.msra.mxu0 %v5346
    %7919 = vmatprep.subr.mxu0 %v5355
    %7920 = vmatpush1.msra.mxu0 %v5354
    %7921 = vmatprep.subr.mxu0 %v5363
    %7922 = vmatpush1.msra.mxu0 %v5362
    %7923 = vmatprep.subr.mxu0 %v5371
    %7924 = vmatpush1.msra.mxu0 %v5370
    %7925 = vmatprep.subr.mxu0 %v5379
    %7926 = vmatpush1.msra.mxu0 %v5378
    %7927 = vmatprep.subr.mxu0 %v5387
    %7928 = vmatpush1.msra.mxu0 %v5386
    %7929 = vmatprep.subr.mxu0 %v5395
    %7930 = vmatpush1.msra.mxu0 %v5394
    %7931 = vmatprep.subr.mxu0 %v5403
    %7932 = vmatpush1.msra.mxu0 %v5402
    %7933 = vmatprep.subr.mxu0 %v5411
    %7934 = vmatpush1.msra.mxu0 %v5410
    %7935 = vmatprep.subr.mxu0 %v5419
    %7936 = vmatpush1.msra.mxu0 %v5418
    %7937 = vmatprep.subr.mxu0 %v5427
    %7938 = vmatpush1.msra.mxu0 %v5426
    %7939 = vmatprep.subr.mxu0 %v5435
    %7940 = vmatpush1.msra.mxu0 %v5434
    %7941 = vmatprep.mubr.f32.mxu0 %v7685
    %7942 = vmatmul.mubr.f32.gmra.mrb[0].mxu0 %v7661
    %v7943 = vpop.f32.mrb[0].mxu0
    %v7944 = vadd.f32 0.0, %v7943
    %v7945 = vpop.f32.mrb[0].mxu0
    %v7946 = vadd.f32 0.0, %v7945
    %7947 = vdwg.mxu0
    %7948 = vmatprep.subr.mxu0 %v5189
    %7949 = vmatpush1.msra.mxu0 %v5188
    %7950 = vmatprep.subr.mxu0 %v5197
    %7951 = vmatpush1.msra.mxu0 %v5196
    %7952 = vmatprep.subr.mxu0 %v5205
    %7953 = vmatpush1.msra.mxu0 %v5204
    %7954 = vmatprep.subr.mxu0 %v5213
    %7955 = vmatpush1.msra.mxu0 %v5212
    %7956 = vmatprep.subr.mxu0 %v5221
    %7957 = vmatpush1.msra.mxu0 %v5220
    %7958 = vmatprep.subr.mxu0 %v5229
    %7959 = vmatpush1.msra.mxu0 %v5228
    %7960 = vmatprep.subr.mxu0 %v5237
    %7961 = vmatpush1.msra.mxu0 %v5236
    %7962 = vmatprep.subr.mxu0 %v5245
    %7963 = vmatpush1.msra.mxu0 %v5244
    %7964 = vmatprep.subr.mxu0 %v5253
    %7965 = vmatpush1.msra.mxu0 %v5252
    %7966 = vmatprep.subr.mxu0 %v5261
    %7967 = vmatpush1.msra.mxu0 %v5260
    %7968 = vmatprep.subr.mxu0 %v5269
    %7969 = vmatpush1.msra.mxu0 %v5268
    %7970 = vmatprep.subr.mxu0 %v5277
    %7971 = vmatpush1.msra.mxu0 %v5276
    %7972 = vmatprep.subr.mxu0 %v5285
    %7973 = vmatpush1.msra.mxu0 %v5284
    %7974 = vmatprep.subr.mxu0 %v5293
    %7975 = vmatpush1.msra.mxu0 %v5292
    %7976 = vmatprep.subr.mxu0 %v5301
    %7977 = vmatpush1.msra.mxu0 %v5300
    %7978 = vmatprep.subr.mxu0 %v5309
    %7979 = vmatpush1.msra.mxu0 %v5308
    %7980 = vmatprep.subr.mxu0 %v5317
    %7981 = vmatpush1.msra.mxu0 %v5316
    %7982 = vmatprep.subr.mxu0 %v5325
    %7983 = vmatpush1.msra.mxu0 %v5324
    %7984 = vmatprep.subr.mxu0 %v5333
    %7985 = vmatpush1.msra.mxu0 %v5332
    %7986 = vmatprep.subr.mxu0 %v5341
    %7987 = vmatpush1.msra.mxu0 %v5340
    %7988 = vmatprep.subr.mxu0 %v5349
    %7989 = vmatpush1.msra.mxu0 %v5348
    %7990 = vmatprep.subr.mxu0 %v5357
    %7991 = vmatpush1.msra.mxu0 %v5356
    %7992 = vmatprep.subr.mxu0 %v5365
    %7993 = vmatpush1.msra.mxu0 %v5364
    %7994 = vmatprep.subr.mxu0 %v5373
    %7995 = vmatpush1.msra.mxu0 %v5372
    %7996 = vmatprep.subr.mxu0 %v5381
    %7997 = vmatpush1.msra.mxu0 %v5380
    %7998 = vmatprep.subr.mxu0 %v5389
    %7999 = vmatpush1.msra.mxu0 %v5388
    %8000 = vmatprep.subr.mxu0 %v5397
    %8001 = vmatpush1.msra.mxu0 %v5396
    %8002 = vmatprep.subr.mxu0 %v5405
    %8003 = vmatpush1.msra.mxu0 %v5404
    %8004 = vmatprep.subr.mxu0 %v5413
    %8005 = vmatpush1.msra.mxu0 %v5412
    %8006 = vmatprep.subr.mxu0 %v5421
    %8007 = vmatpush1.msra.mxu0 %v5420
    %8008 = vmatprep.subr.mxu0 %v5429
    %8009 = vmatpush1.msra.mxu0 %v5428
    %8010 = vmatprep.subr.mxu0 %v5437
    %8011 = vmatpush1.msra.mxu0 %v5436
    %8012 = vmatprep.mubr.f32.mxu0 %v7685
    %8013 = vmatmul.mubr.f32.gmra.mrb[0].mxu0 %v7661
    %v8014 = vpop.f32.mrb[0].mxu0
    %v8015 = vadd.f32 0.0, %v8014
    %v8016 = vpop.f32.mrb[0].mxu0
    %v8017 = vadd.f32 0.0, %v8016
    %8018 = vdwg.mxu0
    %8019 = vmatprep.subr.mxu0 %v5191
    %8020 = vmatpush1.msra.mxu0 %v5190
    %8021 = vmatprep.subr.mxu0 %v5199
    %8022 = vmatpush1.msra.mxu0 %v5198
    %8023 = vmatprep.subr.mxu0 %v5207
    %8024 = vmatpush1.msra.mxu0 %v5206
    %8025 = vmatprep.subr.mxu0 %v5215
    %8026 = vmatpush1.msra.mxu0 %v5214
    %8027 = vmatprep.subr.mxu0 %v5223
    %8028 = vmatpush1.msra.mxu0 %v5222
    %8029 = vmatprep.subr.mxu0 %v5231
    %8030 = vmatpush1.msra.mxu0 %v5230
    %8031 = vmatprep.subr.mxu0 %v5239
    %8032 = vmatpush1.msra.mxu0 %v5238
    %8033 = vmatprep.subr.mxu0 %v5247
    %8034 = vmatpush1.msra.mxu0 %v5246
    %8035 = vmatprep.subr.mxu0 %v5255
    %8036 = vmatpush1.msra.mxu0 %v5254
    %8037 = vmatprep.subr.mxu0 %v5263
    %8038 = vmatpush1.msra.mxu0 %v5262
    %8039 = vmatprep.subr.mxu0 %v5271
    %8040 = vmatpush1.msra.mxu0 %v5270
    %8041 = vmatprep.subr.mxu0 %v5279
    %8042 = vmatpush1.msra.mxu0 %v5278
    %8043 = vmatprep.subr.mxu0 %v5287
    %8044 = vmatpush1.msra.mxu0 %v5286
    %8045 = vmatprep.subr.mxu0 %v5295
    %8046 = vmatpush1.msra.mxu0 %v5294
    %8047 = vmatprep.subr.mxu0 %v5303
    %8048 = vmatpush1.msra.mxu0 %v5302
    %8049 = vmatprep.subr.mxu0 %v5311
    %8050 = vmatpush1.msra.mxu0 %v5310
    %8051 = vmatprep.subr.mxu0 %v5319
    %8052 = vmatpush1.msra.mxu0 %v5318
    %8053 = vmatprep.subr.mxu0 %v5327
    %8054 = vmatpush1.msra.mxu0 %v5326
    %8055 = vmatprep.subr.mxu0 %v5335
    %8056 = vmatpush1.msra.mxu0 %v5334
    %8057 = vmatprep.subr.mxu0 %v5343
    %8058 = vmatpush1.msra.mxu0 %v5342
    %8059 = vmatprep.subr.mxu0 %v5351
    %8060 = vmatpush1.msra.mxu0 %v5350
    %8061 = vmatprep.subr.mxu0 %v5359
    %8062 = vmatpush1.msra.mxu0 %v5358
    %8063 = vmatprep.subr.mxu0 %v5367
    %8064 = vmatpush1.msra.mxu0 %v5366
    %8065 = vmatprep.subr.mxu0 %v5375
    %8066 = vmatpush1.msra.mxu0 %v5374
    %8067 = vmatprep.subr.mxu0 %v5383
    %8068 = vmatpush1.msra.mxu0 %v5382
    %8069 = vmatprep.subr.mxu0 %v5391
    %8070 = vmatpush1.msra.mxu0 %v5390
    %8071 = vmatprep.subr.mxu0 %v5399
    %8072 = vmatpush1.msra.mxu0 %v5398
    %8073 = vmatprep.subr.mxu0 %v5407
    %8074 = vmatpush1.msra.mxu0 %v5406
    %8075 = vmatprep.subr.mxu0 %v5415
    %8076 = vmatpush1.msra.mxu0 %v5414
    %8077 = vmatprep.subr.mxu0 %v5423
    %8078 = vmatpush1.msra.mxu0 %v5422
    %8079 = vmatprep.subr.mxu0 %v5431
    %8080 = vmatpush1.msra.mxu0 %v5430
    %8081 = vmatprep.subr.mxu0 %v5439
    %8082 = vmatpush1.msra.mxu0 %v5438
    %8083 = vmatprep.mubr.f32.mxu0 %v7685
    %8084 = vmatmul.mubr.f32.gmra.mrb[0].mxu0 %v7661
    %v8085 = vpop.f32.mrb[0].mxu0
    %v8086 = vadd.f32 0.0, %v8085
    %v8087 = vpop.f32.mrb[0].mxu0
    %v8088 = vadd.f32 0.0, %v8087
    %8089 = vdwg.mxu0
    %v8090 = vadd.f32 %v7761, %v7873
    %v8091 = vadd.f32 %v7768, %v7875
    %v8092 = vadd.f32 %v7769, %v7944
    %v8093 = vadd.f32 %v7770, %v7946
    %v8094 = vadd.f32 %v7792, %v8015
    %v8095 = vadd.f32 %v7799, %v8017
    %v8096 = vadd.f32 %v7800, %v8086
    %v8097 = vadd.f32 %v7801, %v8088
    %v8098 = vxor.u32 %v8090, 2147483648
    %v8099 = vxor.u32 %v8091, 2147483648
    %v8100 = vxor.u32 %v8092, 2147483648
    %v8101 = vmul.f32 %v8098, 1.442695
    %v8102 = vpow.pop %v8101
    %v8103 = vmul.f32 %v8099, 1.442695
    %v8104 = vpow.pop %v8103
    %v8105 = vmul.f32 %v8100, 1.442695
    %v8106 = vpow.pop %v8105
    %v8107 = vadd.f32 %v8102, 1.0
    %v8108 = vadd.f32 %v8104, 1.0
    %v8109 = vadd.f32 %v8106, 1.0
    %v8110 = vrcp.pop %v8107
    %v8111 = vmul.f32 1.0, %v8110
    %v8112 = vrcp.pop %v8108
    %v8113 = vmul.f32 1.0, %v8112
    %v8114 = vrcp.pop %v8109
    %v8115 = vmul.f32 1.0, %v8114
    %v8116 = vtanh.pop %v8093
    %v8117 = vmul.f32 %v8113, %v7659
    %v8118 = vmul.f32 %v8111, %v8116
    %v8119 = vadd.f32 %v8117, %v8118
    %v8120 = vtanh.pop %v8119
    %v8121 = vmul.f32 %v8115, %v8120
    %v8122 = vxor.u32 %v8094, 2147483648
    %v8123 = vxor.u32 %v8095, 2147483648
    %v8124 = vxor.u32 %v8096, 2147483648
    %v8125 = vmul.f32 %v8122, 1.442695
    %v8126 = vpow.pop %v8125
    %v8127 = vmul.f32 %v8123, 1.442695
    %v8128 = vpow.pop %v8127
    %v8129 = vmul.f32 %v8124, 1.442695
    %v8130 = vpow.pop %v8129
    %v8131 = vadd.f32 %v8126, 1.0
    %v8132 = vadd.f32 %v8128, 1.0
    %v8133 = vadd.f32 %v8130, 1.0
    %v8134 = vrcp.pop %v8131
    %v8135 = vmul.f32 1.0, %v8134
    %v8136 = vrcp.pop %v8132
    %v8137 = vmul.f32 1.0, %v8136
    %v8138 = vrcp.pop %v8133
    %v8139 = vmul.f32 1.0, %v8138
    %v8140 = vtanh.pop %v8097
    %v8141 = vmul.f32 %v8137, %v7683
    %v8142 = vmul.f32 %v8135, %v8140
    %v8143 = vadd.f32 %v8141, %v8142
    %v8144 = vtanh.pop %v8143
    %v8145 = vmul.f32 %v8139, %v8144
    %v8148 = vunpack.c.l.s4 1966171168
    %v8149 = vunpack.c.0.s8 %v8148
    %v8150 = vlaneseq
    %v8151 = vshrl.u32 %v8150, 7
    %v8152 = vsub.s32 %v8149, %v8151
    %v8153 = vrot.slane %v8121, %v8152
    %v8154 = vcombine.high %v8153, %v8153
    %v8156 = vunpack.c.l.s4 1966171168
    %v8157 = vunpack.c.0.s8 %v8156
    %v8158 = vlaneseq
    %v8159 = vshrl.u32 %v8158, 7
    %v8160 = vsub.s32 %v8157, %v8159
    %v8161 = vrot.slane %v8153, %v8160
    %v8163 = vunpack.c.l.s4 1966171168
    %v8164 = vunpack.c.0.s8 %v8163
    %v8165 = vlaneseq
    %v8166 = vshrl.u32 %v8165, 7
    %v8167 = vsub.s32 %v8164, %v8166
    %v8168 = vrot.slane %v8154, %v8167
    %8171 = vst [vmem:[#allocation3 + $0x5] sm:$0x1] %v8161
    %8172 = vst [vmem:[#allocation3 + $0x15] sm:$0x1] %v8168
    %v8175 = vunpack.c.l.s4 1966171168
    %v8176 = vunpack.c.0.s8 %v8175
    %v8177 = vlaneseq
    %v8178 = vshrl.u32 %v8177, 7
    %v8179 = vsub.s32 %v8176, %v8178
    %v8180 = vrot.slane %v8145, %v8179
    %v8181 = vcombine.high %v8180, %v8180
    %v8183 = vunpack.c.l.s4 1966171168
    %v8184 = vunpack.c.0.s8 %v8183
    %v8185 = vlaneseq
    %v8186 = vshrl.u32 %v8185, 7
    %v8187 = vsub.s32 %v8184, %v8186
    %v8188 = vrot.slane %v8180, %v8187
    %v8190 = vunpack.c.l.s4 1966171168
    %v8191 = vunpack.c.0.s8 %v8190
    %v8192 = vlaneseq
    %v8193 = vshrl.u32 %v8192, 7
    %v8194 = vsub.s32 %v8191, %v8193
    %v8195 = vrot.slane %v8181, %v8194
    %8198 = vst [vmem:[#allocation3 + $0xa] sm:$0x1] %v8188
    %8199 = vst [vmem:[#allocation3 + $0x1a] sm:$0x1] %v8195
    %v8200 = vld [vmem:[%s3630] ss:$8 sm:$0xf]
    %v8201 = vld [vmem:[%s3632] ss:$8 sm:$0xf]
    %v8202 = vld [vmem:[%s3634] ss:$8 sm:$0xf]
    %v8203 = vld [vmem:[%s3636] ss:$8 sm:$0xf]
    %v8206 = vcombine.low %v8200, %v8201
    %v8208 = vunpack.c.l.s4 1966171168
    %v8209 = vunpack.c.0.s8 %v8208
    %v8210 = vlaneseq
    %v8211 = vshrl.u32 %v8210, 7
    %v8212 = vsub.s32 %v8209, %v8211
    %v8213 = vrot.slane %v8206, %v8212
    %v8214 = vcombine.high %v8213, %v8213
    %v8216 = vunpack.c.l.s4 1966171168
    %v8217 = vunpack.c.0.s8 %v8216
    %v8218 = vlaneseq
    %v8219 = vshrl.u32 %v8218, 7
    %v8220 = vsub.s32 %v8217, %v8219
    %v8221 = vrot.slane %v8213, %v8220
    %v8223 = vunpack.c.l.s4 1966171168
    %v8224 = vunpack.c.0.s8 %v8223
    %v8225 = vlaneseq
    %v8226 = vshrl.u32 %v8225, 7
    %v8227 = vsub.s32 %v8224, %v8226
    %v8228 = vrot.slane %v8214, %v8227
    %v8229 = vcombine.high %v8221, %v8221
    %v8230 = vcombine.high %v8228, %v8228
    %v8237 = vcombine.low %v8202, %v8203
    %v8239 = vunpack.c.l.s4 1966171168
    %v8240 = vunpack.c.0.s8 %v8239
    %v8241 = vlaneseq
    %v8242 = vshrl.u32 %v8241, 7
    %v8243 = vsub.s32 %v8240, %v8242
    %v8244 = vrot.slane %v8237, %v8243
    %v8245 = vcombine.high %v8244, %v8244
    %v8247 = vunpack.c.l.s4 1966171168
    %v8248 = vunpack.c.0.s8 %v8247
    %v8249 = vlaneseq
    %v8250 = vshrl.u32 %v8249, 7
    %v8251 = vsub.s32 %v8248, %v8250
    %v8252 = vrot.slane %v8244, %v8251
    %v8254 = vunpack.c.l.s4 1966171168
    %v8255 = vunpack.c.0.s8 %v8254
    %v8256 = vlaneseq
    %v8257 = vshrl.u32 %v8256, 7
    %v8258 = vsub.s32 %v8255, %v8257
    %v8259 = vrot.slane %v8245, %v8258
    %v8260 = vcombine.high %v8252, %v8252
    %v8261 = vcombine.high %v8259, %v8259
    %8266 = vmatprep.subr.mxu0 %v5185
    %8267 = vmatpush1.msra.mxu0 %v5184
    %8268 = vmatprep.subr.mxu0 %v5193
    %8269 = vmatpush1.msra.mxu0 %v5192
    %8270 = vmatprep.subr.mxu0 %v5201
    %8271 = vmatpush1.msra.mxu0 %v5200
    %8272 = vmatprep.subr.mxu0 %v5209
    %8273 = vmatpush1.msra.mxu0 %v5208
    %8274 = vmatprep.subr.mxu0 %v5217
    %8275 = vmatpush1.msra.mxu0 %v5216
    %8276 = vmatprep.subr.mxu0 %v5225
    %8277 = vmatpush1.msra.mxu0 %v5224
    %8278 = vmatprep.subr.mxu0 %v5233
    %8279 = vmatpush1.msra.mxu0 %v5232
    %8280 = vmatprep.subr.mxu0 %v5241
    %8281 = vmatpush1.msra.mxu0 %v5240
    %8282 = vmatprep.subr.mxu0 %v5249
    %8283 = vmatpush1.msra.mxu0 %v5248
    %8284 = vmatprep.subr.mxu0 %v5257
    %8285 = vmatpush1.msra.mxu0 %v5256
    %8286 = vmatprep.subr.mxu0 %v5265
    %8287 = vmatpush1.msra.mxu0 %v5264
    %8288 = vmatprep.subr.mxu0 %v5273
    %8289 = vmatpush1.msra.mxu0 %v5272
    %8290 = vmatprep.subr.mxu0 %v5281
    %8291 = vmatpush1.msra.mxu0 %v5280
    %8292 = vmatprep.subr.mxu0 %v5289
    %8293 = vmatpush1.msra.mxu0 %v5288
    %8294 = vmatprep.subr.mxu0 %v5297
    %8295 = vmatpush1.msra.mxu0 %v5296
    %8296 = vmatprep.subr.mxu0 %v5305
    %8297 = vmatpush1.msra.mxu0 %v5304
    %8298 = vmatprep.subr.mxu0 %v5313
    %8299 = vmatpush1.msra.mxu0 %v5312
    %8300 = vmatprep.subr.mxu0 %v5321
    %8301 = vmatpush1.msra.mxu0 %v5320
    %8302 = vmatprep.subr.mxu0 %v5329
    %8303 = vmatpush1.msra.mxu0 %v5328
    %8304 = vmatprep.subr.mxu0 %v5337
    %8305 = vmatpush1.msra.mxu0 %v5336
    %8306 = vmatprep.subr.mxu0 %v5345
    %8307 = vmatpush1.msra.mxu0 %v5344
    %8308 = vmatprep.subr.mxu0 %v5353
    %8309 = vmatpush1.msra.mxu0 %v5352
    %8310 = vmatprep.subr.mxu0 %v5361
    %8311 = vmatpush1.msra.mxu0 %v5360
    %8312 = vmatprep.subr.mxu0 %v5369
    %8313 = vmatpush1.msra.mxu0 %v5368
    %8314 = vmatprep.subr.mxu0 %v5377
    %8315 = vmatpush1.msra.mxu0 %v5376
    %8316 = vmatprep.subr.mxu0 %v5385
    %8317 = vmatpush1.msra.mxu0 %v5384
    %8318 = vmatprep.subr.mxu0 %v5393
    %8319 = vmatpush1.msra.mxu0 %v5392
    %8320 = vmatprep.subr.mxu0 %v5401
    %8321 = vmatpush1.msra.mxu0 %v5400
    %8322 = vmatprep.subr.mxu0 %v5409
    %8323 = vmatpush1.msra.mxu0 %v5408
    %8324 = vmatprep.subr.mxu0 %v5417
    %8325 = vmatpush1.msra.mxu0 %v5416
    %8326 = vmatprep.subr.mxu0 %v5425
    %8327 = vmatpush1.msra.mxu0 %v5424
    %8328 = vmatprep.subr.mxu0 %v5433
    %8329 = vmatpush1.msra.mxu0 %v5432
    %8330 = vmatprep.mubr.f32.mxu0 %v8145
    %8331 = vmatmul.mubr.f32.gmra.mrb[0].mxu0 %v8121
    %v8332 = vpop.f32.mrb[0].mxu0
    %v8333 = vadd.f32 0.0, %v8332
    %v8334 = vpop.f32.mrb[0].mxu0
    %v8335 = vadd.f32 0.0, %v8334
    %8336 = vdwg.mxu0
    %8337 = vmatprep.subr.mxu0 %v5187
    %8338 = vmatpush1.msra.mxu0 %v5186
    %8339 = vmatprep.subr.mxu0 %v5195
    %8340 = vmatpush1.msra.mxu0 %v5194
    %8341 = vmatprep.subr.mxu0 %v5203
    %8342 = vmatpush1.msra.mxu0 %v5202
    %8343 = vmatprep.subr.mxu0 %v5211
    %8344 = vmatpush1.msra.mxu0 %v5210
    %8345 = vmatprep.subr.mxu0 %v5219
    %8346 = vmatpush1.msra.mxu0 %v5218
    %8347 = vmatprep.subr.mxu0 %v5227
    %8348 = vmatpush1.msra.mxu0 %v5226
    %8349 = vmatprep.subr.mxu0 %v5235
    %8350 = vmatpush1.msra.mxu0 %v5234
    %8351 = vmatprep.subr.mxu0 %v5243
    %8352 = vmatpush1.msra.mxu0 %v5242
    %8353 = vmatprep.subr.mxu0 %v5251
    %8354 = vmatpush1.msra.mxu0 %v5250
    %8355 = vmatprep.subr.mxu0 %v5259
    %8356 = vmatpush1.msra.mxu0 %v5258
    %8357 = vmatprep.subr.mxu0 %v5267
    %8358 = vmatpush1.msra.mxu0 %v5266
    %8359 = vmatprep.subr.mxu0 %v5275
    %8360 = vmatpush1.msra.mxu0 %v5274
    %8361 = vmatprep.subr.mxu0 %v5283
    %8362 = vmatpush1.msra.mxu0 %v5282
    %8363 = vmatprep.subr.mxu0 %v5291
    %8364 = vmatpush1.msra.mxu0 %v5290
    %8365 = vmatprep.subr.mxu0 %v5299
    %8366 = vmatpush1.msra.mxu0 %v5298
    %8367 = vmatprep.subr.mxu0 %v5307
    %8368 = vmatpush1.msra.mxu0 %v5306
    %8369 = vmatprep.subr.mxu0 %v5315
    %8370 = vmatpush1.msra.mxu0 %v5314
    %8371 = vmatprep.subr.mxu0 %v5323
    %8372 = vmatpush1.msra.mxu0 %v5322
    %8373 = vmatprep.subr.mxu0 %v5331
    %8374 = vmatpush1.msra.mxu0 %v5330
    %8375 = vmatprep.subr.mxu0 %v5339
    %8376 = vmatpush1.msra.mxu0 %v5338
    %8377 = vmatprep.subr.mxu0 %v5347
    %8378 = vmatpush1.msra.mxu0 %v5346
    %8379 = vmatprep.subr.mxu0 %v5355
    %8380 = vmatpush1.msra.mxu0 %v5354
    %8381 = vmatprep.subr.mxu0 %v5363
    %8382 = vmatpush1.msra.mxu0 %v5362
    %8383 = vmatprep.subr.mxu0 %v5371
    %8384 = vmatpush1.msra.mxu0 %v5370
    %8385 = vmatprep.subr.mxu0 %v5379
    %8386 = vmatpush1.msra.mxu0 %v5378
    %8387 = vmatprep.subr.mxu0 %v5387
    %8388 = vmatpush1.msra.mxu0 %v5386
    %8389 = vmatprep.subr.mxu0 %v5395
    %8390 = vmatpush1.msra.mxu0 %v5394
    %8391 = vmatprep.subr.mxu0 %v5403
    %8392 = vmatpush1.msra.mxu0 %v5402
    %8393 = vmatprep.subr.mxu0 %v5411
    %8394 = vmatpush1.msra.mxu0 %v5410
    %8395 = vmatprep.subr.mxu0 %v5419
    %8396 = vmatpush1.msra.mxu0 %v5418
    %8397 = vmatprep.subr.mxu0 %v5427
    %8398 = vmatpush1.msra.mxu0 %v5426
    %8399 = vmatprep.subr.mxu0 %v5435
    %8400 = vmatpush1.msra.mxu0 %v5434
    %8401 = vmatprep.mubr.f32.mxu0 %v8145
    %8402 = vmatmul.mubr.f32.gmra.mrb[0].mxu0 %v8121
    %v8403 = vpop.f32.mrb[0].mxu0
    %v8404 = vadd.f32 0.0, %v8403
    %v8405 = vpop.f32.mrb[0].mxu0
    %v8406 = vadd.f32 0.0, %v8405
    %8407 = vdwg.mxu0
    %8408 = vmatprep.subr.mxu0 %v5189
    %8409 = vmatpush1.msra.mxu0 %v5188
    %8410 = vmatprep.subr.mxu0 %v5197
    %8411 = vmatpush1.msra.mxu0 %v5196
    %8412 = vmatprep.subr.mxu0 %v5205
    %8413 = vmatpush1.msra.mxu0 %v5204
    %8414 = vmatprep.subr.mxu0 %v5213
    %8415 = vmatpush1.msra.mxu0 %v5212
    %8416 = vmatprep.subr.mxu0 %v5221
    %8417 = vmatpush1.msra.mxu0 %v5220
    %8418 = vmatprep.subr.mxu0 %v5229
    %8419 = vmatpush1.msra.mxu0 %v5228
    %8420 = vmatprep.subr.mxu0 %v5237
    %8421 = vmatpush1.msra.mxu0 %v5236
    %8422 = vmatprep.subr.mxu0 %v5245
    %8423 = vmatpush1.msra.mxu0 %v5244
    %8424 = vmatprep.subr.mxu0 %v5253
    %8425 = vmatpush1.msra.mxu0 %v5252
    %8426 = vmatprep.subr.mxu0 %v5261
    %8427 = vmatpush1.msra.mxu0 %v5260
    %8428 = vmatprep.subr.mxu0 %v5269
    %8429 = vmatpush1.msra.mxu0 %v5268
    %8430 = vmatprep.subr.mxu0 %v5277
    %8431 = vmatpush1.msra.mxu0 %v5276
    %8432 = vmatprep.subr.mxu0 %v5285
    %8433 = vmatpush1.msra.mxu0 %v5284
    %8434 = vmatprep.subr.mxu0 %v5293
    %8435 = vmatpush1.msra.mxu0 %v5292
    %8436 = vmatprep.subr.mxu0 %v5301
    %8437 = vmatpush1.msra.mxu0 %v5300
    %8438 = vmatprep.subr.mxu0 %v5309
    %8439 = vmatpush1.msra.mxu0 %v5308
    %8440 = vmatprep.subr.mxu0 %v5317
    %8441 = vmatpush1.msra.mxu0 %v5316
    %8442 = vmatprep.subr.mxu0 %v5325
    %8443 = vmatpush1.msra.mxu0 %v5324
    %8444 = vmatprep.subr.mxu0 %v5333
    %8445 = vmatpush1.msra.mxu0 %v5332
    %8446 = vmatprep.subr.mxu0 %v5341
    %8447 = vmatpush1.msra.mxu0 %v5340
    %8448 = vmatprep.subr.mxu0 %v5349
    %8449 = vmatpush1.msra.mxu0 %v5348
    %8450 = vmatprep.subr.mxu0 %v5357
    %8451 = vmatpush1.msra.mxu0 %v5356
    %8452 = vmatprep.subr.mxu0 %v5365
    %8453 = vmatpush1.msra.mxu0 %v5364
    %8454 = vmatprep.subr.mxu0 %v5373
    %8455 = vmatpush1.msra.mxu0 %v5372
    %8456 = vmatprep.subr.mxu0 %v5381
    %8457 = vmatpush1.msra.mxu0 %v5380
    %8458 = vmatprep.subr.mxu0 %v5389
    %8459 = vmatpush1.msra.mxu0 %v5388
    %8460 = vmatprep.subr.mxu0 %v5397
    %8461 = vmatpush1.msra.mxu0 %v5396
    %8462 = vmatprep.subr.mxu0 %v5405
    %8463 = vmatpush1.msra.mxu0 %v5404
    %8464 = vmatprep.subr.mxu0 %v5413
    %8465 = vmatpush1.msra.mxu0 %v5412
    %8466 = vmatprep.subr.mxu0 %v5421
    %8467 = vmatpush1.msra.mxu0 %v5420
    %8468 = vmatprep.subr.mxu0 %v5429
    %8469 = vmatpush1.msra.mxu0 %v5428
    %8470 = vmatprep.subr.mxu0 %v5437
    %8471 = vmatpush1.msra.mxu0 %v5436
    %8472 = vmatprep.mubr.f32.mxu0 %v8145
    %8473 = vmatmul.mubr.f32.gmra.mrb[0].mxu0 %v8121
    %v8474 = vpop.f32.mrb[0].mxu0
    %v8475 = vadd.f32 0.0, %v8474
    %v8476 = vpop.f32.mrb[0].mxu0
    %v8477 = vadd.f32 0.0, %v8476
    %8478 = vdwg.mxu0
    %8479 = vmatprep.subr.mxu0 %v5191
    %8480 = vmatpush1.msra.mxu0 %v5190
    %8481 = vmatprep.subr.mxu0 %v5199
    %8482 = vmatpush1.msra.mxu0 %v5198
    %8483 = vmatprep.subr.mxu0 %v5207
    %8484 = vmatpush1.msra.mxu0 %v5206
    %8485 = vmatprep.subr.mxu0 %v5215
    %8486 = vmatpush1.msra.mxu0 %v5214
    %8487 = vmatprep.subr.mxu0 %v5223
    %8488 = vmatpush1.msra.mxu0 %v5222
    %8489 = vmatprep.subr.mxu0 %v5231
    %8490 = vmatpush1.msra.mxu0 %v5230
    %8491 = vmatprep.subr.mxu0 %v5239
    %8492 = vmatpush1.msra.mxu0 %v5238
    %8493 = vmatprep.subr.mxu0 %v5247
    %8494 = vmatpush1.msra.mxu0 %v5246
    %8495 = vmatprep.subr.mxu0 %v5255
    %8496 = vmatpush1.msra.mxu0 %v5254
    %8497 = vmatprep.subr.mxu0 %v5263
    %8498 = vmatpush1.msra.mxu0 %v5262
    %8499 = vmatprep.subr.mxu0 %v5271
    %8500 = vmatpush1.msra.mxu0 %v5270
    %8501 = vmatprep.subr.mxu0 %v5279
    %8502 = vmatpush1.msra.mxu0 %v5278
    %8503 = vmatprep.subr.mxu0 %v5287
    %8504 = vmatpush1.msra.mxu0 %v5286
    %8505 = vmatprep.subr.mxu0 %v5295
    %8506 = vmatpush1.msra.mxu0 %v5294
    %8507 = vmatprep.subr.mxu0 %v5303
    %8508 = vmatpush1.msra.mxu0 %v5302
    %8509 = vmatprep.subr.mxu0 %v5311
    %8510 = vmatpush1.msra.mxu0 %v5310
    %8511 = vmatprep.subr.mxu0 %v5319
    %8512 = vmatpush1.msra.mxu0 %v5318
    %8513 = vmatprep.subr.mxu0 %v5327
    %8514 = vmatpush1.msra.mxu0 %v5326
    %8515 = vmatprep.subr.mxu0 %v5335
    %8516 = vmatpush1.msra.mxu0 %v5334
    %8517 = vmatprep.subr.mxu0 %v5343
    %8518 = vmatpush1.msra.mxu0 %v5342
    %8519 = vmatprep.subr.mxu0 %v5351
    %8520 = vmatpush1.msra.mxu0 %v5350
    %8521 = vmatprep.subr.mxu0 %v5359
    %8522 = vmatpush1.msra.mxu0 %v5358
    %8523 = vmatprep.subr.mxu0 %v5367
    %8524 = vmatpush1.msra.mxu0 %v5366
    %8525 = vmatprep.subr.mxu0 %v5375
    %8526 = vmatpush1.msra.mxu0 %v5374
    %8527 = vmatprep.subr.mxu0 %v5383
    %8528 = vmatpush1.msra.mxu0 %v5382
    %8529 = vmatprep.subr.mxu0 %v5391
    %8530 = vmatpush1.msra.mxu0 %v5390
    %8531 = vmatprep.subr.mxu0 %v5399
    %8532 = vmatpush1.msra.mxu0 %v5398
    %8533 = vmatprep.subr.mxu0 %v5407
    %8534 = vmatpush1.msra.mxu0 %v5406
    %8535 = vmatprep.subr.mxu0 %v5415
    %8536 = vmatpush1.msra.mxu0 %v5414
    %8537 = vmatprep.subr.mxu0 %v5423
    %8538 = vmatpush1.msra.mxu0 %v5422
    %8539 = vmatprep.subr.mxu0 %v5431
    %8540 = vmatpush1.msra.mxu0 %v5430
    %8541 = vmatprep.subr.mxu0 %v5439
    %8542 = vmatpush1.msra.mxu0 %v5438
    %8543 = vmatprep.mubr.f32.mxu0 %v8145
    %8544 = vmatmul.mubr.f32.gmra.mrb[0].mxu0 %v8121
    %v8545 = vpop.f32.mrb[0].mxu0
    %v8546 = vadd.f32 0.0, %v8545
    %v8547 = vpop.f32.mrb[0].mxu0
    %v8548 = vadd.f32 0.0, %v8547
    %8549 = vdwg.mxu0
    %v8550 = vadd.f32 %v8221, %v8333
    %v8551 = vadd.f32 %v8228, %v8335
    %v8552 = vadd.f32 %v8229, %v8404
    %v8553 = vadd.f32 %v8230, %v8406
    %v8554 = vadd.f32 %v8252, %v8475
    %v8555 = vadd.f32 %v8259, %v8477
    %v8556 = vadd.f32 %v8260, %v8546
    %v8557 = vadd.f32 %v8261, %v8548
    %v8558 = vxor.u32 %v8550, 2147483648
    %v8559 = vxor.u32 %v8551, 2147483648
    %v8560 = vxor.u32 %v8552, 2147483648
    %v8561 = vmul.f32 %v8558, 1.442695
    %v8562 = vpow.pop %v8561
    %v8563 = vmul.f32 %v8559, 1.442695
    %v8564 = vpow.pop %v8563
    %v8565 = vmul.f32 %v8560, 1.442695
    %v8566 = vpow.pop %v8565
    %v8567 = vadd.f32 %v8562, 1.0
    %v8568 = vadd.f32 %v8564, 1.0
    %v8569 = vadd.f32 %v8566, 1.0
    %v8570 = vrcp.pop %v8567
    %v8571 = vmul.f32 1.0, %v8570
    %v8572 = vrcp.pop %v8568
    %v8573 = vmul.f32 1.0, %v8572
    %v8574 = vrcp.pop %v8569
    %v8575 = vmul.f32 1.0, %v8574
    %v8576 = vtanh.pop %v8553
    %v8577 = vmul.f32 %v8573, %v8119
    %v8578 = vmul.f32 %v8571, %v8576
    %v8579 = vadd.f32 %v8577, %v8578
    %v8580 = vtanh.pop %v8579
    %v8581 = vmul.f32 %v8575, %v8580
    %v8582 = vxor.u32 %v8554, 2147483648
    %v8583 = vxor.u32 %v8555, 2147483648
    %v8584 = vxor.u32 %v8556, 2147483648
    %v8585 = vmul.f32 %v8582, 1.442695
    %v8586 = vpow.pop %v8585
    %v8587 = vmul.f32 %v8583, 1.442695
    %v8588 = vpow.pop %v8587
    %v8589 = vmul.f32 %v8584, 1.442695
    %v8590 = vpow.pop %v8589
    %v8591 = vadd.f32 %v8586, 1.0
    %v8592 = vadd.f32 %v8588, 1.0
    %v8593 = vadd.f32 %v8590, 1.0
    %v8594 = vrcp.pop %v8591
    %v8595 = vmul.f32 1.0, %v8594
    %v8596 = vrcp.pop %v8592
    %v8597 = vmul.f32 1.0, %v8596
    %v8598 = vrcp.pop %v8593
    %v8599 = vmul.f32 1.0, %v8598
    %v8600 = vtanh.pop %v8557
    %v8601 = vmul.f32 %v8597, %v8143
    %v8602 = vmul.f32 %v8595, %v8600
    %v8603 = vadd.f32 %v8601, %v8602
    %v8604 = vtanh.pop %v8603
    %v8605 = vmul.f32 %v8599, %v8604
    %v8608 = vunpack.c.l.s4 1966171168
    %v8609 = vunpack.c.0.s8 %v8608
    %v8610 = vlaneseq
    %v8611 = vshrl.u32 %v8610, 7
    %v8612 = vsub.s32 %v8609, %v8611
    %v8613 = vrot.slane %v8581, %v8612
    %v8614 = vcombine.high %v8613, %v8613
    %v8616 = vunpack.c.l.s4 1966171168
    %v8617 = vunpack.c.0.s8 %v8616
    %v8618 = vlaneseq
    %v8619 = vshrl.u32 %v8618, 7
    %v8620 = vsub.s32 %v8617, %v8619
    %v8621 = vrot.slane %v8613, %v8620
    %v8623 = vunpack.c.l.s4 1966171168
    %v8624 = vunpack.c.0.s8 %v8623
    %v8625 = vlaneseq
    %v8626 = vshrl.u32 %v8625, 7
    %v8627 = vsub.s32 %v8624, %v8626
    %v8628 = vrot.slane %v8614, %v8627
    %8631 = vst [vmem:[#allocation3 + $0x6] sm:$0x1] %v8621
    %8632 = vst [vmem:[#allocation3 + $0x16] sm:$0x1] %v8628
    %v8635 = vunpack.c.l.s4 1966171168
    %v8636 = vunpack.c.0.s8 %v8635
    %v8637 = vlaneseq
    %v8638 = vshrl.u32 %v8637, 7
    %v8639 = vsub.s32 %v8636, %v8638
    %v8640 = vrot.slane %v8605, %v8639
    %v8641 = vcombine.high %v8640, %v8640
    %v8643 = vunpack.c.l.s4 1966171168
    %v8644 = vunpack.c.0.s8 %v8643
    %v8645 = vlaneseq
    %v8646 = vshrl.u32 %v8645, 7
    %v8647 = vsub.s32 %v8644, %v8646
    %v8648 = vrot.slane %v8640, %v8647
    %v8650 = vunpack.c.l.s4 1966171168
    %v8651 = vunpack.c.0.s8 %v8650
    %v8652 = vlaneseq
    %v8653 = vshrl.u32 %v8652, 7
    %v8654 = vsub.s32 %v8651, %v8653
    %v8655 = vrot.slane %v8641, %v8654
    %8658 = vst [vmem:[#allocation3 + $0x9] sm:$0x1] %v8648
    %8659 = vst [vmem:[#allocation3 + $0x19] sm:$0x1] %v8655
    %v8660 = vld [vmem:[%s4094] ss:$8 sm:$0xf]
    %v8661 = vld [vmem:[%s4096] ss:$8 sm:$0xf]
    %v8662 = vld [vmem:[%s4098] ss:$8 sm:$0xf]
    %v8663 = vld [vmem:[%s4100] ss:$8 sm:$0xf]
    %v8666 = vcombine.low %v8660, %v8661
    %v8668 = vunpack.c.l.s4 1966171168
    %v8669 = vunpack.c.0.s8 %v8668
    %v8670 = vlaneseq
    %v8671 = vshrl.u32 %v8670, 7
    %v8672 = vsub.s32 %v8669, %v8671
    %v8673 = vrot.slane %v8666, %v8672
    %v8674 = vcombine.high %v8673, %v8673
    %v8676 = vunpack.c.l.s4 1966171168
    %v8677 = vunpack.c.0.s8 %v8676
    %v8678 = vlaneseq
    %v8679 = vshrl.u32 %v8678, 7
    %v8680 = vsub.s32 %v8677, %v8679
    %v8681 = vrot.slane %v8673, %v8680
    %v8683 = vunpack.c.l.s4 1966171168
    %v8684 = vunpack.c.0.s8 %v8683
    %v8685 = vlaneseq
    %v8686 = vshrl.u32 %v8685, 7
    %v8687 = vsub.s32 %v8684, %v8686
    %v8688 = vrot.slane %v8674, %v8687
    %v8689 = vcombine.high %v8681, %v8681
    %v8690 = vcombine.high %v8688, %v8688
    %v8697 = vcombine.low %v8662, %v8663
    %v8699 = vunpack.c.l.s4 1966171168
    %v8700 = vunpack.c.0.s8 %v8699
    %v8701 = vlaneseq
    %v8702 = vshrl.u32 %v8701, 7
    %v8703 = vsub.s32 %v8700, %v8702
    %v8704 = vrot.slane %v8697, %v8703
    %v8705 = vcombine.high %v8704, %v8704
    %v8707 = vunpack.c.l.s4 1966171168
    %v8708 = vunpack.c.0.s8 %v8707
    %v8709 = vlaneseq
    %v8710 = vshrl.u32 %v8709, 7
    %v8711 = vsub.s32 %v8708, %v8710
    %v8712 = vrot.slane %v8704, %v8711
    %v8714 = vunpack.c.l.s4 1966171168
    %v8715 = vunpack.c.0.s8 %v8714
    %v8716 = vlaneseq
    %v8717 = vshrl.u32 %v8716, 7
    %v8718 = vsub.s32 %v8715, %v8717
    %v8719 = vrot.slane %v8705, %v8718
    %v8720 = vcombine.high %v8712, %v8712
    %v8721 = vcombine.high %v8719, %v8719
    %8726 = vmatprep.subr.mxu0 %v5185
    %8727 = vmatpush1.msra.mxu0 %v5184
    %8728 = vmatprep.subr.mxu0 %v5193
    %8729 = vmatpush1.msra.mxu0 %v5192
    %8730 = vmatprep.subr.mxu0 %v5201
    %8731 = vmatpush1.msra.mxu0 %v5200
    %8732 = vmatprep.subr.mxu0 %v5209
    %8733 = vmatpush1.msra.mxu0 %v5208
    %8734 = vmatprep.subr.mxu0 %v5217
    %8735 = vmatpush1.msra.mxu0 %v5216
    %8736 = vmatprep.subr.mxu0 %v5225
    %8737 = vmatpush1.msra.mxu0 %v5224
    %8738 = vmatprep.subr.mxu0 %v5233
    %8739 = vmatpush1.msra.mxu0 %v5232
    %8740 = vmatprep.subr.mxu0 %v5241
    %8741 = vmatpush1.msra.mxu0 %v5240
    %8742 = vmatprep.subr.mxu0 %v5249
    %8743 = vmatpush1.msra.mxu0 %v5248
    %8744 = vmatprep.subr.mxu0 %v5257
    %8745 = vmatpush1.msra.mxu0 %v5256
    %8746 = vmatprep.subr.mxu0 %v5265
    %8747 = vmatpush1.msra.mxu0 %v5264
    %8748 = vmatprep.subr.mxu0 %v5273
    %8749 = vmatpush1.msra.mxu0 %v5272
    %8750 = vmatprep.subr.mxu0 %v5281
    %8751 = vmatpush1.msra.mxu0 %v5280
    %8752 = vmatprep.subr.mxu0 %v5289
    %8753 = vmatpush1.msra.mxu0 %v5288
    %8754 = vmatprep.subr.mxu0 %v5297
    %8755 = vmatpush1.msra.mxu0 %v5296
    %8756 = vmatprep.subr.mxu0 %v5305
    %8757 = vmatpush1.msra.mxu0 %v5304
    %8758 = vmatprep.subr.mxu0 %v5313
    %8759 = vmatpush1.msra.mxu0 %v5312
    %8760 = vmatprep.subr.mxu0 %v5321
    %8761 = vmatpush1.msra.mxu0 %v5320
    %8762 = vmatprep.subr.mxu0 %v5329
    %8763 = vmatpush1.msra.mxu0 %v5328
    %8764 = vmatprep.subr.mxu0 %v5337
    %8765 = vmatpush1.msra.mxu0 %v5336
    %8766 = vmatprep.subr.mxu0 %v5345
    %8767 = vmatpush1.msra.mxu0 %v5344
    %8768 = vmatprep.subr.mxu0 %v5353
    %8769 = vmatpush1.msra.mxu0 %v5352
    %8770 = vmatprep.subr.mxu0 %v5361
    %8771 = vmatpush1.msra.mxu0 %v5360
    %8772 = vmatprep.subr.mxu0 %v5369
    %8773 = vmatpush1.msra.mxu0 %v5368
    %8774 = vmatprep.subr.mxu0 %v5377
    %8775 = vmatpush1.msra.mxu0 %v5376
    %8776 = vmatprep.subr.mxu0 %v5385
    %8777 = vmatpush1.msra.mxu0 %v5384
    %8778 = vmatprep.subr.mxu0 %v5393
    %8779 = vmatpush1.msra.mxu0 %v5392
    %8780 = vmatprep.subr.mxu0 %v5401
    %8781 = vmatpush1.msra.mxu0 %v5400
    %8782 = vmatprep.subr.mxu0 %v5409
    %8783 = vmatpush1.msra.mxu0 %v5408
    %8784 = vmatprep.subr.mxu0 %v5417
    %8785 = vmatpush1.msra.mxu0 %v5416
    %8786 = vmatprep.subr.mxu0 %v5425
    %8787 = vmatpush1.msra.mxu0 %v5424
    %8788 = vmatprep.subr.mxu0 %v5433
    %8789 = vmatpush1.msra.mxu0 %v5432
    %8790 = vmatprep.mubr.f32.mxu0 %v8605
    %8791 = vmatmul.mubr.f32.gmra.mrb[0].mxu0 %v8581
    %v8792 = vpop.f32.mrb[0].mxu0
    %v8793 = vadd.f32 0.0, %v8792
    %v8794 = vpop.f32.mrb[0].mxu0
    %v8795 = vadd.f32 0.0, %v8794
    %8796 = vdwg.mxu0
    %8797 = vmatprep.subr.mxu0 %v5187
    %8798 = vmatpush1.msra.mxu0 %v5186
    %8799 = vmatprep.subr.mxu0 %v5195
    %8800 = vmatpush1.msra.mxu0 %v5194
    %8801 = vmatprep.subr.mxu0 %v5203
    %8802 = vmatpush1.msra.mxu0 %v5202
    %8803 = vmatprep.subr.mxu0 %v5211
    %8804 = vmatpush1.msra.mxu0 %v5210
    %8805 = vmatprep.subr.mxu0 %v5219
    %8806 = vmatpush1.msra.mxu0 %v5218
    %8807 = vmatprep.subr.mxu0 %v5227
    %8808 = vmatpush1.msra.mxu0 %v5226
    %8809 = vmatprep.subr.mxu0 %v5235
    %8810 = vmatpush1.msra.mxu0 %v5234
    %8811 = vmatprep.subr.mxu0 %v5243
    %8812 = vmatpush1.msra.mxu0 %v5242
    %8813 = vmatprep.subr.mxu0 %v5251
    %8814 = vmatpush1.msra.mxu0 %v5250
    %8815 = vmatprep.subr.mxu0 %v5259
    %8816 = vmatpush1.msra.mxu0 %v5258
    %8817 = vmatprep.subr.mxu0 %v5267
    %8818 = vmatpush1.msra.mxu0 %v5266
    %8819 = vmatprep.subr.mxu0 %v5275
    %8820 = vmatpush1.msra.mxu0 %v5274
    %8821 = vmatprep.subr.mxu0 %v5283
    %8822 = vmatpush1.msra.mxu0 %v5282
    %8823 = vmatprep.subr.mxu0 %v5291
    %8824 = vmatpush1.msra.mxu0 %v5290
    %8825 = vmatprep.subr.mxu0 %v5299
    %8826 = vmatpush1.msra.mxu0 %v5298
    %8827 = vmatprep.subr.mxu0 %v5307
    %8828 = vmatpush1.msra.mxu0 %v5306
    %8829 = vmatprep.subr.mxu0 %v5315
    %8830 = vmatpush1.msra.mxu0 %v5314
    %8831 = vmatprep.subr.mxu0 %v5323
    %8832 = vmatpush1.msra.mxu0 %v5322
    %8833 = vmatprep.subr.mxu0 %v5331
    %8834 = vmatpush1.msra.mxu0 %v5330
    %8835 = vmatprep.subr.mxu0 %v5339
    %8836 = vmatpush1.msra.mxu0 %v5338
    %8837 = vmatprep.subr.mxu0 %v5347
    %8838 = vmatpush1.msra.mxu0 %v5346
    %8839 = vmatprep.subr.mxu0 %v5355
    %8840 = vmatpush1.msra.mxu0 %v5354
    %8841 = vmatprep.subr.mxu0 %v5363
    %8842 = vmatpush1.msra.mxu0 %v5362
    %8843 = vmatprep.subr.mxu0 %v5371
    %8844 = vmatpush1.msra.mxu0 %v5370
    %8845 = vmatprep.subr.mxu0 %v5379
    %8846 = vmatpush1.msra.mxu0 %v5378
    %8847 = vmatprep.subr.mxu0 %v5387
    %8848 = vmatpush1.msra.mxu0 %v5386
    %8849 = vmatprep.subr.mxu0 %v5395
    %8850 = vmatpush1.msra.mxu0 %v5394
    %8851 = vmatprep.subr.mxu0 %v5403
    %8852 = vmatpush1.msra.mxu0 %v5402
    %8853 = vmatprep.subr.mxu0 %v5411
    %8854 = vmatpush1.msra.mxu0 %v5410
    %8855 = vmatprep.subr.mxu0 %v5419
    %8856 = vmatpush1.msra.mxu0 %v5418
    %8857 = vmatprep.subr.mxu0 %v5427
    %8858 = vmatpush1.msra.mxu0 %v5426
    %8859 = vmatprep.subr.mxu0 %v5435
    %8860 = vmatpush1.msra.mxu0 %v5434
    %8861 = vmatprep.mubr.f32.mxu0 %v8605
    %8862 = vmatmul.mubr.f32.gmra.mrb[0].mxu0 %v8581
    %v8863 = vpop.f32.mrb[0].mxu0
    %v8864 = vadd.f32 0.0, %v8863
    %v8865 = vpop.f32.mrb[0].mxu0
    %v8866 = vadd.f32 0.0, %v8865
    %8867 = vdwg.mxu0
    %8868 = vmatprep.subr.mxu0 %v5189
    %8869 = vmatpush1.msra.mxu0 %v5188
    %8870 = vmatprep.subr.mxu0 %v5197
    %8871 = vmatpush1.msra.mxu0 %v5196
    %8872 = vmatprep.subr.mxu0 %v5205
    %8873 = vmatpush1.msra.mxu0 %v5204
    %8874 = vmatprep.subr.mxu0 %v5213
    %8875 = vmatpush1.msra.mxu0 %v5212
    %8876 = vmatprep.subr.mxu0 %v5221
    %8877 = vmatpush1.msra.mxu0 %v5220
    %8878 = vmatprep.subr.mxu0 %v5229
    %8879 = vmatpush1.msra.mxu0 %v5228
    %8880 = vmatprep.subr.mxu0 %v5237
    %8881 = vmatpush1.msra.mxu0 %v5236
    %8882 = vmatprep.subr.mxu0 %v5245
    %8883 = vmatpush1.msra.mxu0 %v5244
    %8884 = vmatprep.subr.mxu0 %v5253
    %8885 = vmatpush1.msra.mxu0 %v5252
    %8886 = vmatprep.subr.mxu0 %v5261
    %8887 = vmatpush1.msra.mxu0 %v5260
    %8888 = vmatprep.subr.mxu0 %v5269
    %8889 = vmatpush1.msra.mxu0 %v5268
    %8890 = vmatprep.subr.mxu0 %v5277
    %8891 = vmatpush1.msra.mxu0 %v5276
    %8892 = vmatprep.subr.mxu0 %v5285
    %8893 = vmatpush1.msra.mxu0 %v5284
    %8894 = vmatprep.subr.mxu0 %v5293
    %8895 = vmatpush1.msra.mxu0 %v5292
    %8896 = vmatprep.subr.mxu0 %v5301
    %8897 = vmatpush1.msra.mxu0 %v5300
    %8898 = vmatprep.subr.mxu0 %v5309
    %8899 = vmatpush1.msra.mxu0 %v5308
    %8900 = vmatprep.subr.mxu0 %v5317
    %8901 = vmatpush1.msra.mxu0 %v5316
    %8902 = vmatprep.subr.mxu0 %v5325
    %8903 = vmatpush1.msra.mxu0 %v5324
    %8904 = vmatprep.subr.mxu0 %v5333
    %8905 = vmatpush1.msra.mxu0 %v5332
    %8906 = vmatprep.subr.mxu0 %v5341
    %8907 = vmatpush1.msra.mxu0 %v5340
    %8908 = vmatprep.subr.mxu0 %v5349
    %8909 = vmatpush1.msra.mxu0 %v5348
    %8910 = vmatprep.subr.mxu0 %v5357
    %8911 = vmatpush1.msra.mxu0 %v5356
    %8912 = vmatprep.subr.mxu0 %v5365
    %8913 = vmatpush1.msra.mxu0 %v5364
    %8914 = vmatprep.subr.mxu0 %v5373
    %8915 = vmatpush1.msra.mxu0 %v5372
    %8916 = vmatprep.subr.mxu0 %v5381
    %8917 = vmatpush1.msra.mxu0 %v5380
    %8918 = vmatprep.subr.mxu0 %v5389
    %8919 = vmatpush1.msra.mxu0 %v5388
    %8920 = vmatprep.subr.mxu0 %v5397
    %8921 = vmatpush1.msra.mxu0 %v5396
    %8922 = vmatprep.subr.mxu0 %v5405
    %8923 = vmatpush1.msra.mxu0 %v5404
    %8924 = vmatprep.subr.mxu0 %v5413
    %8925 = vmatpush1.msra.mxu0 %v5412
    %8926 = vmatprep.subr.mxu0 %v5421
    %8927 = vmatpush1.msra.mxu0 %v5420
    %8928 = vmatprep.subr.mxu0 %v5429
    %8929 = vmatpush1.msra.mxu0 %v5428
    %8930 = vmatprep.subr.mxu0 %v5437
    %8931 = vmatpush1.msra.mxu0 %v5436
    %8932 = vmatprep.mubr.f32.mxu0 %v8605
    %8933 = vmatmul.mubr.f32.gmra.mrb[0].mxu0 %v8581
    %v8934 = vpop.f32.mrb[0].mxu0
    %v8935 = vadd.f32 0.0, %v8934
    %v8936 = vpop.f32.mrb[0].mxu0
    %v8937 = vadd.f32 0.0, %v8936
    %8938 = vdwg.mxu0
    %8939 = vmatprep.subr.mxu0 %v5191
    %8940 = vmatpush1.msra.mxu0 %v5190
    %8941 = vmatprep.subr.mxu0 %v5199
    %8942 = vmatpush1.msra.mxu0 %v5198
    %8943 = vmatprep.subr.mxu0 %v5207
    %8944 = vmatpush1.msra.mxu0 %v5206
    %8945 = vmatprep.subr.mxu0 %v5215
    %8946 = vmatpush1.msra.mxu0 %v5214
    %8947 = vmatprep.subr.mxu0 %v5223
    %8948 = vmatpush1.msra.mxu0 %v5222
    %8949 = vmatprep.subr.mxu0 %v5231
    %8950 = vmatpush1.msra.mxu0 %v5230
    %8951 = vmatprep.subr.mxu0 %v5239
    %8952 = vmatpush1.msra.mxu0 %v5238
    %8953 = vmatprep.subr.mxu0 %v5247
    %8954 = vmatpush1.msra.mxu0 %v5246
    %8955 = vmatprep.subr.mxu0 %v5255
    %8956 = vmatpush1.msra.mxu0 %v5254
    %8957 = vmatprep.subr.mxu0 %v5263
    %8958 = vmatpush1.msra.mxu0 %v5262
    %8959 = vmatprep.subr.mxu0 %v5271
    %8960 = vmatpush1.msra.mxu0 %v5270
    %8961 = vmatprep.subr.mxu0 %v5279
    %8962 = vmatpush1.msra.mxu0 %v5278
    %8963 = vmatprep.subr.mxu0 %v5287
    %8964 = vmatpush1.msra.mxu0 %v5286
    %8965 = vmatprep.subr.mxu0 %v5295
    %8966 = vmatpush1.msra.mxu0 %v5294
    %8967 = vmatprep.subr.mxu0 %v5303
    %8968 = vmatpush1.msra.mxu0 %v5302
    %8969 = vmatprep.subr.mxu0 %v5311
    %8970 = vmatpush1.msra.mxu0 %v5310
    %8971 = vmatprep.subr.mxu0 %v5319
    %8972 = vmatpush1.msra.mxu0 %v5318
    %8973 = vmatprep.subr.mxu0 %v5327
    %8974 = vmatpush1.msra.mxu0 %v5326
    %8975 = vmatprep.subr.mxu0 %v5335
    %8976 = vmatpush1.msra.mxu0 %v5334
    %8977 = vmatprep.subr.mxu0 %v5343
    %8978 = vmatpush1.msra.mxu0 %v5342
    %8979 = vmatprep.subr.mxu0 %v5351
    %8980 = vmatpush1.msra.mxu0 %v5350
    %8981 = vmatprep.subr.mxu0 %v5359
    %8982 = vmatpush1.msra.mxu0 %v5358
    %8983 = vmatprep.subr.mxu0 %v5367
    %8984 = vmatpush1.msra.mxu0 %v5366
    %8985 = vmatprep.subr.mxu0 %v5375
    %8986 = vmatpush1.msra.mxu0 %v5374
    %8987 = vmatprep.subr.mxu0 %v5383
    %8988 = vmatpush1.msra.mxu0 %v5382
    %8989 = vmatprep.subr.mxu0 %v5391
    %8990 = vmatpush1.msra.mxu0 %v5390
    %8991 = vmatprep.subr.mxu0 %v5399
    %8992 = vmatpush1.msra.mxu0 %v5398
    %8993 = vmatprep.subr.mxu0 %v5407
    %8994 = vmatpush1.msra.mxu0 %v5406
    %8995 = vmatprep.subr.mxu0 %v5415
    %8996 = vmatpush1.msra.mxu0 %v5414
    %8997 = vmatprep.subr.mxu0 %v5423
    %8998 = vmatpush1.msra.mxu0 %v5422
    %8999 = vmatprep.subr.mxu0 %v5431
    %9000 = vmatpush1.msra.mxu0 %v5430
    %9001 = vmatprep.subr.mxu0 %v5439
    %9002 = vmatpush1.msra.mxu0 %v5438
    %9003 = vmatprep.mubr.f32.mxu0 %v8605
    %9004 = vmatmul.mubr.f32.gmra.mrb[0].mxu0 %v8581
    %v9005 = vpop.f32.mrb[0].mxu0
    %v9006 = vadd.f32 0.0, %v9005
    %v9007 = vpop.f32.mrb[0].mxu0
    %v9008 = vadd.f32 0.0, %v9007
    %9009 = vdwg.mxu0
    %v9010 = vadd.f32 %v8681, %v8793
    %v9011 = vadd.f32 %v8688, %v8795
    %v9012 = vadd.f32 %v8689, %v8864
    %v9013 = vadd.f32 %v8690, %v8866
    %v9014 = vadd.f32 %v8712, %v8935
    %v9015 = vadd.f32 %v8719, %v8937
    %v9016 = vadd.f32 %v8720, %v9006
    %v9017 = vadd.f32 %v8721, %v9008
    %v9018 = vxor.u32 %v9010, 2147483648
    %v9019 = vxor.u32 %v9011, 2147483648
    %v9020 = vxor.u32 %v9012, 2147483648
    %v9021 = vmul.f32 %v9018, 1.442695
    %v9022 = vpow.pop %v9021
    %v9023 = vmul.f32 %v9019, 1.442695
    %v9024 = vpow.pop %v9023
    %v9025 = vmul.f32 %v9020, 1.442695
    %v9026 = vpow.pop %v9025
    %v9027 = vadd.f32 %v9022, 1.0
    %v9028 = vadd.f32 %v9024, 1.0
    %v9029 = vadd.f32 %v9026, 1.0
    %v9030 = vrcp.pop %v9027
    %v9031 = vmul.f32 1.0, %v9030
    %v9032 = vrcp.pop %v9028
    %v9033 = vmul.f32 1.0, %v9032
    %v9034 = vrcp.pop %v9029
    %v9035 = vmul.f32 1.0, %v9034
    %v9036 = vtanh.pop %v9013
    %v9037 = vmul.f32 %v9033, %v8579
    %v9038 = vmul.f32 %v9031, %v9036
    %v9039 = vadd.f32 %v9037, %v9038
    %v9040 = vtanh.pop %v9039
    %v9041 = vmul.f32 %v9035, %v9040
    %v9042 = vxor.u32 %v9014, 2147483648
    %v9043 = vxor.u32 %v9015, 2147483648
    %v9044 = vxor.u32 %v9016, 2147483648
    %v9045 = vmul.f32 %v9042, 1.442695
    %v9046 = vpow.pop %v9045
    %v9047 = vmul.f32 %v9043, 1.442695
    %v9048 = vpow.pop %v9047
    %v9049 = vmul.f32 %v9044, 1.442695
    %v9050 = vpow.pop %v9049
    %v9051 = vadd.f32 %v9046, 1.0
    %v9052 = vadd.f32 %v9048, 1.0
    %v9053 = vadd.f32 %v9050, 1.0
    %v9054 = vrcp.pop %v9051
    %v9055 = vmul.f32 1.0, %v9054
    %v9056 = vrcp.pop %v9052
    %v9057 = vmul.f32 1.0, %v9056
    %v9058 = vrcp.pop %v9053
    %v9059 = vmul.f32 1.0, %v9058
    %v9060 = vtanh.pop %v9017
    %v9061 = vmul.f32 %v9057, %v8603
    %v9062 = vmul.f32 %v9055, %v9060
    %v9063 = vadd.f32 %v9061, %v9062
    %v9064 = vtanh.pop %v9063
    %v9065 = vmul.f32 %v9059, %v9064
    %v9068 = vunpack.c.l.s4 1966171168
    %v9069 = vunpack.c.0.s8 %v9068
    %v9070 = vlaneseq
    %v9071 = vshrl.u32 %v9070, 7
    %v9072 = vsub.s32 %v9069, %v9071
    %v9073 = vrot.slane %v9041, %v9072
    %v9074 = vcombine.high %v9073, %v9073
    %v9076 = vunpack.c.l.s4 1966171168
    %v9077 = vunpack.c.0.s8 %v9076
    %v9078 = vlaneseq
    %v9079 = vshrl.u32 %v9078, 7
    %v9080 = vsub.s32 %v9077, %v9079
    %v9081 = vrot.slane %v9073, %v9080
    %v9083 = vunpack.c.l.s4 1966171168
    %v9084 = vunpack.c.0.s8 %v9083
    %v9085 = vlaneseq
    %v9086 = vshrl.u32 %v9085, 7
    %v9087 = vsub.s32 %v9084, %v9086
    %v9088 = vrot.slane %v9074, %v9087
    %9091 = vst [vmem:[#allocation3 + $0x7] sm:$0x1] %v9081
    %9092 = vst [vmem:[#allocation3 + $0x17] sm:$0x1] %v9088
    %v9095 = vunpack.c.l.s4 1966171168
    %v9096 = vunpack.c.0.s8 %v9095
    %v9097 = vlaneseq
    %v9098 = vshrl.u32 %v9097, 7
    %v9099 = vsub.s32 %v9096, %v9098
    %v9100 = vrot.slane %v9065, %v9099
    %v9101 = vcombine.high %v9100, %v9100
    %v9103 = vunpack.c.l.s4 1966171168
    %v9104 = vunpack.c.0.s8 %v9103
    %v9105 = vlaneseq
    %v9106 = vshrl.u32 %v9105, 7
    %v9107 = vsub.s32 %v9104, %v9106
    %v9108 = vrot.slane %v9100, %v9107
    %v9110 = vunpack.c.l.s4 1966171168
    %v9111 = vunpack.c.0.s8 %v9110
    %v9112 = vlaneseq
    %v9113 = vshrl.u32 %v9112, 7
    %v9114 = vsub.s32 %v9111, %v9113
    %v9115 = vrot.slane %v9101, %v9114
    %9118 = vst [vmem:[#allocation3 + $0x8] sm:$0x1] %v9108
    %9119 = vst [vmem:[#allocation3 + $0x18] sm:$0x1] %v9115
    %v9120 = vld [vmem:[#allocation3] sm:$0xff]
    %v9121 = vld [vmem:[#allocation3 + $0x8] sm:$0xff]
    %v9122 = vld [vmem:[#allocation3 + $0x10] sm:$0xff]
    %v9123 = vld [vmem:[#allocation3 + $0x18] sm:$0xff]
    %9126 = vrot.lane.b32.xlu0 %v9121, 64
    %v9127 = vpop.permute.xlu0 %9126
    %9128 = vrot.lane.b32.xlu0 %v9123, 64
    %v9129 = vpop.permute.xlu0 %9128
    %vm9132 = vcmask 523264
    %v9133 = vsel %vm9132, %v9120, %v9127
    %v9134 = vsel %vm9132, %v9122, %v9129
    %9135 = vst [vmem:[#allocation13] sm:$0xff] %v9133
    %9136 = vst [vmem:[#allocation13 + $0x8] sm:$0xff] %v9134
    // Predicated region
    $region50: #{tpu_custom_call.1} parent=1 // pred_check
      _
    $region51: #{tpu_custom_call.1} parent=1 // pred_check_branch
      %9138 = sbr.rel (0) target = $region53
    $region52: #{tpu_custom_call.1} parent=1 // pred_region
      %s9140 = ssub.s32 256, 256
      %9141 = vsyncadd [#allocation6], %s9140
      %s9142 = sshll.u32 [#allocation13], 4
      %s9143 = int_to_ptr.vmem [resolvable:$true] %s9142
      %9148 = dma.vmem_to_hbm [thread:$0]  %s9143, 256, %s7, [#allocation6], 128, 128, 8
    $region53: #{tpu_custom_call.1} parent=1 // pred_fallthru
      _
    // Predicated region
    $region54: #{tpu_custom_call.1} parent=1 // pred_check
      _
    $region55: #{tpu_custom_call.1} parent=1 // pred_check_branch
      %9150 = sbr.rel (0) target = $region57
    $region56: #{tpu_custom_call.1} parent=1 // pred_region
      %9151 = dma.done [#allocation6], 256
    $region57: #{tpu_custom_call.1} parent=1 // pred_fallthru
      _
    %9152 = vsyncpa [#allocation5], 1
    %9153 = vsyncpa [#allocation8], 1
    %9154 = vsyncpa [#allocation11], 1
    %9155 = vsyncpa [#allocation6], 1

</llo_original>
